<compile_context>
chip_gen: v7x
topology: tpu7x:2x2x1
jax: 0.10.0
libtpu: 0.0.40
codegen_flags: <defaults>
</compile_context>

<pallas_src>
import jax
import jax.numpy as jnp
import numpy as np
from jax import lax
from jax.experimental import pallas as pl
from jax.experimental.pallas import tpu as pltpu

BN_EPS = 1e-5
_VMEM_LIMIT = 32 * 1024 * 1024
_MM_PREC = lax.Precision.HIGHEST   # exact f32 matmul (matches the reference conv)


def _mish(x):
    # mish(x) = x * tanh(softplus(x)) = x * u / (u + 2),  u = t*(t+2),  t = exp(x).
    # Exact algebraic form: one EUP exp + one exact VPU divide.  The clamp keeps
    # exp finite; for x > 20, tanh(softplus(x)) == 1 in f32, so mish(x) == x.
    t = jnp.exp(jnp.minimum(x, 20.0))
    u = t * (t + 2.0)
    return x * u / (u + 2.0)


# --------------------------------------------------------------------------
# Kernel A: Conv2d(3x3, stride 1, pad 1) + bias + partial BN stats
# --------------------------------------------------------------------------
def conv_stats_kernel(x_ref, w_ref, b_ref, y_ref, stats_ref, xpad):
    """x_ref:(1,H,W,Cin)  w_ref:(9*Cin,Cout)  b_ref:(1,Cout)
       y_ref:(1,TH,W,Cout)  stats_ref:(1,1,2,Cout)  xpad:(TH+2,W+2,Cin) scratch."""
    _, H, W, Cin = x_ref.shape
    _, TH, _, Cout = y_ref.shape
    h = pl.program_id(1)
    nh = pl.num_programs(1)
    r0 = pl.multiple_of(h * TH, TH)

    # ---- zero-padded halo window built in VMEM (masked stores only) ----
    xpad[...] = jnp.zeros(xpad.shape, xpad.dtype)
    xpad[1:TH + 1, 1:W + 1, :] = x_ref[0, pl.ds(r0, TH), :, :]

    @pl.when(h > 0)
    def _():
        xpad[0:1, 1:W + 1, :] = x_ref[0, pl.ds(r0 - 1, 1), :, :]

    @pl.when(h < nh - 1)
    def _():
        xpad[TH + 1:TH + 2, 1:W + 1, :] = x_ref[0, pl.ds(r0 + TH, 1), :, :]

    # ---- im2col slab (lane-dim concat), then a single matmul with K = 9*Cin ----
    cols = [xpad[kh:kh + TH, kw:kw + W, :] for kh in range(3) for kw in range(3)]
    patch = jnp.concatenate(cols, axis=-1).reshape(TH * W, 9 * Cin)

    y = jnp.dot(patch, w_ref[...],
                preferred_element_type=jnp.float32,
                precision=_MM_PREC) + b_ref[...]

    y_ref[...] = y.reshape(1, TH, W, Cout)
    # Single-pass BN partial statistics for this tile (sum, sum of squares).
    s1 = jnp.sum(y, axis=0, keepdims=True)
    s2 = jnp.sum(y * y, axis=0, keepdims=True)
    stats_ref[0, 0, :, :] = jnp.concatenate([s1, s2], axis=0)


# --------------------------------------------------------------------------
# Kernel B: BatchNorm (batch stats) + Mish, optionally fused MaxPool2d(2)
# --------------------------------------------------------------------------
def _bn_scale_shift(stats_ref, gamma_ref, beta_ref, count):
    st = jnp.sum(stats_ref[...], axis=(0, 1))          # (2, C): [sum, sumsq]
    inv = 1.0 / count
    mean = st[0:1, :] * inv                            # (1, C)
    var = st[1:2, :] * inv - mean * mean               # biased var (PyTorch train BN)
    scale = gamma_ref[...] * lax.rsqrt(var + BN_EPS)   # (1, C)
    shift = beta_ref[...] - mean * scale
    return scale, shift


def bn_mish_kernel(y_ref, stats_ref, gamma_ref, beta_ref, out_ref):
    N, NH, _, _ = stats_ref.shape
    _, TH, W, _ = y_ref.shape
    scale, shift = _bn_scale_shift(stats_ref, gamma_ref, beta_ref,
                                   float(N * NH * TH * W))
    out_ref[...] = _mish(y_ref[...] * scale + shift)


def bn_mish_pool_kernel(y_ref, stats_ref, gamma_ref, beta_ref, out_ref, pool_ref):
    """y_ref/out_ref:(1,TH,W//2,2,C)  pool_ref:(1,TH//2,W//2,C).
       The W axis was pre-split in the wrapper (free row-major reshape), so both
       pooling maxes are plain leading-/sublane-dim reductions."""
    N, NH, _, C = stats_ref.shape
    _, TH, WH, TWO, _ = y_ref.shape
    scale, shift = _bn_scale_shift(stats_ref, gamma_ref, beta_ref,
                                   float(N * NH * TH * WH * TWO))
    act = _mish(y_ref[...] * scale + shift)            # (1, TH, W//2, 2, C)
    out_ref[...] = act

    pw = jnp.max(act, axis=3)[0]                        # W-pool  -> (TH, W//2, C)
    ph = pw.reshape(TH // 2, 2, WH, C)                  # leading-dim split only
    pool_ref[...] = jnp.max(ph, axis=1)[None]           # H-pool  -> (1, TH//2, W//2, C)


# --------------------------------------------------------------------------
# Wrappers
# --------------------------------------------------------------------------
def _row_tile(h):
    # Largest small even tile dividing H (8 keeps the toy case multi-tile so the
    # in-kernel halo path is exercised).  Re-derive for real sizes / per chip.
    for t in (8, 4, 2):
        if h % t == 0:
            return t
    return h  # TODO(synk): odd H/W is not handled by the fused-pool path.


def _conv_stats(x, w, b, th):
    N, H, W, Cin = x.shape
    Cout = w.shape[-1]
    nh = H // th
    w2 = w.reshape(9 * Cin, Cout).astype(jnp.float32)   # (kh,kw,cin) rows == im2col order
    return pl.pallas_call(
        conv_stats_kernel,
        out_shape=(jax.ShapeDtypeStruct((N, H, W, Cout), jnp.float32),
                   jax.ShapeDtypeStruct((N, nh, 2, Cout), jnp.float32)),
        grid=(N, nh),
        in_specs=[
            pl.BlockSpec((1, H, W, Cin), lambda n, h: (n, 0, 0, 0)),   # resident per n
            pl.BlockSpec((9 * Cin, Cout), lambda n, h: (0, 0)),
            pl.BlockSpec((1, Cout), lambda n, h: (0, 0)),
        ],
        out_specs=(
            pl.BlockSpec((1, th, W, Cout), lambda n, h: (n, h, 0, 0)),
            pl.BlockSpec((1, 1, 2, Cout), lambda n, h: (n, h, 0, 0)),
        ),
        scratch_shapes=[pltpu.VMEM((th + 2, W + 2, Cin), jnp.float32)],
        compiler_params=pltpu.CompilerParams(
            dimension_semantics=("parallel", "parallel"),
            vmem_limit_bytes=_VMEM_LIMIT),
    )(x.astype(jnp.float32), w2, b.reshape(1, Cout).astype(jnp.float32))


def _bn_mish_call(y, stats, gamma, beta, th, with_pool):
    N, H, W, C = y.shape
    nh = stats.shape[1]
    g = gamma.reshape(1, C).astype(jnp.float32)
    bt = beta.reshape(1, C).astype(jnp.float32)
    stats_spec = pl.BlockSpec((N, nh, 2, C), lambda n, h: (0, 0, 0, 0))   # tiny, resident
    vec_spec = pl.BlockSpec((1, C), lambda n, h: (0, 0))
    cp = pltpu.CompilerParams(dimension_semantics=("parallel", "parallel"),
                              vmem_limit_bytes=_VMEM_LIMIT)
    if with_pool:
        y5 = y.reshape(N, H, W // 2, 2, C)               # free row-major split of W
        act5, pooled = pl.pallas_call(
            bn_mish_pool_kernel,
            out_shape=(jax.ShapeDtypeStruct((N, H, W // 2, 2, C), jnp.float32),
                       jax.ShapeDtypeStruct((N, H // 2, W // 2, C), jnp.float32)),
            grid=(N, nh),
            in_specs=[pl.BlockSpec((1, th, W // 2, 2, C), lambda n, h: (n, h, 0, 0, 0)),
                      stats_spec, vec_spec, vec_spec],
            out_specs=(
                pl.BlockSpec((1, th, W // 2, 2, C), lambda n, h: (n, h, 0, 0, 0)),
                pl.BlockSpec((1, th // 2, W // 2, C), lambda n, h: (n, h, 0, 0)),
            ),
            compiler_params=cp,
        )(y5, stats, g, bt)
        return act5.reshape(N, H, W, C), pooled
    return pl.pallas_call(
        bn_mish_kernel,
        out_shape=jax.ShapeDtypeStruct((N, H, W, C), jnp.float32),
        grid=(N, nh),
        in_specs=[pl.BlockSpec((1, th, W, C), lambda n, h: (n, h, 0, 0)),
                  stats_spec, vec_spec, vec_spec],
        out_specs=pl.BlockSpec((1, th, W, C), lambda n, h: (n, h, 0, 0)),
        compiler_params=cp,
    )(y, stats, g, bt)


def conv_block(x_nhwc, w, b, gamma, beta, th, with_pool=False):
    y, stats = _conv_stats(x_nhwc, w, b, th)
    return _bn_mish_call(y, stats, gamma, beta, th, with_pool)


@jax.jit
def downsample(x_nchw, params):
    """Equivalent of DownSample.forward: returns (x, pool(x)) in NCHW."""
    x = jnp.transpose(x_nchw, (0, 2, 3, 1)).astype(jnp.float32)   # NCHW -> NHWC
    th = _row_tile(x.shape[1])
    y1 = conv_block(x, *params["conv1"], th)
    y2, pooled = conv_block(y1, *params["conv2"], th, with_pool=True)
    return (jnp.transpose(y2, (0, 3, 1, 2)),
            jnp.transpose(pooled, (0, 3, 1, 2)))


def init_params(key, cin, cout):
    ks = jax.random.split(key, 8)

    def conv_init(kw, kb, ci, co):
        bound = 1.0 / float(np.sqrt(ci * 9))
        w = jax.random.uniform(kw, (3, 3, ci, co), jnp.float32, -bound, bound)
        b = jax.random.uniform(kb, (co,), jnp.float32, -bound, bound)
        return w, b

    w1, b1 = conv_init(ks[0], ks[1], cin, cout)
    w2, b2 = conv_init(ks[2], ks[3], cout, cout)
    g1 = 1.0 + 0.1 * jax.random.normal(ks[4], (cout,), jnp.float32)
    be1 = 0.1 * jax.random.normal(ks[5], (cout,), jnp.float32)
    g2 = 1.0 + 0.1 * jax.random.normal(ks[6], (cout,), jnp.float32)
    be2 = 0.1 * jax.random.normal(ks[7], (cout,), jnp.float32)
    return {"conv1": (w1, b1, g1, be1), "conv2": (w2, b2, g2, be2)}


# ---------------- pure-JAX reference (correctness check only) ----------------
def _ref_conv_block(x, w, b, gamma, beta):
    y = lax.conv_general_dilated(
        x, w, window_strides=(1, 1), padding=((1, 1), (1, 1)),
        dimension_numbers=("NHWC", "HWIO", "NHWC"),
        precision=_MM_PREC,
        preferred_element_type=jnp.float32) + b
    mean = y.mean(axis=(0, 1, 2), keepdims=True)
    var = ((y - mean) ** 2).mean(axis=(0, 1, 2), keepdims=True)
    z = (y - mean) * lax.rsqrt(var + BN_EPS) * gamma + beta
    return z * jnp.tanh(jax.nn.softplus(z))


def _ref_downsample(x_nchw, params):
    x = jnp.transpose(x_nchw, (0, 2, 3, 1))
    y1 = _ref_conv_block(x, *params["conv1"])
    y2 = _ref_conv_block(y1, *params["conv2"])
    p = lax.reduce_window(y2, -jnp.inf, lax.max, (1, 2, 2, 1), (1, 2, 2, 1), "VALID")
    return jnp.transpose(y2, (0, 3, 1, 2)), jnp.transpose(p, (0, 3, 1, 2))


if __name__ == "__main__":
    N, Cin, Cout, H, W = 2, 4, 8, 16, 16
    key = jax.random.PRNGKey(0)
    kx, kp = jax.random.split(key)
    x = jax.random.normal(kx, (N, Cin, H, W), jnp.float32)   # NCHW like PyTorch
    params = init_params(kp, Cin, Cout)

    out, pooled = downsample(x, params)
    jax.block_until_ready((out, pooled))

    assert out.shape == (N, Cout, H, W)
    assert pooled.shape == (N, Cout, H // 2, W // 2)

    ref_out, ref_pooled = _ref_downsample(x, params)
    np.testing.assert_allclose(np.asarray(out), np.asarray(ref_out),
                               rtol=2e-3, atol=2e-3)
    np.testing.assert_allclose(np.asarray(pooled), np.asarray(ref_pooled),
                               rtol=2e-3, atol=2e-3)

    print("KERNEL_OK")
</pallas_src>

<mosaic_0001>
module attributes {stable_mosaic.version = 11 : i64} {
  func.func @conv_stats_kernel(%arg0: i32, %arg1: i32, %arg2: memref<1x16x16x4xf32, #tpu.memory_space<vmem>>, %arg3: memref<36x8xf32, #tpu.memory_space<vmem>>, %arg4: memref<1x8xf32, #tpu.memory_space<vmem>>, %arg5: memref<1x8x16x8xf32, #tpu.memory_space<vmem>>, %arg6: memref<1x1x2x8xf32, #tpu.memory_space<vmem>>, %arg7: memref<10x18x4xf32, #tpu.memory_space<vmem>>) attributes {dimension_semantics = [#tpu.dimension_semantics<parallel>, #tpu.dimension_semantics<parallel>], iteration_bounds = array<i64: 2, 2>, scalar_prefetch = 0 : i64, scratch_operands = 1 : i64, tpu.core_type = #tpu.core_type<tc>, window_params = [{transform_indices = @transform_0, window_bounds = array<i64: 1, 16, 16, 4>}, {pipeline_mode = #tpu.pipeline_mode<synchronous>, transform_indices = @transform_1, window_bounds = array<i64: 36, 8>}, {pipeline_mode = #tpu.pipeline_mode<synchronous>, transform_indices = @transform_2, window_bounds = array<i64: 1, 8>}, {transform_indices = @transform_3, window_bounds = array<i64: 1, 8, 16, 8>}, {transform_indices = @transform_4, window_bounds = array<i64: 1, 1, 2, 8>}]} {
    %c8_i32 = arith.constant 8 : i32
    %0 = arith.muli %arg1, %c8_i32 : i32
    %1 = tpu.assume_multiple %0, 8 : i32
    %cst = arith.constant 0.000000e+00 : f32
    %2 = vector.broadcast %cst : f32 to vector<10x18x4xf32>
    %c0 = arith.constant 0 : index
    %c0_0 = arith.constant 0 : index
    %c0_1 = arith.constant 0 : index
    %3 = vector.load %arg7[%c0, %c0_0, %c0_1] : memref<10x18x4xf32, #tpu.memory_space<vmem>>, vector<10x18x4xf32>
    tpu.vector_store %arg7[%c0, %c0_0, %c0_1], %2 {strides = array<i32>} : memref<10x18x4xf32, #tpu.memory_space<vmem>>, vector<10x18x4xf32>,
    %c0_2 = arith.constant 0 : index
    %4 = arith.index_cast %1 : i32 to index
    %c0_3 = arith.constant 0 : index
    %c0_4 = arith.constant 0 : index
    %5 = vector.load %arg2[%c0_2, %4, %c0_3, %c0_4] : memref<1x16x16x4xf32, #tpu.memory_space<vmem>>, vector<1x8x16x4xf32>
    %6 = vector.shape_cast %5 : vector<1x8x16x4xf32> to vector<8x16x4xf32>
    %c1 = arith.constant 1 : index
    %c1_5 = arith.constant 1 : index
    %c0_6 = arith.constant 0 : index
    %7 = vector.load %arg7[%c1, %c1_5, %c0_6] : memref<10x18x4xf32, #tpu.memory_space<vmem>>, vector<8x16x4xf32>
    tpu.vector_store %arg7[%c1, %c1_5, %c0_6], %6 {strides = array<i32>} : memref<10x18x4xf32, #tpu.memory_space<vmem>>, vector<8x16x4xf32>,
    %c0_i32 = arith.constant 0 : i32
    %8 = arith.cmpi sgt, %arg1, %c0_i32 : i32
    %9 = arith.extui %8 : i1 to i32
    %c0_i32_7 = arith.constant 0 : i32
    %10 = arith.cmpi ne, %9, %c0_i32_7 : i32
    scf.if %10 {
      %c1_i32_50 = arith.constant 1 : i32
      %41 = arith.subi %1, %c1_i32_50 : i32
      %c0_51 = arith.constant 0 : index
      %42 = arith.index_cast %41 : i32 to index
      %c0_52 = arith.constant 0 : index
      %c0_53 = arith.constant 0 : index
      %43 = vector.load %arg2[%c0_51, %42, %c0_52, %c0_53] : memref<1x16x16x4xf32, #tpu.memory_space<vmem>>, vector<1x1x16x4xf32>
      %44 = vector.shape_cast %43 : vector<1x1x16x4xf32> to vector<1x16x4xf32>
      %c0_54 = arith.constant 0 : index
      %c1_55 = arith.constant 1 : index
      %c0_56 = arith.constant 0 : index
      %45 = vector.load %arg7[%c0_54, %c1_55, %c0_56] : memref<10x18x4xf32, #tpu.memory_space<vmem>>, vector<1x16x4xf32>
      tpu.vector_store %arg7[%c0_54, %c1_55, %c0_56], %44 {strides = array<i32>} : memref<10x18x4xf32, #tpu.memory_space<vmem>>, vector<1x16x4xf32>,
    } else {
    }
    %c1_i32 = arith.constant 1 : i32
    %11 = arith.cmpi slt, %arg1, %c1_i32 : i32
    %12 = arith.extui %11 : i1 to i32
    %c0_i32_8 = arith.constant 0 : i32
    %13 = arith.cmpi ne, %12, %c0_i32_8 : i32
    scf.if %13 {
      %c8_i32_50 = arith.constant 8 : i32
      %41 = arith.addi %1, %c8_i32_50 : i32
      %c0_51 = arith.constant 0 : index
      %42 = arith.index_cast %41 : i32 to index
      %c0_52 = arith.constant 0 : index
      %c0_53 = arith.constant 0 : index
      %43 = vector.load %arg2[%c0_51, %42, %c0_52, %c0_53] : memref<1x16x16x4xf32, #tpu.memory_space<vmem>>, vector<1x1x16x4xf32>
      %44 = vector.shape_cast %43 : vector<1x1x16x4xf32> to vector<1x16x4xf32>
      %c9 = arith.constant 9 : index
      %c1_54 = arith.constant 1 : index
      %c0_55 = arith.constant 0 : index
      %45 = vector.load %arg7[%c9, %c1_54, %c0_55] : memref<10x18x4xf32, #tpu.memory_space<vmem>>, vector<1x16x4xf32>
      tpu.vector_store %arg7[%c9, %c1_54, %c0_55], %44 {strides = array<i32>} : memref<10x18x4xf32, #tpu.memory_space<vmem>>, vector<1x16x4xf32>,
    } else {
    }
    %c0_9 = arith.constant 0 : index
    %c0_10 = arith.constant 0 : index
    %c0_11 = arith.constant 0 : index
    %14 = vector.load %arg7[%c0_9, %c0_10, %c0_11] : memref<10x18x4xf32, #tpu.memory_space<vmem>>, vector<8x16x4xf32>
    %c0_12 = arith.constant 0 : index
    %c1_13 = arith.constant 1 : index
    %c0_14 = arith.constant 0 : index
    %15 = vector.load %arg7[%c0_12, %c1_13, %c0_14] : memref<10x18x4xf32, #tpu.memory_space<vmem>>, vector<8x16x4xf32>
    %c0_15 = arith.constant 0 : index
    %c2 = arith.constant 2 : index
    %c0_16 = arith.constant 0 : index
    %16 = vector.load %arg7[%c0_15, %c2, %c0_16] : memref<10x18x4xf32, #tpu.memory_space<vmem>>, vector<8x16x4xf32>
    %c1_17 = arith.constant 1 : index
    %c0_18 = arith.constant 0 : index
    %c0_19 = arith.constant 0 : index
    %17 = vector.load %arg7[%c1_17, %c0_18, %c0_19] : memref<10x18x4xf32, #tpu.memory_space<vmem>>, vector<8x16x4xf32>
    %c1_20 = arith.constant 1 : index
    %c1_21 = arith.constant 1 : index
    %c0_22 = arith.constant 0 : index
    %18 = vector.load %arg7[%c1_20, %c1_21, %c0_22] : memref<10x18x4xf32, #tpu.memory_space<vmem>>, vector<8x16x4xf32>
    %c1_23 = arith.constant 1 : index
    %c2_24 = arith.constant 2 : index
    %c0_25 = arith.constant 0 : index
    %19 = vector.load %arg7[%c1_23, %c2_24, %c0_25] : memref<10x18x4xf32, #tpu.memory_space<vmem>>, vector<8x16x4xf32>
    %c2_26 = arith.constant 2 : index
    %c0_27 = arith.constant 0 : index
    %c0_28 = arith.constant 0 : index
    %20 = vector.load %arg7[%c2_26, %c0_27, %c0_28] : memref<10x18x4xf32, #tpu.memory_space<vmem>>, vector<8x16x4xf32>
    %c2_29 = arith.constant 2 : index
    %c1_30 = arith.constant 1 : index
    %c0_31 = arith.constant 0 : index
    %21 = vector.load %arg7[%c2_29, %c1_30, %c0_31] : memref<10x18x4xf32, #tpu.memory_space<vmem>>, vector<8x16x4xf32>
    %c2_32 = arith.constant 2 : index
    %c2_33 = arith.constant 2 : index
    %c0_34 = arith.constant 0 : index
    %22 = vector.load %arg7[%c2_32, %c2_33, %c0_34] : memref<10x18x4xf32, #tpu.memory_space<vmem>>, vector<8x16x4xf32>
    %23 = tpu.concatenate %14, %15, %16, %17, %18, %19, %20, %21, %22 in 2 : vector<8x16x4xf32>, vector<8x16x4xf32>, vector<8x16x4xf32>, vector<8x16x4xf32>, vector<8x16x4xf32>, vector<8x16x4xf32>, vector<8x16x4xf32>, vector<8x16x4xf32>, vector<8x16x4xf32> -> vector<8x16x36xf32>
    %24 = vector.shape_cast %23 : vector<8x16x36xf32> to vector<128x36xf32>
    %c0_35 = arith.constant 0 : index
    %c0_36 = arith.constant 0 : index
    %25 = vector.load %arg3[%c0_35, %c0_36] : memref<36x8xf32, #tpu.memory_space<vmem>>, vector<36x8xf32>
    %cst_37 = arith.constant dense<0.000000e+00> : vector<128x8xf32>
    %26 = tpu.matmul %24, %25, %cst_37 {dimension_numbers = #tpu.dot_dimension_numbers<[1], [0], [0], [1], [0, 0, 1, 1], [], []>, precision = #tpu.contract_precision<fp32>} : vector<128x36xf32>, vector<36x8xf32>, vector<128x8xf32> -> vector<128x8xf32>
    %c0_38 = arith.constant 0 : index
    %c0_39 = arith.constant 0 : index
    %27 = vector.load %arg4[%c0_38, %c0_39] : memref<1x8xf32, #tpu.memory_space<vmem>>, vector<1x8xf32>
    %28 = vector.broadcast %27 : vector<1x8xf32> to vector<128x8xf32>
    %29 = arith.addf %26, %28 : vector<128x8xf32>
    %30 = vector.shape_cast %29 : vector<128x8xf32> to vector<1x8x16x8xf32>
    %c0_40 = arith.constant 0 : index
    %c0_41 = arith.constant 0 : index
    %c0_42 = arith.constant 0 : index
    %c0_43 = arith.constant 0 : index
    %31 = vector.load %arg5[%c0_40, %c0_41, %c0_42, %c0_43] : memref<1x8x16x8xf32, #tpu.memory_space<vmem>>, vector<1x8x16x8xf32>
    tpu.vector_store %arg5[%c0_40, %c0_41, %c0_42, %c0_43], %30 {strides = array<i32>} : memref<1x8x16x8xf32, #tpu.memory_space<vmem>>, vector<1x8x16x8xf32>,
    %cst_44 = arith.constant dense<0.000000e+00> : vector<8xf32>
    %32 = vector.multi_reduction <add>, %29, %cst_44 [0] : vector<128x8xf32> to vector<8xf32>
    %33 = vector.shape_cast %32 : vector<8xf32> to vector<1x8xf32>
    %34 = arith.mulf %29, %29 : vector<128x8xf32>
    %cst_45 = arith.constant dense<0.000000e+00> : vector<8xf32>
    %35 = vector.multi_reduction <add>, %34, %cst_45 [0] : vector<128x8xf32> to vector<8xf32>
    %36 = vector.shape_cast %35 : vector<8xf32> to vector<1x8xf32>
    %37 = tpu.concatenate %33, %36 in 0 : vector<1x8xf32>, vector<1x8xf32> -> vector<2x8xf32>
    %c0_46 = arith.constant 0 : index
    %c0_47 = arith.constant 0 : index
    %c0_48 = arith.constant 0 : index
    %c0_49 = arith.constant 0 : index
    %38 = vector.load %arg6[%c0_46, %c0_47, %c0_48, %c0_49] : memref<1x1x2x8xf32, #tpu.memory_space<vmem>>, vector<1x1x2x8xf32>
    %39 = vector.shape_cast %38 : vector<1x1x2x8xf32> to vector<2x8xf32>
    %40 = vector.shape_cast %37 : vector<2x8xf32> to vector<1x1x2x8xf32>
    tpu.vector_store %arg6[%c0_46, %c0_47, %c0_48, %c0_49], %40 {strides = array<i32>} : memref<1x1x2x8xf32, #tpu.memory_space<vmem>>, vector<1x1x2x8xf32>,
    return
  }
  func.func @transform_0(%arg0: i32, %arg1: i32) -> (i32, i32, i32, i32) {
    %c0_i32 = arith.constant 0 : i32
    %c0_i32_0 = arith.constant 0 : i32
    %c0_i32_1 = arith.constant 0 : i32
    %c0_i32_2 = arith.constant 0 : i32
    return %arg0, %c0_i32, %c0_i32_0, %c0_i32_1 : i32, i32, i32, i32
  }
  func.func @transform_1(%arg0: i32, %arg1: i32) -> (i32, i32) {
    %c0_i32 = arith.constant 0 : i32
    %c0_i32_0 = arith.constant 0 : i32
    %c0_i32_1 = arith.constant 0 : i32
    return %c0_i32, %c0_i32_0 : i32, i32
  }
  func.func @transform_2(%arg0: i32, %arg1: i32) -> (i32, i32) {
    %c0_i32 = arith.constant 0 : i32
    %c0_i32_0 = arith.constant 0 : i32
    %c0_i32_1 = arith.constant 0 : i32
    return %c0_i32, %c0_i32_0 : i32, i32
  }
  func.func @transform_3(%arg0: i32, %arg1: i32) -> (i32, i32, i32, i32) {
    %c0_i32 = arith.constant 0 : i32
    %c0_i32_0 = arith.constant 0 : i32
    %c0_i32_1 = arith.constant 0 : i32
    return %arg0, %arg1, %c0_i32, %c0_i32_0 : i32, i32, i32, i32
  }
  func.func @transform_4(%arg0: i32, %arg1: i32) -> (i32, i32, i32, i32) {
    %c0_i32 = arith.constant 0 : i32
    %c0_i32_0 = arith.constant 0 : i32
    %c0_i32_1 = arith.constant 0 : i32
    return %arg0, %arg1, %c0_i32, %c0_i32_0 : i32, i32, i32, i32
  }
}

module attributes {stable_mosaic.version = 11 : i64} {
  func.func @bn_mish_kernel(%arg0: i32, %arg1: i32, %arg2: memref<1x8x16x8xf32, #tpu.memory_space<vmem>>, %arg3: memref<2x2x2x8xf32, #tpu.memory_space<vmem>>, %arg4: memref<1x8xf32, #tpu.memory_space<vmem>>, %arg5: memref<1x8xf32, #tpu.memory_space<vmem>>, %arg6: memref<1x8x16x8xf32, #tpu.memory_space<vmem>>) attributes {dimension_semantics = [#tpu.dimension_semantics<parallel>, #tpu.dimension_semantics<parallel>], iteration_bounds = array<i64: 2, 2>, scalar_prefetch = 0 : i64, scratch_operands = 0 : i64, tpu.core_type = #tpu.core_type<tc>, window_params = [{transform_indices = @transform_0, window_bounds = array<i64: 1, 8, 16, 8>}, {pipeline_mode = #tpu.pipeline_mode<synchronous>, transform_indices = @transform_1, window_bounds = array<i64: 2, 2, 2, 8>}, {pipeline_mode = #tpu.pipeline_mode<synchronous>, transform_indices = @transform_2, window_bounds = array<i64: 1, 8>}, {pipeline_mode = #tpu.pipeline_mode<synchronous>, transform_indices = @transform_3, window_bounds = array<i64: 1, 8>}, {transform_indices = @transform_4, window_bounds = array<i64: 1, 8, 16, 8>}]} {
    %c0 = arith.constant 0 : index
    %c0_0 = arith.constant 0 : index
    %c0_1 = arith.constant 0 : index
    %c0_2 = arith.constant 0 : index
    %0 = vector.load %arg3[%c0, %c0_0, %c0_1, %c0_2] : memref<2x2x2x8xf32, #tpu.memory_space<vmem>>, vector<2x2x2x8xf32>
    %cst = arith.constant dense<0.000000e+00> : vector<2x8xf32>
    %1 = vector.multi_reduction <add>, %0, %cst [0, 1] : vector<2x2x2x8xf32> to vector<2x8xf32>
    %2 = vector.extract_strided_slice %1 {offsets = [0, 0], sizes = [1, 8], strides = [1, 1]} : vector<2x8xf32> to vector<1x8xf32>
    %cst_3 = arith.constant 0.001953125 : f32
    %3 = vector.broadcast %cst_3 : f32 to vector<1x8xf32>
    %4 = arith.mulf %2, %3 : vector<1x8xf32>
    %5 = vector.extract_strided_slice %1 {offsets = [1, 0], sizes = [1, 8], strides = [1, 1]} : vector<2x8xf32> to vector<1x8xf32>
    %cst_4 = arith.constant 0.001953125 : f32
    %6 = vector.broadcast %cst_4 : f32 to vector<1x8xf32>
    %7 = arith.mulf %5, %6 : vector<1x8xf32>
    %8 = arith.mulf %4, %4 : vector<1x8xf32>
    %9 = arith.subf %7, %8 : vector<1x8xf32>
    %c0_5 = arith.constant 0 : index
    %c0_6 = arith.constant 0 : index
    %10 = vector.load %arg4[%c0_5, %c0_6] : memref<1x8xf32, #tpu.memory_space<vmem>>, vector<1x8xf32>
    %cst_7 = arith.constant 9.99999974E-6 : f32
    %11 = vector.broadcast %cst_7 : f32 to vector<1x8xf32>
    %12 = arith.addf %9, %11 : vector<1x8xf32>
    %13 = math.rsqrt %12 : vector<1x8xf32>
    %14 = arith.mulf %10, %13 : vector<1x8xf32>
    %c0_8 = arith.constant 0 : index
    %c0_9 = arith.constant 0 : index
    %15 = vector.load %arg5[%c0_8, %c0_9] : memref<1x8xf32, #tpu.memory_space<vmem>>, vector<1x8xf32>
    %16 = arith.mulf %4, %14 : vector<1x8xf32>
    %17 = arith.subf %15, %16 : vector<1x8xf32>
    %c0_10 = arith.constant 0 : index
    %c0_11 = arith.constant 0 : index
    %c0_12 = arith.constant 0 : index
    %c0_13 = arith.constant 0 : index
    %18 = vector.load %arg2[%c0_10, %c0_11, %c0_12, %c0_13] : memref<1x8x16x8xf32, #tpu.memory_space<vmem>>, vector<1x8x16x8xf32>
    %19 = vector.shape_cast %14 : vector<1x8xf32> to vector<1x1x1x8xf32>
    %20 = vector.broadcast %19 : vector<1x1x1x8xf32> to vector<1x8x16x8xf32>
    %21 = arith.mulf %18, %20 : vector<1x8x16x8xf32>
    %22 = vector.shape_cast %17 : vector<1x8xf32> to vector<1x1x1x8xf32>
    %23 = vector.broadcast %22 : vector<1x1x1x8xf32> to vector<1x8x16x8xf32>
    %24 = arith.addf %21, %23 : vector<1x8x16x8xf32>
    %cst_14 = arith.constant 2.000000e+01 : f32
    %25 = vector.broadcast %cst_14 : f32 to vector<1x8x16x8xf32>
    %26 = arith.minimumf %24, %25 : vector<1x8x16x8xf32>
    %27 = math.exp %26 : vector<1x8x16x8xf32>
    %cst_15 = arith.constant 2.000000e+00 : f32
    %28 = vector.broadcast %cst_15 : f32 to vector<1x8x16x8xf32>
    %29 = arith.addf %27, %28 : vector<1x8x16x8xf32>
    %30 = arith.mulf %27, %29 : vector<1x8x16x8xf32>
    %31 = arith.mulf %24, %30 : vector<1x8x16x8xf32>
    %cst_16 = arith.constant 2.000000e+00 : f32
    %32 = vector.broadcast %cst_16 : f32 to vector<1x8x16x8xf32>
    %33 = arith.addf %30, %32 : vector<1x8x16x8xf32>
    %34 = arith.divf %31, %33 : vector<1x8x16x8xf32>
    %c0_17 = arith.constant 0 : index
    %c0_18 = arith.constant 0 : index
    %c0_19 = arith.constant 0 : index
    %c0_20 = arith.constant 0 : index
    %35 = vector.load %arg6[%c0_17, %c0_18, %c0_19, %c0_20] : memref<1x8x16x8xf32, #tpu.memory_space<vmem>>, vector<1x8x16x8xf32>
    tpu.vector_store %arg6[%c0_17, %c0_18, %c0_19, %c0_20], %34 {strides = array<i32>} : memref<1x8x16x8xf32, #tpu.memory_space<vmem>>, vector<1x8x16x8xf32>,
    return
  }
  func.func @transform_0(%arg0: i32, %arg1: i32) -> (i32, i32, i32, i32) {
    %c0_i32 = arith.constant 0 : i32
    %c0_i32_0 = arith.constant 0 : i32
    %c0_i32_1 = arith.constant 0 : i32
    return %arg0, %arg1, %c0_i32, %c0_i32_0 : i32, i32, i32, i32
  }
  func.func @transform_1(%arg0: i32, %arg1: i32) -> (i32, i32, i32, i32) {
    %c0_i32 = arith.constant 0 : i32
    %c0_i32_0 = arith.constant 0 : i32
    %c0_i32_1 = arith.constant 0 : i32
    %c0_i32_2 = arith.constant 0 : i32
    %c0_i32_3 = arith.constant 0 : i32
    return %c0_i32, %c0_i32_0, %c0_i32_1, %c0_i32_2 : i32, i32, i32, i32
  }
  func.func @transform_2(%arg0: i32, %arg1: i32) -> (i32, i32) {
    %c0_i32 = arith.constant 0 : i32
    %c0_i32_0 = arith.constant 0 : i32
    %c0_i32_1 = arith.constant 0 : i32
    return %c0_i32, %c0_i32_0 : i32, i32
  }
  func.func @transform_3(%arg0: i32, %arg1: i32) -> (i32, i32) {
    %c0_i32 = arith.constant 0 : i32
    %c0_i32_0 = arith.constant 0 : i32
    %c0_i32_1 = arith.constant 0 : i32
    return %c0_i32, %c0_i32_0 : i32, i32
  }
  func.func @transform_4(%arg0: i32, %arg1: i32) -> (i32, i32, i32, i32) {
    %c0_i32 = arith.constant 0 : i32
    %c0_i32_0 = arith.constant 0 : i32
    %c0_i32_1 = arith.constant 0 : i32
    return %arg0, %arg1, %c0_i32, %c0_i32_0 : i32, i32, i32, i32
  }
}

module attributes {stable_mosaic.version = 11 : i64} {
  func.func @bn_mish_pool_kernel(%arg0: i32, %arg1: i32, %arg2: memref<1x8x8x2x8xf32, #tpu.memory_space<vmem>>, %arg3: memref<2x2x2x8xf32, #tpu.memory_space<vmem>>, %arg4: memref<1x8xf32, #tpu.memory_space<vmem>>, %arg5: memref<1x8xf32, #tpu.memory_space<vmem>>, %arg6: memref<1x8x8x2x8xf32, #tpu.memory_space<vmem>>, %arg7: memref<1x4x8x8xf32, #tpu.memory_space<vmem>>) attributes {dimension_semantics = [#tpu.dimension_semantics<parallel>, #tpu.dimension_semantics<parallel>], iteration_bounds = array<i64: 2, 2>, scalar_prefetch = 0 : i64, scratch_operands = 0 : i64, tpu.core_type = #tpu.core_type<tc>, window_params = [{transform_indices = @transform_0, window_bounds = array<i64: 1, 8, 8, 2, 8>}, {pipeline_mode = #tpu.pipeline_mode<synchronous>, transform_indices = @transform_1, window_bounds = array<i64: 2, 2, 2, 8>}, {pipeline_mode = #tpu.pipeline_mode<synchronous>, transform_indices = @transform_2, window_bounds = array<i64: 1, 8>}, {pipeline_mode = #tpu.pipeline_mode<synchronous>, transform_indices = @transform_3, window_bounds = array<i64: 1, 8>}, {transform_indices = @transform_4, window_bounds = array<i64: 1, 8, 8, 2, 8>}, {transform_indices = @transform_5, window_bounds = array<i64: 1, 4, 8, 8>}]} {
    %c0 = arith.constant 0 : index
    %c0_0 = arith.constant 0 : index
    %c0_1 = arith.constant 0 : index
    %c0_2 = arith.constant 0 : index
    %0 = vector.load %arg3[%c0, %c0_0, %c0_1, %c0_2] : memref<2x2x2x8xf32, #tpu.memory_space<vmem>>, vector<2x2x2x8xf32>
    %cst = arith.constant dense<0.000000e+00> : vector<2x8xf32>
    %1 = vector.multi_reduction <add>, %0, %cst [0, 1] : vector<2x2x2x8xf32> to vector<2x8xf32>
    %2 = vector.extract_strided_slice %1 {offsets = [0, 0], sizes = [1, 8], strides = [1, 1]} : vector<2x8xf32> to vector<1x8xf32>
    %cst_3 = arith.constant 0.001953125 : f32
    %3 = vector.broadcast %cst_3 : f32 to vector<1x8xf32>
    %4 = arith.mulf %2, %3 : vector<1x8xf32>
    %5 = vector.extract_strided_slice %1 {offsets = [1, 0], sizes = [1, 8], strides = [1, 1]} : vector<2x8xf32> to vector<1x8xf32>
    %cst_4 = arith.constant 0.001953125 : f32
    %6 = vector.broadcast %cst_4 : f32 to vector<1x8xf32>
    %7 = arith.mulf %5, %6 : vector<1x8xf32>
    %8 = arith.mulf %4, %4 : vector<1x8xf32>
    %9 = arith.subf %7, %8 : vector<1x8xf32>
    %c0_5 = arith.constant 0 : index
    %c0_6 = arith.constant 0 : index
    %10 = vector.load %arg4[%c0_5, %c0_6] : memref<1x8xf32, #tpu.memory_space<vmem>>, vector<1x8xf32>
    %cst_7 = arith.constant 9.99999974E-6 : f32
    %11 = vector.broadcast %cst_7 : f32 to vector<1x8xf32>
    %12 = arith.addf %9, %11 : vector<1x8xf32>
    %13 = math.rsqrt %12 : vector<1x8xf32>
    %14 = arith.mulf %10, %13 : vector<1x8xf32>
    %c0_8 = arith.constant 0 : index
    %c0_9 = arith.constant 0 : index
    %15 = vector.load %arg5[%c0_8, %c0_9] : memref<1x8xf32, #tpu.memory_space<vmem>>, vector<1x8xf32>
    %16 = arith.mulf %4, %14 : vector<1x8xf32>
    %17 = arith.subf %15, %16 : vector<1x8xf32>
    %c0_10 = arith.constant 0 : index
    %c0_11 = arith.constant 0 : index
    %c0_12 = arith.constant 0 : index
    %c0_13 = arith.constant 0 : index
    %c0_14 = arith.constant 0 : index
    %18 = vector.load %arg2[%c0_10, %c0_11, %c0_12, %c0_13, %c0_14] : memref<1x8x8x2x8xf32, #tpu.memory_space<vmem>>, vector<1x8x8x2x8xf32>
    %19 = vector.shape_cast %14 : vector<1x8xf32> to vector<1x1x1x1x8xf32>
    %20 = vector.broadcast %19 : vector<1x1x1x1x8xf32> to vector<1x8x8x2x8xf32>
    %21 = arith.mulf %18, %20 : vector<1x8x8x2x8xf32>
    %22 = vector.shape_cast %17 : vector<1x8xf32> to vector<1x1x1x1x8xf32>
    %23 = vector.broadcast %22 : vector<1x1x1x1x8xf32> to vector<1x8x8x2x8xf32>
    %24 = arith.addf %21, %23 : vector<1x8x8x2x8xf32>
    %cst_15 = arith.constant 2.000000e+01 : f32
    %25 = vector.broadcast %cst_15 : f32 to vector<1x8x8x2x8xf32>
    %26 = arith.minimumf %24, %25 : vector<1x8x8x2x8xf32>
    %27 = math.exp %26 : vector<1x8x8x2x8xf32>
    %cst_16 = arith.constant 2.000000e+00 : f32
    %28 = vector.broadcast %cst_16 : f32 to vector<1x8x8x2x8xf32>
    %29 = arith.addf %27, %28 : vector<1x8x8x2x8xf32>
    %30 = arith.mulf %27, %29 : vector<1x8x8x2x8xf32>
    %31 = arith.mulf %24, %30 : vector<1x8x8x2x8xf32>
    %cst_17 = arith.constant 2.000000e+00 : f32
    %32 = vector.broadcast %cst_17 : f32 to vector<1x8x8x2x8xf32>
    %33 = arith.addf %30, %32 : vector<1x8x8x2x8xf32>
    %34 = arith.divf %31, %33 : vector<1x8x8x2x8xf32>
    %c0_18 = arith.constant 0 : index
    %c0_19 = arith.constant 0 : index
    %c0_20 = arith.constant 0 : index
    %c0_21 = arith.constant 0 : index
    %c0_22 = arith.constant 0 : index
    %35 = vector.load %arg6[%c0_18, %c0_19, %c0_20, %c0_21, %c0_22] : memref<1x8x8x2x8xf32, #tpu.memory_space<vmem>>, vector<1x8x8x2x8xf32>
    tpu.vector_store %arg6[%c0_18, %c0_19, %c0_20, %c0_21, %c0_22], %34 {strides = array<i32>} : memref<1x8x8x2x8xf32, #tpu.memory_space<vmem>>, vector<1x8x8x2x8xf32>,
    %cst_23 = arith.constant dense<0xFF800000> : vector<1x8x8x8xf32>
    %36 = vector.multi_reduction <maximumf>, %34, %cst_23 [3] : vector<1x8x8x2x8xf32> to vector<1x8x8x8xf32>
    %37 = vector.shape_cast %36 : vector<1x8x8x8xf32> to vector<8x8x8xf32>
    %38 = vector.shape_cast %37 : vector<8x8x8xf32> to vector<4x2x8x8xf32>
    %cst_24 = arith.constant dense<0xFF800000> : vector<4x8x8xf32>
    %39 = vector.multi_reduction <maximumf>, %38, %cst_24 [1] : vector<4x2x8x8xf32> to vector<4x8x8xf32>
    %40 = vector.shape_cast %39 : vector<4x8x8xf32> to vector<1x4x8x8xf32>
    %c0_25 = arith.constant 0 : index
    %c0_26 = arith.constant 0 : index
    %c0_27 = arith.constant 0 : index
    %c0_28 = arith.constant 0 : index
    %41 = vector.load %arg7[%c0_25, %c0_26, %c0_27, %c0_28] : memref<1x4x8x8xf32, #tpu.memory_space<vmem>>, vector<1x4x8x8xf32>
    tpu.vector_store %arg7[%c0_25, %c0_26, %c0_27, %c0_28], %40 {strides = array<i32>} : memref<1x4x8x8xf32, #tpu.memory_space<vmem>>, vector<1x4x8x8xf32>,
    return
  }
  func.func @transform_0(%arg0: i32, %arg1: i32) -> (i32, i32, i32, i32, i32) {
    %c0_i32 = arith.constant 0 : i32
    %c0_i32_0 = arith.constant 0 : i32
    %c0_i32_1 = arith.constant 0 : i32
    %c0_i32_2 = arith.constant 0 : i32
    return %arg0, %arg1, %c0_i32, %c0_i32_0, %c0_i32_1 : i32, i32, i32, i32, i32
  }
  func.func @transform_1(%arg0: i32, %arg1: i32) -> (i32, i32, i32, i32) {
    %c0_i32 = arith.constant 0 : i32
    %c0_i32_0 = arith.constant 0 : i32
    %c0_i32_1 = arith.constant 0 : i32
    %c0_i32_2 = arith.constant 0 : i32
    %c0_i32_3 = arith.constant 0 : i32
    return %c0_i32, %c0_i32_0, %c0_i32_1, %c0_i32_2 : i32, i32, i32, i32
  }
  func.func @transform_2(%arg0: i32, %arg1: i32) -> (i32, i32) {
    %c0_i32 = arith.constant 0 : i32
    %c0_i32_0 = arith.constant 0 : i32
    %c0_i32_1 = arith.constant 0 : i32
    return %c0_i32, %c0_i32_0 : i32, i32
  }
  func.func @transform_3(%arg0: i32, %arg1: i32) -> (i32, i32) {
    %c0_i32 = arith.constant 0 : i32
    %c0_i32_0 = arith.constant 0 : i32
    %c0_i32_1 = arith.constant 0 : i32
    return %c0_i32, %c0_i32_0 : i32, i32
  }
  func.func @transform_4(%arg0: i32, %arg1: i32) -> (i32, i32, i32, i32, i32) {
    %c0_i32 = arith.constant 0 : i32
    %c0_i32_0 = arith.constant 0 : i32
    %c0_i32_1 = arith.constant 0 : i32
    %c0_i32_2 = arith.constant 0 : i32
    return %arg0, %arg1, %c0_i32, %c0_i32_0, %c0_i32_1 : i32, i32, i32, i32, i32
  }
  func.func @transform_5(%arg0: i32, %arg1: i32) -> (i32, i32, i32, i32) {
    %c0_i32 = arith.constant 0 : i32
    %c0_i32_0 = arith.constant 0 : i32
    %c0_i32_1 = arith.constant 0 : i32
    return %arg0, %arg1, %c0_i32, %c0_i32_0 : i32, i32, i32, i32
  }
}

module attributes {stable_mosaic.version = 11 : i64} {
  func.func @conv_stats_kernel(%arg0: i32, %arg1: i32, %arg2: memref<1x16x16x8xf32, #tpu.memory_space<vmem>>, %arg3: memref<72x8xf32, #tpu.memory_space<vmem>>, %arg4: memref<1x8xf32, #tpu.memory_space<vmem>>, %arg5: memref<1x8x16x8xf32, #tpu.memory_space<vmem>>, %arg6: memref<1x1x2x8xf32, #tpu.memory_space<vmem>>, %arg7: memref<10x18x8xf32, #tpu.memory_space<vmem>>) attributes {dimension_semantics = [#tpu.dimension_semantics<parallel>, #tpu.dimension_semantics<parallel>], iteration_bounds = array<i64: 2, 2>, scalar_prefetch = 0 : i64, scratch_operands = 1 : i64, tpu.core_type = #tpu.core_type<tc>, window_params = [{transform_indices = @transform_0, window_bounds = array<i64: 1, 16, 16, 8>}, {pipeline_mode = #tpu.pipeline_mode<synchronous>, transform_indices = @transform_1, window_bounds = array<i64: 72, 8>}, {pipeline_mode = #tpu.pipeline_mode<synchronous>, transform_indices = @transform_2, window_bounds = array<i64: 1, 8>}, {transform_indices = @transform_3, window_bounds = array<i64: 1, 8, 16, 8>}, {transform_indices = @transform_4, window_bounds = array<i64: 1, 1, 2, 8>}]} {
    %c8_i32 = arith.constant 8 : i32
    %0 = arith.muli %arg1, %c8_i32 : i32
    %1 = tpu.assume_multiple %0, 8 : i32
    %cst = arith.constant 0.000000e+00 : f32
    %2 = vector.broadcast %cst : f32 to vector<10x18x8xf32>
    %c0 = arith.constant 0 : index
    %c0_0 = arith.constant 0 : index
    %c0_1 = arith.constant 0 : index
    %3 = vector.load %arg7[%c0, %c0_0, %c0_1] : memref<10x18x8xf32, #tpu.memory_space<vmem>>, vector<10x18x8xf32>
    tpu.vector_store %arg7[%c0, %c0_0, %c0_1], %2 {strides = array<i32>} : memref<10x18x8xf32, #tpu.memory_space<vmem>>, vector<10x18x8xf32>,
    %c0_2 = arith.constant 0 : index
    %4 = arith.index_cast %1 : i32 to index
    %c0_3 = arith.constant 0 : index
    %c0_4 = arith.constant 0 : index
    %5 = vector.load %arg2[%c0_2, %4, %c0_3, %c0_4] : memref<1x16x16x8xf32, #tpu.memory_space<vmem>>, vector<1x8x16x8xf32>
    %6 = vector.shape_cast %5 : vector<1x8x16x8xf32> to vector<8x16x8xf32>
    %c1 = arith.constant 1 : index
    %c1_5 = arith.constant 1 : index
    %c0_6 = arith.constant 0 : index
    %7 = vector.load %arg7[%c1, %c1_5, %c0_6] : memref<10x18x8xf32, #tpu.memory_space<vmem>>, vector<8x16x8xf32>
    tpu.vector_store %arg7[%c1, %c1_5, %c0_6], %6 {strides = array<i32>} : memref<10x18x8xf32, #tpu.memory_space<vmem>>, vector<8x16x8xf32>,
    %c0_i32 = arith.constant 0 : i32
    %8 = arith.cmpi sgt, %arg1, %c0_i32 : i32
    %9 = arith.extui %8 : i1 to i32
    %c0_i32_7 = arith.constant 0 : i32
    %10 = arith.cmpi ne, %9, %c0_i32_7 : i32
    scf.if %10 {
      %c1_i32_50 = arith.constant 1 : i32
      %41 = arith.subi %1, %c1_i32_50 : i32
      %c0_51 = arith.constant 0 : index
      %42 = arith.index_cast %41 : i32 to index
      %c0_52 = arith.constant 0 : index
      %c0_53 = arith.constant 0 : index
      %43 = vector.load %arg2[%c0_51, %42, %c0_52, %c0_53] : memref<1x16x16x8xf32, #tpu.memory_space<vmem>>, vector<1x1x16x8xf32>
      %44 = vector.shape_cast %43 : vector<1x1x16x8xf32> to vector<1x16x8xf32>
      %c0_54 = arith.constant 0 : index
      %c1_55 = arith.constant 1 : index
      %c0_56 = arith.constant 0 : index
      %45 = vector.load %arg7[%c0_54, %c1_55, %c0_56] : memref<10x18x8xf32, #tpu.memory_space<vmem>>, vector<1x16x8xf32>
      tpu.vector_store %arg7[%c0_54, %c1_55, %c0_56], %44 {strides = array<i32>} : memref<10x18x8xf32, #tpu.memory_space<vmem>>, vector<1x16x8xf32>,
    } else {
    }
    %c1_i32 = arith.constant 1 : i32
    %11 = arith.cmpi slt, %arg1, %c1_i32 : i32
    %12 = arith.extui %11 : i1 to i32
    %c0_i32_8 = arith.constant 0 : i32
    %13 = arith.cmpi ne, %12, %c0_i32_8 : i32
    scf.if %13 {
      %c8_i32_50 = arith.constant 8 : i32
      %41 = arith.addi %1, %c8_i32_50 : i32
      %c0_51 = arith.constant 0 : index
      %42 = arith.index_cast %41 : i32 to index
      %c0_52 = arith.constant 0 : index
      %c0_53 = arith.constant 0 : index
      %43 = vector.load %arg2[%c0_51, %42, %c0_52, %c0_53] : memref<1x16x16x8xf32, #tpu.memory_space<vmem>>, vector<1x1x16x8xf32>
      %44 = vector.shape_cast %43 : vector<1x1x16x8xf32> to vector<1x16x8xf32>
      %c9 = arith.constant 9 : index
      %c1_54 = arith.constant 1 : index
      %c0_55 = arith.constant 0 : index
      %45 = vector.load %arg7[%c9, %c1_54, %c0_55] : memref<10x18x8xf32, #tpu.memory_space<vmem>>, vector<1x16x8xf32>
      tpu.vector_store %arg7[%c9, %c1_54, %c0_55], %44 {strides = array<i32>} : memref<10x18x8xf32, #tpu.memory_space<vmem>>, vector<1x16x8xf32>,
    } else {
    }
    %c0_9 = arith.constant 0 : index
    %c0_10 = arith.constant 0 : index
    %c0_11 = arith.constant 0 : index
    %14 = vector.load %arg7[%c0_9, %c0_10, %c0_11] : memref<10x18x8xf32, #tpu.memory_space<vmem>>, vector<8x16x8xf32>
    %c0_12 = arith.constant 0 : index
    %c1_13 = arith.constant 1 : index
    %c0_14 = arith.constant 0 : index
    %15 = vector.load %arg7[%c0_12, %c1_13, %c0_14] : memref<10x18x8xf32, #tpu.memory_space<vmem>>, vector<8x16x8xf32>
    %c0_15 = arith.constant 0 : index
    %c2 = arith.constant 2 : index
    %c0_16 = arith.constant 0 : index
    %16 = vector.load %arg7[%c0_15, %c2, %c0_16] : memref<10x18x8xf32, #tpu.memory_space<vmem>>, vector<8x16x8xf32>
    %c1_17 = arith.constant 1 : index
    %c0_18 = arith.constant 0 : index
    %c0_19 = arith.constant 0 : index
    %17 = vector.load %arg7[%c1_17, %c0_18, %c0_19] : memref<10x18x8xf32, #tpu.memory_space<vmem>>, vector<8x16x8xf32>
    %c1_20 = arith.constant 1 : index
    %c1_21 = arith.constant 1 : index
    %c0_22 = arith.constant 0 : index
    %18 = vector.load %arg7[%c1_20, %c1_21, %c0_22] : memref<10x18x8xf32, #tpu.memory_space<vmem>>, vector<8x16x8xf32>
    %c1_23 = arith.constant 1 : index
    %c2_24 = arith.constant 2 : index
    %c0_25 = arith.constant 0 : index
    %19 = vector.load %arg7[%c1_23, %c2_24, %c0_25] : memref<10x18x8xf32, #tpu.memory_space<vmem>>, vector<8x16x8xf32>
    %c2_26 = arith.constant 2 : index
    %c0_27 = arith.constant 0 : index
    %c0_28 = arith.constant 0 : index
    %20 = vector.load %arg7[%c2_26, %c0_27, %c0_28] : memref<10x18x8xf32, #tpu.memory_space<vmem>>, vector<8x16x8xf32>
    %c2_29 = arith.constant 2 : index
    %c1_30 = arith.constant 1 : index
    %c0_31 = arith.constant 0 : index
    %21 = vector.load %arg7[%c2_29, %c1_30, %c0_31] : memref<10x18x8xf32, #tpu.memory_space<vmem>>, vector<8x16x8xf32>
    %c2_32 = arith.constant 2 : index
    %c2_33 = arith.constant 2 : index
    %c0_34 = arith.constant 0 : index
    %22 = vector.load %arg7[%c2_32, %c2_33, %c0_34] : memref<10x18x8xf32, #tpu.memory_space<vmem>>, vector<8x16x8xf32>
    %23 = tpu.concatenate %14, %15, %16, %17, %18, %19, %20, %21, %22 in 2 : vector<8x16x8xf32>, vector<8x16x8xf32>, vector<8x16x8xf32>, vector<8x16x8xf32>, vector<8x16x8xf32>, vector<8x16x8xf32>, vector<8x16x8xf32>, vector<8x16x8xf32>, vector<8x16x8xf32> -> vector<8x16x72xf32>
    %24 = vector.shape_cast %23 : vector<8x16x72xf32> to vector<128x72xf32>
    %c0_35 = arith.constant 0 : index
    %c0_36 = arith.constant 0 : index
    %25 = vector.load %arg3[%c0_35, %c0_36] : memref<72x8xf32, #tpu.memory_space<vmem>>, vector<72x8xf32>
    %cst_37 = arith.constant dense<0.000000e+00> : vector<128x8xf32>
    %26 = tpu.matmul %24, %25, %cst_37 {dimension_numbers = #tpu.dot_dimension_numbers<[1], [0], [0], [1], [0, 0, 1, 1], [], []>, precision = #tpu.contract_precision<fp32>} : vector<128x72xf32>, vector<72x8xf32>, vector<128x8xf32> -> vector<128x8xf32>
    %c0_38 = arith.constant 0 : index
    %c0_39 = arith.constant 0 : index
    %27 = vector.load %arg4[%c0_38, %c0_39] : memref<1x8xf32, #tpu.memory_space<vmem>>, vector<1x8xf32>
    %28 = vector.broadcast %27 : vector<1x8xf32> to vector<128x8xf32>
    %29 = arith.addf %26, %28 : vector<128x8xf32>
    %30 = vector.shape_cast %29 : vector<128x8xf32> to vector<1x8x16x8xf32>
    %c0_40 = arith.constant 0 : index
    %c0_41 = arith.constant 0 : index
    %c0_42 = arith.constant 0 : index
    %c0_43 = arith.constant 0 : index
    %31 = vector.load %arg5[%c0_40, %c0_41, %c0_42, %c0_43] : memref<1x8x16x8xf32, #tpu.memory_space<vmem>>, vector<1x8x16x8xf32>
    tpu.vector_store %arg5[%c0_40, %c0_41, %c0_42, %c0_43], %30 {strides = array<i32>} : memref<1x8x16x8xf32, #tpu.memory_space<vmem>>, vector<1x8x16x8xf32>,
    %cst_44 = arith.constant dense<0.000000e+00> : vector<8xf32>
    %32 = vector.multi_reduction <add>, %29, %cst_44 [0] : vector<128x8xf32> to vector<8xf32>
    %33 = vector.shape_cast %32 : vector<8xf32> to vector<1x8xf32>
    %34 = arith.mulf %29, %29 : vector<128x8xf32>
    %cst_45 = arith.constant dense<0.000000e+00> : vector<8xf32>
    %35 = vector.multi_reduction <add>, %34, %cst_45 [0] : vector<128x8xf32> to vector<8xf32>
    %36 = vector.shape_cast %35 : vector<8xf32> to vector<1x8xf32>
    %37 = tpu.concatenate %33, %36 in 0 : vector<1x8xf32>, vector<1x8xf32> -> vector<2x8xf32>
    %c0_46 = arith.constant 0 : index
    %c0_47 = arith.constant 0 : index
    %c0_48 = arith.constant 0 : index
    %c0_49 = arith.constant 0 : index
    %38 = vector.load %arg6[%c0_46, %c0_47, %c0_48, %c0_49] : memref<1x1x2x8xf32, #tpu.memory_space<vmem>>, vector<1x1x2x8xf32>
    %39 = vector.shape_cast %38 : vector<1x1x2x8xf32> to vector<2x8xf32>
    %40 = vector.shape_cast %37 : vector<2x8xf32> to vector<1x1x2x8xf32>
    tpu.vector_store %arg6[%c0_46, %c0_47, %c0_48, %c0_49], %40 {strides = array<i32>} : memref<1x1x2x8xf32, #tpu.memory_space<vmem>>, vector<1x1x2x8xf32>,
    return
  }
  func.func @transform_0(%arg0: i32, %arg1: i32) -> (i32, i32, i32, i32) {
    %c0_i32 = arith.constant 0 : i32
    %c0_i32_0 = arith.constant 0 : i32
    %c0_i32_1 = arith.constant 0 : i32
    %c0_i32_2 = arith.constant 0 : i32
    return %arg0, %c0_i32, %c0_i32_0, %c0_i32_1 : i32, i32, i32, i32
  }
  func.func @transform_1(%arg0: i32, %arg1: i32) -> (i32, i32) {
    %c0_i32 = arith.constant 0 : i32
    %c0_i32_0 = arith.constant 0 : i32
    %c0_i32_1 = arith.constant 0 : i32
    return %c0_i32, %c0_i32_0 : i32, i32
  }
  func.func @transform_2(%arg0: i32, %arg1: i32) -> (i32, i32) {
    %c0_i32 = arith.constant 0 : i32
    %c0_i32_0 = arith.constant 0 : i32
    %c0_i32_1 = arith.constant 0 : i32
    return %c0_i32, %c0_i32_0 : i32, i32
  }
  func.func @transform_3(%arg0: i32, %arg1: i32) -> (i32, i32, i32, i32) {
    %c0_i32 = arith.constant 0 : i32
    %c0_i32_0 = arith.constant 0 : i32
    %c0_i32_1 = arith.constant 0 : i32
    return %arg0, %arg1, %c0_i32, %c0_i32_0 : i32, i32, i32, i32
  }
  func.func @transform_4(%arg0: i32, %arg1: i32) -> (i32, i32, i32, i32) {
    %c0_i32 = arith.constant 0 : i32
    %c0_i32_0 = arith.constant 0 : i32
    %c0_i32_1 = arith.constant 0 : i32
    return %arg0, %arg1, %c0_i32, %c0_i32_0 : i32, i32, i32, i32
  }
}

</mosaic_0001>

<llo_original>
// kernel: downsample.5
$region0: #{downsample.5}
  #allocation0 [shape = 'u32[]', space=smem, size = 0x4, offset = 0x4, fixed_abs, tag = 'smem constant byte address 0x4 - core index']
  #allocation1 [shape = 'u32[144,128]{1,0:T(1,128)}', space=vmem, size = 0x12000, scoped, tag = 'internal scratch']
  %s0 = inlined_call_operand.vmem [shape: f32[2,16,16,8], index: 0, kind: input, shape index: {}]
  %s1 = inlined_call_operand.vmem [shape: f32[2,2,2,8], index: 1, kind: input, shape index: {}]
  %s2 = inlined_call_operand.vmem [shape: f32[1,8], index: 2, kind: input, shape index: {}]
  %s3 = inlined_call_operand.vmem [shape: f32[1,8], index: 3, kind: input, shape index: {}]
  %s4 = inlined_call_operand.vmem [shape: f32[2,16,16,8], index: 4, kind: output, shape index: {}]
  %s5 = sld [smem:[#allocation0]]
  $region49: #{downsample.5} parent=0
    _
  %s7 = ssub.s32 1, %s5
  %s8 = scalar_select 0, %s7, %s5
  loop: start=0, step=1, limit=6
  $region2: #{downsample.5} parent=0 // loop_pre_header
    _
  $region3: #{downsample.5} parent=0 // loop_header
    %s10 = sphi 0, %s14
    %p11 = scmp.ge.s32.totalorder %s10, 6
    %s17 = sphi 0, %s29
    %s18 = sphi 0, %s25
    %s19 = sphi 0, %s17
    %s20 = sphi 0, %s18
    %s21 = sphi 0, %s19
    %s22 = sphi 0, %s20
    %s34 = sphi 0, %s36
    %s37 = sphi 0, %s34
    %s38 = sphi 0, %s37
    %s54 = sphi 0, %s38
    %s58 = sphi 0, %s58
    %s60 = sphi 0, %s58
    %s61 = sphi 0, %s60
    %s75 = sphi 0, %s61
    %s79 = sphi 0, %s79
    %s81 = sphi 0, %s79
    %s82 = sphi 0, %s81
    %s96 = sphi 0, %s82
    %s100 = sphi 0, %s100
    %s102 = sphi 0, %s100
    %s103 = sphi 0, %s102
    %s117 = sphi 0, %s103
    %s125 = sphi 0, %s127
    %s128 = sphi 0, %s125
    %s129 = sphi 0, %s128
    %s145 = sphi 0, %s129
  $region4: #{downsample.5} parent=0 // loop_header_branch
    %13 = sbr.rel (%p11) target = $region8
  $region5: #{downsample.5} parent=0 // loop_body
    %s15 = ssub.s32 %s10, 1
    %s16 = ssub.s32 %s10, 2
    %s23 = sadd.s32 1, %s18
    %p24 = scmp.ge.s32.totalorder %s23, 2
    %s25 = scalar_select %p24, 0, %s23
    %s26 = sadd.s32 1, %s17
    %s27 = scalar_select %p24, %s26, %s17
    %p28 = scmp.ge.s32.totalorder %s27, 2
    %s29 = scalar_select %p28, 0, %s27
    %s30 = ssub.s32 %s17, %s29
    %s31 = ssub.s32 %s18, %s25
    %s32 = sor.u32 %s30, %s31
    %p33 = scmp.eq.s32.totalorder %s32, 0
    %s35 = sadd.s32 %s34, 1
    %s36 = scalar_select %p33, %s34, %s35
    %p39 = pneg %p33
    %p40 = scmp.eq.s32.totalorder %s10, 3
    %p41 = por %p39, %p40
    %p42 = scmp.ne.s32.totalorder %s34, %s37
    %p43 = scmp.eq.s32.totalorder %s10, 0
    %p44 = por %p42, %p43
    %p45 = scmp.ne.s32.totalorder %s34, %s37
    %p46 = scmp.eq.s32.totalorder %s15, 3
    %p47 = por %p45, %p46
    %p48 = scmp.ne.s32.totalorder %s37, %s38
    %p49 = scmp.eq.s32.totalorder %s15, 0
    %p50 = por %p48, %p49
    %p51 = scmp.ne.s32.totalorder %s37, %s38
    %p52 = scmp.eq.s32.totalorder %s16, 3
    %p53 = por %p51, %p52
    %p55 = scmp.ne.s32.totalorder %s38, %s54
    %p56 = scmp.eq.s32.totalorder %s16, 0
    %p57 = por %p55, %p56
    %s59 = sadd.s32 %s58, 1
    %p62 = scmp.eq.s32.totalorder %s10, 3
    %p63 = scmp.ne.s32.totalorder %s58, %s60
    %p64 = scmp.eq.s32.totalorder %s10, 0
    %p65 = por %p63, %p64
    %p66 = scmp.ne.s32.totalorder %s58, %s60
    %p67 = scmp.eq.s32.totalorder %s15, 3
    %p68 = por %p66, %p67
    %p69 = scmp.ne.s32.totalorder %s60, %s61
    %p70 = scmp.eq.s32.totalorder %s15, 0
    %p71 = por %p69, %p70
    %p72 = scmp.ne.s32.totalorder %s60, %s61
    %p73 = scmp.eq.s32.totalorder %s16, 3
    %p74 = por %p72, %p73
    %p76 = scmp.ne.s32.totalorder %s61, %s75
    %p77 = scmp.eq.s32.totalorder %s16, 0
    %p78 = por %p76, %p77
    %s80 = sadd.s32 %s79, 1
    %p83 = scmp.eq.s32.totalorder %s10, 3
    %p84 = scmp.ne.s32.totalorder %s79, %s81
    %p85 = scmp.eq.s32.totalorder %s10, 0
    %p86 = por %p84, %p85
    %p87 = scmp.ne.s32.totalorder %s79, %s81
    %p88 = scmp.eq.s32.totalorder %s15, 3
    %p89 = por %p87, %p88
    %p90 = scmp.ne.s32.totalorder %s81, %s82
    %p91 = scmp.eq.s32.totalorder %s15, 0
    %p92 = por %p90, %p91
    %p93 = scmp.ne.s32.totalorder %s81, %s82
    %p94 = scmp.eq.s32.totalorder %s16, 3
    %p95 = por %p93, %p94
    %p97 = scmp.ne.s32.totalorder %s82, %s96
    %p98 = scmp.eq.s32.totalorder %s16, 0
    %p99 = por %p97, %p98
    %s101 = sadd.s32 %s100, 1
    %p104 = scmp.eq.s32.totalorder %s10, 3
    %p105 = scmp.ne.s32.totalorder %s100, %s102
    %p106 = scmp.eq.s32.totalorder %s10, 0
    %p107 = por %p105, %p106
    %p108 = scmp.ne.s32.totalorder %s100, %s102
    %p109 = scmp.eq.s32.totalorder %s15, 3
    %p110 = por %p108, %p109
    %p111 = scmp.ne.s32.totalorder %s102, %s103
    %p112 = scmp.eq.s32.totalorder %s15, 0
    %p113 = por %p111, %p112
    %p114 = scmp.ne.s32.totalorder %s102, %s103
    %p115 = scmp.eq.s32.totalorder %s16, 3
    %p116 = por %p114, %p115
    %p118 = scmp.ne.s32.totalorder %s103, %s117
    %p119 = scmp.eq.s32.totalorder %s16, 0
    %p120 = por %p118, %p119
    %s121 = ssub.s32 %s17, %s29
    %s122 = ssub.s32 %s18, %s25
    %s123 = sor.u32 %s121, %s122
    %p124 = scmp.eq.s32.totalorder %s123, 0
    %s126 = sadd.s32 %s125, 1
    %s127 = scalar_select %p124, %s125, %s126
    %p130 = pneg %p124
    %p131 = scmp.eq.s32.totalorder %s10, 3
    %p132 = por %p130, %p131
    %p133 = scmp.ne.s32.totalorder %s125, %s128
    %p134 = scmp.eq.s32.totalorder %s10, 0
    %p135 = por %p133, %p134
    %p136 = scmp.ne.s32.totalorder %s125, %s128
    %p137 = scmp.eq.s32.totalorder %s15, 3
    %p138 = por %p136, %p137
    %p139 = scmp.ne.s32.totalorder %s128, %s129
    %p140 = scmp.eq.s32.totalorder %s15, 0
    %p141 = por %p139, %p140
    %p142 = scmp.ne.s32.totalorder %s128, %s129
    %p143 = scmp.eq.s32.totalorder %s16, 3
    %p144 = por %p142, %p143
    %p146 = scmp.ne.s32.totalorder %s129, %s145
    %p147 = scmp.eq.s32.totalorder %s16, 0
    %p148 = por %p146, %p147
    %p149 = scmp.le.s32.totalorder 1, %s10
    %p150 = scmp.lt.s32.totalorder %s10, 5
    %p151 = pnand %p149, %p150
    %p152 = pneg %p151
    // Predicated region
    $region9: #{downsample.5} parent=5 // pred_check
      _
    $region10: #{downsample.5} parent=5 // pred_check_branch
      %154 = sbr.rel (%p151) target = $region12
    $region11: #{downsample.5} parent=5 // pred_region
      %s155 = ssub.s32 %s10, 1
      // Predicated region
      $region13: #{downsample.5} parent=11 // pred_check
        %p156 = pneg %p71
      $region14: #{downsample.5} parent=11 // pred_check_branch
        %158 = sbr.rel (%p156) target = $region16
      $region15: #{downsample.5} parent=11 // pred_region
        _
      $region16: #{downsample.5} parent=11 // pred_fallthru
        _
      // Predicated region
      $region17: #{downsample.5} parent=11 // pred_check
        %p159 = pneg %p92
      $region18: #{downsample.5} parent=11 // pred_check_branch
        %161 = sbr.rel (%p159) target = $region20
      $region19: #{downsample.5} parent=11 // pred_region
        _
      $region20: #{downsample.5} parent=11 // pred_fallthru
        _
      // Predicated region
      $region21: #{downsample.5} parent=11 // pred_check
        %p162 = pneg %p113
      $region22: #{downsample.5} parent=11 // pred_check_branch
        %164 = sbr.rel (%p162) target = $region24
      $region23: #{downsample.5} parent=11 // pred_region
        _
      $region24: #{downsample.5} parent=11 // pred_fallthru
        _
    $region12: #{downsample.5} parent=5 // pred_fallthru
      _
    %p165 = scmp.lt.s32.totalorder %s10, 4
    // Predicated region
    $region25: #{downsample.5} parent=5 // pred_check
      %p166 = pneg %p165
    $region26: #{downsample.5} parent=5 // pred_check_branch
      %168 = sbr.rel (%p166) target = $region28
    $region27: #{downsample.5} parent=5 // pred_region
      // Predicated region
      $region29: #{downsample.5} parent=27 // pred_check
        %p169 = pneg %p44
      $region30: #{downsample.5} parent=27 // pred_check_branch
        %171 = sbr.rel (%p169) target = $region32
      $region31: #{downsample.5} parent=27 // pred_region
        %s172 = smul.u32 8, %s18
        %p173 = scmp.lt.s32.totalorder %s17, 1
        %s174 = scalar_select %p173, %s17, 1
        %p175 = scmp.lt.s32.totalorder %s172, 15
        %s176 = scalar_select %p175, %s172, 15
        %s177 = smul.addr %s176, 2
        %s178 = smul.addr %s174, 32
        %s179 = sadd.s32 %s177, %s178
        %s180 = smul.addr %s179, 8
        %s181 = scalar_lea.vmem %s0, %s180
        %s182 = smul.u32 8, %s18
      $region32: #{downsample.5} parent=27 // pred_fallthru
        _
    $region28: #{downsample.5} parent=5 // pred_fallthru
      _
    %p183 = scmp.le.s32.totalorder 1, %s10
    %p184 = scmp.lt.s32.totalorder %s10, 5
    %p185 = pnand %p183, %p184
    %p186 = pneg %p185
    // Predicated region
    $region33: #{downsample.5} parent=5 // pred_check
      _
    $region34: #{downsample.5} parent=5 // pred_check_branch
      %188 = sbr.rel (%p185) target = $region36
    $region35: #{downsample.5} parent=5 // pred_region
      %s189 = ssub.s32 %s10, 1
      %s190 = smul.u32 8, %s20
      %p191 = scmp.lt.s32.totalorder %s19, 1
      %s192 = scalar_select %p191, %s19, 1
      %p193 = scmp.lt.s32.totalorder %s190, 15
      %s194 = scalar_select %p193, %s190, 15
      %s195 = smul.addr %s194, 2
      %s196 = smul.addr %s192, 32
      %s197 = sadd.s32 %s195, %s196
      %s198 = smul.addr %s197, 8
      %s199 = scalar_lea.vmem %s0, %s198
      %p200 = pneg %p50
      %p201 = pneg %p47
      %p202 = pneg %p71
      %p203 = pneg %p68
      %p204 = pneg %p92
      %p205 = pneg %p89
      %p206 = pneg %p113
      %p207 = pneg %p110
      %p208 = pneg %p141
      %p209 = pneg %p138
      %s210 = smul.u32 8, %s20
      %p211 = scmp.lt.s32.totalorder %s19, 1
      %s212 = scalar_select %p211, %s19, 1
      %p213 = scmp.lt.s32.totalorder %s210, 15
      %s214 = scalar_select %p213, %s210, 15
      %s215 = smul.addr %s214, 2
      %s216 = smul.addr %s212, 32
      %s217 = sadd.s32 %s215, %s216
      %s218 = smul.addr %s217, 8
      %s219 = scalar_lea.vmem %s4, %s218
      %s220 = smul.u32 8, %s20
      %p221 = scmp.lt.s32.totalorder %s19, 1
      %s222 = scalar_select %p221, %s19, 1
      %p223 = scmp.lt.s32.totalorder %s220, 15
      %s224 = scalar_select %p223, %s220, 15
      %s225 = smul.addr %s224, 2
      %s226 = smul.addr %s222, 32
      %s227 = sadd.s32 %s225, %s226
      %s228 = smul.addr %s227, 8
      %s229 = scalar_lea.vmem %s0, %s228
      %s230 = smul.u32 8, %s20
      %s231 = smul.u32 8, %s20
      %p232 = scmp.lt.s32.totalorder %s19, 1
      %s233 = scalar_select %p232, %s19, 1
      %p234 = scmp.lt.s32.totalorder %s231, 15
      %s235 = scalar_select %p234, %s231, 15
      %s236 = smul.addr %s235, 2
      %s237 = smul.addr %s233, 32
      %s238 = sadd.s32 %s236, %s237
      %s239 = smul.addr %s238, 8
      %s240 = scalar_lea.vmem %s4, %s239
      %s241 = smul.u32 8, %s20
      %v242 = vld [vmem:[%s1] sm:$0x3]
      %v243 = vld [vmem:[%s1 + $0x2] sm:$0x3]
      %v244 = vld [vmem:[%s1 + $0x4] sm:$0x3]
      %v245 = vld [vmem:[%s1 + $0x6] sm:$0x3]
      %vm246 = vcmask 58368
      %v247 = vsel %vm246, %v242, 0.0
      %v248 = vsel %vm246, %v243, 0.0
      %v249 = vadd.f32 %v247, %v248
      %v250 = vsel %vm246, %v244, 0.0
      %v251 = vadd.f32 %v249, %v250
      %v252 = vsel %vm246, %v245, 0.0
      %v253 = vadd.f32 %v251, %v252
      %v254 = vmul.f32 %v253, 0.001953125
      %v255 = vmul.f32 %v254, %v254
      %v257 = vrot.slane %v255, 7
      %v259 = vsub.f32 %v254, %v257
      %v260 = vld [vmem:[%s2] sm:$0x1]
      %v261 = vadd.f32 %v259, 1e-05
      %v262 = vrsqrt.pop %v261
      %v265 = vunpack.c.l.s4 1966171168
      %v266 = vunpack.c.0.s8 %v265
      %v267 = vlaneseq
      %v268 = vshrl.u32 %v267, 7
      %v269 = vsub.s32 %v266, %v268
      %v270 = vrot.slane %v262, %v269
      %v271 = vcombine.high %v270, %v270
      %v273 = vunpack.c.l.s4 1966171168
      %v274 = vunpack.c.0.s8 %v273
      %v275 = vlaneseq
      %v276 = vshrl.u32 %v275, 7
      %v277 = vsub.s32 %v274, %v276
      %v278 = vrot.slane %v271, %v277
      %v280 = vmul.f32 %v260, %v278
      %v281 = vld [vmem:[%s3] sm:$0x1]
      %v282 = vmul.f32 %v254, %v280
      %v283 = vsub.f32 %v281, %v282
      %v284 = vld [vmem:[%s229] sm:$0xff]
      %v285 = vld [vmem:[%s229 + $0x8] sm:$0xff]
      %v286 = vld [vmem:[%s229 + $0x10] sm:$0xff]
      %v287 = vld [vmem:[%s229 + $0x18] sm:$0xff]
      %v288 = vld [vmem:[%s229 + $0x20] sm:$0xff]
      %v289 = vld [vmem:[%s229 + $0x28] sm:$0xff]
      %v290 = vld [vmem:[%s229 + $0x30] sm:$0xff]
      %v291 = vld [vmem:[%s229 + $0x38] sm:$0xff]
      %v292 = vld [vmem:[%s229 + $0x40] sm:$0xff]
      %v293 = vld [vmem:[%s229 + $0x48] sm:$0xff]
      %v294 = vld [vmem:[%s229 + $0x50] sm:$0xff]
      %v295 = vld [vmem:[%s229 + $0x58] sm:$0xff]
      %v296 = vld [vmem:[%s229 + $0x60] sm:$0xff]
      %v297 = vld [vmem:[%s229 + $0x68] sm:$0xff]
      %v298 = vld [vmem:[%s229 + $0x70] sm:$0xff]
      %v299 = vld [vmem:[%s229 + $0x78] sm:$0xff]
      %v301 = vlaneseq
      %v302 = vshrl.u32 %v301, 7
      %v303 = vsub.s32 0, %v302
      %v304 = vrot.slane %v280, %v303
      %v306 = vmul.f32 %v284, %v304
      %v307 = vmul.f32 %v285, %v304
      %v308 = vmul.f32 %v286, %v304
      %v309 = vmul.f32 %v287, %v304
      %v310 = vmul.f32 %v288, %v304
      %v311 = vmul.f32 %v289, %v304
      %v312 = vmul.f32 %v290, %v304
      %v313 = vmul.f32 %v291, %v304
      %v314 = vmul.f32 %v292, %v304
      %v315 = vmul.f32 %v293, %v304
      %v316 = vmul.f32 %v294, %v304
      %v317 = vmul.f32 %v295, %v304
      %v318 = vmul.f32 %v296, %v304
      %v319 = vmul.f32 %v297, %v304
      %v320 = vmul.f32 %v298, %v304
      %v321 = vmul.f32 %v299, %v304
      %v323 = vlaneseq
      %v324 = vshrl.u32 %v323, 7
      %v325 = vsub.s32 0, %v324
      %v326 = vrot.slane %v283, %v325
      %v328 = vadd.f32 %v306, %v326
      %v329 = vadd.f32 %v307, %v326
      %v330 = vadd.f32 %v308, %v326
      %v331 = vadd.f32 %v309, %v326
      %v332 = vadd.f32 %v310, %v326
      %v333 = vadd.f32 %v311, %v326
      %v334 = vadd.f32 %v312, %v326
      %v335 = vadd.f32 %v313, %v326
      %v336 = vadd.f32 %v314, %v326
      %v337 = vadd.f32 %v315, %v326
      %v338 = vadd.f32 %v316, %v326
      %v339 = vadd.f32 %v317, %v326
      %v340 = vadd.f32 %v318, %v326
      %v341 = vadd.f32 %v319, %v326
      %v342 = vadd.f32 %v320, %v326
      %v343 = vadd.f32 %v321, %v326
      %v344 = vmin.f32 %v328, 20.0
      %v345 = vmin.f32 %v329, 20.0
      %v346 = vmin.f32 %v330, 20.0
      %v347 = vmin.f32 %v331, 20.0
      %v348 = vmin.f32 %v332, 20.0
      %v349 = vmin.f32 %v333, 20.0
      %v350 = vmin.f32 %v334, 20.0
      %v351 = vmin.f32 %v335, 20.0
      %v352 = vmin.f32 %v336, 20.0
      %v353 = vmin.f32 %v337, 20.0
      %v354 = vmin.f32 %v338, 20.0
      %v355 = vmin.f32 %v339, 20.0
      %v356 = vmin.f32 %v340, 20.0
      %v357 = vmin.f32 %v341, 20.0
      %v358 = vmin.f32 %v342, 20.0
      %v359 = vmin.f32 %v343, 20.0
      %v360 = vmul.f32 %v344, 1.442695
      %v361 = vpow.pop %v360
      %v362 = vmul.f32 %v345, 1.442695
      %v363 = vpow.pop %v362
      %v364 = vmul.f32 %v346, 1.442695
      %v365 = vpow.pop %v364
      %v366 = vmul.f32 %v347, 1.442695
      %v367 = vpow.pop %v366
      %v368 = vmul.f32 %v348, 1.442695
      %v369 = vpow.pop %v368
      %v370 = vmul.f32 %v349, 1.442695
      %v371 = vpow.pop %v370
      %v372 = vmul.f32 %v350, 1.442695
      %v373 = vpow.pop %v372
      %v374 = vmul.f32 %v351, 1.442695
      %v375 = vpow.pop %v374
      %v376 = vmul.f32 %v352, 1.442695
      %v377 = vpow.pop %v376
      %v378 = vmul.f32 %v353, 1.442695
      %v379 = vpow.pop %v378
      %v380 = vmul.f32 %v354, 1.442695
      %v381 = vpow.pop %v380
      %v382 = vmul.f32 %v355, 1.442695
      %v383 = vpow.pop %v382
      %v384 = vmul.f32 %v356, 1.442695
      %v385 = vpow.pop %v384
      %v386 = vmul.f32 %v357, 1.442695
      %v387 = vpow.pop %v386
      %v388 = vmul.f32 %v358, 1.442695
      %v389 = vpow.pop %v388
      %v390 = vmul.f32 %v359, 1.442695
      %v391 = vpow.pop %v390
      %v392 = vadd.f32 %v361, 2.0
      %v393 = vadd.f32 %v363, 2.0
      %v394 = vadd.f32 %v365, 2.0
      %v395 = vadd.f32 %v367, 2.0
      %v396 = vadd.f32 %v369, 2.0
      %v397 = vadd.f32 %v371, 2.0
      %v398 = vadd.f32 %v373, 2.0
      %v399 = vadd.f32 %v375, 2.0
      %v400 = vadd.f32 %v377, 2.0
      %v401 = vadd.f32 %v379, 2.0
      %v402 = vadd.f32 %v381, 2.0
      %v403 = vadd.f32 %v383, 2.0
      %v404 = vadd.f32 %v385, 2.0
      %v405 = vadd.f32 %v387, 2.0
      %v406 = vadd.f32 %v389, 2.0
      %v407 = vadd.f32 %v391, 2.0
      %v408 = vmul.f32 %v361, %v392
      %v409 = vmul.f32 %v363, %v393
      %v410 = vmul.f32 %v365, %v394
      %v411 = vmul.f32 %v367, %v395
      %v412 = vmul.f32 %v369, %v396
      %v413 = vmul.f32 %v371, %v397
      %v414 = vmul.f32 %v373, %v398
      %v415 = vmul.f32 %v375, %v399
      %v416 = vmul.f32 %v377, %v400
      %v417 = vmul.f32 %v379, %v401
      %v418 = vmul.f32 %v381, %v402
      %v419 = vmul.f32 %v383, %v403
      %v420 = vmul.f32 %v385, %v404
      %v421 = vmul.f32 %v387, %v405
      %v422 = vmul.f32 %v389, %v406
      %v423 = vmul.f32 %v391, %v407
      %v424 = vmul.f32 %v328, %v408
      %v425 = vmul.f32 %v329, %v409
      %v426 = vmul.f32 %v330, %v410
      %v427 = vmul.f32 %v331, %v411
      %v428 = vmul.f32 %v332, %v412
      %v429 = vmul.f32 %v333, %v413
      %v430 = vmul.f32 %v334, %v414
      %v431 = vmul.f32 %v335, %v415
      %v432 = vmul.f32 %v336, %v416
      %v433 = vmul.f32 %v337, %v417
      %v434 = vmul.f32 %v338, %v418
      %v435 = vmul.f32 %v339, %v419
      %v436 = vmul.f32 %v340, %v420
      %v437 = vmul.f32 %v341, %v421
      %v438 = vmul.f32 %v342, %v422
      %v439 = vmul.f32 %v343, %v423
      %v440 = vadd.f32 %v408, 2.0
      %v441 = vadd.f32 %v409, 2.0
      %v442 = vadd.f32 %v410, 2.0
      %v443 = vadd.f32 %v411, 2.0
      %v444 = vadd.f32 %v412, 2.0
      %v445 = vadd.f32 %v413, 2.0
      %v446 = vadd.f32 %v414, 2.0
      %v447 = vadd.f32 %v415, 2.0
      %v448 = vadd.f32 %v416, 2.0
      %v449 = vadd.f32 %v417, 2.0
      %v450 = vadd.f32 %v418, 2.0
      %v451 = vadd.f32 %v419, 2.0
      %v452 = vadd.f32 %v420, 2.0
      %v453 = vadd.f32 %v421, 2.0
      %v454 = vadd.f32 %v422, 2.0
      %v455 = vadd.f32 %v423, 2.0
      %v456 = vrcp.pop %v440
      %v457 = vmul.f32 %v424, %v456
      %v458 = vrcp.pop %v441
      %v459 = vmul.f32 %v425, %v458
      %v460 = vrcp.pop %v442
      %v461 = vmul.f32 %v426, %v460
      %v462 = vrcp.pop %v443
      %v463 = vmul.f32 %v427, %v462
      %v464 = vrcp.pop %v444
      %v465 = vmul.f32 %v428, %v464
      %v466 = vrcp.pop %v445
      %v467 = vmul.f32 %v429, %v466
      %v468 = vrcp.pop %v446
      %v469 = vmul.f32 %v430, %v468
      %v470 = vrcp.pop %v447
      %v471 = vmul.f32 %v431, %v470
      %v472 = vrcp.pop %v448
      %v473 = vmul.f32 %v432, %v472
      %v474 = vrcp.pop %v449
      %v475 = vmul.f32 %v433, %v474
      %v476 = vrcp.pop %v450
      %v477 = vmul.f32 %v434, %v476
      %v478 = vrcp.pop %v451
      %v479 = vmul.f32 %v435, %v478
      %v480 = vrcp.pop %v452
      %v481 = vmul.f32 %v436, %v480
      %v482 = vrcp.pop %v453
      %v483 = vmul.f32 %v437, %v482
      %v484 = vrcp.pop %v454
      %v485 = vmul.f32 %v438, %v484
      %v486 = vrcp.pop %v455
      %v487 = vmul.f32 %v439, %v486
      %vm488 = vcmask 64512
      %489 = vst.msk [vmem:[%s240] sm:$0xff] %vm488, %v457
      %490 = vst.msk [vmem:[%s240 + $0x8] sm:$0xff] %vm488, %v459
      %491 = vst.msk [vmem:[%s240 + $0x10] sm:$0xff] %vm488, %v461
      %492 = vst.msk [vmem:[%s240 + $0x18] sm:$0xff] %vm488, %v463
      %493 = vst.msk [vmem:[%s240 + $0x20] sm:$0xff] %vm488, %v465
      %494 = vst.msk [vmem:[%s240 + $0x28] sm:$0xff] %vm488, %v467
      %495 = vst.msk [vmem:[%s240 + $0x30] sm:$0xff] %vm488, %v469
      %496 = vst.msk [vmem:[%s240 + $0x38] sm:$0xff] %vm488, %v471
      %497 = vst.msk [vmem:[%s240 + $0x40] sm:$0xff] %vm488, %v473
      %498 = vst.msk [vmem:[%s240 + $0x48] sm:$0xff] %vm488, %v475
      %499 = vst.msk [vmem:[%s240 + $0x50] sm:$0xff] %vm488, %v477
      %500 = vst.msk [vmem:[%s240 + $0x58] sm:$0xff] %vm488, %v479
      %501 = vst.msk [vmem:[%s240 + $0x60] sm:$0xff] %vm488, %v481
      %502 = vst.msk [vmem:[%s240 + $0x68] sm:$0xff] %vm488, %v483
      %503 = vst.msk [vmem:[%s240 + $0x70] sm:$0xff] %vm488, %v485
      %504 = vst.msk [vmem:[%s240 + $0x78] sm:$0xff] %vm488, %v487
      %s505 = smul.u32 8, %s20
      %p506 = scmp.lt.s32.totalorder %s19, 1
      %s507 = scalar_select %p506, %s19, 1
      %p508 = scmp.lt.s32.totalorder %s505, 15
      %s509 = scalar_select %p508, %s505, 15
      %s510 = smul.addr %s509, 2
      %s511 = smul.addr %s507, 32
      %s512 = sadd.s32 %s510, %s511
      %s513 = smul.addr %s512, 8
      %s514 = scalar_lea.vmem %s4, %s513
      // Predicated region
      $region37: #{downsample.5} parent=35 // pred_check
        %p515 = pneg %p138
      $region38: #{downsample.5} parent=35 // pred_check_branch
        %517 = sbr.rel (%p515) target = $region40
      $region39: #{downsample.5} parent=35 // pred_region
        %s518 = smul.u32 8, %s20
      $region40: #{downsample.5} parent=35 // pred_fallthru
        _
    $region36: #{downsample.5} parent=5 // pred_fallthru
      _
    %p519 = scmp.le.s32.totalorder 2, %s10
    // Predicated region
    $region41: #{downsample.5} parent=5 // pred_check
      %p520 = pneg %p519
    $region42: #{downsample.5} parent=5 // pred_check_branch
      %522 = sbr.rel (%p520) target = $region44
    $region43: #{downsample.5} parent=5 // pred_region
      %s523 = ssub.s32 %s10, 2
      // Predicated region
      $region45: #{downsample.5} parent=43 // pred_check
        %p524 = pneg %p144
      $region46: #{downsample.5} parent=43 // pred_check_branch
        %526 = sbr.rel (%p524) target = $region48
      $region47: #{downsample.5} parent=43 // pred_region
        %s527 = smul.u32 8, %s22
        %p528 = scmp.lt.s32.totalorder %s21, 1
        %s529 = scalar_select %p528, %s21, 1
        %p530 = scmp.lt.s32.totalorder %s527, 15
        %s531 = scalar_select %p530, %s527, 15
        %s532 = smul.addr %s531, 2
        %s533 = smul.addr %s529, 32
        %s534 = sadd.s32 %s532, %s533
        %s535 = smul.addr %s534, 8
        %s536 = scalar_lea.vmem %s4, %s535
      $region48: #{downsample.5} parent=43 // pred_fallthru
        _
    $region44: #{downsample.5} parent=5 // pred_fallthru
      _
  $region6: #{downsample.5} parent=0 // loop_footer
    %s14 = sadd.s32 1, %s10
  $region7: #{downsample.5} parent=0 // loop_footer_branch
    %9 = sbr.rel target = $region3
  $region8: #{downsample.5} parent=0 // loop_exit
    _

// kernel: downsample.4
$region0: #{downsample.4}
  #allocation0 [shape = 'u32[]', space=smem, size = 0x4, offset = 0x4, fixed_abs, tag = 'smem constant byte address 0x4 - core index']
  #allocation1 [shape = 'u32[144,128]{1,0:T(1,128)}', space=vmem, size = 0x12000, scoped, tag = 'internal scratch']
  #allocation2 [shape = 'f32[10,18,4]{2,1,0:T(8,128)}', space=vmem, size = 0x1e000, scoped, tag = 'scratch operand']
  %s0 = inlined_call_operand.vmem [shape: f32[2,16,16,4], index: 0, kind: input, shape index: {}]
  %s1 = inlined_call_operand.vmem [shape: f32[36,8], index: 1, kind: input, shape index: {}]
  %s2 = inlined_call_operand.vmem [shape: f32[1,8], index: 2, kind: input, shape index: {}]
  %s3 = inlined_call_operand.vmem [shape: f32[2,16,16,8], index: 3, kind: output, shape index: {0}]
  %s4 = inlined_call_operand.vmem [shape: f32[2,2,2,8], index: 4, kind: output, shape index: {1}]
  %5 = xla_tuple %s3, %s4
  %s6 = sld [smem:[#allocation0]]
  $region61: #{downsample.4} parent=0
    _
  %s8 = ssub.s32 1, %s6
  %s9 = scalar_select 0, %s8, %s6
  loop: start=0, step=1, limit=6
  $region2: #{downsample.4} parent=0 // loop_pre_header
    _
  $region3: #{downsample.4} parent=0 // loop_header
    %s11 = sphi 0, %s15
    %p12 = scmp.ge.s32.totalorder %s11, 6
    %s18 = sphi 0, %s30
    %s19 = sphi 0, %s26
    %s20 = sphi 0, %s18
    %s21 = sphi 0, %s19
    %s22 = sphi 0, %s20
    %s23 = sphi 0, %s21
    %s33 = sphi 0, %s35
    %s36 = sphi 0, %s33
    %s37 = sphi 0, %s36
    %s53 = sphi 0, %s37
    %s57 = sphi 0, %s57
    %s59 = sphi 0, %s57
    %s60 = sphi 0, %s59
    %s74 = sphi 0, %s60
    %s78 = sphi 0, %s78
    %s80 = sphi 0, %s78
    %s81 = sphi 0, %s80
    %s95 = sphi 0, %s81
    %s103 = sphi 0, %s105
    %s106 = sphi 0, %s103
    %s107 = sphi 0, %s106
    %s123 = sphi 0, %s107
    %s131 = sphi 0, %s133
    %s134 = sphi 0, %s131
    %s135 = sphi 0, %s134
    %s151 = sphi 0, %s135
  $region4: #{downsample.4} parent=0 // loop_header_branch
    %14 = sbr.rel (%p12) target = $region8
  $region5: #{downsample.4} parent=0 // loop_body
    %s16 = ssub.s32 %s11, 1
    %s17 = ssub.s32 %s11, 2
    %s24 = sadd.s32 1, %s19
    %p25 = scmp.ge.s32.totalorder %s24, 2
    %s26 = scalar_select %p25, 0, %s24
    %s27 = sadd.s32 1, %s18
    %s28 = scalar_select %p25, %s27, %s18
    %p29 = scmp.ge.s32.totalorder %s28, 2
    %s30 = scalar_select %p29, 0, %s28
    %s31 = ssub.s32 %s18, %s30
    %p32 = scmp.eq.s32.totalorder %s31, 0
    %s34 = sadd.s32 %s33, 1
    %s35 = scalar_select %p32, %s33, %s34
    %p38 = pneg %p32
    %p39 = scmp.eq.s32.totalorder %s11, 3
    %p40 = por %p38, %p39
    %p41 = scmp.ne.s32.totalorder %s33, %s36
    %p42 = scmp.eq.s32.totalorder %s11, 0
    %p43 = por %p41, %p42
    %p44 = scmp.ne.s32.totalorder %s33, %s36
    %p45 = scmp.eq.s32.totalorder %s16, 3
    %p46 = por %p44, %p45
    %p47 = scmp.ne.s32.totalorder %s36, %s37
    %p48 = scmp.eq.s32.totalorder %s16, 0
    %p49 = por %p47, %p48
    %p50 = scmp.ne.s32.totalorder %s36, %s37
    %p51 = scmp.eq.s32.totalorder %s17, 3
    %p52 = por %p50, %p51
    %p54 = scmp.ne.s32.totalorder %s37, %s53
    %p55 = scmp.eq.s32.totalorder %s17, 0
    %p56 = por %p54, %p55
    %s58 = sadd.s32 %s57, 1
    %p61 = scmp.eq.s32.totalorder %s11, 3
    %p62 = scmp.ne.s32.totalorder %s57, %s59
    %p63 = scmp.eq.s32.totalorder %s11, 0
    %p64 = por %p62, %p63
    %p65 = scmp.ne.s32.totalorder %s57, %s59
    %p66 = scmp.eq.s32.totalorder %s16, 3
    %p67 = por %p65, %p66
    %p68 = scmp.ne.s32.totalorder %s59, %s60
    %p69 = scmp.eq.s32.totalorder %s16, 0
    %p70 = por %p68, %p69
    %p71 = scmp.ne.s32.totalorder %s59, %s60
    %p72 = scmp.eq.s32.totalorder %s17, 3
    %p73 = por %p71, %p72
    %p75 = scmp.ne.s32.totalorder %s60, %s74
    %p76 = scmp.eq.s32.totalorder %s17, 0
    %p77 = por %p75, %p76
    %s79 = sadd.s32 %s78, 1
    %p82 = scmp.eq.s32.totalorder %s11, 3
    %p83 = scmp.ne.s32.totalorder %s78, %s80
    %p84 = scmp.eq.s32.totalorder %s11, 0
    %p85 = por %p83, %p84
    %p86 = scmp.ne.s32.totalorder %s78, %s80
    %p87 = scmp.eq.s32.totalorder %s16, 3
    %p88 = por %p86, %p87
    %p89 = scmp.ne.s32.totalorder %s80, %s81
    %p90 = scmp.eq.s32.totalorder %s16, 0
    %p91 = por %p89, %p90
    %p92 = scmp.ne.s32.totalorder %s80, %s81
    %p93 = scmp.eq.s32.totalorder %s17, 3
    %p94 = por %p92, %p93
    %p96 = scmp.ne.s32.totalorder %s81, %s95
    %p97 = scmp.eq.s32.totalorder %s17, 0
    %p98 = por %p96, %p97
    %s99 = ssub.s32 %s18, %s30
    %s100 = ssub.s32 %s19, %s26
    %s101 = sor.u32 %s99, %s100
    %p102 = scmp.eq.s32.totalorder %s101, 0
    %s104 = sadd.s32 %s103, 1
    %s105 = scalar_select %p102, %s103, %s104
    %p108 = pneg %p102
    %p109 = scmp.eq.s32.totalorder %s11, 3
    %p110 = por %p108, %p109
    %p111 = scmp.ne.s32.totalorder %s103, %s106
    %p112 = scmp.eq.s32.totalorder %s11, 0
    %p113 = por %p111, %p112
    %p114 = scmp.ne.s32.totalorder %s103, %s106
    %p115 = scmp.eq.s32.totalorder %s16, 3
    %p116 = por %p114, %p115
    %p117 = scmp.ne.s32.totalorder %s106, %s107
    %p118 = scmp.eq.s32.totalorder %s16, 0
    %p119 = por %p117, %p118
    %p120 = scmp.ne.s32.totalorder %s106, %s107
    %p121 = scmp.eq.s32.totalorder %s17, 3
    %p122 = por %p120, %p121
    %p124 = scmp.ne.s32.totalorder %s107, %s123
    %p125 = scmp.eq.s32.totalorder %s17, 0
    %p126 = por %p124, %p125
    %s127 = ssub.s32 %s18, %s30
    %s128 = ssub.s32 %s19, %s26
    %s129 = sor.u32 %s127, %s128
    %p130 = scmp.eq.s32.totalorder %s129, 0
    %s132 = sadd.s32 %s131, 1
    %s133 = scalar_select %p130, %s131, %s132
    %p136 = pneg %p130
    %p137 = scmp.eq.s32.totalorder %s11, 3
    %p138 = por %p136, %p137
    %p139 = scmp.ne.s32.totalorder %s131, %s134
    %p140 = scmp.eq.s32.totalorder %s11, 0
    %p141 = por %p139, %p140
    %p142 = scmp.ne.s32.totalorder %s131, %s134
    %p143 = scmp.eq.s32.totalorder %s16, 3
    %p144 = por %p142, %p143
    %p145 = scmp.ne.s32.totalorder %s134, %s135
    %p146 = scmp.eq.s32.totalorder %s16, 0
    %p147 = por %p145, %p146
    %p148 = scmp.ne.s32.totalorder %s134, %s135
    %p149 = scmp.eq.s32.totalorder %s17, 3
    %p150 = por %p148, %p149
    %p152 = scmp.ne.s32.totalorder %s135, %s151
    %p153 = scmp.eq.s32.totalorder %s17, 0
    %p154 = por %p152, %p153
    %p155 = scmp.le.s32.totalorder 1, %s11
    %p156 = scmp.lt.s32.totalorder %s11, 5
    %p157 = pnand %p155, %p156
    %p158 = pneg %p157
    // Predicated region
    $region9: #{downsample.4} parent=5 // pred_check
      _
    $region10: #{downsample.4} parent=5 // pred_check_branch
      %160 = sbr.rel (%p157) target = $region12
    $region11: #{downsample.4} parent=5 // pred_region
      %s161 = ssub.s32 %s11, 1
      // Predicated region
      $region13: #{downsample.4} parent=11 // pred_check
        %p162 = pneg %p70
      $region14: #{downsample.4} parent=11 // pred_check_branch
        %164 = sbr.rel (%p162) target = $region16
      $region15: #{downsample.4} parent=11 // pred_region
        _
      $region16: #{downsample.4} parent=11 // pred_fallthru
        _
      // Predicated region
      $region17: #{downsample.4} parent=11 // pred_check
        %p165 = pneg %p91
      $region18: #{downsample.4} parent=11 // pred_check_branch
        %167 = sbr.rel (%p165) target = $region20
      $region19: #{downsample.4} parent=11 // pred_region
        _
      $region20: #{downsample.4} parent=11 // pred_fallthru
        _
    $region12: #{downsample.4} parent=5 // pred_fallthru
      _
    %p168 = scmp.lt.s32.totalorder %s11, 4
    // Predicated region
    $region21: #{downsample.4} parent=5 // pred_check
      %p169 = pneg %p168
    $region22: #{downsample.4} parent=5 // pred_check_branch
      %171 = sbr.rel (%p169) target = $region24
    $region23: #{downsample.4} parent=5 // pred_region
      // Predicated region
      $region25: #{downsample.4} parent=23 // pred_check
        %p172 = pneg %p43
      $region26: #{downsample.4} parent=23 // pred_check_branch
        %174 = sbr.rel (%p172) target = $region28
      $region27: #{downsample.4} parent=23 // pred_region
        %p175 = scmp.lt.s32.totalorder %s18, 1
        %s176 = scalar_select %p175, %s18, 1
        %s177 = smul.addr %s176, 32
        %s178 = smul.addr %s177, 8
        %s179 = scalar_lea.vmem %s0, %s178
      $region28: #{downsample.4} parent=23 // pred_fallthru
        _
    $region24: #{downsample.4} parent=5 // pred_fallthru
      _
    %p180 = scmp.le.s32.totalorder 1, %s11
    %p181 = scmp.lt.s32.totalorder %s11, 5
    %p182 = pnand %p180, %p181
    %p183 = pneg %p182
    // Predicated region
    $region29: #{downsample.4} parent=5 // pred_check
      _
    $region30: #{downsample.4} parent=5 // pred_check_branch
      %185 = sbr.rel (%p182) target = $region32
    $region31: #{downsample.4} parent=5 // pred_region
      %s186 = ssub.s32 %s11, 1
      %p187 = scmp.lt.s32.totalorder %s20, 1
      %s188 = scalar_select %p187, %s20, 1
      %s189 = smul.addr %s188, 32
      %s190 = smul.addr %s189, 8
      %s191 = scalar_lea.vmem %s0, %s190
      %p192 = pneg %p49
      %p193 = pneg %p46
      %p194 = pneg %p70
      %p195 = pneg %p67
      %p196 = pneg %p91
      %p197 = pneg %p88
      %p198 = pneg %p119
      %p199 = pneg %p116
      %s200 = smul.u32 8, %s21
      %p201 = scmp.lt.s32.totalorder %s20, 1
      %s202 = scalar_select %p201, %s20, 1
      %p203 = scmp.lt.s32.totalorder %s200, 15
      %s204 = scalar_select %p203, %s200, 15
      %s205 = smul.addr %s204, 2
      %s206 = smul.addr %s202, 32
      %s207 = sadd.s32 %s205, %s206
      %s208 = smul.addr %s207, 8
      %s209 = scalar_lea.vmem %s3, %s208
      %p210 = pneg %p147
      %p211 = pneg %p144
      %p212 = scmp.lt.s32.totalorder %s20, 1
      %s213 = scalar_select %p212, %s20, 1
      %p214 = scmp.lt.s32.totalorder %s21, 1
      %s215 = scalar_select %p214, %s21, 1
      %s216 = smul.addr %s213, 2
      %s217 = sadd.s32 %s215, %s216
      %s218 = smul.addr %s217, 2
      %s219 = scalar_lea.vmem %s4, %s218
      %p220 = scmp.lt.s32.totalorder %s20, 1
      %s221 = scalar_select %p220, %s20, 1
      %s222 = smul.addr %s221, 32
      %s223 = smul.addr %s222, 8
      %s224 = scalar_lea.vmem %s0, %s223
      %s225 = smul.u32 8, %s21
      %p226 = scmp.lt.s32.totalorder %s20, 1
      %s227 = scalar_select %p226, %s20, 1
      %p228 = scmp.lt.s32.totalorder %s225, 15
      %s229 = scalar_select %p228, %s225, 15
      %s230 = smul.addr %s229, 2
      %s231 = smul.addr %s227, 32
      %s232 = sadd.s32 %s230, %s231
      %s233 = smul.addr %s232, 8
      %s234 = scalar_lea.vmem %s3, %s233
      %s235 = smul.u32 8, %s21
      %p236 = scmp.lt.s32.totalorder %s20, 1
      %s237 = scalar_select %p236, %s20, 1
      %p238 = scmp.lt.s32.totalorder %s21, 1
      %s239 = scalar_select %p238, %s21, 1
      %s240 = smul.addr %s237, 2
      %s241 = sadd.s32 %s239, %s240
      %s242 = smul.addr %s241, 2
      %s243 = scalar_lea.vmem %s4, %s242
      %s244 = smul.u32 %s21, 8
      %vm245 = vcmask 31744
      %246 = vst.msk [vmem:[#allocation2] sm:$0xff] %vm245, 0.0
      %247 = vst.msk [vmem:[#allocation2 + $0x8] sm:$0xff] %vm245, 0.0
      %vm248 = vcmask 25600
      %249 = vst.msk [vmem:[#allocation2 + $0x10] sm:$0x3] %vm248, 0.0
      %250 = vst.msk [vmem:[#allocation2 + $0x18] sm:$0xff] %vm245, 0.0
      %251 = vst.msk [vmem:[#allocation2 + $0x20] sm:$0xff] %vm245, 0.0
      %252 = vst.msk [vmem:[#allocation2 + $0x28] sm:$0x3] %vm248, 0.0
      %253 = vst.msk [vmem:[#allocation2 + $0x30] sm:$0xff] %vm245, 0.0
      %254 = vst.msk [vmem:[#allocation2 + $0x38] sm:$0xff] %vm245, 0.0
      %255 = vst.msk [vmem:[#allocation2 + $0x40] sm:$0x3] %vm248, 0.0
      %256 = vst.msk [vmem:[#allocation2 + $0x48] sm:$0xff] %vm245, 0.0
      %257 = vst.msk [vmem:[#allocation2 + $0x50] sm:$0xff] %vm245, 0.0
      %258 = vst.msk [vmem:[#allocation2 + $0x58] sm:$0x3] %vm248, 0.0
      %259 = vst.msk [vmem:[#allocation2 + $0x60] sm:$0xff] %vm245, 0.0
      %260 = vst.msk [vmem:[#allocation2 + $0x68] sm:$0xff] %vm245, 0.0
      %261 = vst.msk [vmem:[#allocation2 + $0x70] sm:$0x3] %vm248, 0.0
      %262 = vst.msk [vmem:[#allocation2 + $0x78] sm:$0xff] %vm245, 0.0
      %263 = vst.msk [vmem:[#allocation2 + $0x80] sm:$0xff] %vm245, 0.0
      %264 = vst.msk [vmem:[#allocation2 + $0x88] sm:$0x3] %vm248, 0.0
      %265 = vst.msk [vmem:[#allocation2 + $0x90] sm:$0xff] %vm245, 0.0
      %266 = vst.msk [vmem:[#allocation2 + $0x98] sm:$0xff] %vm245, 0.0
      %267 = vst.msk [vmem:[#allocation2 + $0xa0] sm:$0x3] %vm248, 0.0
      %268 = vst.msk [vmem:[#allocation2 + $0xa8] sm:$0xff] %vm245, 0.0
      %269 = vst.msk [vmem:[#allocation2 + $0xb0] sm:$0xff] %vm245, 0.0
      %270 = vst.msk [vmem:[#allocation2 + $0xb8] sm:$0x3] %vm248, 0.0
      %271 = vst.msk [vmem:[#allocation2 + $0xc0] sm:$0xff] %vm245, 0.0
      %272 = vst.msk [vmem:[#allocation2 + $0xc8] sm:$0xff] %vm245, 0.0
      %273 = vst.msk [vmem:[#allocation2 + $0xd0] sm:$0x3] %vm248, 0.0
      %274 = vst.msk [vmem:[#allocation2 + $0xd8] sm:$0xff] %vm245, 0.0
      %275 = vst.msk [vmem:[#allocation2 + $0xe0] sm:$0xff] %vm245, 0.0
      %276 = vst.msk [vmem:[#allocation2 + $0xe8] sm:$0x3] %vm248, 0.0
      %s277 = smul.u32 %s244, 16
      %s278 = scalar_lea.vmem %s224, %s277
      %v279 = vld [vmem:[%s278] sm:$0xff]
      %v280 = vld [vmem:[%s278 + $0x8] sm:$0xff]
      %v281 = vld [vmem:[%s278 + $0x10] sm:$0xff]
      %v282 = vld [vmem:[%s278 + $0x18] sm:$0xff]
      %v283 = vld [vmem:[%s278 + $0x20] sm:$0xff]
      %v284 = vld [vmem:[%s278 + $0x28] sm:$0xff]
      %v285 = vld [vmem:[%s278 + $0x30] sm:$0xff]
      %v286 = vld [vmem:[%s278 + $0x38] sm:$0xff]
      %v287 = vld [vmem:[%s278 + $0x40] sm:$0xff]
      %v288 = vld [vmem:[%s278 + $0x48] sm:$0xff]
      %v289 = vld [vmem:[%s278 + $0x50] sm:$0xff]
      %v290 = vld [vmem:[%s278 + $0x58] sm:$0xff]
      %v291 = vld [vmem:[%s278 + $0x60] sm:$0xff]
      %v292 = vld [vmem:[%s278 + $0x68] sm:$0xff]
      %v293 = vld [vmem:[%s278 + $0x70] sm:$0xff]
      %v294 = vld [vmem:[%s278 + $0x78] sm:$0xff]
      %s295 = scalar_lea.vmem [#allocation2], 24
      %296 = vst.msk [vmem:[%s295 + $0x1] sm:$0xff] %vm245, %v279
      %297 = vst.msk [vmem:[%s295 + $0x9] sm:$0xff] %vm245, %v280
      %298 = vst.msk [vmem:[%s295 + $0x19] sm:$0xff] %vm245, %v281
      %299 = vst.msk [vmem:[%s295 + $0x21] sm:$0xff] %vm245, %v282
      %300 = vst.msk [vmem:[%s295 + $0x31] sm:$0xff] %vm245, %v283
      %301 = vst.msk [vmem:[%s295 + $0x39] sm:$0xff] %vm245, %v284
      %302 = vst.msk [vmem:[%s295 + $0x49] sm:$0xff] %vm245, %v285
      %303 = vst.msk [vmem:[%s295 + $0x51] sm:$0xff] %vm245, %v286
      %304 = vst.msk [vmem:[%s295 + $0x61] sm:$0xff] %vm245, %v287
      %305 = vst.msk [vmem:[%s295 + $0x69] sm:$0xff] %vm245, %v288
      %306 = vst.msk [vmem:[%s295 + $0x79] sm:$0xff] %vm245, %v289
      %307 = vst.msk [vmem:[%s295 + $0x81] sm:$0xff] %vm245, %v290
      %308 = vst.msk [vmem:[%s295 + $0x91] sm:$0xff] %vm245, %v291
      %309 = vst.msk [vmem:[%s295 + $0x99] sm:$0xff] %vm245, %v292
      %310 = vst.msk [vmem:[%s295 + $0xa9] sm:$0xff] %vm245, %v293
      %311 = vst.msk [vmem:[%s295 + $0xb1] sm:$0xff] %vm245, %v294
      %p312 = scmp.gt.s32.totalorder %s21, 0
      // Predicated region
      $region33: #{downsample.4} parent=31 // pred_check
        %p313 = pneg %p312
      $region34: #{downsample.4} parent=31 // pred_check_branch
        %315 = sbr.rel (%p313) target = $region36
      $region35: #{downsample.4} parent=31 // pred_region
        %s316 = ssub.s32 %s244, 1
        %s317 = smul.u32 %s316, 16
        %s318 = scalar_lea.vmem %s224, %s317
        %v319 = vld [vmem:[%s318] sm:$0xff]
        %v320 = vld [vmem:[%s318 + $0x8] sm:$0xff]
        %321 = vst.msk [vmem:[#allocation2 + $0x1] sm:$0xff] %vm245, %v319
        %322 = vst.msk [vmem:[#allocation2 + $0x9] sm:$0xff] %vm245, %v320
      $region36: #{downsample.4} parent=31 // pred_fallthru
        _
      %p323 = scmp.lt.s32.totalorder %s21, 1
      // Predicated region
      $region37: #{downsample.4} parent=31 // pred_check
        %p324 = pneg %p323
      $region38: #{downsample.4} parent=31 // pred_check_branch
        %326 = sbr.rel (%p324) target = $region40
      $region39: #{downsample.4} parent=31 // pred_region
        %s327 = sadd.s32 %s244, 8
        %s328 = smul.u32 %s327, 16
        %s329 = scalar_lea.vmem %s224, %s328
        %v330 = vld [vmem:[%s329] sm:$0xff]
        %v331 = vld [vmem:[%s329 + $0x8] sm:$0xff]
        %s332 = scalar_lea.vmem [#allocation2], 216
        %333 = vst.msk [vmem:[%s332 + $0x1] sm:$0xff] %vm245, %v330
        %334 = vst.msk [vmem:[%s332 + $0x9] sm:$0xff] %vm245, %v331
      $region40: #{downsample.4} parent=31 // pred_fallthru
        _
      %v335 = vld [vmem:[#allocation2] sm:$0xff]
      %v336 = vld [vmem:[#allocation2 + $0x8] sm:$0xff]
      %v337 = vld [vmem:[#allocation2 + $0x18] sm:$0xff]
      %v338 = vld [vmem:[#allocation2 + $0x20] sm:$0xff]
      %v339 = vld [vmem:[#allocation2 + $0x30] sm:$0xff]
      %v340 = vld [vmem:[#allocation2 + $0x38] sm:$0xff]
      %v341 = vld [vmem:[#allocation2 + $0x48] sm:$0xff]
      %v342 = vld [vmem:[#allocation2 + $0x50] sm:$0xff]
      %v343 = vld [vmem:[#allocation2 + $0x60] sm:$0xff]
      %v344 = vld [vmem:[#allocation2 + $0x68] sm:$0xff]
      %v345 = vld [vmem:[#allocation2 + $0x78] sm:$0xff]
      %v346 = vld [vmem:[#allocation2 + $0x80] sm:$0xff]
      %v347 = vld [vmem:[#allocation2 + $0x90] sm:$0xff]
      %v348 = vld [vmem:[#allocation2 + $0x98] sm:$0xff]
      %v349 = vld [vmem:[#allocation2 + $0xa8] sm:$0xff]
      %v350 = vld [vmem:[#allocation2 + $0xb0] sm:$0xff]
      %v351 = vld [vmem:[#allocation2 + $0x1] sm:$0xff]
      %v352 = vld [vmem:[#allocation2 + $0x9] sm:$0xff]
      %v353 = vld [vmem:[#allocation2 + $0x19] sm:$0xff]
      %v354 = vld [vmem:[#allocation2 + $0x21] sm:$0xff]
      %v355 = vld [vmem:[#allocation2 + $0x31] sm:$0xff]
      %v356 = vld [vmem:[#allocation2 + $0x39] sm:$0xff]
      %v357 = vld [vmem:[#allocation2 + $0x49] sm:$0xff]
      %v358 = vld [vmem:[#allocation2 + $0x51] sm:$0xff]
      %v359 = vld [vmem:[#allocation2 + $0x61] sm:$0xff]
      %v360 = vld [vmem:[#allocation2 + $0x69] sm:$0xff]
      %v361 = vld [vmem:[#allocation2 + $0x79] sm:$0xff]
      %v362 = vld [vmem:[#allocation2 + $0x81] sm:$0xff]
      %v363 = vld [vmem:[#allocation2 + $0x91] sm:$0xff]
      %v364 = vld [vmem:[#allocation2 + $0x99] sm:$0xff]
      %v365 = vld [vmem:[#allocation2 + $0xa9] sm:$0xff]
      %v366 = vld [vmem:[#allocation2 + $0xb1] sm:$0xff]
      %v367 = vld [vmem:[#allocation2 + $0x2] sm:$0xff]
      %v368 = vld [vmem:[#allocation2 + $0xa] sm:$0xff]
      %v369 = vld [vmem:[#allocation2 + $0x1a] sm:$0xff]
      %v370 = vld [vmem:[#allocation2 + $0x22] sm:$0xff]
      %v371 = vld [vmem:[#allocation2 + $0x32] sm:$0xff]
      %v372 = vld [vmem:[#allocation2 + $0x3a] sm:$0xff]
      %v373 = vld [vmem:[#allocation2 + $0x4a] sm:$0xff]
      %v374 = vld [vmem:[#allocation2 + $0x52] sm:$0xff]
      %v375 = vld [vmem:[#allocation2 + $0x62] sm:$0xff]
      %v376 = vld [vmem:[#allocation2 + $0x6a] sm:$0xff]
      %v377 = vld [vmem:[#allocation2 + $0x7a] sm:$0xff]
      %v378 = vld [vmem:[#allocation2 + $0x82] sm:$0xff]
      %v379 = vld [vmem:[#allocation2 + $0x92] sm:$0xff]
      %v380 = vld [vmem:[#allocation2 + $0x9a] sm:$0xff]
      %v381 = vld [vmem:[#allocation2 + $0xaa] sm:$0xff]
      %v382 = vld [vmem:[#allocation2 + $0xb2] sm:$0xff]
      %v383 = vld [vmem:[%s295] sm:$0xff]
      %v384 = vld [vmem:[%s295 + $0x8] sm:$0xff]
      %v385 = vld [vmem:[%s295 + $0x18] sm:$0xff]
      %v386 = vld [vmem:[%s295 + $0x20] sm:$0xff]
      %v387 = vld [vmem:[%s295 + $0x30] sm:$0xff]
      %v388 = vld [vmem:[%s295 + $0x38] sm:$0xff]
      %v389 = vld [vmem:[%s295 + $0x48] sm:$0xff]
      %v390 = vld [vmem:[%s295 + $0x50] sm:$0xff]
      %v391 = vld [vmem:[%s295 + $0x60] sm:$0xff]
      %v392 = vld [vmem:[%s295 + $0x68] sm:$0xff]
      %v393 = vld [vmem:[%s295 + $0x78] sm:$0xff]
      %v394 = vld [vmem:[%s295 + $0x80] sm:$0xff]
      %v395 = vld [vmem:[%s295 + $0x90] sm:$0xff]
      %v396 = vld [vmem:[%s295 + $0x98] sm:$0xff]
      %v397 = vld [vmem:[%s295 + $0xa8] sm:$0xff]
      %v398 = vld [vmem:[%s295 + $0xb0] sm:$0xff]
      %v399 = vld [vmem:[%s295 + $0x1] sm:$0xff]
      %v400 = vld [vmem:[%s295 + $0x9] sm:$0xff]
      %v401 = vld [vmem:[%s295 + $0x19] sm:$0xff]
      %v402 = vld [vmem:[%s295 + $0x21] sm:$0xff]
      %v403 = vld [vmem:[%s295 + $0x31] sm:$0xff]
      %v404 = vld [vmem:[%s295 + $0x39] sm:$0xff]
      %v405 = vld [vmem:[%s295 + $0x49] sm:$0xff]
      %v406 = vld [vmem:[%s295 + $0x51] sm:$0xff]
      %v407 = vld [vmem:[%s295 + $0x61] sm:$0xff]
      %v408 = vld [vmem:[%s295 + $0x69] sm:$0xff]
      %v409 = vld [vmem:[%s295 + $0x79] sm:$0xff]
      %v410 = vld [vmem:[%s295 + $0x81] sm:$0xff]
      %v411 = vld [vmem:[%s295 + $0x91] sm:$0xff]
      %v412 = vld [vmem:[%s295 + $0x99] sm:$0xff]
      %v413 = vld [vmem:[%s295 + $0xa9] sm:$0xff]
      %v414 = vld [vmem:[%s295 + $0xb1] sm:$0xff]
      %v415 = vld [vmem:[%s295 + $0x2] sm:$0xff]
      %v416 = vld [vmem:[%s295 + $0xa] sm:$0xff]
      %v417 = vld [vmem:[%s295 + $0x1a] sm:$0xff]
      %v418 = vld [vmem:[%s295 + $0x22] sm:$0xff]
      %v419 = vld [vmem:[%s295 + $0x32] sm:$0xff]
      %v420 = vld [vmem:[%s295 + $0x3a] sm:$0xff]
      %v421 = vld [vmem:[%s295 + $0x4a] sm:$0xff]
      %v422 = vld [vmem:[%s295 + $0x52] sm:$0xff]
      %v423 = vld [vmem:[%s295 + $0x62] sm:$0xff]
      %v424 = vld [vmem:[%s295 + $0x6a] sm:$0xff]
      %v425 = vld [vmem:[%s295 + $0x7a] sm:$0xff]
      %v426 = vld [vmem:[%s295 + $0x82] sm:$0xff]
      %v427 = vld [vmem:[%s295 + $0x92] sm:$0xff]
      %v428 = vld [vmem:[%s295 + $0x9a] sm:$0xff]
      %v429 = vld [vmem:[%s295 + $0xaa] sm:$0xff]
      %v430 = vld [vmem:[%s295 + $0xb2] sm:$0xff]
      %s431 = scalar_lea.vmem [#allocation2], 48
      %v432 = vld [vmem:[%s431] sm:$0xff]
      %v433 = vld [vmem:[%s431 + $0x8] sm:$0xff]
      %v434 = vld [vmem:[%s431 + $0x18] sm:$0xff]
      %v435 = vld [vmem:[%s431 + $0x20] sm:$0xff]
      %v436 = vld [vmem:[%s431 + $0x30] sm:$0xff]
      %v437 = vld [vmem:[%s431 + $0x38] sm:$0xff]
      %v438 = vld [vmem:[%s431 + $0x48] sm:$0xff]
      %v439 = vld [vmem:[%s431 + $0x50] sm:$0xff]
      %v440 = vld [vmem:[%s431 + $0x60] sm:$0xff]
      %v441 = vld [vmem:[%s431 + $0x68] sm:$0xff]
      %v442 = vld [vmem:[%s431 + $0x78] sm:$0xff]
      %v443 = vld [vmem:[%s431 + $0x80] sm:$0xff]
      %v444 = vld [vmem:[%s431 + $0x90] sm:$0xff]
      %v445 = vld [vmem:[%s431 + $0x98] sm:$0xff]
      %v446 = vld [vmem:[%s431 + $0xa8] sm:$0xff]
      %v447 = vld [vmem:[%s431 + $0xb0] sm:$0xff]
      %v448 = vld [vmem:[%s431 + $0x1] sm:$0xff]
      %v449 = vld [vmem:[%s431 + $0x9] sm:$0xff]
      %v450 = vld [vmem:[%s431 + $0x19] sm:$0xff]
      %v451 = vld [vmem:[%s431 + $0x21] sm:$0xff]
      %v452 = vld [vmem:[%s431 + $0x31] sm:$0xff]
      %v453 = vld [vmem:[%s431 + $0x39] sm:$0xff]
      %v454 = vld [vmem:[%s431 + $0x49] sm:$0xff]
      %v455 = vld [vmem:[%s431 + $0x51] sm:$0xff]
      %v456 = vld [vmem:[%s431 + $0x61] sm:$0xff]
      %v457 = vld [vmem:[%s431 + $0x69] sm:$0xff]
      %v458 = vld [vmem:[%s431 + $0x79] sm:$0xff]
      %v459 = vld [vmem:[%s431 + $0x81] sm:$0xff]
      %v460 = vld [vmem:[%s431 + $0x91] sm:$0xff]
      %v461 = vld [vmem:[%s431 + $0x99] sm:$0xff]
      %v462 = vld [vmem:[%s431 + $0xa9] sm:$0xff]
      %v463 = vld [vmem:[%s431 + $0xb1] sm:$0xff]
      %v464 = vld [vmem:[%s431 + $0x2] sm:$0xff]
      %v465 = vld [vmem:[%s431 + $0xa] sm:$0xff]
      %v466 = vld [vmem:[%s431 + $0x1a] sm:$0xff]
      %v467 = vld [vmem:[%s431 + $0x22] sm:$0xff]
      %v468 = vld [vmem:[%s431 + $0x32] sm:$0xff]
      %v469 = vld [vmem:[%s431 + $0x3a] sm:$0xff]
      %v470 = vld [vmem:[%s431 + $0x4a] sm:$0xff]
      %v471 = vld [vmem:[%s431 + $0x52] sm:$0xff]
      %v472 = vld [vmem:[%s431 + $0x62] sm:$0xff]
      %v473 = vld [vmem:[%s431 + $0x6a] sm:$0xff]
      %v474 = vld [vmem:[%s431 + $0x7a] sm:$0xff]
      %v475 = vld [vmem:[%s431 + $0x82] sm:$0xff]
      %v476 = vld [vmem:[%s431 + $0x92] sm:$0xff]
      %v477 = vld [vmem:[%s431 + $0x9a] sm:$0xff]
      %v478 = vld [vmem:[%s431 + $0xaa] sm:$0xff]
      %v479 = vld [vmem:[%s431 + $0xb2] sm:$0xff]
      %496 = vrot.lane.b32.xlu0 %v351, 4
      %v497 = vpop.permute.xlu0 %496
      %498 = vrot.lane.b32.xlu0 %v352, 4
      %v499 = vpop.permute.xlu0 %498
      %500 = vrot.lane.b32.xlu0 %v353, 4
      %v501 = vpop.permute.xlu0 %500
      %502 = vrot.lane.b32.xlu0 %v354, 4
      %v503 = vpop.permute.xlu0 %502
      %504 = vrot.lane.b32.xlu0 %v355, 4
      %v505 = vpop.permute.xlu0 %504
      %506 = vrot.lane.b32.xlu0 %v356, 4
      %v507 = vpop.permute.xlu0 %506
      %508 = vrot.lane.b32.xlu0 %v357, 4
      %v509 = vpop.permute.xlu0 %508
      %510 = vrot.lane.b32.xlu0 %v358, 4
      %v511 = vpop.permute.xlu0 %510
      %512 = vrot.lane.b32.xlu0 %v359, 4
      %v513 = vpop.permute.xlu0 %512
      %514 = vrot.lane.b32.xlu0 %v360, 4
      %v515 = vpop.permute.xlu0 %514
      %516 = vrot.lane.b32.xlu0 %v361, 4
      %v517 = vpop.permute.xlu0 %516
      %518 = vrot.lane.b32.xlu0 %v362, 4
      %v519 = vpop.permute.xlu0 %518
      %520 = vrot.lane.b32.xlu0 %v363, 4
      %v521 = vpop.permute.xlu0 %520
      %522 = vrot.lane.b32.xlu0 %v364, 4
      %v523 = vpop.permute.xlu0 %522
      %524 = vrot.lane.b32.xlu0 %v365, 4
      %v525 = vpop.permute.xlu0 %524
      %526 = vrot.lane.b32.xlu0 %v366, 4
      %v527 = vpop.permute.xlu0 %526
      %560 = vrot.lane.b32.xlu0 %v367, 8
      %v561 = vpop.permute.xlu0 %560
      %562 = vrot.lane.b32.xlu0 %v368, 8
      %v563 = vpop.permute.xlu0 %562
      %564 = vrot.lane.b32.xlu0 %v369, 8
      %v565 = vpop.permute.xlu0 %564
      %566 = vrot.lane.b32.xlu0 %v370, 8
      %v567 = vpop.permute.xlu0 %566
      %568 = vrot.lane.b32.xlu0 %v371, 8
      %v569 = vpop.permute.xlu0 %568
      %570 = vrot.lane.b32.xlu0 %v372, 8
      %v571 = vpop.permute.xlu0 %570
      %572 = vrot.lane.b32.xlu0 %v373, 8
      %v573 = vpop.permute.xlu0 %572
      %574 = vrot.lane.b32.xlu0 %v374, 8
      %v575 = vpop.permute.xlu0 %574
      %576 = vrot.lane.b32.xlu0 %v375, 8
      %v577 = vpop.permute.xlu0 %576
      %578 = vrot.lane.b32.xlu0 %v376, 8
      %v579 = vpop.permute.xlu0 %578
      %580 = vrot.lane.b32.xlu0 %v377, 8
      %v581 = vpop.permute.xlu0 %580
      %582 = vrot.lane.b32.xlu0 %v378, 8
      %v583 = vpop.permute.xlu0 %582
      %584 = vrot.lane.b32.xlu0 %v379, 8
      %v585 = vpop.permute.xlu0 %584
      %586 = vrot.lane.b32.xlu0 %v380, 8
      %v587 = vpop.permute.xlu0 %586
      %588 = vrot.lane.b32.xlu0 %v381, 8
      %v589 = vpop.permute.xlu0 %588
      %590 = vrot.lane.b32.xlu0 %v382, 8
      %v591 = vpop.permute.xlu0 %590
      %624 = vrot.lane.b32.xlu0 %v383, 12
      %v625 = vpop.permute.xlu0 %624
      %626 = vrot.lane.b32.xlu0 %v384, 12
      %v627 = vpop.permute.xlu0 %626
      %628 = vrot.lane.b32.xlu0 %v385, 12
      %v629 = vpop.permute.xlu0 %628
      %630 = vrot.lane.b32.xlu0 %v386, 12
      %v631 = vpop.permute.xlu0 %630
      %632 = vrot.lane.b32.xlu0 %v387, 12
      %v633 = vpop.permute.xlu0 %632
      %634 = vrot.lane.b32.xlu0 %v388, 12
      %v635 = vpop.permute.xlu0 %634
      %636 = vrot.lane.b32.xlu0 %v389, 12
      %v637 = vpop.permute.xlu0 %636
      %638 = vrot.lane.b32.xlu0 %v390, 12
      %v639 = vpop.permute.xlu0 %638
      %640 = vrot.lane.b32.xlu0 %v391, 12
      %v641 = vpop.permute.xlu0 %640
      %642 = vrot.lane.b32.xlu0 %v392, 12
      %v643 = vpop.permute.xlu0 %642
      %644 = vrot.lane.b32.xlu0 %v393, 12
      %v645 = vpop.permute.xlu0 %644
      %646 = vrot.lane.b32.xlu0 %v394, 12
      %v647 = vpop.permute.xlu0 %646
      %648 = vrot.lane.b32.xlu0 %v395, 12
      %v649 = vpop.permute.xlu0 %648
      %650 = vrot.lane.b32.xlu0 %v396, 12
      %v651 = vpop.permute.xlu0 %650
      %652 = vrot.lane.b32.xlu0 %v397, 12
      %v653 = vpop.permute.xlu0 %652
      %654 = vrot.lane.b32.xlu0 %v398, 12
      %v655 = vpop.permute.xlu0 %654
      %688 = vrot.lane.b32.xlu0 %v399, 16
      %v689 = vpop.permute.xlu0 %688
      %690 = vrot.lane.b32.xlu0 %v400, 16
      %v691 = vpop.permute.xlu0 %690
      %692 = vrot.lane.b32.xlu0 %v401, 16
      %v693 = vpop.permute.xlu0 %692
      %694 = vrot.lane.b32.xlu0 %v402, 16
      %v695 = vpop.permute.xlu0 %694
      %696 = vrot.lane.b32.xlu0 %v403, 16
      %v697 = vpop.permute.xlu0 %696
      %698 = vrot.lane.b32.xlu0 %v404, 16
      %v699 = vpop.permute.xlu0 %698
      %700 = vrot.lane.b32.xlu0 %v405, 16
      %v701 = vpop.permute.xlu0 %700
      %702 = vrot.lane.b32.xlu0 %v406, 16
      %v703 = vpop.permute.xlu0 %702
      %704 = vrot.lane.b32.xlu0 %v407, 16
      %v705 = vpop.permute.xlu0 %704
      %706 = vrot.lane.b32.xlu0 %v408, 16
      %v707 = vpop.permute.xlu0 %706
      %708 = vrot.lane.b32.xlu0 %v409, 16
      %v709 = vpop.permute.xlu0 %708
      %710 = vrot.lane.b32.xlu0 %v410, 16
      %v711 = vpop.permute.xlu0 %710
      %712 = vrot.lane.b32.xlu0 %v411, 16
      %v713 = vpop.permute.xlu0 %712
      %714 = vrot.lane.b32.xlu0 %v412, 16
      %v715 = vpop.permute.xlu0 %714
      %716 = vrot.lane.b32.xlu0 %v413, 16
      %v717 = vpop.permute.xlu0 %716
      %718 = vrot.lane.b32.xlu0 %v414, 16
      %v719 = vpop.permute.xlu0 %718
      %752 = vrot.lane.b32.xlu0 %v415, 20
      %v753 = vpop.permute.xlu0 %752
      %754 = vrot.lane.b32.xlu0 %v416, 20
      %v755 = vpop.permute.xlu0 %754
      %756 = vrot.lane.b32.xlu0 %v417, 20
      %v757 = vpop.permute.xlu0 %756
      %758 = vrot.lane.b32.xlu0 %v418, 20
      %v759 = vpop.permute.xlu0 %758
      %760 = vrot.lane.b32.xlu0 %v419, 20
      %v761 = vpop.permute.xlu0 %760
      %762 = vrot.lane.b32.xlu0 %v420, 20
      %v763 = vpop.permute.xlu0 %762
      %764 = vrot.lane.b32.xlu0 %v421, 20
      %v765 = vpop.permute.xlu0 %764
      %766 = vrot.lane.b32.xlu0 %v422, 20
      %v767 = vpop.permute.xlu0 %766
      %768 = vrot.lane.b32.xlu0 %v423, 20
      %v769 = vpop.permute.xlu0 %768
      %770 = vrot.lane.b32.xlu0 %v424, 20
      %v771 = vpop.permute.xlu0 %770
      %772 = vrot.lane.b32.xlu0 %v425, 20
      %v773 = vpop.permute.xlu0 %772
      %774 = vrot.lane.b32.xlu0 %v426, 20
      %v775 = vpop.permute.xlu0 %774
      %776 = vrot.lane.b32.xlu0 %v427, 20
      %v777 = vpop.permute.xlu0 %776
      %778 = vrot.lane.b32.xlu0 %v428, 20
      %v779 = vpop.permute.xlu0 %778
      %780 = vrot.lane.b32.xlu0 %v429, 20
      %v781 = vpop.permute.xlu0 %780
      %782 = vrot.lane.b32.xlu0 %v430, 20
      %v783 = vpop.permute.xlu0 %782
      %816 = vrot.lane.b32.xlu0 %v432, 24
      %v817 = vpop.permute.xlu0 %816
      %818 = vrot.lane.b32.xlu0 %v433, 24
      %v819 = vpop.permute.xlu0 %818
      %820 = vrot.lane.b32.xlu0 %v434, 24
      %v821 = vpop.permute.xlu0 %820
      %822 = vrot.lane.b32.xlu0 %v435, 24
      %v823 = vpop.permute.xlu0 %822
      %824 = vrot.lane.b32.xlu0 %v436, 24
      %v825 = vpop.permute.xlu0 %824
      %826 = vrot.lane.b32.xlu0 %v437, 24
      %v827 = vpop.permute.xlu0 %826
      %828 = vrot.lane.b32.xlu0 %v438, 24
      %v829 = vpop.permute.xlu0 %828
      %830 = vrot.lane.b32.xlu0 %v439, 24
      %v831 = vpop.permute.xlu0 %830
      %832 = vrot.lane.b32.xlu0 %v440, 24
      %v833 = vpop.permute.xlu0 %832
      %834 = vrot.lane.b32.xlu0 %v441, 24
      %v835 = vpop.permute.xlu0 %834
      %836 = vrot.lane.b32.xlu0 %v442, 24
      %v837 = vpop.permute.xlu0 %836
      %838 = vrot.lane.b32.xlu0 %v443, 24
      %v839 = vpop.permute.xlu0 %838
      %840 = vrot.lane.b32.xlu0 %v444, 24
      %v841 = vpop.permute.xlu0 %840
      %842 = vrot.lane.b32.xlu0 %v445, 24
      %v843 = vpop.permute.xlu0 %842
      %844 = vrot.lane.b32.xlu0 %v446, 24
      %v845 = vpop.permute.xlu0 %844
      %846 = vrot.lane.b32.xlu0 %v447, 24
      %v847 = vpop.permute.xlu0 %846
      %880 = vrot.lane.b32.xlu0 %v448, 28
      %v881 = vpop.permute.xlu0 %880
      %882 = vrot.lane.b32.xlu0 %v449, 28
      %v883 = vpop.permute.xlu0 %882
      %884 = vrot.lane.b32.xlu0 %v450, 28
      %v885 = vpop.permute.xlu0 %884
      %886 = vrot.lane.b32.xlu0 %v451, 28
      %v887 = vpop.permute.xlu0 %886
      %888 = vrot.lane.b32.xlu0 %v452, 28
      %v889 = vpop.permute.xlu0 %888
      %890 = vrot.lane.b32.xlu0 %v453, 28
      %v891 = vpop.permute.xlu0 %890
      %892 = vrot.lane.b32.xlu0 %v454, 28
      %v893 = vpop.permute.xlu0 %892
      %894 = vrot.lane.b32.xlu0 %v455, 28
      %v895 = vpop.permute.xlu0 %894
      %896 = vrot.lane.b32.xlu0 %v456, 28
      %v897 = vpop.permute.xlu0 %896
      %898 = vrot.lane.b32.xlu0 %v457, 28
      %v899 = vpop.permute.xlu0 %898
      %900 = vrot.lane.b32.xlu0 %v458, 28
      %v901 = vpop.permute.xlu0 %900
      %902 = vrot.lane.b32.xlu0 %v459, 28
      %v903 = vpop.permute.xlu0 %902
      %904 = vrot.lane.b32.xlu0 %v460, 28
      %v905 = vpop.permute.xlu0 %904
      %906 = vrot.lane.b32.xlu0 %v461, 28
      %v907 = vpop.permute.xlu0 %906
      %908 = vrot.lane.b32.xlu0 %v462, 28
      %v909 = vpop.permute.xlu0 %908
      %910 = vrot.lane.b32.xlu0 %v463, 28
      %v911 = vpop.permute.xlu0 %910
      %944 = vrot.lane.b32.xlu0 %v464, 32
      %v945 = vpop.permute.xlu0 %944
      %946 = vrot.lane.b32.xlu0 %v465, 32
      %v947 = vpop.permute.xlu0 %946
      %948 = vrot.lane.b32.xlu0 %v466, 32
      %v949 = vpop.permute.xlu0 %948
      %950 = vrot.lane.b32.xlu0 %v467, 32
      %v951 = vpop.permute.xlu0 %950
      %952 = vrot.lane.b32.xlu0 %v468, 32
      %v953 = vpop.permute.xlu0 %952
      %954 = vrot.lane.b32.xlu0 %v469, 32
      %v955 = vpop.permute.xlu0 %954
      %956 = vrot.lane.b32.xlu0 %v470, 32
      %v957 = vpop.permute.xlu0 %956
      %958 = vrot.lane.b32.xlu0 %v471, 32
      %v959 = vpop.permute.xlu0 %958
      %960 = vrot.lane.b32.xlu0 %v472, 32
      %v961 = vpop.permute.xlu0 %960
      %962 = vrot.lane.b32.xlu0 %v473, 32
      %v963 = vpop.permute.xlu0 %962
      %964 = vrot.lane.b32.xlu0 %v474, 32
      %v965 = vpop.permute.xlu0 %964
      %966 = vrot.lane.b32.xlu0 %v475, 32
      %v967 = vpop.permute.xlu0 %966
      %968 = vrot.lane.b32.xlu0 %v476, 32
      %v969 = vpop.permute.xlu0 %968
      %970 = vrot.lane.b32.xlu0 %v477, 32
      %v971 = vpop.permute.xlu0 %970
      %972 = vrot.lane.b32.xlu0 %v478, 32
      %v973 = vpop.permute.xlu0 %972
      %974 = vrot.lane.b32.xlu0 %v479, 32
      %v975 = vpop.permute.xlu0 %974
      %v992 = vsel %vm245, %v335, %v497
      %v993 = vsel %vm245, %v336, %v499
      %v994 = vsel %vm245, %v337, %v501
      %v995 = vsel %vm245, %v338, %v503
      %v996 = vsel %vm245, %v339, %v505
      %v997 = vsel %vm245, %v340, %v507
      %v998 = vsel %vm245, %v341, %v509
      %v999 = vsel %vm245, %v342, %v511
      %v1000 = vsel %vm245, %v343, %v513
      %v1001 = vsel %vm245, %v344, %v515
      %v1002 = vsel %vm245, %v345, %v517
      %v1003 = vsel %vm245, %v346, %v519
      %v1004 = vsel %vm245, %v347, %v521
      %v1005 = vsel %vm245, %v348, %v523
      %v1006 = vsel %vm245, %v349, %v525
      %v1007 = vsel %vm245, %v350, %v527
      %vm1008 = vcmask 64512
      %v1009 = vsel %vm1008, %v992, %v561
      %v1010 = vsel %vm1008, %v993, %v563
      %v1011 = vsel %vm1008, %v994, %v565
      %v1012 = vsel %vm1008, %v995, %v567
      %v1013 = vsel %vm1008, %v996, %v569
      %v1014 = vsel %vm1008, %v997, %v571
      %v1015 = vsel %vm1008, %v998, %v573
      %v1016 = vsel %vm1008, %v999, %v575
      %v1017 = vsel %vm1008, %v1000, %v577
      %v1018 = vsel %vm1008, %v1001, %v579
      %v1019 = vsel %vm1008, %v1002, %v581
      %v1020 = vsel %vm1008, %v1003, %v583
      %v1021 = vsel %vm1008, %v1004, %v585
      %v1022 = vsel %vm1008, %v1005, %v587
      %v1023 = vsel %vm1008, %v1006, %v589
      %v1024 = vsel %vm1008, %v1007, %v591
      %vm1025 = vcmask 97280
      %v1026 = vsel %vm1025, %v1009, %v625
      %v1027 = vsel %vm1025, %v1010, %v627
      %v1028 = vsel %vm1025, %v1011, %v629
      %v1029 = vsel %vm1025, %v1012, %v631
      %v1030 = vsel %vm1025, %v1013, %v633
      %v1031 = vsel %vm1025, %v1014, %v635
      %v1032 = vsel %vm1025, %v1015, %v637
      %v1033 = vsel %vm1025, %v1016, %v639
      %v1034 = vsel %vm1025, %v1017, %v641
      %v1035 = vsel %vm1025, %v1018, %v643
      %v1036 = vsel %vm1025, %v1019, %v645
      %v1037 = vsel %vm1025, %v1020, %v647
      %v1038 = vsel %vm1025, %v1021, %v649
      %v1039 = vsel %vm1025, %v1022, %v651
      %v1040 = vsel %vm1025, %v1023, %v653
      %v1041 = vsel %vm1025, %v1024, %v655
      %vm1042 = vcmask 130048
      %v1043 = vsel %vm1042, %v1026, %v689
      %v1044 = vsel %vm1042, %v1027, %v691
      %v1045 = vsel %vm1042, %v1028, %v693
      %v1046 = vsel %vm1042, %v1029, %v695
      %v1047 = vsel %vm1042, %v1030, %v697
      %v1048 = vsel %vm1042, %v1031, %v699
      %v1049 = vsel %vm1042, %v1032, %v701
      %v1050 = vsel %vm1042, %v1033, %v703
      %v1051 = vsel %vm1042, %v1034, %v705
      %v1052 = vsel %vm1042, %v1035, %v707
      %v1053 = vsel %vm1042, %v1036, %v709
      %v1054 = vsel %vm1042, %v1037, %v711
      %v1055 = vsel %vm1042, %v1038, %v713
      %v1056 = vsel %vm1042, %v1039, %v715
      %v1057 = vsel %vm1042, %v1040, %v717
      %v1058 = vsel %vm1042, %v1041, %v719
      %vm1059 = vcmask 162816
      %v1060 = vsel %vm1059, %v1043, %v753
      %v1061 = vsel %vm1059, %v1044, %v755
      %v1062 = vsel %vm1059, %v1045, %v757
      %v1063 = vsel %vm1059, %v1046, %v759
      %v1064 = vsel %vm1059, %v1047, %v761
      %v1065 = vsel %vm1059, %v1048, %v763
      %v1066 = vsel %vm1059, %v1049, %v765
      %v1067 = vsel %vm1059, %v1050, %v767
      %v1068 = vsel %vm1059, %v1051, %v769
      %v1069 = vsel %vm1059, %v1052, %v771
      %v1070 = vsel %vm1059, %v1053, %v773
      %v1071 = vsel %vm1059, %v1054, %v775
      %v1072 = vsel %vm1059, %v1055, %v777
      %v1073 = vsel %vm1059, %v1056, %v779
      %v1074 = vsel %vm1059, %v1057, %v781
      %v1075 = vsel %vm1059, %v1058, %v783
      %vm1076 = vcmask 195584
      %v1077 = vsel %vm1076, %v1060, %v817
      %v1078 = vsel %vm1076, %v1061, %v819
      %v1079 = vsel %vm1076, %v1062, %v821
      %v1080 = vsel %vm1076, %v1063, %v823
      %v1081 = vsel %vm1076, %v1064, %v825
      %v1082 = vsel %vm1076, %v1065, %v827
      %v1083 = vsel %vm1076, %v1066, %v829
      %v1084 = vsel %vm1076, %v1067, %v831
      %v1085 = vsel %vm1076, %v1068, %v833
      %v1086 = vsel %vm1076, %v1069, %v835
      %v1087 = vsel %vm1076, %v1070, %v837
      %v1088 = vsel %vm1076, %v1071, %v839
      %v1089 = vsel %vm1076, %v1072, %v841
      %v1090 = vsel %vm1076, %v1073, %v843
      %v1091 = vsel %vm1076, %v1074, %v845
      %v1092 = vsel %vm1076, %v1075, %v847
      %vm1093 = vcmask 228352
      %v1094 = vsel %vm1093, %v1077, %v881
      %v1095 = vsel %vm1093, %v1078, %v883
      %v1096 = vsel %vm1093, %v1079, %v885
      %v1097 = vsel %vm1093, %v1080, %v887
      %v1098 = vsel %vm1093, %v1081, %v889
      %v1099 = vsel %vm1093, %v1082, %v891
      %v1100 = vsel %vm1093, %v1083, %v893
      %v1101 = vsel %vm1093, %v1084, %v895
      %v1102 = vsel %vm1093, %v1085, %v897
      %v1103 = vsel %vm1093, %v1086, %v899
      %v1104 = vsel %vm1093, %v1087, %v901
      %v1105 = vsel %vm1093, %v1088, %v903
      %v1106 = vsel %vm1093, %v1089, %v905
      %v1107 = vsel %vm1093, %v1090, %v907
      %v1108 = vsel %vm1093, %v1091, %v909
      %v1109 = vsel %vm1093, %v1092, %v911
      %vm1110 = vcmask 261120
      %v1111 = vsel %vm1110, %v1094, %v945
      %v1112 = vsel %vm1110, %v1095, %v947
      %v1113 = vsel %vm1110, %v1096, %v949
      %v1114 = vsel %vm1110, %v1097, %v951
      %v1115 = vsel %vm1110, %v1098, %v953
      %v1116 = vsel %vm1110, %v1099, %v955
      %v1117 = vsel %vm1110, %v1100, %v957
      %v1118 = vsel %vm1110, %v1101, %v959
      %v1119 = vsel %vm1110, %v1102, %v961
      %v1120 = vsel %vm1110, %v1103, %v963
      %v1121 = vsel %vm1110, %v1104, %v965
      %v1122 = vsel %vm1110, %v1105, %v967
      %v1123 = vsel %vm1110, %v1106, %v969
      %v1124 = vsel %vm1110, %v1107, %v971
      %v1125 = vsel %vm1110, %v1108, %v973
      %v1126 = vsel %vm1110, %v1109, %v975
      %v1127 = vld [vmem:[%s1] sm:$0xff]
      %v1128 = vld [vmem:[%s1 + $0x8] sm:$0xff]
      %v1129 = vld [vmem:[%s1 + $0x10] sm:$0xff]
      %v1130 = vld [vmem:[%s1 + $0x18] sm:$0xff]
      %v1131 = vld [vmem:[%s1 + $0x20] sm:$0xf]
      %v1132 = vld [vmem:[%s2] sm:$0x1]
      %v1134 = vlaneseq
      %v1135 = vshrl.u32 %v1134, 7
      %v1136 = vsub.s32 0, %v1135
      %v1137 = vrot.slane %v1132, %v1136
      %vm1139 = vcmask 293888
      %v1141 = vsel %vm1139, %v1111, 0
      %v1144 = vsel %vm1139, %v1112, 0
      %v1147 = vsel %vm1139, %v1113, 0
      %v1150 = vsel %vm1139, %v1114, 0
      %v1153 = vsel %vm1139, %v1115, 0
      %v1156 = vsel %vm1139, %v1116, 0
      %v1159 = vsel %vm1139, %v1117, 0
      %v1162 = vsel %vm1139, %v1118, 0
      %v1165 = vsel %vm1139, %v1119, 0
      %v1168 = vsel %vm1139, %v1120, 0
      %v1171 = vsel %vm1139, %v1121, 0
      %v1174 = vsel %vm1139, %v1122, 0
      %v1177 = vsel %vm1139, %v1123, 0
      %v1180 = vsel %vm1139, %v1124, 0
      %v1183 = vsel %vm1139, %v1125, 0
      %v1186 = vsel %vm1139, %v1126, 0
      %vm1188 = vcmask 1043456
      %v1190 = vsel %vm1188, %v1131, 0
      %1192 = vmatprep.subr.mxu0 0.0
      %v1193 = vand.u32 %v1127, 4294901760
      %1194 = vmatpush1.msra.mxu0 %v1193
      %1195 = vmatprep.subr.mxu0 0.0
      %v1196 = vand.u32 %v1128, 4294901760
      %1197 = vmatpush1.msra.mxu0 %v1196
      %1198 = vmatprep.subr.mxu0 0.0
      %v1199 = vand.u32 %v1129, 4294901760
      %1200 = vmatpush1.msra.mxu0 %v1199
      %1201 = vmatprep.subr.mxu0 0.0
      %v1202 = vand.u32 %v1130, 4294901760
      %1203 = vmatpush1.msra.mxu0 %v1202
      %1204 = vmatprep.subr.mxu0 0.0
      %v1205 = vand.u32 %v1190, 4294901760
      %1206 = vmatpush1.msra.mxu0 %v1205
      %1207 = vmatprep.subr.mxu0 0.0
      %1208 = vmatpush1.msra.mxu0 0.0
      %1209 = vmatprep.subr.mxu0 0.0
      %1210 = vmatpush1.msra.mxu0 0.0
      %1211 = vmatprep.subr.mxu0 0.0
      %1212 = vmatpush1.msra.mxu0 0.0
      %1213 = vmatprep.subr.mxu0 0.0
      %1214 = vmatpush1.msra.mxu0 0.0
      %1215 = vmatprep.subr.mxu0 0.0
      %1216 = vmatpush1.msra.mxu0 0.0
      %1217 = vmatprep.subr.mxu0 0.0
      %1218 = vmatpush1.msra.mxu0 0.0
      %1219 = vmatprep.subr.mxu0 0.0
      %1220 = vmatpush1.msra.mxu0 0.0
      %1221 = vmatprep.subr.mxu0 0.0
      %1222 = vmatpush1.msra.mxu0 0.0
      %1223 = vmatprep.subr.mxu0 0.0
      %1224 = vmatpush1.msra.mxu0 0.0
      %1225 = vmatprep.subr.mxu0 0.0
      %1226 = vmatpush1.msra.mxu0 0.0
      %1227 = vmatprep.subr.mxu0 0.0
      %1228 = vmatpush1.msra.mxu0 0.0
      %1229 = vmatprep.subr.mxu0 0.0
      %1230 = vmatpush1.msra.mxu0 0.0
      %1231 = vmatprep.subr.mxu0 0.0
      %1232 = vmatpush1.msra.mxu0 0.0
      %1233 = vmatprep.subr.mxu0 0.0
      %1234 = vmatpush1.msra.mxu0 0.0
      %1235 = vmatprep.subr.mxu0 0.0
      %1236 = vmatpush1.msra.mxu0 0.0
      %1237 = vmatprep.subr.mxu0 0.0
      %1238 = vmatpush1.msra.mxu0 0.0
      %1239 = vmatprep.subr.mxu0 0.0
      %1240 = vmatpush1.msra.mxu0 0.0
      %1241 = vmatprep.subr.mxu0 0.0
      %1242 = vmatpush1.msra.mxu0 0.0
      %1243 = vmatprep.subr.mxu0 0.0
      %1244 = vmatpush1.msra.mxu0 0.0
      %1245 = vmatprep.subr.mxu0 0.0
      %1246 = vmatpush1.msra.mxu0 0.0
      %1247 = vmatprep.subr.mxu0 0.0
      %1248 = vmatpush1.msra.mxu0 0.0
      %1249 = vmatprep.subr.mxu0 0.0
      %1250 = vmatpush1.msra.mxu0 0.0
      %1251 = vmatprep.subr.mxu0 0.0
      %1252 = vmatpush1.msra.mxu0 0.0
      %1253 = vmatprep.subr.mxu0 0.0
      %1254 = vmatpush1.msra.mxu0 0.0
      %1255 = vmatprep.subr.mxu0 0.0
      %1256 = vmatpush1.msra.mxu0 0.0
      %1257 = vmatprep.subr.mxu0 0.0
      %1258 = vmatpush1.msra.mxu0 0.0
      %1259 = vmatprep.subr.mxu0 0.0
      %1260 = vmatpush1.msra.mxu0 0.0
      %1261 = vmatprep.mubr.f32.mxu0 0.0
      %v1262 = vand.u32 %v1141, 4294901760
      %v1263 = vsub.f32 %v1141, %v1262
      %v1264 = vand.u32 %v1263, 4294901760
      %v1265 = vsub.f32 %v1263, %v1264
      %v1266 = vand.u32 %v1265, 4294901760
      %1267 = vmatmul.mubr.f32.gmra.mrb[0].mxu0 %v1266
      %v1268 = vpop.f32.mrb[0].mxu0
      %v1269 = vadd.f32 %v1137, %v1268
      %v1270 = vpop.f32.mrb[0].mxu0
      %1271 = vmatprep.mubr.f32.mxu0 0.0
      %v1272 = vand.u32 %v1144, 4294901760
      %v1273 = vsub.f32 %v1144, %v1272
      %v1274 = vand.u32 %v1273, 4294901760
      %v1275 = vsub.f32 %v1273, %v1274
      %v1276 = vand.u32 %v1275, 4294901760
      %1277 = vmatmul.mubr.f32.gmra.mrb[0].mxu0 %v1276
      %v1278 = vpop.f32.mrb[0].mxu0
      %v1279 = vadd.f32 %v1137, %v1278
      %v1280 = vpop.f32.mrb[0].mxu0
      %1281 = vmatprep.mubr.f32.mxu0 0.0
      %v1282 = vand.u32 %v1147, 4294901760
      %v1283 = vsub.f32 %v1147, %v1282
      %v1284 = vand.u32 %v1283, 4294901760
      %v1285 = vsub.f32 %v1283, %v1284
      %v1286 = vand.u32 %v1285, 4294901760
      %1287 = vmatmul.mubr.f32.gmra.mrb[0].mxu0 %v1286
      %v1288 = vpop.f32.mrb[0].mxu0
      %v1289 = vadd.f32 %v1137, %v1288
      %v1290 = vpop.f32.mrb[0].mxu0
      %1291 = vmatprep.mubr.f32.mxu0 0.0
      %v1292 = vand.u32 %v1150, 4294901760
      %v1293 = vsub.f32 %v1150, %v1292
      %v1294 = vand.u32 %v1293, 4294901760
      %v1295 = vsub.f32 %v1293, %v1294
      %v1296 = vand.u32 %v1295, 4294901760
      %1297 = vmatmul.mubr.f32.gmra.mrb[0].mxu0 %v1296
      %v1298 = vpop.f32.mrb[0].mxu0
      %v1299 = vadd.f32 %v1137, %v1298
      %v1300 = vpop.f32.mrb[0].mxu0
      %1301 = vmatprep.mubr.f32.mxu0 0.0
      %v1302 = vand.u32 %v1153, 4294901760
      %v1303 = vsub.f32 %v1153, %v1302
      %v1304 = vand.u32 %v1303, 4294901760
      %v1305 = vsub.f32 %v1303, %v1304
      %v1306 = vand.u32 %v1305, 4294901760
      %1307 = vmatmul.mubr.f32.gmra.mrb[0].mxu0 %v1306
      %v1308 = vpop.f32.mrb[0].mxu0
      %v1309 = vadd.f32 %v1137, %v1308
      %v1310 = vpop.f32.mrb[0].mxu0
      %1311 = vmatprep.mubr.f32.mxu0 0.0
      %v1312 = vand.u32 %v1156, 4294901760
      %v1313 = vsub.f32 %v1156, %v1312
      %v1314 = vand.u32 %v1313, 4294901760
      %v1315 = vsub.f32 %v1313, %v1314
      %v1316 = vand.u32 %v1315, 4294901760
      %1317 = vmatmul.mubr.f32.gmra.mrb[0].mxu0 %v1316
      %v1318 = vpop.f32.mrb[0].mxu0
      %v1319 = vadd.f32 %v1137, %v1318
      %v1320 = vpop.f32.mrb[0].mxu0
      %1321 = vmatprep.mubr.f32.mxu0 0.0
      %v1322 = vand.u32 %v1159, 4294901760
      %v1323 = vsub.f32 %v1159, %v1322
      %v1324 = vand.u32 %v1323, 4294901760
      %v1325 = vsub.f32 %v1323, %v1324
      %v1326 = vand.u32 %v1325, 4294901760
      %1327 = vmatmul.mubr.f32.gmra.mrb[0].mxu0 %v1326
      %v1328 = vpop.f32.mrb[0].mxu0
      %v1329 = vadd.f32 %v1137, %v1328
      %v1330 = vpop.f32.mrb[0].mxu0
      %1331 = vmatprep.mubr.f32.mxu0 0.0
      %v1332 = vand.u32 %v1162, 4294901760
      %v1333 = vsub.f32 %v1162, %v1332
      %v1334 = vand.u32 %v1333, 4294901760
      %v1335 = vsub.f32 %v1333, %v1334
      %v1336 = vand.u32 %v1335, 4294901760
      %1337 = vmatmul.mubr.f32.gmra.mrb[0].mxu0 %v1336
      %v1338 = vpop.f32.mrb[0].mxu0
      %v1339 = vadd.f32 %v1137, %v1338
      %v1340 = vpop.f32.mrb[0].mxu0
      %1341 = vmatprep.mubr.f32.mxu0 0.0
      %v1342 = vand.u32 %v1165, 4294901760
      %v1343 = vsub.f32 %v1165, %v1342
      %v1344 = vand.u32 %v1343, 4294901760
      %v1345 = vsub.f32 %v1343, %v1344
      %v1346 = vand.u32 %v1345, 4294901760
      %1347 = vmatmul.mubr.f32.gmra.mrb[0].mxu0 %v1346
      %v1348 = vpop.f32.mrb[0].mxu0
      %v1349 = vadd.f32 %v1137, %v1348
      %v1350 = vpop.f32.mrb[0].mxu0
      %1351 = vmatprep.mubr.f32.mxu0 0.0
      %v1352 = vand.u32 %v1168, 4294901760
      %v1353 = vsub.f32 %v1168, %v1352
      %v1354 = vand.u32 %v1353, 4294901760
      %v1355 = vsub.f32 %v1353, %v1354
      %v1356 = vand.u32 %v1355, 4294901760
      %1357 = vmatmul.mubr.f32.gmra.mrb[0].mxu0 %v1356
      %v1358 = vpop.f32.mrb[0].mxu0
      %v1359 = vadd.f32 %v1137, %v1358
      %v1360 = vpop.f32.mrb[0].mxu0
      %1361 = vmatprep.mubr.f32.mxu0 0.0
      %v1362 = vand.u32 %v1171, 4294901760
      %v1363 = vsub.f32 %v1171, %v1362
      %v1364 = vand.u32 %v1363, 4294901760
      %v1365 = vsub.f32 %v1363, %v1364
      %v1366 = vand.u32 %v1365, 4294901760
      %1367 = vmatmul.mubr.f32.gmra.mrb[0].mxu0 %v1366
      %v1368 = vpop.f32.mrb[0].mxu0
      %v1369 = vadd.f32 %v1137, %v1368
      %v1370 = vpop.f32.mrb[0].mxu0
      %1371 = vmatprep.mubr.f32.mxu0 0.0
      %v1372 = vand.u32 %v1174, 4294901760
      %v1373 = vsub.f32 %v1174, %v1372
      %v1374 = vand.u32 %v1373, 4294901760
      %v1375 = vsub.f32 %v1373, %v1374
      %v1376 = vand.u32 %v1375, 4294901760
      %1377 = vmatmul.mubr.f32.gmra.mrb[0].mxu0 %v1376
      %v1378 = vpop.f32.mrb[0].mxu0
      %v1379 = vadd.f32 %v1137, %v1378
      %v1380 = vpop.f32.mrb[0].mxu0
      %1381 = vmatprep.mubr.f32.mxu0 0.0
      %v1382 = vand.u32 %v1177, 4294901760
      %v1383 = vsub.f32 %v1177, %v1382
      %v1384 = vand.u32 %v1383, 4294901760
      %v1385 = vsub.f32 %v1383, %v1384
      %v1386 = vand.u32 %v1385, 4294901760
      %1387 = vmatmul.mubr.f32.gmra.mrb[0].mxu0 %v1386
      %v1388 = vpop.f32.mrb[0].mxu0
      %v1389 = vadd.f32 %v1137, %v1388
      %v1390 = vpop.f32.mrb[0].mxu0
      %1391 = vmatprep.mubr.f32.mxu0 0.0
      %v1392 = vand.u32 %v1180, 4294901760
      %v1393 = vsub.f32 %v1180, %v1392
      %v1394 = vand.u32 %v1393, 4294901760
      %v1395 = vsub.f32 %v1393, %v1394
      %v1396 = vand.u32 %v1395, 4294901760
      %1397 = vmatmul.mubr.f32.gmra.mrb[0].mxu0 %v1396
      %v1398 = vpop.f32.mrb[0].mxu0
      %v1399 = vadd.f32 %v1137, %v1398
      %v1400 = vpop.f32.mrb[0].mxu0
      %1401 = vmatprep.mubr.f32.mxu0 0.0
      %v1402 = vand.u32 %v1183, 4294901760
      %v1403 = vsub.f32 %v1183, %v1402
      %v1404 = vand.u32 %v1403, 4294901760
      %v1405 = vsub.f32 %v1403, %v1404
      %v1406 = vand.u32 %v1405, 4294901760
      %1407 = vmatmul.mubr.f32.gmra.mrb[0].mxu0 %v1406
      %v1408 = vpop.f32.mrb[0].mxu0
      %v1409 = vadd.f32 %v1137, %v1408
      %v1410 = vpop.f32.mrb[0].mxu0
      %1411 = vmatprep.mubr.f32.mxu0 0.0
      %v1412 = vand.u32 %v1186, 4294901760
      %v1413 = vsub.f32 %v1186, %v1412
      %v1414 = vand.u32 %v1413, 4294901760
      %v1415 = vsub.f32 %v1413, %v1414
      %v1416 = vand.u32 %v1415, 4294901760
      %1417 = vmatmul.mubr.f32.gmra.mrb[0].mxu0 %v1416
      %v1418 = vpop.f32.mrb[0].mxu0
      %v1419 = vadd.f32 %v1137, %v1418
      %v1420 = vpop.f32.mrb[0].mxu0
      %1421 = vdwg.mxu0
      %1422 = vmatprep.subr.mxu0 0.0
      %v1423 = vand.u32 %v1127, 4294901760
      %v1424 = vsub.f32 %v1127, %v1423
      %v1425 = vand.u32 %v1424, 4294901760
      %v1426 = vsub.f32 %v1424, %v1425
      %v1427 = vand.u32 %v1426, 4294901760
      %1428 = vmatpush1.msra.mxu0 %v1427
      %1429 = vmatprep.subr.mxu0 0.0
      %v1430 = vand.u32 %v1128, 4294901760
      %v1431 = vsub.f32 %v1128, %v1430
      %v1432 = vand.u32 %v1431, 4294901760
      %v1433 = vsub.f32 %v1431, %v1432
      %v1434 = vand.u32 %v1433, 4294901760
      %1435 = vmatpush1.msra.mxu0 %v1434
      %1436 = vmatprep.subr.mxu0 0.0
      %v1437 = vand.u32 %v1129, 4294901760
      %v1438 = vsub.f32 %v1129, %v1437
      %v1439 = vand.u32 %v1438, 4294901760
      %v1440 = vsub.f32 %v1438, %v1439
      %v1441 = vand.u32 %v1440, 4294901760
      %1442 = vmatpush1.msra.mxu0 %v1441
      %1443 = vmatprep.subr.mxu0 0.0
      %v1444 = vand.u32 %v1130, 4294901760
      %v1445 = vsub.f32 %v1130, %v1444
      %v1446 = vand.u32 %v1445, 4294901760
      %v1447 = vsub.f32 %v1445, %v1446
      %v1448 = vand.u32 %v1447, 4294901760
      %1449 = vmatpush1.msra.mxu0 %v1448
      %1450 = vmatprep.subr.mxu0 0.0
      %v1451 = vand.u32 %v1190, 4294901760
      %v1452 = vsub.f32 %v1190, %v1451
      %v1453 = vand.u32 %v1452, 4294901760
      %v1454 = vsub.f32 %v1452, %v1453
      %v1455 = vand.u32 %v1454, 4294901760
      %1456 = vmatpush1.msra.mxu0 %v1455
      %1457 = vmatprep.subr.mxu0 0.0
      %1458 = vmatpush1.msra.mxu0 0.0
      %1459 = vmatprep.subr.mxu0 0.0
      %1460 = vmatpush1.msra.mxu0 0.0
      %1461 = vmatprep.subr.mxu0 0.0
      %1462 = vmatpush1.msra.mxu0 0.0
      %1463 = vmatprep.subr.mxu0 0.0
      %1464 = vmatpush1.msra.mxu0 0.0
      %1465 = vmatprep.subr.mxu0 0.0
      %1466 = vmatpush1.msra.mxu0 0.0
      %1467 = vmatprep.subr.mxu0 0.0
      %1468 = vmatpush1.msra.mxu0 0.0
      %1469 = vmatprep.subr.mxu0 0.0
      %1470 = vmatpush1.msra.mxu0 0.0
      %1471 = vmatprep.subr.mxu0 0.0
      %1472 = vmatpush1.msra.mxu0 0.0
      %1473 = vmatprep.subr.mxu0 0.0
      %1474 = vmatpush1.msra.mxu0 0.0
      %1475 = vmatprep.subr.mxu0 0.0
      %1476 = vmatpush1.msra.mxu0 0.0
      %1477 = vmatprep.subr.mxu0 0.0
      %1478 = vmatpush1.msra.mxu0 0.0
      %1479 = vmatprep.subr.mxu0 0.0
      %1480 = vmatpush1.msra.mxu0 0.0
      %1481 = vmatprep.subr.mxu0 0.0
      %1482 = vmatpush1.msra.mxu0 0.0
      %1483 = vmatprep.subr.mxu0 0.0
      %1484 = vmatpush1.msra.mxu0 0.0
      %1485 = vmatprep.subr.mxu0 0.0
      %1486 = vmatpush1.msra.mxu0 0.0
      %1487 = vmatprep.subr.mxu0 0.0
      %1488 = vmatpush1.msra.mxu0 0.0
      %1489 = vmatprep.subr.mxu0 0.0
      %1490 = vmatpush1.msra.mxu0 0.0
      %1491 = vmatprep.subr.mxu0 0.0
      %1492 = vmatpush1.msra.mxu0 0.0
      %1493 = vmatprep.subr.mxu0 0.0
      %1494 = vmatpush1.msra.mxu0 0.0
      %1495 = vmatprep.subr.mxu0 0.0
      %1496 = vmatpush1.msra.mxu0 0.0
      %1497 = vmatprep.subr.mxu0 0.0
      %1498 = vmatpush1.msra.mxu0 0.0
      %1499 = vmatprep.subr.mxu0 0.0
      %1500 = vmatpush1.msra.mxu0 0.0
      %1501 = vmatprep.subr.mxu0 0.0
      %1502 = vmatpush1.msra.mxu0 0.0
      %1503 = vmatprep.subr.mxu0 0.0
      %1504 = vmatpush1.msra.mxu0 0.0
      %1505 = vmatprep.subr.mxu0 0.0
      %1506 = vmatpush1.msra.mxu0 0.0
      %1507 = vmatprep.subr.mxu0 0.0
      %1508 = vmatpush1.msra.mxu0 0.0
      %1509 = vmatprep.subr.mxu0 0.0
      %1510 = vmatpush1.msra.mxu0 0.0
      %1511 = vmatprep.mubr.f32.mxu0 0.0
      %v1512 = vand.u32 %v1141, 4294901760
      %1513 = vmatmul.mubr.f32.gmra.mrb[0].mxu0 %v1512
      %v1514 = vpop.f32.mrb[0].mxu0
      %v1515 = vadd.f32 %v1269, %v1514
      %v1516 = vpop.f32.mrb[0].mxu0
      %1517 = vmatprep.mubr.f32.mxu0 0.0
      %v1518 = vand.u32 %v1144, 4294901760
      %1519 = vmatmul.mubr.f32.gmra.mrb[0].mxu0 %v1518
      %v1520 = vpop.f32.mrb[0].mxu0
      %v1521 = vadd.f32 %v1279, %v1520
      %v1522 = vpop.f32.mrb[0].mxu0
      %1523 = vmatprep.mubr.f32.mxu0 0.0
      %v1524 = vand.u32 %v1147, 4294901760
      %1525 = vmatmul.mubr.f32.gmra.mrb[0].mxu0 %v1524
      %v1526 = vpop.f32.mrb[0].mxu0
      %v1527 = vadd.f32 %v1289, %v1526
      %v1528 = vpop.f32.mrb[0].mxu0
      %1529 = vmatprep.mubr.f32.mxu0 0.0
      %v1530 = vand.u32 %v1150, 4294901760
      %1531 = vmatmul.mubr.f32.gmra.mrb[0].mxu0 %v1530
      %v1532 = vpop.f32.mrb[0].mxu0
      %v1533 = vadd.f32 %v1299, %v1532
      %v1534 = vpop.f32.mrb[0].mxu0
      %1535 = vmatprep.mubr.f32.mxu0 0.0
      %v1536 = vand.u32 %v1153, 4294901760
      %1537 = vmatmul.mubr.f32.gmra.mrb[0].mxu0 %v1536
      %v1538 = vpop.f32.mrb[0].mxu0
      %v1539 = vadd.f32 %v1309, %v1538
      %v1540 = vpop.f32.mrb[0].mxu0
      %1541 = vmatprep.mubr.f32.mxu0 0.0
      %v1542 = vand.u32 %v1156, 4294901760
      %1543 = vmatmul.mubr.f32.gmra.mrb[0].mxu0 %v1542
      %v1544 = vpop.f32.mrb[0].mxu0
      %v1545 = vadd.f32 %v1319, %v1544
      %v1546 = vpop.f32.mrb[0].mxu0
      %1547 = vmatprep.mubr.f32.mxu0 0.0
      %v1548 = vand.u32 %v1159, 4294901760
      %1549 = vmatmul.mubr.f32.gmra.mrb[0].mxu0 %v1548
      %v1550 = vpop.f32.mrb[0].mxu0
      %v1551 = vadd.f32 %v1329, %v1550
      %v1552 = vpop.f32.mrb[0].mxu0
      %1553 = vmatprep.mubr.f32.mxu0 0.0
      %v1554 = vand.u32 %v1162, 4294901760
      %1555 = vmatmul.mubr.f32.gmra.mrb[0].mxu0 %v1554
      %v1556 = vpop.f32.mrb[0].mxu0
      %v1557 = vadd.f32 %v1339, %v1556
      %v1558 = vpop.f32.mrb[0].mxu0
      %1559 = vmatprep.mubr.f32.mxu0 0.0
      %v1560 = vand.u32 %v1165, 4294901760
      %1561 = vmatmul.mubr.f32.gmra.mrb[0].mxu0 %v1560
      %v1562 = vpop.f32.mrb[0].mxu0
      %v1563 = vadd.f32 %v1349, %v1562
      %v1564 = vpop.f32.mrb[0].mxu0
      %1565 = vmatprep.mubr.f32.mxu0 0.0
      %v1566 = vand.u32 %v1168, 4294901760
      %1567 = vmatmul.mubr.f32.gmra.mrb[0].mxu0 %v1566
      %v1568 = vpop.f32.mrb[0].mxu0
      %v1569 = vadd.f32 %v1359, %v1568
      %v1570 = vpop.f32.mrb[0].mxu0
      %1571 = vmatprep.mubr.f32.mxu0 0.0
      %v1572 = vand.u32 %v1171, 4294901760
      %1573 = vmatmul.mubr.f32.gmra.mrb[0].mxu0 %v1572
      %v1574 = vpop.f32.mrb[0].mxu0
      %v1575 = vadd.f32 %v1369, %v1574
      %v1576 = vpop.f32.mrb[0].mxu0
      %1577 = vmatprep.mubr.f32.mxu0 0.0
      %v1578 = vand.u32 %v1174, 4294901760
      %1579 = vmatmul.mubr.f32.gmra.mrb[0].mxu0 %v1578
      %v1580 = vpop.f32.mrb[0].mxu0
      %v1581 = vadd.f32 %v1379, %v1580
      %v1582 = vpop.f32.mrb[0].mxu0
      %1583 = vmatprep.mubr.f32.mxu0 0.0
      %v1584 = vand.u32 %v1177, 4294901760
      %1585 = vmatmul.mubr.f32.gmra.mrb[0].mxu0 %v1584
      %v1586 = vpop.f32.mrb[0].mxu0
      %v1587 = vadd.f32 %v1389, %v1586
      %v1588 = vpop.f32.mrb[0].mxu0
      %1589 = vmatprep.mubr.f32.mxu0 0.0
      %v1590 = vand.u32 %v1180, 4294901760
      %1591 = vmatmul.mubr.f32.gmra.mrb[0].mxu0 %v1590
      %v1592 = vpop.f32.mrb[0].mxu0
      %v1593 = vadd.f32 %v1399, %v1592
      %v1594 = vpop.f32.mrb[0].mxu0
      %1595 = vmatprep.mubr.f32.mxu0 0.0
      %v1596 = vand.u32 %v1183, 4294901760
      %1597 = vmatmul.mubr.f32.gmra.mrb[0].mxu0 %v1596
      %v1598 = vpop.f32.mrb[0].mxu0
      %v1599 = vadd.f32 %v1409, %v1598
      %v1600 = vpop.f32.mrb[0].mxu0
      %1601 = vmatprep.mubr.f32.mxu0 0.0
      %v1602 = vand.u32 %v1186, 4294901760
      %1603 = vmatmul.mubr.f32.gmra.mrb[0].mxu0 %v1602
      %v1604 = vpop.f32.mrb[0].mxu0
      %v1605 = vadd.f32 %v1419, %v1604
      %v1606 = vpop.f32.mrb[0].mxu0
      %1607 = vdwg.mxu0
      %1608 = vmatprep.subr.mxu0 0.0
      %v1609 = vand.u32 %v1127, 4294901760
      %v1610 = vsub.f32 %v1127, %v1609
      %1611 = vmatpush1.msra.mxu0 %v1610
      %1612 = vmatprep.subr.mxu0 0.0
      %v1613 = vand.u32 %v1128, 4294901760
      %v1614 = vsub.f32 %v1128, %v1613
      %1615 = vmatpush1.msra.mxu0 %v1614
      %1616 = vmatprep.subr.mxu0 0.0
      %v1617 = vand.u32 %v1129, 4294901760
      %v1618 = vsub.f32 %v1129, %v1617
      %1619 = vmatpush1.msra.mxu0 %v1618
      %1620 = vmatprep.subr.mxu0 0.0
      %v1621 = vand.u32 %v1130, 4294901760
      %v1622 = vsub.f32 %v1130, %v1621
      %1623 = vmatpush1.msra.mxu0 %v1622
      %1624 = vmatprep.subr.mxu0 0.0
      %v1625 = vand.u32 %v1190, 4294901760
      %v1626 = vsub.f32 %v1190, %v1625
      %1627 = vmatpush1.msra.mxu0 %v1626
      %1628 = vmatprep.subr.mxu0 0.0
      %1629 = vmatpush1.msra.mxu0 0.0
      %1630 = vmatprep.subr.mxu0 0.0
      %1631 = vmatpush1.msra.mxu0 0.0
      %1632 = vmatprep.subr.mxu0 0.0
      %1633 = vmatpush1.msra.mxu0 0.0
      %1634 = vmatprep.subr.mxu0 0.0
      %1635 = vmatpush1.msra.mxu0 0.0
      %1636 = vmatprep.subr.mxu0 0.0
      %1637 = vmatpush1.msra.mxu0 0.0
      %1638 = vmatprep.subr.mxu0 0.0
      %1639 = vmatpush1.msra.mxu0 0.0
      %1640 = vmatprep.subr.mxu0 0.0
      %1641 = vmatpush1.msra.mxu0 0.0
      %1642 = vmatprep.subr.mxu0 0.0
      %1643 = vmatpush1.msra.mxu0 0.0
      %1644 = vmatprep.subr.mxu0 0.0
      %1645 = vmatpush1.msra.mxu0 0.0
      %1646 = vmatprep.subr.mxu0 0.0
      %1647 = vmatpush1.msra.mxu0 0.0
      %1648 = vmatprep.subr.mxu0 0.0
      %1649 = vmatpush1.msra.mxu0 0.0
      %1650 = vmatprep.subr.mxu0 0.0
      %1651 = vmatpush1.msra.mxu0 0.0
      %1652 = vmatprep.subr.mxu0 0.0
      %1653 = vmatpush1.msra.mxu0 0.0
      %1654 = vmatprep.subr.mxu0 0.0
      %1655 = vmatpush1.msra.mxu0 0.0
      %1656 = vmatprep.subr.mxu0 0.0
      %1657 = vmatpush1.msra.mxu0 0.0
      %1658 = vmatprep.subr.mxu0 0.0
      %1659 = vmatpush1.msra.mxu0 0.0
      %1660 = vmatprep.subr.mxu0 0.0
      %1661 = vmatpush1.msra.mxu0 0.0
      %1662 = vmatprep.subr.mxu0 0.0
      %1663 = vmatpush1.msra.mxu0 0.0
      %1664 = vmatprep.subr.mxu0 0.0
      %1665 = vmatpush1.msra.mxu0 0.0
      %1666 = vmatprep.subr.mxu0 0.0
      %1667 = vmatpush1.msra.mxu0 0.0
      %1668 = vmatprep.subr.mxu0 0.0
      %1669 = vmatpush1.msra.mxu0 0.0
      %1670 = vmatprep.subr.mxu0 0.0
      %1671 = vmatpush1.msra.mxu0 0.0
      %1672 = vmatprep.subr.mxu0 0.0
      %1673 = vmatpush1.msra.mxu0 0.0
      %1674 = vmatprep.subr.mxu0 0.0
      %1675 = vmatpush1.msra.mxu0 0.0
      %1676 = vmatprep.subr.mxu0 0.0
      %1677 = vmatpush1.msra.mxu0 0.0
      %1678 = vmatprep.subr.mxu0 0.0
      %1679 = vmatpush1.msra.mxu0 0.0
      %1680 = vmatprep.subr.mxu0 0.0
      %1681 = vmatpush1.msra.mxu0 0.0
      %1682 = vmatprep.mubr.f32.mxu0 0.0
      %v1683 = vand.u32 %v1141, 4294901760
      %v1684 = vsub.f32 %v1141, %v1683
      %1685 = vmatmul.mubr.f32.gmra.mrb[0].mxu0 %v1684
      %v1686 = vpop.f32.mrb[0].mxu0
      %v1687 = vadd.f32 %v1515, %v1686
      %v1688 = vpop.f32.mrb[0].mxu0
      %1689 = vmatprep.mubr.f32.mxu0 0.0
      %v1690 = vand.u32 %v1144, 4294901760
      %v1691 = vsub.f32 %v1144, %v1690
      %1692 = vmatmul.mubr.f32.gmra.mrb[0].mxu0 %v1691
      %v1693 = vpop.f32.mrb[0].mxu0
      %v1694 = vadd.f32 %v1521, %v1693
      %v1695 = vpop.f32.mrb[0].mxu0
      %1696 = vmatprep.mubr.f32.mxu0 0.0
      %v1697 = vand.u32 %v1147, 4294901760
      %v1698 = vsub.f32 %v1147, %v1697
      %1699 = vmatmul.mubr.f32.gmra.mrb[0].mxu0 %v1698
      %v1700 = vpop.f32.mrb[0].mxu0
      %v1701 = vadd.f32 %v1527, %v1700
      %v1702 = vpop.f32.mrb[0].mxu0
      %1703 = vmatprep.mubr.f32.mxu0 0.0
      %v1704 = vand.u32 %v1150, 4294901760
      %v1705 = vsub.f32 %v1150, %v1704
      %1706 = vmatmul.mubr.f32.gmra.mrb[0].mxu0 %v1705
      %v1707 = vpop.f32.mrb[0].mxu0
      %v1708 = vadd.f32 %v1533, %v1707
      %v1709 = vpop.f32.mrb[0].mxu0
      %1710 = vmatprep.mubr.f32.mxu0 0.0
      %v1711 = vand.u32 %v1153, 4294901760
      %v1712 = vsub.f32 %v1153, %v1711
      %1713 = vmatmul.mubr.f32.gmra.mrb[0].mxu0 %v1712
      %v1714 = vpop.f32.mrb[0].mxu0
      %v1715 = vadd.f32 %v1539, %v1714
      %v1716 = vpop.f32.mrb[0].mxu0
      %1717 = vmatprep.mubr.f32.mxu0 0.0
      %v1718 = vand.u32 %v1156, 4294901760
      %v1719 = vsub.f32 %v1156, %v1718
      %1720 = vmatmul.mubr.f32.gmra.mrb[0].mxu0 %v1719
      %v1721 = vpop.f32.mrb[0].mxu0
      %v1722 = vadd.f32 %v1545, %v1721
      %v1723 = vpop.f32.mrb[0].mxu0
      %1724 = vmatprep.mubr.f32.mxu0 0.0
      %v1725 = vand.u32 %v1159, 4294901760
      %v1726 = vsub.f32 %v1159, %v1725
      %1727 = vmatmul.mubr.f32.gmra.mrb[0].mxu0 %v1726
      %v1728 = vpop.f32.mrb[0].mxu0
      %v1729 = vadd.f32 %v1551, %v1728
      %v1730 = vpop.f32.mrb[0].mxu0
      %1731 = vmatprep.mubr.f32.mxu0 0.0
      %v1732 = vand.u32 %v1162, 4294901760
      %v1733 = vsub.f32 %v1162, %v1732
      %1734 = vmatmul.mubr.f32.gmra.mrb[0].mxu0 %v1733
      %v1735 = vpop.f32.mrb[0].mxu0
      %v1736 = vadd.f32 %v1557, %v1735
      %v1737 = vpop.f32.mrb[0].mxu0
      %1738 = vmatprep.mubr.f32.mxu0 0.0
      %v1739 = vand.u32 %v1165, 4294901760
      %v1740 = vsub.f32 %v1165, %v1739
      %1741 = vmatmul.mubr.f32.gmra.mrb[0].mxu0 %v1740
      %v1742 = vpop.f32.mrb[0].mxu0
      %v1743 = vadd.f32 %v1563, %v1742
      %v1744 = vpop.f32.mrb[0].mxu0
      %1745 = vmatprep.mubr.f32.mxu0 0.0
      %v1746 = vand.u32 %v1168, 4294901760
      %v1747 = vsub.f32 %v1168, %v1746
      %1748 = vmatmul.mubr.f32.gmra.mrb[0].mxu0 %v1747
      %v1749 = vpop.f32.mrb[0].mxu0
      %v1750 = vadd.f32 %v1569, %v1749
      %v1751 = vpop.f32.mrb[0].mxu0
      %1752 = vmatprep.mubr.f32.mxu0 0.0
      %v1753 = vand.u32 %v1171, 4294901760
      %v1754 = vsub.f32 %v1171, %v1753
      %1755 = vmatmul.mubr.f32.gmra.mrb[0].mxu0 %v1754
      %v1756 = vpop.f32.mrb[0].mxu0
      %v1757 = vadd.f32 %v1575, %v1756
      %v1758 = vpop.f32.mrb[0].mxu0
      %1759 = vmatprep.mubr.f32.mxu0 0.0
      %v1760 = vand.u32 %v1174, 4294901760
      %v1761 = vsub.f32 %v1174, %v1760
      %1762 = vmatmul.mubr.f32.gmra.mrb[0].mxu0 %v1761
      %v1763 = vpop.f32.mrb[0].mxu0
      %v1764 = vadd.f32 %v1581, %v1763
      %v1765 = vpop.f32.mrb[0].mxu0
      %1766 = vmatprep.mubr.f32.mxu0 0.0
      %v1767 = vand.u32 %v1177, 4294901760
      %v1768 = vsub.f32 %v1177, %v1767
      %1769 = vmatmul.mubr.f32.gmra.mrb[0].mxu0 %v1768
      %v1770 = vpop.f32.mrb[0].mxu0
      %v1771 = vadd.f32 %v1587, %v1770
      %v1772 = vpop.f32.mrb[0].mxu0
      %1773 = vmatprep.mubr.f32.mxu0 0.0
      %v1774 = vand.u32 %v1180, 4294901760
      %v1775 = vsub.f32 %v1180, %v1774
      %1776 = vmatmul.mubr.f32.gmra.mrb[0].mxu0 %v1775
      %v1777 = vpop.f32.mrb[0].mxu0
      %v1778 = vadd.f32 %v1593, %v1777
      %v1779 = vpop.f32.mrb[0].mxu0
      %1780 = vmatprep.mubr.f32.mxu0 0.0
      %v1781 = vand.u32 %v1183, 4294901760
      %v1782 = vsub.f32 %v1183, %v1781
      %1783 = vmatmul.mubr.f32.gmra.mrb[0].mxu0 %v1782
      %v1784 = vpop.f32.mrb[0].mxu0
      %v1785 = vadd.f32 %v1599, %v1784
      %v1786 = vpop.f32.mrb[0].mxu0
      %1787 = vmatprep.mubr.f32.mxu0 0.0
      %v1788 = vand.u32 %v1186, 4294901760
      %v1789 = vsub.f32 %v1186, %v1788
      %1790 = vmatmul.mubr.f32.gmra.mrb[0].mxu0 %v1789
      %v1791 = vpop.f32.mrb[0].mxu0
      %v1792 = vadd.f32 %v1605, %v1791
      %v1793 = vpop.f32.mrb[0].mxu0
      %1794 = vdwg.mxu0
      %1795 = vmatprep.subr.mxu0 0.0
      %v1796 = vand.u32 %v1127, 4294901760
      %1797 = vmatpush1.msra.mxu0 %v1796
      %1798 = vmatprep.subr.mxu0 0.0
      %v1799 = vand.u32 %v1128, 4294901760
      %1800 = vmatpush1.msra.mxu0 %v1799
      %1801 = vmatprep.subr.mxu0 0.0
      %v1802 = vand.u32 %v1129, 4294901760
      %1803 = vmatpush1.msra.mxu0 %v1802
      %1804 = vmatprep.subr.mxu0 0.0
      %v1805 = vand.u32 %v1130, 4294901760
      %1806 = vmatpush1.msra.mxu0 %v1805
      %1807 = vmatprep.subr.mxu0 0.0
      %v1808 = vand.u32 %v1190, 4294901760
      %1809 = vmatpush1.msra.mxu0 %v1808
      %1810 = vmatprep.subr.mxu0 0.0
      %1811 = vmatpush1.msra.mxu0 0.0
      %1812 = vmatprep.subr.mxu0 0.0
      %1813 = vmatpush1.msra.mxu0 0.0
      %1814 = vmatprep.subr.mxu0 0.0
      %1815 = vmatpush1.msra.mxu0 0.0
      %1816 = vmatprep.subr.mxu0 0.0
      %1817 = vmatpush1.msra.mxu0 0.0
      %1818 = vmatprep.subr.mxu0 0.0
      %1819 = vmatpush1.msra.mxu0 0.0
      %1820 = vmatprep.subr.mxu0 0.0
      %1821 = vmatpush1.msra.mxu0 0.0
      %1822 = vmatprep.subr.mxu0 0.0
      %1823 = vmatpush1.msra.mxu0 0.0
      %1824 = vmatprep.subr.mxu0 0.0
      %1825 = vmatpush1.msra.mxu0 0.0
      %1826 = vmatprep.subr.mxu0 0.0
      %1827 = vmatpush1.msra.mxu0 0.0
      %1828 = vmatprep.subr.mxu0 0.0
      %1829 = vmatpush1.msra.mxu0 0.0
      %1830 = vmatprep.subr.mxu0 0.0
      %1831 = vmatpush1.msra.mxu0 0.0
      %1832 = vmatprep.subr.mxu0 0.0
      %1833 = vmatpush1.msra.mxu0 0.0
      %1834 = vmatprep.subr.mxu0 0.0
      %1835 = vmatpush1.msra.mxu0 0.0
      %1836 = vmatprep.subr.mxu0 0.0
      %1837 = vmatpush1.msra.mxu0 0.0
      %1838 = vmatprep.subr.mxu0 0.0
      %1839 = vmatpush1.msra.mxu0 0.0
      %1840 = vmatprep.subr.mxu0 0.0
      %1841 = vmatpush1.msra.mxu0 0.0
      %1842 = vmatprep.subr.mxu0 0.0
      %1843 = vmatpush1.msra.mxu0 0.0
      %1844 = vmatprep.subr.mxu0 0.0
      %1845 = vmatpush1.msra.mxu0 0.0
      %1846 = vmatprep.subr.mxu0 0.0
      %1847 = vmatpush1.msra.mxu0 0.0
      %1848 = vmatprep.subr.mxu0 0.0
      %1849 = vmatpush1.msra.mxu0 0.0
      %1850 = vmatprep.subr.mxu0 0.0
      %1851 = vmatpush1.msra.mxu0 0.0
      %1852 = vmatprep.subr.mxu0 0.0
      %1853 = vmatpush1.msra.mxu0 0.0
      %1854 = vmatprep.subr.mxu0 0.0
      %1855 = vmatpush1.msra.mxu0 0.0
      %1856 = vmatprep.subr.mxu0 0.0
      %1857 = vmatpush1.msra.mxu0 0.0
      %1858 = vmatprep.subr.mxu0 0.0
      %1859 = vmatpush1.msra.mxu0 0.0
      %1860 = vmatprep.subr.mxu0 0.0
      %1861 = vmatpush1.msra.mxu0 0.0
      %1862 = vmatprep.subr.mxu0 0.0
      %1863 = vmatpush1.msra.mxu0 0.0
      %1864 = vmatprep.mubr.f32.mxu0 0.0
      %v1865 = vand.u32 %v1141, 4294901760
      %v1866 = vsub.f32 %v1141, %v1865
      %v1867 = vand.u32 %v1866, 4294901760
      %1868 = vmatmul.mubr.f32.gmra.mrb[0].mxu0 %v1867
      %v1869 = vpop.f32.mrb[0].mxu0
      %v1870 = vadd.f32 %v1687, %v1869
      %v1871 = vpop.f32.mrb[0].mxu0
      %1872 = vmatprep.mubr.f32.mxu0 0.0
      %v1873 = vand.u32 %v1144, 4294901760
      %v1874 = vsub.f32 %v1144, %v1873
      %v1875 = vand.u32 %v1874, 4294901760
      %1876 = vmatmul.mubr.f32.gmra.mrb[0].mxu0 %v1875
      %v1877 = vpop.f32.mrb[0].mxu0
      %v1878 = vadd.f32 %v1694, %v1877
      %v1879 = vpop.f32.mrb[0].mxu0
      %1880 = vmatprep.mubr.f32.mxu0 0.0
      %v1881 = vand.u32 %v1147, 4294901760
      %v1882 = vsub.f32 %v1147, %v1881
      %v1883 = vand.u32 %v1882, 4294901760
      %1884 = vmatmul.mubr.f32.gmra.mrb[0].mxu0 %v1883
      %v1885 = vpop.f32.mrb[0].mxu0
      %v1886 = vadd.f32 %v1701, %v1885
      %v1887 = vpop.f32.mrb[0].mxu0
      %1888 = vmatprep.mubr.f32.mxu0 0.0
      %v1889 = vand.u32 %v1150, 4294901760
      %v1890 = vsub.f32 %v1150, %v1889
      %v1891 = vand.u32 %v1890, 4294901760
      %1892 = vmatmul.mubr.f32.gmra.mrb[0].mxu0 %v1891
      %v1893 = vpop.f32.mrb[0].mxu0
      %v1894 = vadd.f32 %v1708, %v1893
      %v1895 = vpop.f32.mrb[0].mxu0
      %1896 = vmatprep.mubr.f32.mxu0 0.0
      %v1897 = vand.u32 %v1153, 4294901760
      %v1898 = vsub.f32 %v1153, %v1897
      %v1899 = vand.u32 %v1898, 4294901760
      %1900 = vmatmul.mubr.f32.gmra.mrb[0].mxu0 %v1899
      %v1901 = vpop.f32.mrb[0].mxu0
      %v1902 = vadd.f32 %v1715, %v1901
      %v1903 = vpop.f32.mrb[0].mxu0
      %1904 = vmatprep.mubr.f32.mxu0 0.0
      %v1905 = vand.u32 %v1156, 4294901760
      %v1906 = vsub.f32 %v1156, %v1905
      %v1907 = vand.u32 %v1906, 4294901760
      %1908 = vmatmul.mubr.f32.gmra.mrb[0].mxu0 %v1907
      %v1909 = vpop.f32.mrb[0].mxu0
      %v1910 = vadd.f32 %v1722, %v1909
      %v1911 = vpop.f32.mrb[0].mxu0
      %1912 = vmatprep.mubr.f32.mxu0 0.0
      %v1913 = vand.u32 %v1159, 4294901760
      %v1914 = vsub.f32 %v1159, %v1913
      %v1915 = vand.u32 %v1914, 4294901760
      %1916 = vmatmul.mubr.f32.gmra.mrb[0].mxu0 %v1915
      %v1917 = vpop.f32.mrb[0].mxu0
      %v1918 = vadd.f32 %v1729, %v1917
      %v1919 = vpop.f32.mrb[0].mxu0
      %1920 = vmatprep.mubr.f32.mxu0 0.0
      %v1921 = vand.u32 %v1162, 4294901760
      %v1922 = vsub.f32 %v1162, %v1921
      %v1923 = vand.u32 %v1922, 4294901760
      %1924 = vmatmul.mubr.f32.gmra.mrb[0].mxu0 %v1923
      %v1925 = vpop.f32.mrb[0].mxu0
      %v1926 = vadd.f32 %v1736, %v1925
      %v1927 = vpop.f32.mrb[0].mxu0
      %1928 = vmatprep.mubr.f32.mxu0 0.0
      %v1929 = vand.u32 %v1165, 4294901760
      %v1930 = vsub.f32 %v1165, %v1929
      %v1931 = vand.u32 %v1930, 4294901760
      %1932 = vmatmul.mubr.f32.gmra.mrb[0].mxu0 %v1931
      %v1933 = vpop.f32.mrb[0].mxu0
      %v1934 = vadd.f32 %v1743, %v1933
      %v1935 = vpop.f32.mrb[0].mxu0
      %1936 = vmatprep.mubr.f32.mxu0 0.0
      %v1937 = vand.u32 %v1168, 4294901760
      %v1938 = vsub.f32 %v1168, %v1937
      %v1939 = vand.u32 %v1938, 4294901760
      %1940 = vmatmul.mubr.f32.gmra.mrb[0].mxu0 %v1939
      %v1941 = vpop.f32.mrb[0].mxu0
      %v1942 = vadd.f32 %v1750, %v1941
      %v1943 = vpop.f32.mrb[0].mxu0
      %1944 = vmatprep.mubr.f32.mxu0 0.0
      %v1945 = vand.u32 %v1171, 4294901760
      %v1946 = vsub.f32 %v1171, %v1945
      %v1947 = vand.u32 %v1946, 4294901760
      %1948 = vmatmul.mubr.f32.gmra.mrb[0].mxu0 %v1947
      %v1949 = vpop.f32.mrb[0].mxu0
      %v1950 = vadd.f32 %v1757, %v1949
      %v1951 = vpop.f32.mrb[0].mxu0
      %1952 = vmatprep.mubr.f32.mxu0 0.0
      %v1953 = vand.u32 %v1174, 4294901760
      %v1954 = vsub.f32 %v1174, %v1953
      %v1955 = vand.u32 %v1954, 4294901760
      %1956 = vmatmul.mubr.f32.gmra.mrb[0].mxu0 %v1955
      %v1957 = vpop.f32.mrb[0].mxu0
      %v1958 = vadd.f32 %v1764, %v1957
      %v1959 = vpop.f32.mrb[0].mxu0
      %1960 = vmatprep.mubr.f32.mxu0 0.0
      %v1961 = vand.u32 %v1177, 4294901760
      %v1962 = vsub.f32 %v1177, %v1961
      %v1963 = vand.u32 %v1962, 4294901760
      %1964 = vmatmul.mubr.f32.gmra.mrb[0].mxu0 %v1963
      %v1965 = vpop.f32.mrb[0].mxu0
      %v1966 = vadd.f32 %v1771, %v1965
      %v1967 = vpop.f32.mrb[0].mxu0
      %1968 = vmatprep.mubr.f32.mxu0 0.0
      %v1969 = vand.u32 %v1180, 4294901760
      %v1970 = vsub.f32 %v1180, %v1969
      %v1971 = vand.u32 %v1970, 4294901760
      %1972 = vmatmul.mubr.f32.gmra.mrb[0].mxu0 %v1971
      %v1973 = vpop.f32.mrb[0].mxu0
      %v1974 = vadd.f32 %v1778, %v1973
      %v1975 = vpop.f32.mrb[0].mxu0
      %1976 = vmatprep.mubr.f32.mxu0 0.0
      %v1977 = vand.u32 %v1183, 4294901760
      %v1978 = vsub.f32 %v1183, %v1977
      %v1979 = vand.u32 %v1978, 4294901760
      %1980 = vmatmul.mubr.f32.gmra.mrb[0].mxu0 %v1979
      %v1981 = vpop.f32.mrb[0].mxu0
      %v1982 = vadd.f32 %v1785, %v1981
      %v1983 = vpop.f32.mrb[0].mxu0
      %1984 = vmatprep.mubr.f32.mxu0 0.0
      %v1985 = vand.u32 %v1186, 4294901760
      %v1986 = vsub.f32 %v1186, %v1985
      %v1987 = vand.u32 %v1986, 4294901760
      %1988 = vmatmul.mubr.f32.gmra.mrb[0].mxu0 %v1987
      %v1989 = vpop.f32.mrb[0].mxu0
      %v1990 = vadd.f32 %v1792, %v1989
      %v1991 = vpop.f32.mrb[0].mxu0
      %1992 = vdwg.mxu0
      %1993 = vmatprep.subr.mxu0 0.0
      %v1994 = vand.u32 %v1127, 4294901760
      %v1995 = vsub.f32 %v1127, %v1994
      %v1996 = vand.u32 %v1995, 4294901760
      %1997 = vmatpush1.msra.mxu0 %v1996
      %1998 = vmatprep.subr.mxu0 0.0
      %v1999 = vand.u32 %v1128, 4294901760
      %v2000 = vsub.f32 %v1128, %v1999
      %v2001 = vand.u32 %v2000, 4294901760
      %2002 = vmatpush1.msra.mxu0 %v2001
      %2003 = vmatprep.subr.mxu0 0.0
      %v2004 = vand.u32 %v1129, 4294901760
      %v2005 = vsub.f32 %v1129, %v2004
      %v2006 = vand.u32 %v2005, 4294901760
      %2007 = vmatpush1.msra.mxu0 %v2006
      %2008 = vmatprep.subr.mxu0 0.0
      %v2009 = vand.u32 %v1130, 4294901760
      %v2010 = vsub.f32 %v1130, %v2009
      %v2011 = vand.u32 %v2010, 4294901760
      %2012 = vmatpush1.msra.mxu0 %v2011
      %2013 = vmatprep.subr.mxu0 0.0
      %v2014 = vand.u32 %v1190, 4294901760
      %v2015 = vsub.f32 %v1190, %v2014
      %v2016 = vand.u32 %v2015, 4294901760
      %2017 = vmatpush1.msra.mxu0 %v2016
      %2018 = vmatprep.subr.mxu0 0.0
      %2019 = vmatpush1.msra.mxu0 0.0
      %2020 = vmatprep.subr.mxu0 0.0
      %2021 = vmatpush1.msra.mxu0 0.0
      %2022 = vmatprep.subr.mxu0 0.0
      %2023 = vmatpush1.msra.mxu0 0.0
      %2024 = vmatprep.subr.mxu0 0.0
      %2025 = vmatpush1.msra.mxu0 0.0
      %2026 = vmatprep.subr.mxu0 0.0
      %2027 = vmatpush1.msra.mxu0 0.0
      %2028 = vmatprep.subr.mxu0 0.0
      %2029 = vmatpush1.msra.mxu0 0.0
      %2030 = vmatprep.subr.mxu0 0.0
      %2031 = vmatpush1.msra.mxu0 0.0
      %2032 = vmatprep.subr.mxu0 0.0
      %2033 = vmatpush1.msra.mxu0 0.0
      %2034 = vmatprep.subr.mxu0 0.0
      %2035 = vmatpush1.msra.mxu0 0.0
      %2036 = vmatprep.subr.mxu0 0.0
      %2037 = vmatpush1.msra.mxu0 0.0
      %2038 = vmatprep.subr.mxu0 0.0
      %2039 = vmatpush1.msra.mxu0 0.0
      %2040 = vmatprep.subr.mxu0 0.0
      %2041 = vmatpush1.msra.mxu0 0.0
      %2042 = vmatprep.subr.mxu0 0.0
      %2043 = vmatpush1.msra.mxu0 0.0
      %2044 = vmatprep.subr.mxu0 0.0
      %2045 = vmatpush1.msra.mxu0 0.0
      %2046 = vmatprep.subr.mxu0 0.0
      %2047 = vmatpush1.msra.mxu0 0.0
      %2048 = vmatprep.subr.mxu0 0.0
      %2049 = vmatpush1.msra.mxu0 0.0
      %2050 = vmatprep.subr.mxu0 0.0
      %2051 = vmatpush1.msra.mxu0 0.0
      %2052 = vmatprep.subr.mxu0 0.0
      %2053 = vmatpush1.msra.mxu0 0.0
      %2054 = vmatprep.subr.mxu0 0.0
      %2055 = vmatpush1.msra.mxu0 0.0
      %2056 = vmatprep.subr.mxu0 0.0
      %2057 = vmatpush1.msra.mxu0 0.0
      %2058 = vmatprep.subr.mxu0 0.0
      %2059 = vmatpush1.msra.mxu0 0.0
      %2060 = vmatprep.subr.mxu0 0.0
      %2061 = vmatpush1.msra.mxu0 0.0
      %2062 = vmatprep.subr.mxu0 0.0
      %2063 = vmatpush1.msra.mxu0 0.0
      %2064 = vmatprep.subr.mxu0 0.0
      %2065 = vmatpush1.msra.mxu0 0.0
      %2066 = vmatprep.subr.mxu0 0.0
      %2067 = vmatpush1.msra.mxu0 0.0
      %2068 = vmatprep.subr.mxu0 0.0
      %2069 = vmatpush1.msra.mxu0 0.0
      %2070 = vmatprep.subr.mxu0 0.0
      %2071 = vmatpush1.msra.mxu0 0.0
      %2072 = vmatprep.mubr.f32.mxu0 0.0
      %v2073 = vand.u32 %v1141, 4294901760
      %2074 = vmatmul.mubr.f32.gmra.mrb[0].mxu0 %v2073
      %v2075 = vpop.f32.mrb[0].mxu0
      %v2076 = vadd.f32 %v1870, %v2075
      %v2077 = vpop.f32.mrb[0].mxu0
      %2078 = vmatprep.mubr.f32.mxu0 0.0
      %v2079 = vand.u32 %v1144, 4294901760
      %2080 = vmatmul.mubr.f32.gmra.mrb[0].mxu0 %v2079
      %v2081 = vpop.f32.mrb[0].mxu0
      %v2082 = vadd.f32 %v1878, %v2081
      %v2083 = vpop.f32.mrb[0].mxu0
      %2084 = vmatprep.mubr.f32.mxu0 0.0
      %v2085 = vand.u32 %v1147, 4294901760
      %2086 = vmatmul.mubr.f32.gmra.mrb[0].mxu0 %v2085
      %v2087 = vpop.f32.mrb[0].mxu0
      %v2088 = vadd.f32 %v1886, %v2087
      %v2089 = vpop.f32.mrb[0].mxu0
      %2090 = vmatprep.mubr.f32.mxu0 0.0
      %v2091 = vand.u32 %v1150, 4294901760
      %2092 = vmatmul.mubr.f32.gmra.mrb[0].mxu0 %v2091
      %v2093 = vpop.f32.mrb[0].mxu0
      %v2094 = vadd.f32 %v1894, %v2093
      %v2095 = vpop.f32.mrb[0].mxu0
      %2096 = vmatprep.mubr.f32.mxu0 0.0
      %v2097 = vand.u32 %v1153, 4294901760
      %2098 = vmatmul.mubr.f32.gmra.mrb[0].mxu0 %v2097
      %v2099 = vpop.f32.mrb[0].mxu0
      %v2100 = vadd.f32 %v1902, %v2099
      %v2101 = vpop.f32.mrb[0].mxu0
      %2102 = vmatprep.mubr.f32.mxu0 0.0
      %v2103 = vand.u32 %v1156, 4294901760
      %2104 = vmatmul.mubr.f32.gmra.mrb[0].mxu0 %v2103
      %v2105 = vpop.f32.mrb[0].mxu0
      %v2106 = vadd.f32 %v1910, %v2105
      %v2107 = vpop.f32.mrb[0].mxu0
      %2108 = vmatprep.mubr.f32.mxu0 0.0
      %v2109 = vand.u32 %v1159, 4294901760
      %2110 = vmatmul.mubr.f32.gmra.mrb[0].mxu0 %v2109
      %v2111 = vpop.f32.mrb[0].mxu0
      %v2112 = vadd.f32 %v1918, %v2111
      %v2113 = vpop.f32.mrb[0].mxu0
      %2114 = vmatprep.mubr.f32.mxu0 0.0
      %v2115 = vand.u32 %v1162, 4294901760
      %2116 = vmatmul.mubr.f32.gmra.mrb[0].mxu0 %v2115
      %v2117 = vpop.f32.mrb[0].mxu0
      %v2118 = vadd.f32 %v1926, %v2117
      %v2119 = vpop.f32.mrb[0].mxu0
      %2120 = vmatprep.mubr.f32.mxu0 0.0
      %v2121 = vand.u32 %v1165, 4294901760
      %2122 = vmatmul.mubr.f32.gmra.mrb[0].mxu0 %v2121
      %v2123 = vpop.f32.mrb[0].mxu0
      %v2124 = vadd.f32 %v1934, %v2123
      %v2125 = vpop.f32.mrb[0].mxu0
      %2126 = vmatprep.mubr.f32.mxu0 0.0
      %v2127 = vand.u32 %v1168, 4294901760
      %2128 = vmatmul.mubr.f32.gmra.mrb[0].mxu0 %v2127
      %v2129 = vpop.f32.mrb[0].mxu0
      %v2130 = vadd.f32 %v1942, %v2129
      %v2131 = vpop.f32.mrb[0].mxu0
      %2132 = vmatprep.mubr.f32.mxu0 0.0
      %v2133 = vand.u32 %v1171, 4294901760
      %2134 = vmatmul.mubr.f32.gmra.mrb[0].mxu0 %v2133
      %v2135 = vpop.f32.mrb[0].mxu0
      %v2136 = vadd.f32 %v1950, %v2135
      %v2137 = vpop.f32.mrb[0].mxu0
      %2138 = vmatprep.mubr.f32.mxu0 0.0
      %v2139 = vand.u32 %v1174, 4294901760
      %2140 = vmatmul.mubr.f32.gmra.mrb[0].mxu0 %v2139
      %v2141 = vpop.f32.mrb[0].mxu0
      %v2142 = vadd.f32 %v1958, %v2141
      %v2143 = vpop.f32.mrb[0].mxu0
      %2144 = vmatprep.mubr.f32.mxu0 0.0
      %v2145 = vand.u32 %v1177, 4294901760
      %2146 = vmatmul.mubr.f32.gmra.mrb[0].mxu0 %v2145
      %v2147 = vpop.f32.mrb[0].mxu0
      %v2148 = vadd.f32 %v1966, %v2147
      %v2149 = vpop.f32.mrb[0].mxu0
      %2150 = vmatprep.mubr.f32.mxu0 0.0
      %v2151 = vand.u32 %v1180, 4294901760
      %2152 = vmatmul.mubr.f32.gmra.mrb[0].mxu0 %v2151
      %v2153 = vpop.f32.mrb[0].mxu0
      %v2154 = vadd.f32 %v1974, %v2153
      %v2155 = vpop.f32.mrb[0].mxu0
      %2156 = vmatprep.mubr.f32.mxu0 0.0
      %v2157 = vand.u32 %v1183, 4294901760
      %2158 = vmatmul.mubr.f32.gmra.mrb[0].mxu0 %v2157
      %v2159 = vpop.f32.mrb[0].mxu0
      %v2160 = vadd.f32 %v1982, %v2159
      %v2161 = vpop.f32.mrb[0].mxu0
      %2162 = vmatprep.mubr.f32.mxu0 0.0
      %v2163 = vand.u32 %v1186, 4294901760
      %2164 = vmatmul.mubr.f32.gmra.mrb[0].mxu0 %v2163
      %v2165 = vpop.f32.mrb[0].mxu0
      %v2166 = vadd.f32 %v1990, %v2165
      %v2167 = vpop.f32.mrb[0].mxu0
      %2168 = vdwg.mxu0
      %2169 = vmatprep.subr.mxu0 0.0
      %v2170 = vand.u32 %v1127, 4294901760
      %2171 = vmatpush1.msra.mxu0 %v2170
      %2172 = vmatprep.subr.mxu0 0.0
      %v2173 = vand.u32 %v1128, 4294901760
      %2174 = vmatpush1.msra.mxu0 %v2173
      %2175 = vmatprep.subr.mxu0 0.0
      %v2176 = vand.u32 %v1129, 4294901760
      %2177 = vmatpush1.msra.mxu0 %v2176
      %2178 = vmatprep.subr.mxu0 0.0
      %v2179 = vand.u32 %v1130, 4294901760
      %2180 = vmatpush1.msra.mxu0 %v2179
      %2181 = vmatprep.subr.mxu0 0.0
      %v2182 = vand.u32 %v1190, 4294901760
      %2183 = vmatpush1.msra.mxu0 %v2182
      %2184 = vmatprep.subr.mxu0 0.0
      %2185 = vmatpush1.msra.mxu0 0.0
      %2186 = vmatprep.subr.mxu0 0.0
      %2187 = vmatpush1.msra.mxu0 0.0
      %2188 = vmatprep.subr.mxu0 0.0
      %2189 = vmatpush1.msra.mxu0 0.0
      %2190 = vmatprep.subr.mxu0 0.0
      %2191 = vmatpush1.msra.mxu0 0.0
      %2192 = vmatprep.subr.mxu0 0.0
      %2193 = vmatpush1.msra.mxu0 0.0
      %2194 = vmatprep.subr.mxu0 0.0
      %2195 = vmatpush1.msra.mxu0 0.0
      %2196 = vmatprep.subr.mxu0 0.0
      %2197 = vmatpush1.msra.mxu0 0.0
      %2198 = vmatprep.subr.mxu0 0.0
      %2199 = vmatpush1.msra.mxu0 0.0
      %2200 = vmatprep.subr.mxu0 0.0
      %2201 = vmatpush1.msra.mxu0 0.0
      %2202 = vmatprep.subr.mxu0 0.0
      %2203 = vmatpush1.msra.mxu0 0.0
      %2204 = vmatprep.subr.mxu0 0.0
      %2205 = vmatpush1.msra.mxu0 0.0
      %2206 = vmatprep.subr.mxu0 0.0
      %2207 = vmatpush1.msra.mxu0 0.0
      %2208 = vmatprep.subr.mxu0 0.0
      %2209 = vmatpush1.msra.mxu0 0.0
      %2210 = vmatprep.subr.mxu0 0.0
      %2211 = vmatpush1.msra.mxu0 0.0
      %2212 = vmatprep.subr.mxu0 0.0
      %2213 = vmatpush1.msra.mxu0 0.0
      %2214 = vmatprep.subr.mxu0 0.0
      %2215 = vmatpush1.msra.mxu0 0.0
      %2216 = vmatprep.subr.mxu0 0.0
      %2217 = vmatpush1.msra.mxu0 0.0
      %2218 = vmatprep.subr.mxu0 0.0
      %2219 = vmatpush1.msra.mxu0 0.0
      %2220 = vmatprep.subr.mxu0 0.0
      %2221 = vmatpush1.msra.mxu0 0.0
      %2222 = vmatprep.subr.mxu0 0.0
      %2223 = vmatpush1.msra.mxu0 0.0
      %2224 = vmatprep.subr.mxu0 0.0
      %2225 = vmatpush1.msra.mxu0 0.0
      %2226 = vmatprep.subr.mxu0 0.0
      %2227 = vmatpush1.msra.mxu0 0.0
      %2228 = vmatprep.subr.mxu0 0.0
      %2229 = vmatpush1.msra.mxu0 0.0
      %2230 = vmatprep.subr.mxu0 0.0
      %2231 = vmatpush1.msra.mxu0 0.0
      %2232 = vmatprep.subr.mxu0 0.0
      %2233 = vmatpush1.msra.mxu0 0.0
      %2234 = vmatprep.subr.mxu0 0.0
      %2235 = vmatpush1.msra.mxu0 0.0
      %2236 = vmatprep.subr.mxu0 0.0
      %2237 = vmatpush1.msra.mxu0 0.0
      %2238 = vmatprep.mubr.f32.mxu0 0.0
      %v2239 = vand.u32 %v1141, 4294901760
      %2240 = vmatmul.mubr.f32.gmra.mrb[0].mxu0 %v2239
      %v2241 = vpop.f32.mrb[0].mxu0
      %v2242 = vadd.f32 %v2076, %v2241
      %v2243 = vpop.f32.mrb[0].mxu0
      %2244 = vmatprep.mubr.f32.mxu0 0.0
      %v2245 = vand.u32 %v1144, 4294901760
      %2246 = vmatmul.mubr.f32.gmra.mrb[0].mxu0 %v2245
      %v2247 = vpop.f32.mrb[0].mxu0
      %v2248 = vadd.f32 %v2082, %v2247
      %v2249 = vpop.f32.mrb[0].mxu0
      %2250 = vmatprep.mubr.f32.mxu0 0.0
      %v2251 = vand.u32 %v1147, 4294901760
      %2252 = vmatmul.mubr.f32.gmra.mrb[0].mxu0 %v2251
      %v2253 = vpop.f32.mrb[0].mxu0
      %v2254 = vadd.f32 %v2088, %v2253
      %v2255 = vpop.f32.mrb[0].mxu0
      %2256 = vmatprep.mubr.f32.mxu0 0.0
      %v2257 = vand.u32 %v1150, 4294901760
      %2258 = vmatmul.mubr.f32.gmra.mrb[0].mxu0 %v2257
      %v2259 = vpop.f32.mrb[0].mxu0
      %v2260 = vadd.f32 %v2094, %v2259
      %v2261 = vpop.f32.mrb[0].mxu0
      %2262 = vmatprep.mubr.f32.mxu0 0.0
      %v2263 = vand.u32 %v1153, 4294901760
      %2264 = vmatmul.mubr.f32.gmra.mrb[0].mxu0 %v2263
      %v2265 = vpop.f32.mrb[0].mxu0
      %v2266 = vadd.f32 %v2100, %v2265
      %v2267 = vpop.f32.mrb[0].mxu0
      %2268 = vmatprep.mubr.f32.mxu0 0.0
      %v2269 = vand.u32 %v1156, 4294901760
      %2270 = vmatmul.mubr.f32.gmra.mrb[0].mxu0 %v2269
      %v2271 = vpop.f32.mrb[0].mxu0
      %v2272 = vadd.f32 %v2106, %v2271
      %v2273 = vpop.f32.mrb[0].mxu0
      %2274 = vmatprep.mubr.f32.mxu0 0.0
      %v2275 = vand.u32 %v1159, 4294901760
      %2276 = vmatmul.mubr.f32.gmra.mrb[0].mxu0 %v2275
      %v2277 = vpop.f32.mrb[0].mxu0
      %v2278 = vadd.f32 %v2112, %v2277
      %v2279 = vpop.f32.mrb[0].mxu0
      %2280 = vmatprep.mubr.f32.mxu0 0.0
      %v2281 = vand.u32 %v1162, 4294901760
      %2282 = vmatmul.mubr.f32.gmra.mrb[0].mxu0 %v2281
      %v2283 = vpop.f32.mrb[0].mxu0
      %v2284 = vadd.f32 %v2118, %v2283
      %v2285 = vpop.f32.mrb[0].mxu0
      %2286 = vmatprep.mubr.f32.mxu0 0.0
      %v2287 = vand.u32 %v1165, 4294901760
      %2288 = vmatmul.mubr.f32.gmra.mrb[0].mxu0 %v2287
      %v2289 = vpop.f32.mrb[0].mxu0
      %v2290 = vadd.f32 %v2124, %v2289
      %v2291 = vpop.f32.mrb[0].mxu0
      %2292 = vmatprep.mubr.f32.mxu0 0.0
      %v2293 = vand.u32 %v1168, 4294901760
      %2294 = vmatmul.mubr.f32.gmra.mrb[0].mxu0 %v2293
      %v2295 = vpop.f32.mrb[0].mxu0
      %v2296 = vadd.f32 %v2130, %v2295
      %v2297 = vpop.f32.mrb[0].mxu0
      %2298 = vmatprep.mubr.f32.mxu0 0.0
      %v2299 = vand.u32 %v1171, 4294901760
      %2300 = vmatmul.mubr.f32.gmra.mrb[0].mxu0 %v2299
      %v2301 = vpop.f32.mrb[0].mxu0
      %v2302 = vadd.f32 %v2136, %v2301
      %v2303 = vpop.f32.mrb[0].mxu0
      %2304 = vmatprep.mubr.f32.mxu0 0.0
      %v2305 = vand.u32 %v1174, 4294901760
      %2306 = vmatmul.mubr.f32.gmra.mrb[0].mxu0 %v2305
      %v2307 = vpop.f32.mrb[0].mxu0
      %v2308 = vadd.f32 %v2142, %v2307
      %v2309 = vpop.f32.mrb[0].mxu0
      %2310 = vmatprep.mubr.f32.mxu0 0.0
      %v2311 = vand.u32 %v1177, 4294901760
      %2312 = vmatmul.mubr.f32.gmra.mrb[0].mxu0 %v2311
      %v2313 = vpop.f32.mrb[0].mxu0
      %v2314 = vadd.f32 %v2148, %v2313
      %v2315 = vpop.f32.mrb[0].mxu0
      %2316 = vmatprep.mubr.f32.mxu0 0.0
      %v2317 = vand.u32 %v1180, 4294901760
      %2318 = vmatmul.mubr.f32.gmra.mrb[0].mxu0 %v2317
      %v2319 = vpop.f32.mrb[0].mxu0
      %v2320 = vadd.f32 %v2154, %v2319
      %v2321 = vpop.f32.mrb[0].mxu0
      %2322 = vmatprep.mubr.f32.mxu0 0.0
      %v2323 = vand.u32 %v1183, 4294901760
      %2324 = vmatmul.mubr.f32.gmra.mrb[0].mxu0 %v2323
      %v2325 = vpop.f32.mrb[0].mxu0
      %v2326 = vadd.f32 %v2160, %v2325
      %v2327 = vpop.f32.mrb[0].mxu0
      %2328 = vmatprep.mubr.f32.mxu0 0.0
      %v2329 = vand.u32 %v1186, 4294901760
      %2330 = vmatmul.mubr.f32.gmra.mrb[0].mxu0 %v2329
      %v2331 = vpop.f32.mrb[0].mxu0
      %v2332 = vadd.f32 %v2166, %v2331
      %v2333 = vpop.f32.mrb[0].mxu0
      %2334 = vdwg.mxu0
      %2335 = vst.msk [vmem:[%s234] sm:$0xff] %vm1008, %v2242
      %2336 = vst.msk [vmem:[%s234 + $0x8] sm:$0xff] %vm1008, %v2248
      %2337 = vst.msk [vmem:[%s234 + $0x10] sm:$0xff] %vm1008, %v2254
      %2338 = vst.msk [vmem:[%s234 + $0x18] sm:$0xff] %vm1008, %v2260
      %2339 = vst.msk [vmem:[%s234 + $0x20] sm:$0xff] %vm1008, %v2266
      %2340 = vst.msk [vmem:[%s234 + $0x28] sm:$0xff] %vm1008, %v2272
      %2341 = vst.msk [vmem:[%s234 + $0x30] sm:$0xff] %vm1008, %v2278
      %2342 = vst.msk [vmem:[%s234 + $0x38] sm:$0xff] %vm1008, %v2284
      %2343 = vst.msk [vmem:[%s234 + $0x40] sm:$0xff] %vm1008, %v2290
      %2344 = vst.msk [vmem:[%s234 + $0x48] sm:$0xff] %vm1008, %v2296
      %2345 = vst.msk [vmem:[%s234 + $0x50] sm:$0xff] %vm1008, %v2302
      %2346 = vst.msk [vmem:[%s234 + $0x58] sm:$0xff] %vm1008, %v2308
      %2347 = vst.msk [vmem:[%s234 + $0x60] sm:$0xff] %vm1008, %v2314
      %2348 = vst.msk [vmem:[%s234 + $0x68] sm:$0xff] %vm1008, %v2320
      %2349 = vst.msk [vmem:[%s234 + $0x70] sm:$0xff] %vm1008, %v2326
      %2350 = vst.msk [vmem:[%s234 + $0x78] sm:$0xff] %vm1008, %v2332
      %v2351 = vsel %vm1008, %v2242, 0.0
      %v2352 = vsel %vm1008, %v2248, 0.0
      %v2353 = vadd.f32 %v2351, %v2352
      %v2354 = vsel %vm1008, %v2254, 0.0
      %v2355 = vadd.f32 %v2353, %v2354
      %v2356 = vsel %vm1008, %v2260, 0.0
      %v2357 = vadd.f32 %v2355, %v2356
      %v2358 = vsel %vm1008, %v2266, 0.0
      %v2359 = vadd.f32 %v2357, %v2358
      %v2360 = vsel %vm1008, %v2272, 0.0
      %v2361 = vadd.f32 %v2359, %v2360
      %v2362 = vsel %vm1008, %v2278, 0.0
      %v2363 = vadd.f32 %v2361, %v2362
      %v2364 = vsel %vm1008, %v2284, 0.0
      %v2365 = vadd.f32 %v2363, %v2364
      %v2366 = vsel %vm1008, %v2290, 0.0
      %v2367 = vadd.f32 %v2365, %v2366
      %v2368 = vsel %vm1008, %v2296, 0.0
      %v2369 = vadd.f32 %v2367, %v2368
      %v2370 = vsel %vm1008, %v2302, 0.0
      %v2371 = vadd.f32 %v2369, %v2370
      %v2372 = vsel %vm1008, %v2308, 0.0
      %v2373 = vadd.f32 %v2371, %v2372
      %v2374 = vsel %vm1008, %v2314, 0.0
      %v2375 = vadd.f32 %v2373, %v2374
      %v2376 = vsel %vm1008, %v2320, 0.0
      %v2377 = vadd.f32 %v2375, %v2376
      %v2378 = vsel %vm1008, %v2326, 0.0
      %v2379 = vadd.f32 %v2377, %v2378
      %v2380 = vsel %vm1008, %v2332, 0.0
      %v2381 = vadd.f32 %v2379, %v2380
      %v2382 = vrot.slane %v2381, 4
      %v2383 = vadd.f32 %v2381, %v2382
      %v2384 = vrot.slane %v2383, 2
      %v2385 = vadd.f32 %v2383, %v2384
      %v2386 = vrot.slane %v2385, 1
      %v2387 = vadd.f32 %v2385, %v2386
      %v2388 = vmul.f32 %v2242, %v2242
      %v2389 = vmul.f32 %v2248, %v2248
      %v2390 = vmul.f32 %v2254, %v2254
      %v2391 = vmul.f32 %v2260, %v2260
      %v2392 = vmul.f32 %v2266, %v2266
      %v2393 = vmul.f32 %v2272, %v2272
      %v2394 = vmul.f32 %v2278, %v2278
      %v2395 = vmul.f32 %v2284, %v2284
      %v2396 = vmul.f32 %v2290, %v2290
      %v2397 = vmul.f32 %v2296, %v2296
      %v2398 = vmul.f32 %v2302, %v2302
      %v2399 = vmul.f32 %v2308, %v2308
      %v2400 = vmul.f32 %v2314, %v2314
      %v2401 = vmul.f32 %v2320, %v2320
      %v2402 = vmul.f32 %v2326, %v2326
      %v2403 = vmul.f32 %v2332, %v2332
      %v2404 = vsel %vm1008, %v2388, 0.0
      %v2405 = vsel %vm1008, %v2389, 0.0
      %v2406 = vadd.f32 %v2404, %v2405
      %v2407 = vsel %vm1008, %v2390, 0.0
      %v2408 = vadd.f32 %v2406, %v2407
      %v2409 = vsel %vm1008, %v2391, 0.0
      %v2410 = vadd.f32 %v2408, %v2409
      %v2411 = vsel %vm1008, %v2392, 0.0
      %v2412 = vadd.f32 %v2410, %v2411
      %v2413 = vsel %vm1008, %v2393, 0.0
      %v2414 = vadd.f32 %v2412, %v2413
      %v2415 = vsel %vm1008, %v2394, 0.0
      %v2416 = vadd.f32 %v2414, %v2415
      %v2417 = vsel %vm1008, %v2395, 0.0
      %v2418 = vadd.f32 %v2416, %v2417
      %v2419 = vsel %vm1008, %v2396, 0.0
      %v2420 = vadd.f32 %v2418, %v2419
      %v2421 = vsel %vm1008, %v2397, 0.0
      %v2422 = vadd.f32 %v2420, %v2421
      %v2423 = vsel %vm1008, %v2398, 0.0
      %v2424 = vadd.f32 %v2422, %v2423
      %v2425 = vsel %vm1008, %v2399, 0.0
      %v2426 = vadd.f32 %v2424, %v2425
      %v2427 = vsel %vm1008, %v2400, 0.0
      %v2428 = vadd.f32 %v2426, %v2427
      %v2429 = vsel %vm1008, %v2401, 0.0
      %v2430 = vadd.f32 %v2428, %v2429
      %v2431 = vsel %vm1008, %v2402, 0.0
      %v2432 = vadd.f32 %v2430, %v2431
      %v2433 = vsel %vm1008, %v2403, 0.0
      %v2434 = vadd.f32 %v2432, %v2433
      %v2435 = vrot.slane %v2434, 4
      %v2436 = vadd.f32 %v2434, %v2435
      %v2437 = vrot.slane %v2436, 2
      %v2438 = vadd.f32 %v2436, %v2437
      %v2439 = vrot.slane %v2438, 1
      %v2440 = vadd.f32 %v2438, %v2439
      %vm2441 = vcmask 1040384
      %v2442 = vsel %vm2441, %v2387, %v2440
      %vm2443 = vcmask 58368
      %2444 = vst.msk [vmem:[%s243] sm:$0x3] %vm2443, %v2442
      %s2445 = smul.u32 8, %s21
      %p2446 = scmp.lt.s32.totalorder %s20, 1
      %s2447 = scalar_select %p2446, %s20, 1
      %p2448 = scmp.lt.s32.totalorder %s2445, 15
      %s2449 = scalar_select %p2448, %s2445, 15
      %s2450 = smul.addr %s2449, 2
      %s2451 = smul.addr %s2447, 32
      %s2452 = sadd.s32 %s2450, %s2451
      %s2453 = smul.addr %s2452, 8
      %s2454 = scalar_lea.vmem %s3, %s2453
      %p2455 = scmp.lt.s32.totalorder %s20, 1
      %s2456 = scalar_select %p2455, %s20, 1
      %p2457 = scmp.lt.s32.totalorder %s21, 1
      %s2458 = scalar_select %p2457, %s21, 1
      %s2459 = smul.addr %s2456, 2
      %s2460 = sadd.s32 %s2458, %s2459
      %s2461 = smul.addr %s2460, 2
      %s2462 = scalar_lea.vmem %s4, %s2461
      // Predicated region
      $region41: #{downsample.4} parent=31 // pred_check
        %p2463 = pneg %p116
      $region42: #{downsample.4} parent=31 // pred_check_branch
        %2465 = sbr.rel (%p2463) target = $region44
      $region43: #{downsample.4} parent=31 // pred_region
        %s2466 = smul.u32 8, %s21
      $region44: #{downsample.4} parent=31 // pred_fallthru
        _
      // Predicated region
      $region45: #{downsample.4} parent=31 // pred_check
        %p2467 = pneg %p144
      $region46: #{downsample.4} parent=31 // pred_check_branch
        %2469 = sbr.rel (%p2467) target = $region48
      $region47: #{downsample.4} parent=31 // pred_region
        _
      $region48: #{downsample.4} parent=31 // pred_fallthru
        _
    $region32: #{downsample.4} parent=5 // pred_fallthru
      _
    %p2470 = scmp.le.s32.totalorder 2, %s11
    // Predicated region
    $region49: #{downsample.4} parent=5 // pred_check
      %p2471 = pneg %p2470
    $region50: #{downsample.4} parent=5 // pred_check_branch
      %2473 = sbr.rel (%p2471) target = $region52
    $region51: #{downsample.4} parent=5 // pred_region
      %s2474 = ssub.s32 %s11, 2
      // Predicated region
      $region53: #{downsample.4} parent=51 // pred_check
        %p2475 = pneg %p122
      $region54: #{downsample.4} parent=51 // pred_check_branch
        %2477 = sbr.rel (%p2475) target = $region56
      $region55: #{downsample.4} parent=51 // pred_region
        %s2478 = smul.u32 8, %s23
        %p2479 = scmp.lt.s32.totalorder %s22, 1
        %s2480 = scalar_select %p2479, %s22, 1
        %p2481 = scmp.lt.s32.totalorder %s2478, 15
        %s2482 = scalar_select %p2481, %s2478, 15
        %s2483 = smul.addr %s2482, 2
        %s2484 = smul.addr %s2480, 32
        %s2485 = sadd.s32 %s2483, %s2484
        %s2486 = smul.addr %s2485, 8
        %s2487 = scalar_lea.vmem %s3, %s2486
      $region56: #{downsample.4} parent=51 // pred_fallthru
        _
      // Predicated region
      $region57: #{downsample.4} parent=51 // pred_check
        %p2488 = pneg %p150
      $region58: #{downsample.4} parent=51 // pred_check_branch
        %2490 = sbr.rel (%p2488) target = $region60
      $region59: #{downsample.4} parent=51 // pred_region
        %p2491 = scmp.lt.s32.totalorder %s22, 1
        %s2492 = scalar_select %p2491, %s22, 1
        %p2493 = scmp.lt.s32.totalorder %s23, 1
        %s2494 = scalar_select %p2493, %s23, 1
        %s2495 = smul.addr %s2492, 2
        %s2496 = sadd.s32 %s2494, %s2495
        %s2497 = smul.addr %s2496, 2
        %s2498 = scalar_lea.vmem %s4, %s2497
      $region60: #{downsample.4} parent=51 // pred_fallthru
        _
    $region52: #{downsample.4} parent=5 // pred_fallthru
      _
  $region6: #{downsample.4} parent=0 // loop_footer
    %s15 = sadd.s32 1, %s11
  $region7: #{downsample.4} parent=0 // loop_footer_branch
    %10 = sbr.rel target = $region3
  $region8: #{downsample.4} parent=0 // loop_exit
    _

// kernel: downsample.6
$region0: #{downsample.6}
  #allocation0 [shape = 'u32[]', space=smem, size = 0x4, offset = 0x4, fixed_abs, tag = 'smem constant byte address 0x4 - core index']
  #allocation1 [shape = 'u32[144,128]{1,0:T(1,128)}', space=vmem, size = 0x12000, scoped, tag = 'internal scratch']
  #allocation2 [shape = 'f32[10,18,8]{2,1,0:T(8,128)}', space=vmem, size = 0x1e000, scoped, tag = 'scratch operand']
  %s0 = inlined_call_operand.vmem [shape: f32[2,16,16,8], index: 0, kind: input, shape index: {}]
  %s1 = inlined_call_operand.vmem [shape: f32[72,8], index: 1, kind: input, shape index: {}]
  %s2 = inlined_call_operand.vmem [shape: f32[1,8], index: 2, kind: input, shape index: {}]
  %s3 = inlined_call_operand.vmem [shape: f32[2,16,16,8], index: 3, kind: output, shape index: {0}]
  %s4 = inlined_call_operand.vmem [shape: f32[2,2,2,8], index: 4, kind: output, shape index: {1}]
  %5 = xla_tuple %s3, %s4
  %s6 = sld [smem:[#allocation0]]
  $region61: #{downsample.6} parent=0
    _
  %s8 = ssub.s32 1, %s6
  %s9 = scalar_select 0, %s8, %s6
  loop: start=0, step=1, limit=6
  $region2: #{downsample.6} parent=0 // loop_pre_header
    _
  $region3: #{downsample.6} parent=0 // loop_header
    %s11 = sphi 0, %s15
    %p12 = scmp.ge.s32.totalorder %s11, 6
    %s18 = sphi 0, %s30
    %s19 = sphi 0, %s26
    %s20 = sphi 0, %s18
    %s21 = sphi 0, %s19
    %s22 = sphi 0, %s20
    %s23 = sphi 0, %s21
    %s33 = sphi 0, %s35
    %s36 = sphi 0, %s33
    %s37 = sphi 0, %s36
    %s53 = sphi 0, %s37
    %s57 = sphi 0, %s57
    %s59 = sphi 0, %s57
    %s60 = sphi 0, %s59
    %s74 = sphi 0, %s60
    %s78 = sphi 0, %s78
    %s80 = sphi 0, %s78
    %s81 = sphi 0, %s80
    %s95 = sphi 0, %s81
    %s103 = sphi 0, %s105
    %s106 = sphi 0, %s103
    %s107 = sphi 0, %s106
    %s123 = sphi 0, %s107
    %s131 = sphi 0, %s133
    %s134 = sphi 0, %s131
    %s135 = sphi 0, %s134
    %s151 = sphi 0, %s135
  $region4: #{downsample.6} parent=0 // loop_header_branch
    %14 = sbr.rel (%p12) target = $region8
  $region5: #{downsample.6} parent=0 // loop_body
    %s16 = ssub.s32 %s11, 1
    %s17 = ssub.s32 %s11, 2
    %s24 = sadd.s32 1, %s19
    %p25 = scmp.ge.s32.totalorder %s24, 2
    %s26 = scalar_select %p25, 0, %s24
    %s27 = sadd.s32 1, %s18
    %s28 = scalar_select %p25, %s27, %s18
    %p29 = scmp.ge.s32.totalorder %s28, 2
    %s30 = scalar_select %p29, 0, %s28
    %s31 = ssub.s32 %s18, %s30
    %p32 = scmp.eq.s32.totalorder %s31, 0
    %s34 = sadd.s32 %s33, 1
    %s35 = scalar_select %p32, %s33, %s34
    %p38 = pneg %p32
    %p39 = scmp.eq.s32.totalorder %s11, 3
    %p40 = por %p38, %p39
    %p41 = scmp.ne.s32.totalorder %s33, %s36
    %p42 = scmp.eq.s32.totalorder %s11, 0
    %p43 = por %p41, %p42
    %p44 = scmp.ne.s32.totalorder %s33, %s36
    %p45 = scmp.eq.s32.totalorder %s16, 3
    %p46 = por %p44, %p45
    %p47 = scmp.ne.s32.totalorder %s36, %s37
    %p48 = scmp.eq.s32.totalorder %s16, 0
    %p49 = por %p47, %p48
    %p50 = scmp.ne.s32.totalorder %s36, %s37
    %p51 = scmp.eq.s32.totalorder %s17, 3
    %p52 = por %p50, %p51
    %p54 = scmp.ne.s32.totalorder %s37, %s53
    %p55 = scmp.eq.s32.totalorder %s17, 0
    %p56 = por %p54, %p55
    %s58 = sadd.s32 %s57, 1
    %p61 = scmp.eq.s32.totalorder %s11, 3
    %p62 = scmp.ne.s32.totalorder %s57, %s59
    %p63 = scmp.eq.s32.totalorder %s11, 0
    %p64 = por %p62, %p63
    %p65 = scmp.ne.s32.totalorder %s57, %s59
    %p66 = scmp.eq.s32.totalorder %s16, 3
    %p67 = por %p65, %p66
    %p68 = scmp.ne.s32.totalorder %s59, %s60
    %p69 = scmp.eq.s32.totalorder %s16, 0
    %p70 = por %p68, %p69
    %p71 = scmp.ne.s32.totalorder %s59, %s60
    %p72 = scmp.eq.s32.totalorder %s17, 3
    %p73 = por %p71, %p72
    %p75 = scmp.ne.s32.totalorder %s60, %s74
    %p76 = scmp.eq.s32.totalorder %s17, 0
    %p77 = por %p75, %p76
    %s79 = sadd.s32 %s78, 1
    %p82 = scmp.eq.s32.totalorder %s11, 3
    %p83 = scmp.ne.s32.totalorder %s78, %s80
    %p84 = scmp.eq.s32.totalorder %s11, 0
    %p85 = por %p83, %p84
    %p86 = scmp.ne.s32.totalorder %s78, %s80
    %p87 = scmp.eq.s32.totalorder %s16, 3
    %p88 = por %p86, %p87
    %p89 = scmp.ne.s32.totalorder %s80, %s81
    %p90 = scmp.eq.s32.totalorder %s16, 0
    %p91 = por %p89, %p90
    %p92 = scmp.ne.s32.totalorder %s80, %s81
    %p93 = scmp.eq.s32.totalorder %s17, 3
    %p94 = por %p92, %p93
    %p96 = scmp.ne.s32.totalorder %s81, %s95
    %p97 = scmp.eq.s32.totalorder %s17, 0
    %p98 = por %p96, %p97
    %s99 = ssub.s32 %s18, %s30
    %s100 = ssub.s32 %s19, %s26
    %s101 = sor.u32 %s99, %s100
    %p102 = scmp.eq.s32.totalorder %s101, 0
    %s104 = sadd.s32 %s103, 1
    %s105 = scalar_select %p102, %s103, %s104
    %p108 = pneg %p102
    %p109 = scmp.eq.s32.totalorder %s11, 3
    %p110 = por %p108, %p109
    %p111 = scmp.ne.s32.totalorder %s103, %s106
    %p112 = scmp.eq.s32.totalorder %s11, 0
    %p113 = por %p111, %p112
    %p114 = scmp.ne.s32.totalorder %s103, %s106
    %p115 = scmp.eq.s32.totalorder %s16, 3
    %p116 = por %p114, %p115
    %p117 = scmp.ne.s32.totalorder %s106, %s107
    %p118 = scmp.eq.s32.totalorder %s16, 0
    %p119 = por %p117, %p118
    %p120 = scmp.ne.s32.totalorder %s106, %s107
    %p121 = scmp.eq.s32.totalorder %s17, 3
    %p122 = por %p120, %p121
    %p124 = scmp.ne.s32.totalorder %s107, %s123
    %p125 = scmp.eq.s32.totalorder %s17, 0
    %p126 = por %p124, %p125
    %s127 = ssub.s32 %s18, %s30
    %s128 = ssub.s32 %s19, %s26
    %s129 = sor.u32 %s127, %s128
    %p130 = scmp.eq.s32.totalorder %s129, 0
    %s132 = sadd.s32 %s131, 1
    %s133 = scalar_select %p130, %s131, %s132
    %p136 = pneg %p130
    %p137 = scmp.eq.s32.totalorder %s11, 3
    %p138 = por %p136, %p137
    %p139 = scmp.ne.s32.totalorder %s131, %s134
    %p140 = scmp.eq.s32.totalorder %s11, 0
    %p141 = por %p139, %p140
    %p142 = scmp.ne.s32.totalorder %s131, %s134
    %p143 = scmp.eq.s32.totalorder %s16, 3
    %p144 = por %p142, %p143
    %p145 = scmp.ne.s32.totalorder %s134, %s135
    %p146 = scmp.eq.s32.totalorder %s16, 0
    %p147 = por %p145, %p146
    %p148 = scmp.ne.s32.totalorder %s134, %s135
    %p149 = scmp.eq.s32.totalorder %s17, 3
    %p150 = por %p148, %p149
    %p152 = scmp.ne.s32.totalorder %s135, %s151
    %p153 = scmp.eq.s32.totalorder %s17, 0
    %p154 = por %p152, %p153
    %p155 = scmp.le.s32.totalorder 1, %s11
    %p156 = scmp.lt.s32.totalorder %s11, 5
    %p157 = pnand %p155, %p156
    %p158 = pneg %p157
    // Predicated region
    $region9: #{downsample.6} parent=5 // pred_check
      _
    $region10: #{downsample.6} parent=5 // pred_check_branch
      %160 = sbr.rel (%p157) target = $region12
    $region11: #{downsample.6} parent=5 // pred_region
      %s161 = ssub.s32 %s11, 1
      // Predicated region
      $region13: #{downsample.6} parent=11 // pred_check
        %p162 = pneg %p70
      $region14: #{downsample.6} parent=11 // pred_check_branch
        %164 = sbr.rel (%p162) target = $region16
      $region15: #{downsample.6} parent=11 // pred_region
        _
      $region16: #{downsample.6} parent=11 // pred_fallthru
        _
      // Predicated region
      $region17: #{downsample.6} parent=11 // pred_check
        %p165 = pneg %p91
      $region18: #{downsample.6} parent=11 // pred_check_branch
        %167 = sbr.rel (%p165) target = $region20
      $region19: #{downsample.6} parent=11 // pred_region
        _
      $region20: #{downsample.6} parent=11 // pred_fallthru
        _
    $region12: #{downsample.6} parent=5 // pred_fallthru
      _
    %p168 = scmp.lt.s32.totalorder %s11, 4
    // Predicated region
    $region21: #{downsample.6} parent=5 // pred_check
      %p169 = pneg %p168
    $region22: #{downsample.6} parent=5 // pred_check_branch
      %171 = sbr.rel (%p169) target = $region24
    $region23: #{downsample.6} parent=5 // pred_region
      // Predicated region
      $region25: #{downsample.6} parent=23 // pred_check
        %p172 = pneg %p43
      $region26: #{downsample.6} parent=23 // pred_check_branch
        %174 = sbr.rel (%p172) target = $region28
      $region27: #{downsample.6} parent=23 // pred_region
        %p175 = scmp.lt.s32.totalorder %s18, 1
        %s176 = scalar_select %p175, %s18, 1
        %s177 = smul.addr %s176, 32
        %s178 = smul.addr %s177, 8
        %s179 = scalar_lea.vmem %s0, %s178
      $region28: #{downsample.6} parent=23 // pred_fallthru
        _
    $region24: #{downsample.6} parent=5 // pred_fallthru
      _
    %p180 = scmp.le.s32.totalorder 1, %s11
    %p181 = scmp.lt.s32.totalorder %s11, 5
    %p182 = pnand %p180, %p181
    %p183 = pneg %p182
    // Predicated region
    $region29: #{downsample.6} parent=5 // pred_check
      _
    $region30: #{downsample.6} parent=5 // pred_check_branch
      %185 = sbr.rel (%p182) target = $region32
    $region31: #{downsample.6} parent=5 // pred_region
      %s186 = ssub.s32 %s11, 1
      %p187 = scmp.lt.s32.totalorder %s20, 1
      %s188 = scalar_select %p187, %s20, 1
      %s189 = smul.addr %s188, 32
      %s190 = smul.addr %s189, 8
      %s191 = scalar_lea.vmem %s0, %s190
      %p192 = pneg %p49
      %p193 = pneg %p46
      %p194 = pneg %p70
      %p195 = pneg %p67
      %p196 = pneg %p91
      %p197 = pneg %p88
      %p198 = pneg %p119
      %p199 = pneg %p116
      %s200 = smul.u32 8, %s21
      %p201 = scmp.lt.s32.totalorder %s20, 1
      %s202 = scalar_select %p201, %s20, 1
      %p203 = scmp.lt.s32.totalorder %s200, 15
      %s204 = scalar_select %p203, %s200, 15
      %s205 = smul.addr %s204, 2
      %s206 = smul.addr %s202, 32
      %s207 = sadd.s32 %s205, %s206
      %s208 = smul.addr %s207, 8
      %s209 = scalar_lea.vmem %s3, %s208
      %p210 = pneg %p147
      %p211 = pneg %p144
      %p212 = scmp.lt.s32.totalorder %s20, 1
      %s213 = scalar_select %p212, %s20, 1
      %p214 = scmp.lt.s32.totalorder %s21, 1
      %s215 = scalar_select %p214, %s21, 1
      %s216 = smul.addr %s213, 2
      %s217 = sadd.s32 %s215, %s216
      %s218 = smul.addr %s217, 2
      %s219 = scalar_lea.vmem %s4, %s218
      %p220 = scmp.lt.s32.totalorder %s20, 1
      %s221 = scalar_select %p220, %s20, 1
      %s222 = smul.addr %s221, 32
      %s223 = smul.addr %s222, 8
      %s224 = scalar_lea.vmem %s0, %s223
      %s225 = smul.u32 8, %s21
      %p226 = scmp.lt.s32.totalorder %s20, 1
      %s227 = scalar_select %p226, %s20, 1
      %p228 = scmp.lt.s32.totalorder %s225, 15
      %s229 = scalar_select %p228, %s225, 15
      %s230 = smul.addr %s229, 2
      %s231 = smul.addr %s227, 32
      %s232 = sadd.s32 %s230, %s231
      %s233 = smul.addr %s232, 8
      %s234 = scalar_lea.vmem %s3, %s233
      %s235 = smul.u32 8, %s21
      %p236 = scmp.lt.s32.totalorder %s20, 1
      %s237 = scalar_select %p236, %s20, 1
      %p238 = scmp.lt.s32.totalorder %s21, 1
      %s239 = scalar_select %p238, %s21, 1
      %s240 = smul.addr %s237, 2
      %s241 = sadd.s32 %s239, %s240
      %s242 = smul.addr %s241, 2
      %s243 = scalar_lea.vmem %s4, %s242
      %s244 = smul.u32 %s21, 8
      %vm245 = vcmask 64512
      %246 = vst.msk [vmem:[#allocation2] sm:$0xff] %vm245, 0.0
      %247 = vst.msk [vmem:[#allocation2 + $0x8] sm:$0xff] %vm245, 0.0
      %vm248 = vcmask 58368
      %249 = vst.msk [vmem:[#allocation2 + $0x10] sm:$0x3] %vm248, 0.0
      %250 = vst.msk [vmem:[#allocation2 + $0x18] sm:$0xff] %vm245, 0.0
      %251 = vst.msk [vmem:[#allocation2 + $0x20] sm:$0xff] %vm245, 0.0
      %252 = vst.msk [vmem:[#allocation2 + $0x28] sm:$0x3] %vm248, 0.0
      %253 = vst.msk [vmem:[#allocation2 + $0x30] sm:$0xff] %vm245, 0.0
      %254 = vst.msk [vmem:[#allocation2 + $0x38] sm:$0xff] %vm245, 0.0
      %255 = vst.msk [vmem:[#allocation2 + $0x40] sm:$0x3] %vm248, 0.0
      %256 = vst.msk [vmem:[#allocation2 + $0x48] sm:$0xff] %vm245, 0.0
      %257 = vst.msk [vmem:[#allocation2 + $0x50] sm:$0xff] %vm245, 0.0
      %258 = vst.msk [vmem:[#allocation2 + $0x58] sm:$0x3] %vm248, 0.0
      %259 = vst.msk [vmem:[#allocation2 + $0x60] sm:$0xff] %vm245, 0.0
      %260 = vst.msk [vmem:[#allocation2 + $0x68] sm:$0xff] %vm245, 0.0
      %261 = vst.msk [vmem:[#allocation2 + $0x70] sm:$0x3] %vm248, 0.0
      %262 = vst.msk [vmem:[#allocation2 + $0x78] sm:$0xff] %vm245, 0.0
      %263 = vst.msk [vmem:[#allocation2 + $0x80] sm:$0xff] %vm245, 0.0
      %264 = vst.msk [vmem:[#allocation2 + $0x88] sm:$0x3] %vm248, 0.0
      %265 = vst.msk [vmem:[#allocation2 + $0x90] sm:$0xff] %vm245, 0.0
      %266 = vst.msk [vmem:[#allocation2 + $0x98] sm:$0xff] %vm245, 0.0
      %267 = vst.msk [vmem:[#allocation2 + $0xa0] sm:$0x3] %vm248, 0.0
      %268 = vst.msk [vmem:[#allocation2 + $0xa8] sm:$0xff] %vm245, 0.0
      %269 = vst.msk [vmem:[#allocation2 + $0xb0] sm:$0xff] %vm245, 0.0
      %270 = vst.msk [vmem:[#allocation2 + $0xb8] sm:$0x3] %vm248, 0.0
      %271 = vst.msk [vmem:[#allocation2 + $0xc0] sm:$0xff] %vm245, 0.0
      %272 = vst.msk [vmem:[#allocation2 + $0xc8] sm:$0xff] %vm245, 0.0
      %273 = vst.msk [vmem:[#allocation2 + $0xd0] sm:$0x3] %vm248, 0.0
      %274 = vst.msk [vmem:[#allocation2 + $0xd8] sm:$0xff] %vm245, 0.0
      %275 = vst.msk [vmem:[#allocation2 + $0xe0] sm:$0xff] %vm245, 0.0
      %276 = vst.msk [vmem:[#allocation2 + $0xe8] sm:$0x3] %vm248, 0.0
      %s277 = smul.u32 %s244, 16
      %s278 = scalar_lea.vmem %s224, %s277
      %v279 = vld [vmem:[%s278] sm:$0xff]
      %v280 = vld [vmem:[%s278 + $0x8] sm:$0xff]
      %v281 = vld [vmem:[%s278 + $0x10] sm:$0xff]
      %v282 = vld [vmem:[%s278 + $0x18] sm:$0xff]
      %v283 = vld [vmem:[%s278 + $0x20] sm:$0xff]
      %v284 = vld [vmem:[%s278 + $0x28] sm:$0xff]
      %v285 = vld [vmem:[%s278 + $0x30] sm:$0xff]
      %v286 = vld [vmem:[%s278 + $0x38] sm:$0xff]
      %v287 = vld [vmem:[%s278 + $0x40] sm:$0xff]
      %v288 = vld [vmem:[%s278 + $0x48] sm:$0xff]
      %v289 = vld [vmem:[%s278 + $0x50] sm:$0xff]
      %v290 = vld [vmem:[%s278 + $0x58] sm:$0xff]
      %v291 = vld [vmem:[%s278 + $0x60] sm:$0xff]
      %v292 = vld [vmem:[%s278 + $0x68] sm:$0xff]
      %v293 = vld [vmem:[%s278 + $0x70] sm:$0xff]
      %v294 = vld [vmem:[%s278 + $0x78] sm:$0xff]
      %s295 = scalar_lea.vmem [#allocation2], 24
      %296 = vst.msk [vmem:[%s295 + $0x1] sm:$0xff] %vm245, %v279
      %297 = vst.msk [vmem:[%s295 + $0x9] sm:$0xff] %vm245, %v280
      %298 = vst.msk [vmem:[%s295 + $0x19] sm:$0xff] %vm245, %v281
      %299 = vst.msk [vmem:[%s295 + $0x21] sm:$0xff] %vm245, %v282
      %300 = vst.msk [vmem:[%s295 + $0x31] sm:$0xff] %vm245, %v283
      %301 = vst.msk [vmem:[%s295 + $0x39] sm:$0xff] %vm245, %v284
      %302 = vst.msk [vmem:[%s295 + $0x49] sm:$0xff] %vm245, %v285
      %303 = vst.msk [vmem:[%s295 + $0x51] sm:$0xff] %vm245, %v286
      %304 = vst.msk [vmem:[%s295 + $0x61] sm:$0xff] %vm245, %v287
      %305 = vst.msk [vmem:[%s295 + $0x69] sm:$0xff] %vm245, %v288
      %306 = vst.msk [vmem:[%s295 + $0x79] sm:$0xff] %vm245, %v289
      %307 = vst.msk [vmem:[%s295 + $0x81] sm:$0xff] %vm245, %v290
      %308 = vst.msk [vmem:[%s295 + $0x91] sm:$0xff] %vm245, %v291
      %309 = vst.msk [vmem:[%s295 + $0x99] sm:$0xff] %vm245, %v292
      %310 = vst.msk [vmem:[%s295 + $0xa9] sm:$0xff] %vm245, %v293
      %311 = vst.msk [vmem:[%s295 + $0xb1] sm:$0xff] %vm245, %v294
      %p312 = scmp.gt.s32.totalorder %s21, 0
      // Predicated region
      $region33: #{downsample.6} parent=31 // pred_check
        %p313 = pneg %p312
      $region34: #{downsample.6} parent=31 // pred_check_branch
        %315 = sbr.rel (%p313) target = $region36
      $region35: #{downsample.6} parent=31 // pred_region
        %s316 = ssub.s32 %s244, 1
        %s317 = smul.u32 %s316, 16
        %s318 = scalar_lea.vmem %s224, %s317
        %v319 = vld [vmem:[%s318] sm:$0xff]
        %v320 = vld [vmem:[%s318 + $0x8] sm:$0xff]
        %321 = vst.msk [vmem:[#allocation2 + $0x1] sm:$0xff] %vm245, %v319
        %322 = vst.msk [vmem:[#allocation2 + $0x9] sm:$0xff] %vm245, %v320
      $region36: #{downsample.6} parent=31 // pred_fallthru
        _
      %p323 = scmp.lt.s32.totalorder %s21, 1
      // Predicated region
      $region37: #{downsample.6} parent=31 // pred_check
        %p324 = pneg %p323
      $region38: #{downsample.6} parent=31 // pred_check_branch
        %326 = sbr.rel (%p324) target = $region40
      $region39: #{downsample.6} parent=31 // pred_region
        %s327 = sadd.s32 %s244, 8
        %s328 = smul.u32 %s327, 16
        %s329 = scalar_lea.vmem %s224, %s328
        %v330 = vld [vmem:[%s329] sm:$0xff]
        %v331 = vld [vmem:[%s329 + $0x8] sm:$0xff]
        %s332 = scalar_lea.vmem [#allocation2], 216
        %333 = vst.msk [vmem:[%s332 + $0x1] sm:$0xff] %vm245, %v330
        %334 = vst.msk [vmem:[%s332 + $0x9] sm:$0xff] %vm245, %v331
      $region40: #{downsample.6} parent=31 // pred_fallthru
        _
      %v335 = vld [vmem:[#allocation2] sm:$0xff]
      %v336 = vld [vmem:[#allocation2 + $0x8] sm:$0xff]
      %v337 = vld [vmem:[#allocation2 + $0x18] sm:$0xff]
      %v338 = vld [vmem:[#allocation2 + $0x20] sm:$0xff]
      %v339 = vld [vmem:[#allocation2 + $0x30] sm:$0xff]
      %v340 = vld [vmem:[#allocation2 + $0x38] sm:$0xff]
      %v341 = vld [vmem:[#allocation2 + $0x48] sm:$0xff]
      %v342 = vld [vmem:[#allocation2 + $0x50] sm:$0xff]
      %v343 = vld [vmem:[#allocation2 + $0x60] sm:$0xff]
      %v344 = vld [vmem:[#allocation2 + $0x68] sm:$0xff]
      %v345 = vld [vmem:[#allocation2 + $0x78] sm:$0xff]
      %v346 = vld [vmem:[#allocation2 + $0x80] sm:$0xff]
      %v347 = vld [vmem:[#allocation2 + $0x90] sm:$0xff]
      %v348 = vld [vmem:[#allocation2 + $0x98] sm:$0xff]
      %v349 = vld [vmem:[#allocation2 + $0xa8] sm:$0xff]
      %v350 = vld [vmem:[#allocation2 + $0xb0] sm:$0xff]
      %v351 = vld [vmem:[#allocation2 + $0x1] sm:$0xff]
      %v352 = vld [vmem:[#allocation2 + $0x9] sm:$0xff]
      %v353 = vld [vmem:[#allocation2 + $0x19] sm:$0xff]
      %v354 = vld [vmem:[#allocation2 + $0x21] sm:$0xff]
      %v355 = vld [vmem:[#allocation2 + $0x31] sm:$0xff]
      %v356 = vld [vmem:[#allocation2 + $0x39] sm:$0xff]
      %v357 = vld [vmem:[#allocation2 + $0x49] sm:$0xff]
      %v358 = vld [vmem:[#allocation2 + $0x51] sm:$0xff]
      %v359 = vld [vmem:[#allocation2 + $0x61] sm:$0xff]
      %v360 = vld [vmem:[#allocation2 + $0x69] sm:$0xff]
      %v361 = vld [vmem:[#allocation2 + $0x79] sm:$0xff]
      %v362 = vld [vmem:[#allocation2 + $0x81] sm:$0xff]
      %v363 = vld [vmem:[#allocation2 + $0x91] sm:$0xff]
      %v364 = vld [vmem:[#allocation2 + $0x99] sm:$0xff]
      %v365 = vld [vmem:[#allocation2 + $0xa9] sm:$0xff]
      %v366 = vld [vmem:[#allocation2 + $0xb1] sm:$0xff]
      %v367 = vld [vmem:[#allocation2 + $0x2] sm:$0xff]
      %v368 = vld [vmem:[#allocation2 + $0xa] sm:$0xff]
      %v369 = vld [vmem:[#allocation2 + $0x1a] sm:$0xff]
      %v370 = vld [vmem:[#allocation2 + $0x22] sm:$0xff]
      %v371 = vld [vmem:[#allocation2 + $0x32] sm:$0xff]
      %v372 = vld [vmem:[#allocation2 + $0x3a] sm:$0xff]
      %v373 = vld [vmem:[#allocation2 + $0x4a] sm:$0xff]
      %v374 = vld [vmem:[#allocation2 + $0x52] sm:$0xff]
      %v375 = vld [vmem:[#allocation2 + $0x62] sm:$0xff]
      %v376 = vld [vmem:[#allocation2 + $0x6a] sm:$0xff]
      %v377 = vld [vmem:[#allocation2 + $0x7a] sm:$0xff]
      %v378 = vld [vmem:[#allocation2 + $0x82] sm:$0xff]
      %v379 = vld [vmem:[#allocation2 + $0x92] sm:$0xff]
      %v380 = vld [vmem:[#allocation2 + $0x9a] sm:$0xff]
      %v381 = vld [vmem:[#allocation2 + $0xaa] sm:$0xff]
      %v382 = vld [vmem:[#allocation2 + $0xb2] sm:$0xff]
      %v383 = vld [vmem:[%s295] sm:$0xff]
      %v384 = vld [vmem:[%s295 + $0x8] sm:$0xff]
      %v385 = vld [vmem:[%s295 + $0x18] sm:$0xff]
      %v386 = vld [vmem:[%s295 + $0x20] sm:$0xff]
      %v387 = vld [vmem:[%s295 + $0x30] sm:$0xff]
      %v388 = vld [vmem:[%s295 + $0x38] sm:$0xff]
      %v389 = vld [vmem:[%s295 + $0x48] sm:$0xff]
      %v390 = vld [vmem:[%s295 + $0x50] sm:$0xff]
      %v391 = vld [vmem:[%s295 + $0x60] sm:$0xff]
      %v392 = vld [vmem:[%s295 + $0x68] sm:$0xff]
      %v393 = vld [vmem:[%s295 + $0x78] sm:$0xff]
      %v394 = vld [vmem:[%s295 + $0x80] sm:$0xff]
      %v395 = vld [vmem:[%s295 + $0x90] sm:$0xff]
      %v396 = vld [vmem:[%s295 + $0x98] sm:$0xff]
      %v397 = vld [vmem:[%s295 + $0xa8] sm:$0xff]
      %v398 = vld [vmem:[%s295 + $0xb0] sm:$0xff]
      %v399 = vld [vmem:[%s295 + $0x1] sm:$0xff]
      %v400 = vld [vmem:[%s295 + $0x9] sm:$0xff]
      %v401 = vld [vmem:[%s295 + $0x19] sm:$0xff]
      %v402 = vld [vmem:[%s295 + $0x21] sm:$0xff]
      %v403 = vld [vmem:[%s295 + $0x31] sm:$0xff]
      %v404 = vld [vmem:[%s295 + $0x39] sm:$0xff]
      %v405 = vld [vmem:[%s295 + $0x49] sm:$0xff]
      %v406 = vld [vmem:[%s295 + $0x51] sm:$0xff]
      %v407 = vld [vmem:[%s295 + $0x61] sm:$0xff]
      %v408 = vld [vmem:[%s295 + $0x69] sm:$0xff]
      %v409 = vld [vmem:[%s295 + $0x79] sm:$0xff]
      %v410 = vld [vmem:[%s295 + $0x81] sm:$0xff]
      %v411 = vld [vmem:[%s295 + $0x91] sm:$0xff]
      %v412 = vld [vmem:[%s295 + $0x99] sm:$0xff]
      %v413 = vld [vmem:[%s295 + $0xa9] sm:$0xff]
      %v414 = vld [vmem:[%s295 + $0xb1] sm:$0xff]
      %v415 = vld [vmem:[%s295 + $0x2] sm:$0xff]
      %v416 = vld [vmem:[%s295 + $0xa] sm:$0xff]
      %v417 = vld [vmem:[%s295 + $0x1a] sm:$0xff]
      %v418 = vld [vmem:[%s295 + $0x22] sm:$0xff]
      %v419 = vld [vmem:[%s295 + $0x32] sm:$0xff]
      %v420 = vld [vmem:[%s295 + $0x3a] sm:$0xff]
      %v421 = vld [vmem:[%s295 + $0x4a] sm:$0xff]
      %v422 = vld [vmem:[%s295 + $0x52] sm:$0xff]
      %v423 = vld [vmem:[%s295 + $0x62] sm:$0xff]
      %v424 = vld [vmem:[%s295 + $0x6a] sm:$0xff]
      %v425 = vld [vmem:[%s295 + $0x7a] sm:$0xff]
      %v426 = vld [vmem:[%s295 + $0x82] sm:$0xff]
      %v427 = vld [vmem:[%s295 + $0x92] sm:$0xff]
      %v428 = vld [vmem:[%s295 + $0x9a] sm:$0xff]
      %v429 = vld [vmem:[%s295 + $0xaa] sm:$0xff]
      %v430 = vld [vmem:[%s295 + $0xb2] sm:$0xff]
      %s431 = scalar_lea.vmem [#allocation2], 48
      %v432 = vld [vmem:[%s431] sm:$0xff]
      %v433 = vld [vmem:[%s431 + $0x8] sm:$0xff]
      %v434 = vld [vmem:[%s431 + $0x18] sm:$0xff]
      %v435 = vld [vmem:[%s431 + $0x20] sm:$0xff]
      %v436 = vld [vmem:[%s431 + $0x30] sm:$0xff]
      %v437 = vld [vmem:[%s431 + $0x38] sm:$0xff]
      %v438 = vld [vmem:[%s431 + $0x48] sm:$0xff]
      %v439 = vld [vmem:[%s431 + $0x50] sm:$0xff]
      %v440 = vld [vmem:[%s431 + $0x60] sm:$0xff]
      %v441 = vld [vmem:[%s431 + $0x68] sm:$0xff]
      %v442 = vld [vmem:[%s431 + $0x78] sm:$0xff]
      %v443 = vld [vmem:[%s431 + $0x80] sm:$0xff]
      %v444 = vld [vmem:[%s431 + $0x90] sm:$0xff]
      %v445 = vld [vmem:[%s431 + $0x98] sm:$0xff]
      %v446 = vld [vmem:[%s431 + $0xa8] sm:$0xff]
      %v447 = vld [vmem:[%s431 + $0xb0] sm:$0xff]
      %v448 = vld [vmem:[%s431 + $0x1] sm:$0xff]
      %v449 = vld [vmem:[%s431 + $0x9] sm:$0xff]
      %v450 = vld [vmem:[%s431 + $0x19] sm:$0xff]
      %v451 = vld [vmem:[%s431 + $0x21] sm:$0xff]
      %v452 = vld [vmem:[%s431 + $0x31] sm:$0xff]
      %v453 = vld [vmem:[%s431 + $0x39] sm:$0xff]
      %v454 = vld [vmem:[%s431 + $0x49] sm:$0xff]
      %v455 = vld [vmem:[%s431 + $0x51] sm:$0xff]
      %v456 = vld [vmem:[%s431 + $0x61] sm:$0xff]
      %v457 = vld [vmem:[%s431 + $0x69] sm:$0xff]
      %v458 = vld [vmem:[%s431 + $0x79] sm:$0xff]
      %v459 = vld [vmem:[%s431 + $0x81] sm:$0xff]
      %v460 = vld [vmem:[%s431 + $0x91] sm:$0xff]
      %v461 = vld [vmem:[%s431 + $0x99] sm:$0xff]
      %v462 = vld [vmem:[%s431 + $0xa9] sm:$0xff]
      %v463 = vld [vmem:[%s431 + $0xb1] sm:$0xff]
      %v464 = vld [vmem:[%s431 + $0x2] sm:$0xff]
      %v465 = vld [vmem:[%s431 + $0xa] sm:$0xff]
      %v466 = vld [vmem:[%s431 + $0x1a] sm:$0xff]
      %v467 = vld [vmem:[%s431 + $0x22] sm:$0xff]
      %v468 = vld [vmem:[%s431 + $0x32] sm:$0xff]
      %v469 = vld [vmem:[%s431 + $0x3a] sm:$0xff]
      %v470 = vld [vmem:[%s431 + $0x4a] sm:$0xff]
      %v471 = vld [vmem:[%s431 + $0x52] sm:$0xff]
      %v472 = vld [vmem:[%s431 + $0x62] sm:$0xff]
      %v473 = vld [vmem:[%s431 + $0x6a] sm:$0xff]
      %v474 = vld [vmem:[%s431 + $0x7a] sm:$0xff]
      %v475 = vld [vmem:[%s431 + $0x82] sm:$0xff]
      %v476 = vld [vmem:[%s431 + $0x92] sm:$0xff]
      %v477 = vld [vmem:[%s431 + $0x9a] sm:$0xff]
      %v478 = vld [vmem:[%s431 + $0xaa] sm:$0xff]
      %v479 = vld [vmem:[%s431 + $0xb2] sm:$0xff]
      %496 = vrot.lane.b32.xlu0 %v351, 8
      %v497 = vpop.permute.xlu0 %496
      %498 = vrot.lane.b32.xlu0 %v352, 8
      %v499 = vpop.permute.xlu0 %498
      %500 = vrot.lane.b32.xlu0 %v353, 8
      %v501 = vpop.permute.xlu0 %500
      %502 = vrot.lane.b32.xlu0 %v354, 8
      %v503 = vpop.permute.xlu0 %502
      %504 = vrot.lane.b32.xlu0 %v355, 8
      %v505 = vpop.permute.xlu0 %504
      %506 = vrot.lane.b32.xlu0 %v356, 8
      %v507 = vpop.permute.xlu0 %506
      %508 = vrot.lane.b32.xlu0 %v357, 8
      %v509 = vpop.permute.xlu0 %508
      %510 = vrot.lane.b32.xlu0 %v358, 8
      %v511 = vpop.permute.xlu0 %510
      %512 = vrot.lane.b32.xlu0 %v359, 8
      %v513 = vpop.permute.xlu0 %512
      %514 = vrot.lane.b32.xlu0 %v360, 8
      %v515 = vpop.permute.xlu0 %514
      %516 = vrot.lane.b32.xlu0 %v361, 8
      %v517 = vpop.permute.xlu0 %516
      %518 = vrot.lane.b32.xlu0 %v362, 8
      %v519 = vpop.permute.xlu0 %518
      %520 = vrot.lane.b32.xlu0 %v363, 8
      %v521 = vpop.permute.xlu0 %520
      %522 = vrot.lane.b32.xlu0 %v364, 8
      %v523 = vpop.permute.xlu0 %522
      %524 = vrot.lane.b32.xlu0 %v365, 8
      %v525 = vpop.permute.xlu0 %524
      %526 = vrot.lane.b32.xlu0 %v366, 8
      %v527 = vpop.permute.xlu0 %526
      %560 = vrot.lane.b32.xlu0 %v367, 16
      %v561 = vpop.permute.xlu0 %560
      %562 = vrot.lane.b32.xlu0 %v368, 16
      %v563 = vpop.permute.xlu0 %562
      %564 = vrot.lane.b32.xlu0 %v369, 16
      %v565 = vpop.permute.xlu0 %564
      %566 = vrot.lane.b32.xlu0 %v370, 16
      %v567 = vpop.permute.xlu0 %566
      %568 = vrot.lane.b32.xlu0 %v371, 16
      %v569 = vpop.permute.xlu0 %568
      %570 = vrot.lane.b32.xlu0 %v372, 16
      %v571 = vpop.permute.xlu0 %570
      %572 = vrot.lane.b32.xlu0 %v373, 16
      %v573 = vpop.permute.xlu0 %572
      %574 = vrot.lane.b32.xlu0 %v374, 16
      %v575 = vpop.permute.xlu0 %574
      %576 = vrot.lane.b32.xlu0 %v375, 16
      %v577 = vpop.permute.xlu0 %576
      %578 = vrot.lane.b32.xlu0 %v376, 16
      %v579 = vpop.permute.xlu0 %578
      %580 = vrot.lane.b32.xlu0 %v377, 16
      %v581 = vpop.permute.xlu0 %580
      %582 = vrot.lane.b32.xlu0 %v378, 16
      %v583 = vpop.permute.xlu0 %582
      %584 = vrot.lane.b32.xlu0 %v379, 16
      %v585 = vpop.permute.xlu0 %584
      %586 = vrot.lane.b32.xlu0 %v380, 16
      %v587 = vpop.permute.xlu0 %586
      %588 = vrot.lane.b32.xlu0 %v381, 16
      %v589 = vpop.permute.xlu0 %588
      %590 = vrot.lane.b32.xlu0 %v382, 16
      %v591 = vpop.permute.xlu0 %590
      %624 = vrot.lane.b32.xlu0 %v383, 24
      %v625 = vpop.permute.xlu0 %624
      %626 = vrot.lane.b32.xlu0 %v384, 24
      %v627 = vpop.permute.xlu0 %626
      %628 = vrot.lane.b32.xlu0 %v385, 24
      %v629 = vpop.permute.xlu0 %628
      %630 = vrot.lane.b32.xlu0 %v386, 24
      %v631 = vpop.permute.xlu0 %630
      %632 = vrot.lane.b32.xlu0 %v387, 24
      %v633 = vpop.permute.xlu0 %632
      %634 = vrot.lane.b32.xlu0 %v388, 24
      %v635 = vpop.permute.xlu0 %634
      %636 = vrot.lane.b32.xlu0 %v389, 24
      %v637 = vpop.permute.xlu0 %636
      %638 = vrot.lane.b32.xlu0 %v390, 24
      %v639 = vpop.permute.xlu0 %638
      %640 = vrot.lane.b32.xlu0 %v391, 24
      %v641 = vpop.permute.xlu0 %640
      %642 = vrot.lane.b32.xlu0 %v392, 24
      %v643 = vpop.permute.xlu0 %642
      %644 = vrot.lane.b32.xlu0 %v393, 24
      %v645 = vpop.permute.xlu0 %644
      %646 = vrot.lane.b32.xlu0 %v394, 24
      %v647 = vpop.permute.xlu0 %646
      %648 = vrot.lane.b32.xlu0 %v395, 24
      %v649 = vpop.permute.xlu0 %648
      %650 = vrot.lane.b32.xlu0 %v396, 24
      %v651 = vpop.permute.xlu0 %650
      %652 = vrot.lane.b32.xlu0 %v397, 24
      %v653 = vpop.permute.xlu0 %652
      %654 = vrot.lane.b32.xlu0 %v398, 24
      %v655 = vpop.permute.xlu0 %654
      %688 = vrot.lane.b32.xlu0 %v399, 32
      %v689 = vpop.permute.xlu0 %688
      %690 = vrot.lane.b32.xlu0 %v400, 32
      %v691 = vpop.permute.xlu0 %690
      %692 = vrot.lane.b32.xlu0 %v401, 32
      %v693 = vpop.permute.xlu0 %692
      %694 = vrot.lane.b32.xlu0 %v402, 32
      %v695 = vpop.permute.xlu0 %694
      %696 = vrot.lane.b32.xlu0 %v403, 32
      %v697 = vpop.permute.xlu0 %696
      %698 = vrot.lane.b32.xlu0 %v404, 32
      %v699 = vpop.permute.xlu0 %698
      %700 = vrot.lane.b32.xlu0 %v405, 32
      %v701 = vpop.permute.xlu0 %700
      %702 = vrot.lane.b32.xlu0 %v406, 32
      %v703 = vpop.permute.xlu0 %702
      %704 = vrot.lane.b32.xlu0 %v407, 32
      %v705 = vpop.permute.xlu0 %704
      %706 = vrot.lane.b32.xlu0 %v408, 32
      %v707 = vpop.permute.xlu0 %706
      %708 = vrot.lane.b32.xlu0 %v409, 32
      %v709 = vpop.permute.xlu0 %708
      %710 = vrot.lane.b32.xlu0 %v410, 32
      %v711 = vpop.permute.xlu0 %710
      %712 = vrot.lane.b32.xlu0 %v411, 32
      %v713 = vpop.permute.xlu0 %712
      %714 = vrot.lane.b32.xlu0 %v412, 32
      %v715 = vpop.permute.xlu0 %714
      %716 = vrot.lane.b32.xlu0 %v413, 32
      %v717 = vpop.permute.xlu0 %716
      %718 = vrot.lane.b32.xlu0 %v414, 32
      %v719 = vpop.permute.xlu0 %718
      %752 = vrot.lane.b32.xlu0 %v415, 40
      %v753 = vpop.permute.xlu0 %752
      %754 = vrot.lane.b32.xlu0 %v416, 40
      %v755 = vpop.permute.xlu0 %754
      %756 = vrot.lane.b32.xlu0 %v417, 40
      %v757 = vpop.permute.xlu0 %756
      %758 = vrot.lane.b32.xlu0 %v418, 40
      %v759 = vpop.permute.xlu0 %758
      %760 = vrot.lane.b32.xlu0 %v419, 40
      %v761 = vpop.permute.xlu0 %760
      %762 = vrot.lane.b32.xlu0 %v420, 40
      %v763 = vpop.permute.xlu0 %762
      %764 = vrot.lane.b32.xlu0 %v421, 40
      %v765 = vpop.permute.xlu0 %764
      %766 = vrot.lane.b32.xlu0 %v422, 40
      %v767 = vpop.permute.xlu0 %766
      %768 = vrot.lane.b32.xlu0 %v423, 40
      %v769 = vpop.permute.xlu0 %768
      %770 = vrot.lane.b32.xlu0 %v424, 40
      %v771 = vpop.permute.xlu0 %770
      %772 = vrot.lane.b32.xlu0 %v425, 40
      %v773 = vpop.permute.xlu0 %772
      %774 = vrot.lane.b32.xlu0 %v426, 40
      %v775 = vpop.permute.xlu0 %774
      %776 = vrot.lane.b32.xlu0 %v427, 40
      %v777 = vpop.permute.xlu0 %776
      %778 = vrot.lane.b32.xlu0 %v428, 40
      %v779 = vpop.permute.xlu0 %778
      %780 = vrot.lane.b32.xlu0 %v429, 40
      %v781 = vpop.permute.xlu0 %780
      %782 = vrot.lane.b32.xlu0 %v430, 40
      %v783 = vpop.permute.xlu0 %782
      %816 = vrot.lane.b32.xlu0 %v432, 48
      %v817 = vpop.permute.xlu0 %816
      %818 = vrot.lane.b32.xlu0 %v433, 48
      %v819 = vpop.permute.xlu0 %818
      %820 = vrot.lane.b32.xlu0 %v434, 48
      %v821 = vpop.permute.xlu0 %820
      %822 = vrot.lane.b32.xlu0 %v435, 48
      %v823 = vpop.permute.xlu0 %822
      %824 = vrot.lane.b32.xlu0 %v436, 48
      %v825 = vpop.permute.xlu0 %824
      %826 = vrot.lane.b32.xlu0 %v437, 48
      %v827 = vpop.permute.xlu0 %826
      %828 = vrot.lane.b32.xlu0 %v438, 48
      %v829 = vpop.permute.xlu0 %828
      %830 = vrot.lane.b32.xlu0 %v439, 48
      %v831 = vpop.permute.xlu0 %830
      %832 = vrot.lane.b32.xlu0 %v440, 48
      %v833 = vpop.permute.xlu0 %832
      %834 = vrot.lane.b32.xlu0 %v441, 48
      %v835 = vpop.permute.xlu0 %834
      %836 = vrot.lane.b32.xlu0 %v442, 48
      %v837 = vpop.permute.xlu0 %836
      %838 = vrot.lane.b32.xlu0 %v443, 48
      %v839 = vpop.permute.xlu0 %838
      %840 = vrot.lane.b32.xlu0 %v444, 48
      %v841 = vpop.permute.xlu0 %840
      %842 = vrot.lane.b32.xlu0 %v445, 48
      %v843 = vpop.permute.xlu0 %842
      %844 = vrot.lane.b32.xlu0 %v446, 48
      %v845 = vpop.permute.xlu0 %844
      %846 = vrot.lane.b32.xlu0 %v447, 48
      %v847 = vpop.permute.xlu0 %846
      %880 = vrot.lane.b32.xlu0 %v448, 56
      %v881 = vpop.permute.xlu0 %880
      %882 = vrot.lane.b32.xlu0 %v449, 56
      %v883 = vpop.permute.xlu0 %882
      %884 = vrot.lane.b32.xlu0 %v450, 56
      %v885 = vpop.permute.xlu0 %884
      %886 = vrot.lane.b32.xlu0 %v451, 56
      %v887 = vpop.permute.xlu0 %886
      %888 = vrot.lane.b32.xlu0 %v452, 56
      %v889 = vpop.permute.xlu0 %888
      %890 = vrot.lane.b32.xlu0 %v453, 56
      %v891 = vpop.permute.xlu0 %890
      %892 = vrot.lane.b32.xlu0 %v454, 56
      %v893 = vpop.permute.xlu0 %892
      %894 = vrot.lane.b32.xlu0 %v455, 56
      %v895 = vpop.permute.xlu0 %894
      %896 = vrot.lane.b32.xlu0 %v456, 56
      %v897 = vpop.permute.xlu0 %896
      %898 = vrot.lane.b32.xlu0 %v457, 56
      %v899 = vpop.permute.xlu0 %898
      %900 = vrot.lane.b32.xlu0 %v458, 56
      %v901 = vpop.permute.xlu0 %900
      %902 = vrot.lane.b32.xlu0 %v459, 56
      %v903 = vpop.permute.xlu0 %902
      %904 = vrot.lane.b32.xlu0 %v460, 56
      %v905 = vpop.permute.xlu0 %904
      %906 = vrot.lane.b32.xlu0 %v461, 56
      %v907 = vpop.permute.xlu0 %906
      %908 = vrot.lane.b32.xlu0 %v462, 56
      %v909 = vpop.permute.xlu0 %908
      %910 = vrot.lane.b32.xlu0 %v463, 56
      %v911 = vpop.permute.xlu0 %910
      %944 = vrot.lane.b32.xlu0 %v464, 64
      %v945 = vpop.permute.xlu0 %944
      %946 = vrot.lane.b32.xlu0 %v465, 64
      %v947 = vpop.permute.xlu0 %946
      %948 = vrot.lane.b32.xlu0 %v466, 64
      %v949 = vpop.permute.xlu0 %948
      %950 = vrot.lane.b32.xlu0 %v467, 64
      %v951 = vpop.permute.xlu0 %950
      %952 = vrot.lane.b32.xlu0 %v468, 64
      %v953 = vpop.permute.xlu0 %952
      %954 = vrot.lane.b32.xlu0 %v469, 64
      %v955 = vpop.permute.xlu0 %954
      %956 = vrot.lane.b32.xlu0 %v470, 64
      %v957 = vpop.permute.xlu0 %956
      %958 = vrot.lane.b32.xlu0 %v471, 64
      %v959 = vpop.permute.xlu0 %958
      %960 = vrot.lane.b32.xlu0 %v472, 64
      %v961 = vpop.permute.xlu0 %960
      %962 = vrot.lane.b32.xlu0 %v473, 64
      %v963 = vpop.permute.xlu0 %962
      %964 = vrot.lane.b32.xlu0 %v474, 64
      %v965 = vpop.permute.xlu0 %964
      %966 = vrot.lane.b32.xlu0 %v475, 64
      %v967 = vpop.permute.xlu0 %966
      %968 = vrot.lane.b32.xlu0 %v476, 64
      %v969 = vpop.permute.xlu0 %968
      %970 = vrot.lane.b32.xlu0 %v477, 64
      %v971 = vpop.permute.xlu0 %970
      %972 = vrot.lane.b32.xlu0 %v478, 64
      %v973 = vpop.permute.xlu0 %972
      %974 = vrot.lane.b32.xlu0 %v479, 64
      %v975 = vpop.permute.xlu0 %974
      %v992 = vsel %vm245, %v335, %v497
      %v993 = vsel %vm245, %v336, %v499
      %v994 = vsel %vm245, %v337, %v501
      %v995 = vsel %vm245, %v338, %v503
      %v996 = vsel %vm245, %v339, %v505
      %v997 = vsel %vm245, %v340, %v507
      %v998 = vsel %vm245, %v341, %v509
      %v999 = vsel %vm245, %v342, %v511
      %v1000 = vsel %vm245, %v343, %v513
      %v1001 = vsel %vm245, %v344, %v515
      %v1002 = vsel %vm245, %v345, %v517
      %v1003 = vsel %vm245, %v346, %v519
      %v1004 = vsel %vm245, %v347, %v521
      %v1005 = vsel %vm245, %v348, %v523
      %v1006 = vsel %vm245, %v349, %v525
      %v1007 = vsel %vm245, %v350, %v527
      %vm1008 = vcmask 130048
      %v1009 = vsel %vm1008, %v992, %v561
      %v1010 = vsel %vm1008, %v993, %v563
      %v1011 = vsel %vm1008, %v994, %v565
      %v1012 = vsel %vm1008, %v995, %v567
      %v1013 = vsel %vm1008, %v996, %v569
      %v1014 = vsel %vm1008, %v997, %v571
      %v1015 = vsel %vm1008, %v998, %v573
      %v1016 = vsel %vm1008, %v999, %v575
      %v1017 = vsel %vm1008, %v1000, %v577
      %v1018 = vsel %vm1008, %v1001, %v579
      %v1019 = vsel %vm1008, %v1002, %v581
      %v1020 = vsel %vm1008, %v1003, %v583
      %v1021 = vsel %vm1008, %v1004, %v585
      %v1022 = vsel %vm1008, %v1005, %v587
      %v1023 = vsel %vm1008, %v1006, %v589
      %v1024 = vsel %vm1008, %v1007, %v591
      %vm1025 = vcmask 195584
      %v1026 = vsel %vm1025, %v1009, %v625
      %v1027 = vsel %vm1025, %v1010, %v627
      %v1028 = vsel %vm1025, %v1011, %v629
      %v1029 = vsel %vm1025, %v1012, %v631
      %v1030 = vsel %vm1025, %v1013, %v633
      %v1031 = vsel %vm1025, %v1014, %v635
      %v1032 = vsel %vm1025, %v1015, %v637
      %v1033 = vsel %vm1025, %v1016, %v639
      %v1034 = vsel %vm1025, %v1017, %v641
      %v1035 = vsel %vm1025, %v1018, %v643
      %v1036 = vsel %vm1025, %v1019, %v645
      %v1037 = vsel %vm1025, %v1020, %v647
      %v1038 = vsel %vm1025, %v1021, %v649
      %v1039 = vsel %vm1025, %v1022, %v651
      %v1040 = vsel %vm1025, %v1023, %v653
      %v1041 = vsel %vm1025, %v1024, %v655
      %vm1042 = vcmask 261120
      %v1043 = vsel %vm1042, %v1026, %v689
      %v1044 = vsel %vm1042, %v1027, %v691
      %v1045 = vsel %vm1042, %v1028, %v693
      %v1046 = vsel %vm1042, %v1029, %v695
      %v1047 = vsel %vm1042, %v1030, %v697
      %v1048 = vsel %vm1042, %v1031, %v699
      %v1049 = vsel %vm1042, %v1032, %v701
      %v1050 = vsel %vm1042, %v1033, %v703
      %v1051 = vsel %vm1042, %v1034, %v705
      %v1052 = vsel %vm1042, %v1035, %v707
      %v1053 = vsel %vm1042, %v1036, %v709
      %v1054 = vsel %vm1042, %v1037, %v711
      %v1055 = vsel %vm1042, %v1038, %v713
      %v1056 = vsel %vm1042, %v1039, %v715
      %v1057 = vsel %vm1042, %v1040, %v717
      %v1058 = vsel %vm1042, %v1041, %v719
      %vm1059 = vcmask 326656
      %v1060 = vsel %vm1059, %v1043, %v753
      %v1061 = vsel %vm1059, %v1044, %v755
      %v1062 = vsel %vm1059, %v1045, %v757
      %v1063 = vsel %vm1059, %v1046, %v759
      %v1064 = vsel %vm1059, %v1047, %v761
      %v1065 = vsel %vm1059, %v1048, %v763
      %v1066 = vsel %vm1059, %v1049, %v765
      %v1067 = vsel %vm1059, %v1050, %v767
      %v1068 = vsel %vm1059, %v1051, %v769
      %v1069 = vsel %vm1059, %v1052, %v771
      %v1070 = vsel %vm1059, %v1053, %v773
      %v1071 = vsel %vm1059, %v1054, %v775
      %v1072 = vsel %vm1059, %v1055, %v777
      %v1073 = vsel %vm1059, %v1056, %v779
      %v1074 = vsel %vm1059, %v1057, %v781
      %v1075 = vsel %vm1059, %v1058, %v783
      %vm1076 = vcmask 392192
      %v1077 = vsel %vm1076, %v1060, %v817
      %v1078 = vsel %vm1076, %v1061, %v819
      %v1079 = vsel %vm1076, %v1062, %v821
      %v1080 = vsel %vm1076, %v1063, %v823
      %v1081 = vsel %vm1076, %v1064, %v825
      %v1082 = vsel %vm1076, %v1065, %v827
      %v1083 = vsel %vm1076, %v1066, %v829
      %v1084 = vsel %vm1076, %v1067, %v831
      %v1085 = vsel %vm1076, %v1068, %v833
      %v1086 = vsel %vm1076, %v1069, %v835
      %v1087 = vsel %vm1076, %v1070, %v837
      %v1088 = vsel %vm1076, %v1071, %v839
      %v1089 = vsel %vm1076, %v1072, %v841
      %v1090 = vsel %vm1076, %v1073, %v843
      %v1091 = vsel %vm1076, %v1074, %v845
      %v1092 = vsel %vm1076, %v1075, %v847
      %vm1093 = vcmask 457728
      %v1094 = vsel %vm1093, %v1077, %v881
      %v1095 = vsel %vm1093, %v1078, %v883
      %v1096 = vsel %vm1093, %v1079, %v885
      %v1097 = vsel %vm1093, %v1080, %v887
      %v1098 = vsel %vm1093, %v1081, %v889
      %v1099 = vsel %vm1093, %v1082, %v891
      %v1100 = vsel %vm1093, %v1083, %v893
      %v1101 = vsel %vm1093, %v1084, %v895
      %v1102 = vsel %vm1093, %v1085, %v897
      %v1103 = vsel %vm1093, %v1086, %v899
      %v1104 = vsel %vm1093, %v1087, %v901
      %v1105 = vsel %vm1093, %v1088, %v903
      %v1106 = vsel %vm1093, %v1089, %v905
      %v1107 = vsel %vm1093, %v1090, %v907
      %v1108 = vsel %vm1093, %v1091, %v909
      %v1109 = vsel %vm1093, %v1092, %v911
      %vm1110 = vcmask 523264
      %v1111 = vsel %vm1110, %v1094, %v945
      %v1112 = vsel %vm1110, %v1095, %v947
      %v1113 = vsel %vm1110, %v1096, %v949
      %v1114 = vsel %vm1110, %v1097, %v951
      %v1115 = vsel %vm1110, %v1098, %v953
      %v1116 = vsel %vm1110, %v1099, %v955
      %v1117 = vsel %vm1110, %v1100, %v957
      %v1118 = vsel %vm1110, %v1101, %v959
      %v1119 = vsel %vm1110, %v1102, %v961
      %v1120 = vsel %vm1110, %v1103, %v963
      %v1121 = vsel %vm1110, %v1104, %v965
      %v1122 = vsel %vm1110, %v1105, %v967
      %v1123 = vsel %vm1110, %v1106, %v969
      %v1124 = vsel %vm1110, %v1107, %v971
      %v1125 = vsel %vm1110, %v1108, %v973
      %v1126 = vsel %vm1110, %v1109, %v975
      %v1127 = vld [vmem:[%s1] sm:$0xff]
      %v1128 = vld [vmem:[%s1 + $0x8] sm:$0xff]
      %v1129 = vld [vmem:[%s1 + $0x10] sm:$0xff]
      %v1130 = vld [vmem:[%s1 + $0x18] sm:$0xff]
      %v1131 = vld [vmem:[%s1 + $0x20] sm:$0xff]
      %v1132 = vld [vmem:[%s1 + $0x28] sm:$0xff]
      %v1133 = vld [vmem:[%s1 + $0x30] sm:$0xff]
      %v1134 = vld [vmem:[%s1 + $0x38] sm:$0xff]
      %v1135 = vld [vmem:[%s1 + $0x40] sm:$0xff]
      %v1136 = vld [vmem:[%s2] sm:$0x1]
      %v1138 = vlaneseq
      %v1139 = vshrl.u32 %v1138, 7
      %v1140 = vsub.s32 0, %v1139
      %v1141 = vrot.slane %v1136, %v1140
      %vm1143 = vcmask 588800
      %v1145 = vsel %vm1143, %v1111, 0
      %v1148 = vsel %vm1143, %v1112, 0
      %v1151 = vsel %vm1143, %v1113, 0
      %v1154 = vsel %vm1143, %v1114, 0
      %v1157 = vsel %vm1143, %v1115, 0
      %v1160 = vsel %vm1143, %v1116, 0
      %v1163 = vsel %vm1143, %v1117, 0
      %v1166 = vsel %vm1143, %v1118, 0
      %v1169 = vsel %vm1143, %v1119, 0
      %v1172 = vsel %vm1143, %v1120, 0
      %v1175 = vsel %vm1143, %v1121, 0
      %v1178 = vsel %vm1143, %v1122, 0
      %v1181 = vsel %vm1143, %v1123, 0
      %v1184 = vsel %vm1143, %v1124, 0
      %v1187 = vsel %vm1143, %v1125, 0
      %v1190 = vsel %vm1143, %v1126, 0
      %1192 = vmatprep.subr.mxu0 0.0
      %v1193 = vand.u32 %v1127, 4294901760
      %1194 = vmatpush1.msra.mxu0 %v1193
      %1195 = vmatprep.subr.mxu0 0.0
      %v1196 = vand.u32 %v1128, 4294901760
      %1197 = vmatpush1.msra.mxu0 %v1196
      %1198 = vmatprep.subr.mxu0 0.0
      %v1199 = vand.u32 %v1129, 4294901760
      %1200 = vmatpush1.msra.mxu0 %v1199
      %1201 = vmatprep.subr.mxu0 0.0
      %v1202 = vand.u32 %v1130, 4294901760
      %1203 = vmatpush1.msra.mxu0 %v1202
      %1204 = vmatprep.subr.mxu0 0.0
      %v1205 = vand.u32 %v1131, 4294901760
      %1206 = vmatpush1.msra.mxu0 %v1205
      %1207 = vmatprep.subr.mxu0 0.0
      %v1208 = vand.u32 %v1132, 4294901760
      %1209 = vmatpush1.msra.mxu0 %v1208
      %1210 = vmatprep.subr.mxu0 0.0
      %v1211 = vand.u32 %v1133, 4294901760
      %1212 = vmatpush1.msra.mxu0 %v1211
      %1213 = vmatprep.subr.mxu0 0.0
      %v1214 = vand.u32 %v1134, 4294901760
      %1215 = vmatpush1.msra.mxu0 %v1214
      %1216 = vmatprep.subr.mxu0 0.0
      %v1217 = vand.u32 %v1135, 4294901760
      %1218 = vmatpush1.msra.mxu0 %v1217
      %1219 = vmatprep.subr.mxu0 0.0
      %1220 = vmatpush1.msra.mxu0 0.0
      %1221 = vmatprep.subr.mxu0 0.0
      %1222 = vmatpush1.msra.mxu0 0.0
      %1223 = vmatprep.subr.mxu0 0.0
      %1224 = vmatpush1.msra.mxu0 0.0
      %1225 = vmatprep.subr.mxu0 0.0
      %1226 = vmatpush1.msra.mxu0 0.0
      %1227 = vmatprep.subr.mxu0 0.0
      %1228 = vmatpush1.msra.mxu0 0.0
      %1229 = vmatprep.subr.mxu0 0.0
      %1230 = vmatpush1.msra.mxu0 0.0
      %1231 = vmatprep.subr.mxu0 0.0
      %1232 = vmatpush1.msra.mxu0 0.0
      %1233 = vmatprep.subr.mxu0 0.0
      %1234 = vmatpush1.msra.mxu0 0.0
      %1235 = vmatprep.subr.mxu0 0.0
      %1236 = vmatpush1.msra.mxu0 0.0
      %1237 = vmatprep.subr.mxu0 0.0
      %1238 = vmatpush1.msra.mxu0 0.0
      %1239 = vmatprep.subr.mxu0 0.0
      %1240 = vmatpush1.msra.mxu0 0.0
      %1241 = vmatprep.subr.mxu0 0.0
      %1242 = vmatpush1.msra.mxu0 0.0
      %1243 = vmatprep.subr.mxu0 0.0
      %1244 = vmatpush1.msra.mxu0 0.0
      %1245 = vmatprep.subr.mxu0 0.0
      %1246 = vmatpush1.msra.mxu0 0.0
      %1247 = vmatprep.subr.mxu0 0.0
      %1248 = vmatpush1.msra.mxu0 0.0
      %1249 = vmatprep.subr.mxu0 0.0
      %1250 = vmatpush1.msra.mxu0 0.0
      %1251 = vmatprep.subr.mxu0 0.0
      %1252 = vmatpush1.msra.mxu0 0.0
      %1253 = vmatprep.subr.mxu0 0.0
      %1254 = vmatpush1.msra.mxu0 0.0
      %1255 = vmatprep.subr.mxu0 0.0
      %1256 = vmatpush1.msra.mxu0 0.0
      %1257 = vmatprep.subr.mxu0 0.0
      %1258 = vmatpush1.msra.mxu0 0.0
      %1259 = vmatprep.subr.mxu0 0.0
      %1260 = vmatpush1.msra.mxu0 0.0
      %1261 = vmatprep.subr.mxu0 0.0
      %1262 = vmatpush1.msra.mxu0 0.0
      %1263 = vmatprep.subr.mxu0 0.0
      %1264 = vmatpush1.msra.mxu0 0.0
      %1265 = vmatprep.mubr.f32.mxu0 0.0
      %v1266 = vand.u32 %v1145, 4294901760
      %v1267 = vsub.f32 %v1145, %v1266
      %v1268 = vand.u32 %v1267, 4294901760
      %v1269 = vsub.f32 %v1267, %v1268
      %v1270 = vand.u32 %v1269, 4294901760
      %1271 = vmatmul.mubr.f32.gmra.mrb[0].mxu0 %v1270
      %v1272 = vpop.f32.mrb[0].mxu0
      %v1273 = vadd.f32 %v1141, %v1272
      %v1274 = vpop.f32.mrb[0].mxu0
      %1275 = vmatprep.mubr.f32.mxu0 0.0
      %v1276 = vand.u32 %v1148, 4294901760
      %v1277 = vsub.f32 %v1148, %v1276
      %v1278 = vand.u32 %v1277, 4294901760
      %v1279 = vsub.f32 %v1277, %v1278
      %v1280 = vand.u32 %v1279, 4294901760
      %1281 = vmatmul.mubr.f32.gmra.mrb[0].mxu0 %v1280
      %v1282 = vpop.f32.mrb[0].mxu0
      %v1283 = vadd.f32 %v1141, %v1282
      %v1284 = vpop.f32.mrb[0].mxu0
      %1285 = vmatprep.mubr.f32.mxu0 0.0
      %v1286 = vand.u32 %v1151, 4294901760
      %v1287 = vsub.f32 %v1151, %v1286
      %v1288 = vand.u32 %v1287, 4294901760
      %v1289 = vsub.f32 %v1287, %v1288
      %v1290 = vand.u32 %v1289, 4294901760
      %1291 = vmatmul.mubr.f32.gmra.mrb[0].mxu0 %v1290
      %v1292 = vpop.f32.mrb[0].mxu0
      %v1293 = vadd.f32 %v1141, %v1292
      %v1294 = vpop.f32.mrb[0].mxu0
      %1295 = vmatprep.mubr.f32.mxu0 0.0
      %v1296 = vand.u32 %v1154, 4294901760
      %v1297 = vsub.f32 %v1154, %v1296
      %v1298 = vand.u32 %v1297, 4294901760
      %v1299 = vsub.f32 %v1297, %v1298
      %v1300 = vand.u32 %v1299, 4294901760
      %1301 = vmatmul.mubr.f32.gmra.mrb[0].mxu0 %v1300
      %v1302 = vpop.f32.mrb[0].mxu0
      %v1303 = vadd.f32 %v1141, %v1302
      %v1304 = vpop.f32.mrb[0].mxu0
      %1305 = vmatprep.mubr.f32.mxu0 0.0
      %v1306 = vand.u32 %v1157, 4294901760
      %v1307 = vsub.f32 %v1157, %v1306
      %v1308 = vand.u32 %v1307, 4294901760
      %v1309 = vsub.f32 %v1307, %v1308
      %v1310 = vand.u32 %v1309, 4294901760
      %1311 = vmatmul.mubr.f32.gmra.mrb[0].mxu0 %v1310
      %v1312 = vpop.f32.mrb[0].mxu0
      %v1313 = vadd.f32 %v1141, %v1312
      %v1314 = vpop.f32.mrb[0].mxu0
      %1315 = vmatprep.mubr.f32.mxu0 0.0
      %v1316 = vand.u32 %v1160, 4294901760
      %v1317 = vsub.f32 %v1160, %v1316
      %v1318 = vand.u32 %v1317, 4294901760
      %v1319 = vsub.f32 %v1317, %v1318
      %v1320 = vand.u32 %v1319, 4294901760
      %1321 = vmatmul.mubr.f32.gmra.mrb[0].mxu0 %v1320
      %v1322 = vpop.f32.mrb[0].mxu0
      %v1323 = vadd.f32 %v1141, %v1322
      %v1324 = vpop.f32.mrb[0].mxu0
      %1325 = vmatprep.mubr.f32.mxu0 0.0
      %v1326 = vand.u32 %v1163, 4294901760
      %v1327 = vsub.f32 %v1163, %v1326
      %v1328 = vand.u32 %v1327, 4294901760
      %v1329 = vsub.f32 %v1327, %v1328
      %v1330 = vand.u32 %v1329, 4294901760
      %1331 = vmatmul.mubr.f32.gmra.mrb[0].mxu0 %v1330
      %v1332 = vpop.f32.mrb[0].mxu0
      %v1333 = vadd.f32 %v1141, %v1332
      %v1334 = vpop.f32.mrb[0].mxu0
      %1335 = vmatprep.mubr.f32.mxu0 0.0
      %v1336 = vand.u32 %v1166, 4294901760
      %v1337 = vsub.f32 %v1166, %v1336
      %v1338 = vand.u32 %v1337, 4294901760
      %v1339 = vsub.f32 %v1337, %v1338
      %v1340 = vand.u32 %v1339, 4294901760
      %1341 = vmatmul.mubr.f32.gmra.mrb[0].mxu0 %v1340
      %v1342 = vpop.f32.mrb[0].mxu0
      %v1343 = vadd.f32 %v1141, %v1342
      %v1344 = vpop.f32.mrb[0].mxu0
      %1345 = vmatprep.mubr.f32.mxu0 0.0
      %v1346 = vand.u32 %v1169, 4294901760
      %v1347 = vsub.f32 %v1169, %v1346
      %v1348 = vand.u32 %v1347, 4294901760
      %v1349 = vsub.f32 %v1347, %v1348
      %v1350 = vand.u32 %v1349, 4294901760
      %1351 = vmatmul.mubr.f32.gmra.mrb[0].mxu0 %v1350
      %v1352 = vpop.f32.mrb[0].mxu0
      %v1353 = vadd.f32 %v1141, %v1352
      %v1354 = vpop.f32.mrb[0].mxu0
      %1355 = vmatprep.mubr.f32.mxu0 0.0
      %v1356 = vand.u32 %v1172, 4294901760
      %v1357 = vsub.f32 %v1172, %v1356
      %v1358 = vand.u32 %v1357, 4294901760
      %v1359 = vsub.f32 %v1357, %v1358
      %v1360 = vand.u32 %v1359, 4294901760
      %1361 = vmatmul.mubr.f32.gmra.mrb[0].mxu0 %v1360
      %v1362 = vpop.f32.mrb[0].mxu0
      %v1363 = vadd.f32 %v1141, %v1362
      %v1364 = vpop.f32.mrb[0].mxu0
      %1365 = vmatprep.mubr.f32.mxu0 0.0
      %v1366 = vand.u32 %v1175, 4294901760
      %v1367 = vsub.f32 %v1175, %v1366
      %v1368 = vand.u32 %v1367, 4294901760
      %v1369 = vsub.f32 %v1367, %v1368
      %v1370 = vand.u32 %v1369, 4294901760
      %1371 = vmatmul.mubr.f32.gmra.mrb[0].mxu0 %v1370
      %v1372 = vpop.f32.mrb[0].mxu0
      %v1373 = vadd.f32 %v1141, %v1372
      %v1374 = vpop.f32.mrb[0].mxu0
      %1375 = vmatprep.mubr.f32.mxu0 0.0
      %v1376 = vand.u32 %v1178, 4294901760
      %v1377 = vsub.f32 %v1178, %v1376
      %v1378 = vand.u32 %v1377, 4294901760
      %v1379 = vsub.f32 %v1377, %v1378
      %v1380 = vand.u32 %v1379, 4294901760
      %1381 = vmatmul.mubr.f32.gmra.mrb[0].mxu0 %v1380
      %v1382 = vpop.f32.mrb[0].mxu0
      %v1383 = vadd.f32 %v1141, %v1382
      %v1384 = vpop.f32.mrb[0].mxu0
      %1385 = vmatprep.mubr.f32.mxu0 0.0
      %v1386 = vand.u32 %v1181, 4294901760
      %v1387 = vsub.f32 %v1181, %v1386
      %v1388 = vand.u32 %v1387, 4294901760
      %v1389 = vsub.f32 %v1387, %v1388
      %v1390 = vand.u32 %v1389, 4294901760
      %1391 = vmatmul.mubr.f32.gmra.mrb[0].mxu0 %v1390
      %v1392 = vpop.f32.mrb[0].mxu0
      %v1393 = vadd.f32 %v1141, %v1392
      %v1394 = vpop.f32.mrb[0].mxu0
      %1395 = vmatprep.mubr.f32.mxu0 0.0
      %v1396 = vand.u32 %v1184, 4294901760
      %v1397 = vsub.f32 %v1184, %v1396
      %v1398 = vand.u32 %v1397, 4294901760
      %v1399 = vsub.f32 %v1397, %v1398
      %v1400 = vand.u32 %v1399, 4294901760
      %1401 = vmatmul.mubr.f32.gmra.mrb[0].mxu0 %v1400
      %v1402 = vpop.f32.mrb[0].mxu0
      %v1403 = vadd.f32 %v1141, %v1402
      %v1404 = vpop.f32.mrb[0].mxu0
      %1405 = vmatprep.mubr.f32.mxu0 0.0
      %v1406 = vand.u32 %v1187, 4294901760
      %v1407 = vsub.f32 %v1187, %v1406
      %v1408 = vand.u32 %v1407, 4294901760
      %v1409 = vsub.f32 %v1407, %v1408
      %v1410 = vand.u32 %v1409, 4294901760
      %1411 = vmatmul.mubr.f32.gmra.mrb[0].mxu0 %v1410
      %v1412 = vpop.f32.mrb[0].mxu0
      %v1413 = vadd.f32 %v1141, %v1412
      %v1414 = vpop.f32.mrb[0].mxu0
      %1415 = vmatprep.mubr.f32.mxu0 0.0
      %v1416 = vand.u32 %v1190, 4294901760
      %v1417 = vsub.f32 %v1190, %v1416
      %v1418 = vand.u32 %v1417, 4294901760
      %v1419 = vsub.f32 %v1417, %v1418
      %v1420 = vand.u32 %v1419, 4294901760
      %1421 = vmatmul.mubr.f32.gmra.mrb[0].mxu0 %v1420
      %v1422 = vpop.f32.mrb[0].mxu0
      %v1423 = vadd.f32 %v1141, %v1422
      %v1424 = vpop.f32.mrb[0].mxu0
      %1425 = vdwg.mxu0
      %1426 = vmatprep.subr.mxu0 0.0
      %v1427 = vand.u32 %v1127, 4294901760
      %v1428 = vsub.f32 %v1127, %v1427
      %v1429 = vand.u32 %v1428, 4294901760
      %v1430 = vsub.f32 %v1428, %v1429
      %v1431 = vand.u32 %v1430, 4294901760
      %1432 = vmatpush1.msra.mxu0 %v1431
      %1433 = vmatprep.subr.mxu0 0.0
      %v1434 = vand.u32 %v1128, 4294901760
      %v1435 = vsub.f32 %v1128, %v1434
      %v1436 = vand.u32 %v1435, 4294901760
      %v1437 = vsub.f32 %v1435, %v1436
      %v1438 = vand.u32 %v1437, 4294901760
      %1439 = vmatpush1.msra.mxu0 %v1438
      %1440 = vmatprep.subr.mxu0 0.0
      %v1441 = vand.u32 %v1129, 4294901760
      %v1442 = vsub.f32 %v1129, %v1441
      %v1443 = vand.u32 %v1442, 4294901760
      %v1444 = vsub.f32 %v1442, %v1443
      %v1445 = vand.u32 %v1444, 4294901760
      %1446 = vmatpush1.msra.mxu0 %v1445
      %1447 = vmatprep.subr.mxu0 0.0
      %v1448 = vand.u32 %v1130, 4294901760
      %v1449 = vsub.f32 %v1130, %v1448
      %v1450 = vand.u32 %v1449, 4294901760
      %v1451 = vsub.f32 %v1449, %v1450
      %v1452 = vand.u32 %v1451, 4294901760
      %1453 = vmatpush1.msra.mxu0 %v1452
      %1454 = vmatprep.subr.mxu0 0.0
      %v1455 = vand.u32 %v1131, 4294901760
      %v1456 = vsub.f32 %v1131, %v1455
      %v1457 = vand.u32 %v1456, 4294901760
      %v1458 = vsub.f32 %v1456, %v1457
      %v1459 = vand.u32 %v1458, 4294901760
      %1460 = vmatpush1.msra.mxu0 %v1459
      %1461 = vmatprep.subr.mxu0 0.0
      %v1462 = vand.u32 %v1132, 4294901760
      %v1463 = vsub.f32 %v1132, %v1462
      %v1464 = vand.u32 %v1463, 4294901760
      %v1465 = vsub.f32 %v1463, %v1464
      %v1466 = vand.u32 %v1465, 4294901760
      %1467 = vmatpush1.msra.mxu0 %v1466
      %1468 = vmatprep.subr.mxu0 0.0
      %v1469 = vand.u32 %v1133, 4294901760
      %v1470 = vsub.f32 %v1133, %v1469
      %v1471 = vand.u32 %v1470, 4294901760
      %v1472 = vsub.f32 %v1470, %v1471
      %v1473 = vand.u32 %v1472, 4294901760
      %1474 = vmatpush1.msra.mxu0 %v1473
      %1475 = vmatprep.subr.mxu0 0.0
      %v1476 = vand.u32 %v1134, 4294901760
      %v1477 = vsub.f32 %v1134, %v1476
      %v1478 = vand.u32 %v1477, 4294901760
      %v1479 = vsub.f32 %v1477, %v1478
      %v1480 = vand.u32 %v1479, 4294901760
      %1481 = vmatpush1.msra.mxu0 %v1480
      %1482 = vmatprep.subr.mxu0 0.0
      %v1483 = vand.u32 %v1135, 4294901760
      %v1484 = vsub.f32 %v1135, %v1483
      %v1485 = vand.u32 %v1484, 4294901760
      %v1486 = vsub.f32 %v1484, %v1485
      %v1487 = vand.u32 %v1486, 4294901760
      %1488 = vmatpush1.msra.mxu0 %v1487
      %1489 = vmatprep.subr.mxu0 0.0
      %1490 = vmatpush1.msra.mxu0 0.0
      %1491 = vmatprep.subr.mxu0 0.0
      %1492 = vmatpush1.msra.mxu0 0.0
      %1493 = vmatprep.subr.mxu0 0.0
      %1494 = vmatpush1.msra.mxu0 0.0
      %1495 = vmatprep.subr.mxu0 0.0
      %1496 = vmatpush1.msra.mxu0 0.0
      %1497 = vmatprep.subr.mxu0 0.0
      %1498 = vmatpush1.msra.mxu0 0.0
      %1499 = vmatprep.subr.mxu0 0.0
      %1500 = vmatpush1.msra.mxu0 0.0
      %1501 = vmatprep.subr.mxu0 0.0
      %1502 = vmatpush1.msra.mxu0 0.0
      %1503 = vmatprep.subr.mxu0 0.0
      %1504 = vmatpush1.msra.mxu0 0.0
      %1505 = vmatprep.subr.mxu0 0.0
      %1506 = vmatpush1.msra.mxu0 0.0
      %1507 = vmatprep.subr.mxu0 0.0
      %1508 = vmatpush1.msra.mxu0 0.0
      %1509 = vmatprep.subr.mxu0 0.0
      %1510 = vmatpush1.msra.mxu0 0.0
      %1511 = vmatprep.subr.mxu0 0.0
      %1512 = vmatpush1.msra.mxu0 0.0
      %1513 = vmatprep.subr.mxu0 0.0
      %1514 = vmatpush1.msra.mxu0 0.0
      %1515 = vmatprep.subr.mxu0 0.0
      %1516 = vmatpush1.msra.mxu0 0.0
      %1517 = vmatprep.subr.mxu0 0.0
      %1518 = vmatpush1.msra.mxu0 0.0
      %1519 = vmatprep.subr.mxu0 0.0
      %1520 = vmatpush1.msra.mxu0 0.0
      %1521 = vmatprep.subr.mxu0 0.0
      %1522 = vmatpush1.msra.mxu0 0.0
      %1523 = vmatprep.subr.mxu0 0.0
      %1524 = vmatpush1.msra.mxu0 0.0
      %1525 = vmatprep.subr.mxu0 0.0
      %1526 = vmatpush1.msra.mxu0 0.0
      %1527 = vmatprep.subr.mxu0 0.0
      %1528 = vmatpush1.msra.mxu0 0.0
      %1529 = vmatprep.subr.mxu0 0.0
      %1530 = vmatpush1.msra.mxu0 0.0
      %1531 = vmatprep.subr.mxu0 0.0
      %1532 = vmatpush1.msra.mxu0 0.0
      %1533 = vmatprep.subr.mxu0 0.0
      %1534 = vmatpush1.msra.mxu0 0.0
      %1535 = vmatprep.mubr.f32.mxu0 0.0
      %v1536 = vand.u32 %v1145, 4294901760
      %1537 = vmatmul.mubr.f32.gmra.mrb[0].mxu0 %v1536
      %v1538 = vpop.f32.mrb[0].mxu0
      %v1539 = vadd.f32 %v1273, %v1538
      %v1540 = vpop.f32.mrb[0].mxu0
      %1541 = vmatprep.mubr.f32.mxu0 0.0
      %v1542 = vand.u32 %v1148, 4294901760
      %1543 = vmatmul.mubr.f32.gmra.mrb[0].mxu0 %v1542
      %v1544 = vpop.f32.mrb[0].mxu0
      %v1545 = vadd.f32 %v1283, %v1544
      %v1546 = vpop.f32.mrb[0].mxu0
      %1547 = vmatprep.mubr.f32.mxu0 0.0
      %v1548 = vand.u32 %v1151, 4294901760
      %1549 = vmatmul.mubr.f32.gmra.mrb[0].mxu0 %v1548
      %v1550 = vpop.f32.mrb[0].mxu0
      %v1551 = vadd.f32 %v1293, %v1550
      %v1552 = vpop.f32.mrb[0].mxu0
      %1553 = vmatprep.mubr.f32.mxu0 0.0
      %v1554 = vand.u32 %v1154, 4294901760
      %1555 = vmatmul.mubr.f32.gmra.mrb[0].mxu0 %v1554
      %v1556 = vpop.f32.mrb[0].mxu0
      %v1557 = vadd.f32 %v1303, %v1556
      %v1558 = vpop.f32.mrb[0].mxu0
      %1559 = vmatprep.mubr.f32.mxu0 0.0
      %v1560 = vand.u32 %v1157, 4294901760
      %1561 = vmatmul.mubr.f32.gmra.mrb[0].mxu0 %v1560
      %v1562 = vpop.f32.mrb[0].mxu0
      %v1563 = vadd.f32 %v1313, %v1562
      %v1564 = vpop.f32.mrb[0].mxu0
      %1565 = vmatprep.mubr.f32.mxu0 0.0
      %v1566 = vand.u32 %v1160, 4294901760
      %1567 = vmatmul.mubr.f32.gmra.mrb[0].mxu0 %v1566
      %v1568 = vpop.f32.mrb[0].mxu0
      %v1569 = vadd.f32 %v1323, %v1568
      %v1570 = vpop.f32.mrb[0].mxu0
      %1571 = vmatprep.mubr.f32.mxu0 0.0
      %v1572 = vand.u32 %v1163, 4294901760
      %1573 = vmatmul.mubr.f32.gmra.mrb[0].mxu0 %v1572
      %v1574 = vpop.f32.mrb[0].mxu0
      %v1575 = vadd.f32 %v1333, %v1574
      %v1576 = vpop.f32.mrb[0].mxu0
      %1577 = vmatprep.mubr.f32.mxu0 0.0
      %v1578 = vand.u32 %v1166, 4294901760
      %1579 = vmatmul.mubr.f32.gmra.mrb[0].mxu0 %v1578
      %v1580 = vpop.f32.mrb[0].mxu0
      %v1581 = vadd.f32 %v1343, %v1580
      %v1582 = vpop.f32.mrb[0].mxu0
      %1583 = vmatprep.mubr.f32.mxu0 0.0
      %v1584 = vand.u32 %v1169, 4294901760
      %1585 = vmatmul.mubr.f32.gmra.mrb[0].mxu0 %v1584
      %v1586 = vpop.f32.mrb[0].mxu0
      %v1587 = vadd.f32 %v1353, %v1586
      %v1588 = vpop.f32.mrb[0].mxu0
      %1589 = vmatprep.mubr.f32.mxu0 0.0
      %v1590 = vand.u32 %v1172, 4294901760
      %1591 = vmatmul.mubr.f32.gmra.mrb[0].mxu0 %v1590
      %v1592 = vpop.f32.mrb[0].mxu0
      %v1593 = vadd.f32 %v1363, %v1592
      %v1594 = vpop.f32.mrb[0].mxu0
      %1595 = vmatprep.mubr.f32.mxu0 0.0
      %v1596 = vand.u32 %v1175, 4294901760
      %1597 = vmatmul.mubr.f32.gmra.mrb[0].mxu0 %v1596
      %v1598 = vpop.f32.mrb[0].mxu0
      %v1599 = vadd.f32 %v1373, %v1598
      %v1600 = vpop.f32.mrb[0].mxu0
      %1601 = vmatprep.mubr.f32.mxu0 0.0
      %v1602 = vand.u32 %v1178, 4294901760
      %1603 = vmatmul.mubr.f32.gmra.mrb[0].mxu0 %v1602
      %v1604 = vpop.f32.mrb[0].mxu0
      %v1605 = vadd.f32 %v1383, %v1604
      %v1606 = vpop.f32.mrb[0].mxu0
      %1607 = vmatprep.mubr.f32.mxu0 0.0
      %v1608 = vand.u32 %v1181, 4294901760
      %1609 = vmatmul.mubr.f32.gmra.mrb[0].mxu0 %v1608
      %v1610 = vpop.f32.mrb[0].mxu0
      %v1611 = vadd.f32 %v1393, %v1610
      %v1612 = vpop.f32.mrb[0].mxu0
      %1613 = vmatprep.mubr.f32.mxu0 0.0
      %v1614 = vand.u32 %v1184, 4294901760
      %1615 = vmatmul.mubr.f32.gmra.mrb[0].mxu0 %v1614
      %v1616 = vpop.f32.mrb[0].mxu0
      %v1617 = vadd.f32 %v1403, %v1616
      %v1618 = vpop.f32.mrb[0].mxu0
      %1619 = vmatprep.mubr.f32.mxu0 0.0
      %v1620 = vand.u32 %v1187, 4294901760
      %1621 = vmatmul.mubr.f32.gmra.mrb[0].mxu0 %v1620
      %v1622 = vpop.f32.mrb[0].mxu0
      %v1623 = vadd.f32 %v1413, %v1622
      %v1624 = vpop.f32.mrb[0].mxu0
      %1625 = vmatprep.mubr.f32.mxu0 0.0
      %v1626 = vand.u32 %v1190, 4294901760
      %1627 = vmatmul.mubr.f32.gmra.mrb[0].mxu0 %v1626
      %v1628 = vpop.f32.mrb[0].mxu0
      %v1629 = vadd.f32 %v1423, %v1628
      %v1630 = vpop.f32.mrb[0].mxu0
      %1631 = vdwg.mxu0
      %1632 = vmatprep.subr.mxu0 0.0
      %v1633 = vand.u32 %v1127, 4294901760
      %v1634 = vsub.f32 %v1127, %v1633
      %1635 = vmatpush1.msra.mxu0 %v1634
      %1636 = vmatprep.subr.mxu0 0.0
      %v1637 = vand.u32 %v1128, 4294901760
      %v1638 = vsub.f32 %v1128, %v1637
      %1639 = vmatpush1.msra.mxu0 %v1638
      %1640 = vmatprep.subr.mxu0 0.0
      %v1641 = vand.u32 %v1129, 4294901760
      %v1642 = vsub.f32 %v1129, %v1641
      %1643 = vmatpush1.msra.mxu0 %v1642
      %1644 = vmatprep.subr.mxu0 0.0
      %v1645 = vand.u32 %v1130, 4294901760
      %v1646 = vsub.f32 %v1130, %v1645
      %1647 = vmatpush1.msra.mxu0 %v1646
      %1648 = vmatprep.subr.mxu0 0.0
      %v1649 = vand.u32 %v1131, 4294901760
      %v1650 = vsub.f32 %v1131, %v1649
      %1651 = vmatpush1.msra.mxu0 %v1650
      %1652 = vmatprep.subr.mxu0 0.0
      %v1653 = vand.u32 %v1132, 4294901760
      %v1654 = vsub.f32 %v1132, %v1653
      %1655 = vmatpush1.msra.mxu0 %v1654
      %1656 = vmatprep.subr.mxu0 0.0
      %v1657 = vand.u32 %v1133, 4294901760
      %v1658 = vsub.f32 %v1133, %v1657
      %1659 = vmatpush1.msra.mxu0 %v1658
      %1660 = vmatprep.subr.mxu0 0.0
      %v1661 = vand.u32 %v1134, 4294901760
      %v1662 = vsub.f32 %v1134, %v1661
      %1663 = vmatpush1.msra.mxu0 %v1662
      %1664 = vmatprep.subr.mxu0 0.0
      %v1665 = vand.u32 %v1135, 4294901760
      %v1666 = vsub.f32 %v1135, %v1665
      %1667 = vmatpush1.msra.mxu0 %v1666
      %1668 = vmatprep.subr.mxu0 0.0
      %1669 = vmatpush1.msra.mxu0 0.0
      %1670 = vmatprep.subr.mxu0 0.0
      %1671 = vmatpush1.msra.mxu0 0.0
      %1672 = vmatprep.subr.mxu0 0.0
      %1673 = vmatpush1.msra.mxu0 0.0
      %1674 = vmatprep.subr.mxu0 0.0
      %1675 = vmatpush1.msra.mxu0 0.0
      %1676 = vmatprep.subr.mxu0 0.0
      %1677 = vmatpush1.msra.mxu0 0.0
      %1678 = vmatprep.subr.mxu0 0.0
      %1679 = vmatpush1.msra.mxu0 0.0
      %1680 = vmatprep.subr.mxu0 0.0
      %1681 = vmatpush1.msra.mxu0 0.0
      %1682 = vmatprep.subr.mxu0 0.0
      %1683 = vmatpush1.msra.mxu0 0.0
      %1684 = vmatprep.subr.mxu0 0.0
      %1685 = vmatpush1.msra.mxu0 0.0
      %1686 = vmatprep.subr.mxu0 0.0
      %1687 = vmatpush1.msra.mxu0 0.0
      %1688 = vmatprep.subr.mxu0 0.0
      %1689 = vmatpush1.msra.mxu0 0.0
      %1690 = vmatprep.subr.mxu0 0.0
      %1691 = vmatpush1.msra.mxu0 0.0
      %1692 = vmatprep.subr.mxu0 0.0
      %1693 = vmatpush1.msra.mxu0 0.0
      %1694 = vmatprep.subr.mxu0 0.0
      %1695 = vmatpush1.msra.mxu0 0.0
      %1696 = vmatprep.subr.mxu0 0.0
      %1697 = vmatpush1.msra.mxu0 0.0
      %1698 = vmatprep.subr.mxu0 0.0
      %1699 = vmatpush1.msra.mxu0 0.0
      %1700 = vmatprep.subr.mxu0 0.0
      %1701 = vmatpush1.msra.mxu0 0.0
      %1702 = vmatprep.subr.mxu0 0.0
      %1703 = vmatpush1.msra.mxu0 0.0
      %1704 = vmatprep.subr.mxu0 0.0
      %1705 = vmatpush1.msra.mxu0 0.0
      %1706 = vmatprep.subr.mxu0 0.0
      %1707 = vmatpush1.msra.mxu0 0.0
      %1708 = vmatprep.subr.mxu0 0.0
      %1709 = vmatpush1.msra.mxu0 0.0
      %1710 = vmatprep.subr.mxu0 0.0
      %1711 = vmatpush1.msra.mxu0 0.0
      %1712 = vmatprep.subr.mxu0 0.0
      %1713 = vmatpush1.msra.mxu0 0.0
      %1714 = vmatprep.mubr.f32.mxu0 0.0
      %v1715 = vand.u32 %v1145, 4294901760
      %v1716 = vsub.f32 %v1145, %v1715
      %1717 = vmatmul.mubr.f32.gmra.mrb[0].mxu0 %v1716
      %v1718 = vpop.f32.mrb[0].mxu0
      %v1719 = vadd.f32 %v1539, %v1718
      %v1720 = vpop.f32.mrb[0].mxu0
      %1721 = vmatprep.mubr.f32.mxu0 0.0
      %v1722 = vand.u32 %v1148, 4294901760
      %v1723 = vsub.f32 %v1148, %v1722
      %1724 = vmatmul.mubr.f32.gmra.mrb[0].mxu0 %v1723
      %v1725 = vpop.f32.mrb[0].mxu0
      %v1726 = vadd.f32 %v1545, %v1725
      %v1727 = vpop.f32.mrb[0].mxu0
      %1728 = vmatprep.mubr.f32.mxu0 0.0
      %v1729 = vand.u32 %v1151, 4294901760
      %v1730 = vsub.f32 %v1151, %v1729
      %1731 = vmatmul.mubr.f32.gmra.mrb[0].mxu0 %v1730
      %v1732 = vpop.f32.mrb[0].mxu0
      %v1733 = vadd.f32 %v1551, %v1732
      %v1734 = vpop.f32.mrb[0].mxu0
      %1735 = vmatprep.mubr.f32.mxu0 0.0
      %v1736 = vand.u32 %v1154, 4294901760
      %v1737 = vsub.f32 %v1154, %v1736
      %1738 = vmatmul.mubr.f32.gmra.mrb[0].mxu0 %v1737
      %v1739 = vpop.f32.mrb[0].mxu0
      %v1740 = vadd.f32 %v1557, %v1739
      %v1741 = vpop.f32.mrb[0].mxu0
      %1742 = vmatprep.mubr.f32.mxu0 0.0
      %v1743 = vand.u32 %v1157, 4294901760
      %v1744 = vsub.f32 %v1157, %v1743
      %1745 = vmatmul.mubr.f32.gmra.mrb[0].mxu0 %v1744
      %v1746 = vpop.f32.mrb[0].mxu0
      %v1747 = vadd.f32 %v1563, %v1746
      %v1748 = vpop.f32.mrb[0].mxu0
      %1749 = vmatprep.mubr.f32.mxu0 0.0
      %v1750 = vand.u32 %v1160, 4294901760
      %v1751 = vsub.f32 %v1160, %v1750
      %1752 = vmatmul.mubr.f32.gmra.mrb[0].mxu0 %v1751
      %v1753 = vpop.f32.mrb[0].mxu0
      %v1754 = vadd.f32 %v1569, %v1753
      %v1755 = vpop.f32.mrb[0].mxu0
      %1756 = vmatprep.mubr.f32.mxu0 0.0
      %v1757 = vand.u32 %v1163, 4294901760
      %v1758 = vsub.f32 %v1163, %v1757
      %1759 = vmatmul.mubr.f32.gmra.mrb[0].mxu0 %v1758
      %v1760 = vpop.f32.mrb[0].mxu0
      %v1761 = vadd.f32 %v1575, %v1760
      %v1762 = vpop.f32.mrb[0].mxu0
      %1763 = vmatprep.mubr.f32.mxu0 0.0
      %v1764 = vand.u32 %v1166, 4294901760
      %v1765 = vsub.f32 %v1166, %v1764
      %1766 = vmatmul.mubr.f32.gmra.mrb[0].mxu0 %v1765
      %v1767 = vpop.f32.mrb[0].mxu0
      %v1768 = vadd.f32 %v1581, %v1767
      %v1769 = vpop.f32.mrb[0].mxu0
      %1770 = vmatprep.mubr.f32.mxu0 0.0
      %v1771 = vand.u32 %v1169, 4294901760
      %v1772 = vsub.f32 %v1169, %v1771
      %1773 = vmatmul.mubr.f32.gmra.mrb[0].mxu0 %v1772
      %v1774 = vpop.f32.mrb[0].mxu0
      %v1775 = vadd.f32 %v1587, %v1774
      %v1776 = vpop.f32.mrb[0].mxu0
      %1777 = vmatprep.mubr.f32.mxu0 0.0
      %v1778 = vand.u32 %v1172, 4294901760
      %v1779 = vsub.f32 %v1172, %v1778
      %1780 = vmatmul.mubr.f32.gmra.mrb[0].mxu0 %v1779
      %v1781 = vpop.f32.mrb[0].mxu0
      %v1782 = vadd.f32 %v1593, %v1781
      %v1783 = vpop.f32.mrb[0].mxu0
      %1784 = vmatprep.mubr.f32.mxu0 0.0
      %v1785 = vand.u32 %v1175, 4294901760
      %v1786 = vsub.f32 %v1175, %v1785
      %1787 = vmatmul.mubr.f32.gmra.mrb[0].mxu0 %v1786
      %v1788 = vpop.f32.mrb[0].mxu0
      %v1789 = vadd.f32 %v1599, %v1788
      %v1790 = vpop.f32.mrb[0].mxu0
      %1791 = vmatprep.mubr.f32.mxu0 0.0
      %v1792 = vand.u32 %v1178, 4294901760
      %v1793 = vsub.f32 %v1178, %v1792
      %1794 = vmatmul.mubr.f32.gmra.mrb[0].mxu0 %v1793
      %v1795 = vpop.f32.mrb[0].mxu0
      %v1796 = vadd.f32 %v1605, %v1795
      %v1797 = vpop.f32.mrb[0].mxu0
      %1798 = vmatprep.mubr.f32.mxu0 0.0
      %v1799 = vand.u32 %v1181, 4294901760
      %v1800 = vsub.f32 %v1181, %v1799
      %1801 = vmatmul.mubr.f32.gmra.mrb[0].mxu0 %v1800
      %v1802 = vpop.f32.mrb[0].mxu0
      %v1803 = vadd.f32 %v1611, %v1802
      %v1804 = vpop.f32.mrb[0].mxu0
      %1805 = vmatprep.mubr.f32.mxu0 0.0
      %v1806 = vand.u32 %v1184, 4294901760
      %v1807 = vsub.f32 %v1184, %v1806
      %1808 = vmatmul.mubr.f32.gmra.mrb[0].mxu0 %v1807
      %v1809 = vpop.f32.mrb[0].mxu0
      %v1810 = vadd.f32 %v1617, %v1809
      %v1811 = vpop.f32.mrb[0].mxu0
      %1812 = vmatprep.mubr.f32.mxu0 0.0
      %v1813 = vand.u32 %v1187, 4294901760
      %v1814 = vsub.f32 %v1187, %v1813
      %1815 = vmatmul.mubr.f32.gmra.mrb[0].mxu0 %v1814
      %v1816 = vpop.f32.mrb[0].mxu0
      %v1817 = vadd.f32 %v1623, %v1816
      %v1818 = vpop.f32.mrb[0].mxu0
      %1819 = vmatprep.mubr.f32.mxu0 0.0
      %v1820 = vand.u32 %v1190, 4294901760
      %v1821 = vsub.f32 %v1190, %v1820
      %1822 = vmatmul.mubr.f32.gmra.mrb[0].mxu0 %v1821
      %v1823 = vpop.f32.mrb[0].mxu0
      %v1824 = vadd.f32 %v1629, %v1823
      %v1825 = vpop.f32.mrb[0].mxu0
      %1826 = vdwg.mxu0
      %1827 = vmatprep.subr.mxu0 0.0
      %v1828 = vand.u32 %v1127, 4294901760
      %1829 = vmatpush1.msra.mxu0 %v1828
      %1830 = vmatprep.subr.mxu0 0.0
      %v1831 = vand.u32 %v1128, 4294901760
      %1832 = vmatpush1.msra.mxu0 %v1831
      %1833 = vmatprep.subr.mxu0 0.0
      %v1834 = vand.u32 %v1129, 4294901760
      %1835 = vmatpush1.msra.mxu0 %v1834
      %1836 = vmatprep.subr.mxu0 0.0
      %v1837 = vand.u32 %v1130, 4294901760
      %1838 = vmatpush1.msra.mxu0 %v1837
      %1839 = vmatprep.subr.mxu0 0.0
      %v1840 = vand.u32 %v1131, 4294901760
      %1841 = vmatpush1.msra.mxu0 %v1840
      %1842 = vmatprep.subr.mxu0 0.0
      %v1843 = vand.u32 %v1132, 4294901760
      %1844 = vmatpush1.msra.mxu0 %v1843
      %1845 = vmatprep.subr.mxu0 0.0
      %v1846 = vand.u32 %v1133, 4294901760
      %1847 = vmatpush1.msra.mxu0 %v1846
      %1848 = vmatprep.subr.mxu0 0.0
      %v1849 = vand.u32 %v1134, 4294901760
      %1850 = vmatpush1.msra.mxu0 %v1849
      %1851 = vmatprep.subr.mxu0 0.0
      %v1852 = vand.u32 %v1135, 4294901760
      %1853 = vmatpush1.msra.mxu0 %v1852
      %1854 = vmatprep.subr.mxu0 0.0
      %1855 = vmatpush1.msra.mxu0 0.0
      %1856 = vmatprep.subr.mxu0 0.0
      %1857 = vmatpush1.msra.mxu0 0.0
      %1858 = vmatprep.subr.mxu0 0.0
      %1859 = vmatpush1.msra.mxu0 0.0
      %1860 = vmatprep.subr.mxu0 0.0
      %1861 = vmatpush1.msra.mxu0 0.0
      %1862 = vmatprep.subr.mxu0 0.0
      %1863 = vmatpush1.msra.mxu0 0.0
      %1864 = vmatprep.subr.mxu0 0.0
      %1865 = vmatpush1.msra.mxu0 0.0
      %1866 = vmatprep.subr.mxu0 0.0
      %1867 = vmatpush1.msra.mxu0 0.0
      %1868 = vmatprep.subr.mxu0 0.0
      %1869 = vmatpush1.msra.mxu0 0.0
      %1870 = vmatprep.subr.mxu0 0.0
      %1871 = vmatpush1.msra.mxu0 0.0
      %1872 = vmatprep.subr.mxu0 0.0
      %1873 = vmatpush1.msra.mxu0 0.0
      %1874 = vmatprep.subr.mxu0 0.0
      %1875 = vmatpush1.msra.mxu0 0.0
      %1876 = vmatprep.subr.mxu0 0.0
      %1877 = vmatpush1.msra.mxu0 0.0
      %1878 = vmatprep.subr.mxu0 0.0
      %1879 = vmatpush1.msra.mxu0 0.0
      %1880 = vmatprep.subr.mxu0 0.0
      %1881 = vmatpush1.msra.mxu0 0.0
      %1882 = vmatprep.subr.mxu0 0.0
      %1883 = vmatpush1.msra.mxu0 0.0
      %1884 = vmatprep.subr.mxu0 0.0
      %1885 = vmatpush1.msra.mxu0 0.0
      %1886 = vmatprep.subr.mxu0 0.0
      %1887 = vmatpush1.msra.mxu0 0.0
      %1888 = vmatprep.subr.mxu0 0.0
      %1889 = vmatpush1.msra.mxu0 0.0
      %1890 = vmatprep.subr.mxu0 0.0
      %1891 = vmatpush1.msra.mxu0 0.0
      %1892 = vmatprep.subr.mxu0 0.0
      %1893 = vmatpush1.msra.mxu0 0.0
      %1894 = vmatprep.subr.mxu0 0.0
      %1895 = vmatpush1.msra.mxu0 0.0
      %1896 = vmatprep.subr.mxu0 0.0
      %1897 = vmatpush1.msra.mxu0 0.0
      %1898 = vmatprep.subr.mxu0 0.0
      %1899 = vmatpush1.msra.mxu0 0.0
      %1900 = vmatprep.mubr.f32.mxu0 0.0
      %v1901 = vand.u32 %v1145, 4294901760
      %v1902 = vsub.f32 %v1145, %v1901
      %v1903 = vand.u32 %v1902, 4294901760
      %1904 = vmatmul.mubr.f32.gmra.mrb[0].mxu0 %v1903
      %v1905 = vpop.f32.mrb[0].mxu0
      %v1906 = vadd.f32 %v1719, %v1905
      %v1907 = vpop.f32.mrb[0].mxu0
      %1908 = vmatprep.mubr.f32.mxu0 0.0
      %v1909 = vand.u32 %v1148, 4294901760
      %v1910 = vsub.f32 %v1148, %v1909
      %v1911 = vand.u32 %v1910, 4294901760
      %1912 = vmatmul.mubr.f32.gmra.mrb[0].mxu0 %v1911
      %v1913 = vpop.f32.mrb[0].mxu0
      %v1914 = vadd.f32 %v1726, %v1913
      %v1915 = vpop.f32.mrb[0].mxu0
      %1916 = vmatprep.mubr.f32.mxu0 0.0
      %v1917 = vand.u32 %v1151, 4294901760
      %v1918 = vsub.f32 %v1151, %v1917
      %v1919 = vand.u32 %v1918, 4294901760
      %1920 = vmatmul.mubr.f32.gmra.mrb[0].mxu0 %v1919
      %v1921 = vpop.f32.mrb[0].mxu0
      %v1922 = vadd.f32 %v1733, %v1921
      %v1923 = vpop.f32.mrb[0].mxu0
      %1924 = vmatprep.mubr.f32.mxu0 0.0
      %v1925 = vand.u32 %v1154, 4294901760
      %v1926 = vsub.f32 %v1154, %v1925
      %v1927 = vand.u32 %v1926, 4294901760
      %1928 = vmatmul.mubr.f32.gmra.mrb[0].mxu0 %v1927
      %v1929 = vpop.f32.mrb[0].mxu0
      %v1930 = vadd.f32 %v1740, %v1929
      %v1931 = vpop.f32.mrb[0].mxu0
      %1932 = vmatprep.mubr.f32.mxu0 0.0
      %v1933 = vand.u32 %v1157, 4294901760
      %v1934 = vsub.f32 %v1157, %v1933
      %v1935 = vand.u32 %v1934, 4294901760
      %1936 = vmatmul.mubr.f32.gmra.mrb[0].mxu0 %v1935
      %v1937 = vpop.f32.mrb[0].mxu0
      %v1938 = vadd.f32 %v1747, %v1937
      %v1939 = vpop.f32.mrb[0].mxu0
      %1940 = vmatprep.mubr.f32.mxu0 0.0
      %v1941 = vand.u32 %v1160, 4294901760
      %v1942 = vsub.f32 %v1160, %v1941
      %v1943 = vand.u32 %v1942, 4294901760
      %1944 = vmatmul.mubr.f32.gmra.mrb[0].mxu0 %v1943
      %v1945 = vpop.f32.mrb[0].mxu0
      %v1946 = vadd.f32 %v1754, %v1945
      %v1947 = vpop.f32.mrb[0].mxu0
      %1948 = vmatprep.mubr.f32.mxu0 0.0
      %v1949 = vand.u32 %v1163, 4294901760
      %v1950 = vsub.f32 %v1163, %v1949
      %v1951 = vand.u32 %v1950, 4294901760
      %1952 = vmatmul.mubr.f32.gmra.mrb[0].mxu0 %v1951
      %v1953 = vpop.f32.mrb[0].mxu0
      %v1954 = vadd.f32 %v1761, %v1953
      %v1955 = vpop.f32.mrb[0].mxu0
      %1956 = vmatprep.mubr.f32.mxu0 0.0
      %v1957 = vand.u32 %v1166, 4294901760
      %v1958 = vsub.f32 %v1166, %v1957
      %v1959 = vand.u32 %v1958, 4294901760
      %1960 = vmatmul.mubr.f32.gmra.mrb[0].mxu0 %v1959
      %v1961 = vpop.f32.mrb[0].mxu0
      %v1962 = vadd.f32 %v1768, %v1961
      %v1963 = vpop.f32.mrb[0].mxu0
      %1964 = vmatprep.mubr.f32.mxu0 0.0
      %v1965 = vand.u32 %v1169, 4294901760
      %v1966 = vsub.f32 %v1169, %v1965
      %v1967 = vand.u32 %v1966, 4294901760
      %1968 = vmatmul.mubr.f32.gmra.mrb[0].mxu0 %v1967
      %v1969 = vpop.f32.mrb[0].mxu0
      %v1970 = vadd.f32 %v1775, %v1969
      %v1971 = vpop.f32.mrb[0].mxu0
      %1972 = vmatprep.mubr.f32.mxu0 0.0
      %v1973 = vand.u32 %v1172, 4294901760
      %v1974 = vsub.f32 %v1172, %v1973
      %v1975 = vand.u32 %v1974, 4294901760
      %1976 = vmatmul.mubr.f32.gmra.mrb[0].mxu0 %v1975
      %v1977 = vpop.f32.mrb[0].mxu0
      %v1978 = vadd.f32 %v1782, %v1977
      %v1979 = vpop.f32.mrb[0].mxu0
      %1980 = vmatprep.mubr.f32.mxu0 0.0
      %v1981 = vand.u32 %v1175, 4294901760
      %v1982 = vsub.f32 %v1175, %v1981
      %v1983 = vand.u32 %v1982, 4294901760
      %1984 = vmatmul.mubr.f32.gmra.mrb[0].mxu0 %v1983
      %v1985 = vpop.f32.mrb[0].mxu0
      %v1986 = vadd.f32 %v1789, %v1985
      %v1987 = vpop.f32.mrb[0].mxu0
      %1988 = vmatprep.mubr.f32.mxu0 0.0
      %v1989 = vand.u32 %v1178, 4294901760
      %v1990 = vsub.f32 %v1178, %v1989
      %v1991 = vand.u32 %v1990, 4294901760
      %1992 = vmatmul.mubr.f32.gmra.mrb[0].mxu0 %v1991
      %v1993 = vpop.f32.mrb[0].mxu0
      %v1994 = vadd.f32 %v1796, %v1993
      %v1995 = vpop.f32.mrb[0].mxu0
      %1996 = vmatprep.mubr.f32.mxu0 0.0
      %v1997 = vand.u32 %v1181, 4294901760
      %v1998 = vsub.f32 %v1181, %v1997
      %v1999 = vand.u32 %v1998, 4294901760
      %2000 = vmatmul.mubr.f32.gmra.mrb[0].mxu0 %v1999
      %v2001 = vpop.f32.mrb[0].mxu0
      %v2002 = vadd.f32 %v1803, %v2001
      %v2003 = vpop.f32.mrb[0].mxu0
      %2004 = vmatprep.mubr.f32.mxu0 0.0
      %v2005 = vand.u32 %v1184, 4294901760
      %v2006 = vsub.f32 %v1184, %v2005
      %v2007 = vand.u32 %v2006, 4294901760
      %2008 = vmatmul.mubr.f32.gmra.mrb[0].mxu0 %v2007
      %v2009 = vpop.f32.mrb[0].mxu0
      %v2010 = vadd.f32 %v1810, %v2009
      %v2011 = vpop.f32.mrb[0].mxu0
      %2012 = vmatprep.mubr.f32.mxu0 0.0
      %v2013 = vand.u32 %v1187, 4294901760
      %v2014 = vsub.f32 %v1187, %v2013
      %v2015 = vand.u32 %v2014, 4294901760
      %2016 = vmatmul.mubr.f32.gmra.mrb[0].mxu0 %v2015
      %v2017 = vpop.f32.mrb[0].mxu0
      %v2018 = vadd.f32 %v1817, %v2017
      %v2019 = vpop.f32.mrb[0].mxu0
      %2020 = vmatprep.mubr.f32.mxu0 0.0
      %v2021 = vand.u32 %v1190, 4294901760
      %v2022 = vsub.f32 %v1190, %v2021
      %v2023 = vand.u32 %v2022, 4294901760
      %2024 = vmatmul.mubr.f32.gmra.mrb[0].mxu0 %v2023
      %v2025 = vpop.f32.mrb[0].mxu0
      %v2026 = vadd.f32 %v1824, %v2025
      %v2027 = vpop.f32.mrb[0].mxu0
      %2028 = vdwg.mxu0
      %2029 = vmatprep.subr.mxu0 0.0
      %v2030 = vand.u32 %v1127, 4294901760
      %v2031 = vsub.f32 %v1127, %v2030
      %v2032 = vand.u32 %v2031, 4294901760
      %2033 = vmatpush1.msra.mxu0 %v2032
      %2034 = vmatprep.subr.mxu0 0.0
      %v2035 = vand.u32 %v1128, 4294901760
      %v2036 = vsub.f32 %v1128, %v2035
      %v2037 = vand.u32 %v2036, 4294901760
      %2038 = vmatpush1.msra.mxu0 %v2037
      %2039 = vmatprep.subr.mxu0 0.0
      %v2040 = vand.u32 %v1129, 4294901760
      %v2041 = vsub.f32 %v1129, %v2040
      %v2042 = vand.u32 %v2041, 4294901760
      %2043 = vmatpush1.msra.mxu0 %v2042
      %2044 = vmatprep.subr.mxu0 0.0
      %v2045 = vand.u32 %v1130, 4294901760
      %v2046 = vsub.f32 %v1130, %v2045
      %v2047 = vand.u32 %v2046, 4294901760
      %2048 = vmatpush1.msra.mxu0 %v2047
      %2049 = vmatprep.subr.mxu0 0.0
      %v2050 = vand.u32 %v1131, 4294901760
      %v2051 = vsub.f32 %v1131, %v2050
      %v2052 = vand.u32 %v2051, 4294901760
      %2053 = vmatpush1.msra.mxu0 %v2052
      %2054 = vmatprep.subr.mxu0 0.0
      %v2055 = vand.u32 %v1132, 4294901760
      %v2056 = vsub.f32 %v1132, %v2055
      %v2057 = vand.u32 %v2056, 4294901760
      %2058 = vmatpush1.msra.mxu0 %v2057
      %2059 = vmatprep.subr.mxu0 0.0
      %v2060 = vand.u32 %v1133, 4294901760
      %v2061 = vsub.f32 %v1133, %v2060
      %v2062 = vand.u32 %v2061, 4294901760
      %2063 = vmatpush1.msra.mxu0 %v2062
      %2064 = vmatprep.subr.mxu0 0.0
      %v2065 = vand.u32 %v1134, 4294901760
      %v2066 = vsub.f32 %v1134, %v2065
      %v2067 = vand.u32 %v2066, 4294901760
      %2068 = vmatpush1.msra.mxu0 %v2067
      %2069 = vmatprep.subr.mxu0 0.0
      %v2070 = vand.u32 %v1135, 4294901760
      %v2071 = vsub.f32 %v1135, %v2070
      %v2072 = vand.u32 %v2071, 4294901760
      %2073 = vmatpush1.msra.mxu0 %v2072
      %2074 = vmatprep.subr.mxu0 0.0
      %2075 = vmatpush1.msra.mxu0 0.0
      %2076 = vmatprep.subr.mxu0 0.0
      %2077 = vmatpush1.msra.mxu0 0.0
      %2078 = vmatprep.subr.mxu0 0.0
      %2079 = vmatpush1.msra.mxu0 0.0
      %2080 = vmatprep.subr.mxu0 0.0
      %2081 = vmatpush1.msra.mxu0 0.0
      %2082 = vmatprep.subr.mxu0 0.0
      %2083 = vmatpush1.msra.mxu0 0.0
      %2084 = vmatprep.subr.mxu0 0.0
      %2085 = vmatpush1.msra.mxu0 0.0
      %2086 = vmatprep.subr.mxu0 0.0
      %2087 = vmatpush1.msra.mxu0 0.0
      %2088 = vmatprep.subr.mxu0 0.0
      %2089 = vmatpush1.msra.mxu0 0.0
      %2090 = vmatprep.subr.mxu0 0.0
      %2091 = vmatpush1.msra.mxu0 0.0
      %2092 = vmatprep.subr.mxu0 0.0
      %2093 = vmatpush1.msra.mxu0 0.0
      %2094 = vmatprep.subr.mxu0 0.0
      %2095 = vmatpush1.msra.mxu0 0.0
      %2096 = vmatprep.subr.mxu0 0.0
      %2097 = vmatpush1.msra.mxu0 0.0
      %2098 = vmatprep.subr.mxu0 0.0
      %2099 = vmatpush1.msra.mxu0 0.0
      %2100 = vmatprep.subr.mxu0 0.0
      %2101 = vmatpush1.msra.mxu0 0.0
      %2102 = vmatprep.subr.mxu0 0.0
      %2103 = vmatpush1.msra.mxu0 0.0
      %2104 = vmatprep.subr.mxu0 0.0
      %2105 = vmatpush1.msra.mxu0 0.0
      %2106 = vmatprep.subr.mxu0 0.0
      %2107 = vmatpush1.msra.mxu0 0.0
      %2108 = vmatprep.subr.mxu0 0.0
      %2109 = vmatpush1.msra.mxu0 0.0
      %2110 = vmatprep.subr.mxu0 0.0
      %2111 = vmatpush1.msra.mxu0 0.0
      %2112 = vmatprep.subr.mxu0 0.0
      %2113 = vmatpush1.msra.mxu0 0.0
      %2114 = vmatprep.subr.mxu0 0.0
      %2115 = vmatpush1.msra.mxu0 0.0
      %2116 = vmatprep.subr.mxu0 0.0
      %2117 = vmatpush1.msra.mxu0 0.0
      %2118 = vmatprep.subr.mxu0 0.0
      %2119 = vmatpush1.msra.mxu0 0.0
      %2120 = vmatprep.mubr.f32.mxu0 0.0
      %v2121 = vand.u32 %v1145, 4294901760
      %2122 = vmatmul.mubr.f32.gmra.mrb[0].mxu0 %v2121
      %v2123 = vpop.f32.mrb[0].mxu0
      %v2124 = vadd.f32 %v1906, %v2123
      %v2125 = vpop.f32.mrb[0].mxu0
      %2126 = vmatprep.mubr.f32.mxu0 0.0
      %v2127 = vand.u32 %v1148, 4294901760
      %2128 = vmatmul.mubr.f32.gmra.mrb[0].mxu0 %v2127
      %v2129 = vpop.f32.mrb[0].mxu0
      %v2130 = vadd.f32 %v1914, %v2129
      %v2131 = vpop.f32.mrb[0].mxu0
      %2132 = vmatprep.mubr.f32.mxu0 0.0
      %v2133 = vand.u32 %v1151, 4294901760
      %2134 = vmatmul.mubr.f32.gmra.mrb[0].mxu0 %v2133
      %v2135 = vpop.f32.mrb[0].mxu0
      %v2136 = vadd.f32 %v1922, %v2135
      %v2137 = vpop.f32.mrb[0].mxu0
      %2138 = vmatprep.mubr.f32.mxu0 0.0
      %v2139 = vand.u32 %v1154, 4294901760
      %2140 = vmatmul.mubr.f32.gmra.mrb[0].mxu0 %v2139
      %v2141 = vpop.f32.mrb[0].mxu0
      %v2142 = vadd.f32 %v1930, %v2141
      %v2143 = vpop.f32.mrb[0].mxu0
      %2144 = vmatprep.mubr.f32.mxu0 0.0
      %v2145 = vand.u32 %v1157, 4294901760
      %2146 = vmatmul.mubr.f32.gmra.mrb[0].mxu0 %v2145
      %v2147 = vpop.f32.mrb[0].mxu0
      %v2148 = vadd.f32 %v1938, %v2147
      %v2149 = vpop.f32.mrb[0].mxu0
      %2150 = vmatprep.mubr.f32.mxu0 0.0
      %v2151 = vand.u32 %v1160, 4294901760
      %2152 = vmatmul.mubr.f32.gmra.mrb[0].mxu0 %v2151
      %v2153 = vpop.f32.mrb[0].mxu0
      %v2154 = vadd.f32 %v1946, %v2153
      %v2155 = vpop.f32.mrb[0].mxu0
      %2156 = vmatprep.mubr.f32.mxu0 0.0
      %v2157 = vand.u32 %v1163, 4294901760
      %2158 = vmatmul.mubr.f32.gmra.mrb[0].mxu0 %v2157
      %v2159 = vpop.f32.mrb[0].mxu0
      %v2160 = vadd.f32 %v1954, %v2159
      %v2161 = vpop.f32.mrb[0].mxu0
      %2162 = vmatprep.mubr.f32.mxu0 0.0
      %v2163 = vand.u32 %v1166, 4294901760
      %2164 = vmatmul.mubr.f32.gmra.mrb[0].mxu0 %v2163
      %v2165 = vpop.f32.mrb[0].mxu0
      %v2166 = vadd.f32 %v1962, %v2165
      %v2167 = vpop.f32.mrb[0].mxu0
      %2168 = vmatprep.mubr.f32.mxu0 0.0
      %v2169 = vand.u32 %v1169, 4294901760
      %2170 = vmatmul.mubr.f32.gmra.mrb[0].mxu0 %v2169
      %v2171 = vpop.f32.mrb[0].mxu0
      %v2172 = vadd.f32 %v1970, %v2171
      %v2173 = vpop.f32.mrb[0].mxu0
      %2174 = vmatprep.mubr.f32.mxu0 0.0
      %v2175 = vand.u32 %v1172, 4294901760
      %2176 = vmatmul.mubr.f32.gmra.mrb[0].mxu0 %v2175
      %v2177 = vpop.f32.mrb[0].mxu0
      %v2178 = vadd.f32 %v1978, %v2177
      %v2179 = vpop.f32.mrb[0].mxu0
      %2180 = vmatprep.mubr.f32.mxu0 0.0
      %v2181 = vand.u32 %v1175, 4294901760
      %2182 = vmatmul.mubr.f32.gmra.mrb[0].mxu0 %v2181
      %v2183 = vpop.f32.mrb[0].mxu0
      %v2184 = vadd.f32 %v1986, %v2183
      %v2185 = vpop.f32.mrb[0].mxu0
      %2186 = vmatprep.mubr.f32.mxu0 0.0
      %v2187 = vand.u32 %v1178, 4294901760
      %2188 = vmatmul.mubr.f32.gmra.mrb[0].mxu0 %v2187
      %v2189 = vpop.f32.mrb[0].mxu0
      %v2190 = vadd.f32 %v1994, %v2189
      %v2191 = vpop.f32.mrb[0].mxu0
      %2192 = vmatprep.mubr.f32.mxu0 0.0
      %v2193 = vand.u32 %v1181, 4294901760
      %2194 = vmatmul.mubr.f32.gmra.mrb[0].mxu0 %v2193
      %v2195 = vpop.f32.mrb[0].mxu0
      %v2196 = vadd.f32 %v2002, %v2195
      %v2197 = vpop.f32.mrb[0].mxu0
      %2198 = vmatprep.mubr.f32.mxu0 0.0
      %v2199 = vand.u32 %v1184, 4294901760
      %2200 = vmatmul.mubr.f32.gmra.mrb[0].mxu0 %v2199
      %v2201 = vpop.f32.mrb[0].mxu0
      %v2202 = vadd.f32 %v2010, %v2201
      %v2203 = vpop.f32.mrb[0].mxu0
      %2204 = vmatprep.mubr.f32.mxu0 0.0
      %v2205 = vand.u32 %v1187, 4294901760
      %2206 = vmatmul.mubr.f32.gmra.mrb[0].mxu0 %v2205
      %v2207 = vpop.f32.mrb[0].mxu0
      %v2208 = vadd.f32 %v2018, %v2207
      %v2209 = vpop.f32.mrb[0].mxu0
      %2210 = vmatprep.mubr.f32.mxu0 0.0
      %v2211 = vand.u32 %v1190, 4294901760
      %2212 = vmatmul.mubr.f32.gmra.mrb[0].mxu0 %v2211
      %v2213 = vpop.f32.mrb[0].mxu0
      %v2214 = vadd.f32 %v2026, %v2213
      %v2215 = vpop.f32.mrb[0].mxu0
      %2216 = vdwg.mxu0
      %2217 = vmatprep.subr.mxu0 0.0
      %v2218 = vand.u32 %v1127, 4294901760
      %2219 = vmatpush1.msra.mxu0 %v2218
      %2220 = vmatprep.subr.mxu0 0.0
      %v2221 = vand.u32 %v1128, 4294901760
      %2222 = vmatpush1.msra.mxu0 %v2221
      %2223 = vmatprep.subr.mxu0 0.0
      %v2224 = vand.u32 %v1129, 4294901760
      %2225 = vmatpush1.msra.mxu0 %v2224
      %2226 = vmatprep.subr.mxu0 0.0
      %v2227 = vand.u32 %v1130, 4294901760
      %2228 = vmatpush1.msra.mxu0 %v2227
      %2229 = vmatprep.subr.mxu0 0.0
      %v2230 = vand.u32 %v1131, 4294901760
      %2231 = vmatpush1.msra.mxu0 %v2230
      %2232 = vmatprep.subr.mxu0 0.0
      %v2233 = vand.u32 %v1132, 4294901760
      %2234 = vmatpush1.msra.mxu0 %v2233
      %2235 = vmatprep.subr.mxu0 0.0
      %v2236 = vand.u32 %v1133, 4294901760
      %2237 = vmatpush1.msra.mxu0 %v2236
      %2238 = vmatprep.subr.mxu0 0.0
      %v2239 = vand.u32 %v1134, 4294901760
      %2240 = vmatpush1.msra.mxu0 %v2239
      %2241 = vmatprep.subr.mxu0 0.0
      %v2242 = vand.u32 %v1135, 4294901760
      %2243 = vmatpush1.msra.mxu0 %v2242
      %2244 = vmatprep.subr.mxu0 0.0
      %2245 = vmatpush1.msra.mxu0 0.0
      %2246 = vmatprep.subr.mxu0 0.0
      %2247 = vmatpush1.msra.mxu0 0.0
      %2248 = vmatprep.subr.mxu0 0.0
      %2249 = vmatpush1.msra.mxu0 0.0
      %2250 = vmatprep.subr.mxu0 0.0
      %2251 = vmatpush1.msra.mxu0 0.0
      %2252 = vmatprep.subr.mxu0 0.0
      %2253 = vmatpush1.msra.mxu0 0.0
      %2254 = vmatprep.subr.mxu0 0.0
      %2255 = vmatpush1.msra.mxu0 0.0
      %2256 = vmatprep.subr.mxu0 0.0
      %2257 = vmatpush1.msra.mxu0 0.0
      %2258 = vmatprep.subr.mxu0 0.0
      %2259 = vmatpush1.msra.mxu0 0.0
      %2260 = vmatprep.subr.mxu0 0.0
      %2261 = vmatpush1.msra.mxu0 0.0
      %2262 = vmatprep.subr.mxu0 0.0
      %2263 = vmatpush1.msra.mxu0 0.0
      %2264 = vmatprep.subr.mxu0 0.0
      %2265 = vmatpush1.msra.mxu0 0.0
      %2266 = vmatprep.subr.mxu0 0.0
      %2267 = vmatpush1.msra.mxu0 0.0
      %2268 = vmatprep.subr.mxu0 0.0
      %2269 = vmatpush1.msra.mxu0 0.0
      %2270 = vmatprep.subr.mxu0 0.0
      %2271 = vmatpush1.msra.mxu0 0.0
      %2272 = vmatprep.subr.mxu0 0.0
      %2273 = vmatpush1.msra.mxu0 0.0
      %2274 = vmatprep.subr.mxu0 0.0
      %2275 = vmatpush1.msra.mxu0 0.0
      %2276 = vmatprep.subr.mxu0 0.0
      %2277 = vmatpush1.msra.mxu0 0.0
      %2278 = vmatprep.subr.mxu0 0.0
      %2279 = vmatpush1.msra.mxu0 0.0
      %2280 = vmatprep.subr.mxu0 0.0
      %2281 = vmatpush1.msra.mxu0 0.0
      %2282 = vmatprep.subr.mxu0 0.0
      %2283 = vmatpush1.msra.mxu0 0.0
      %2284 = vmatprep.subr.mxu0 0.0
      %2285 = vmatpush1.msra.mxu0 0.0
      %2286 = vmatprep.subr.mxu0 0.0
      %2287 = vmatpush1.msra.mxu0 0.0
      %2288 = vmatprep.subr.mxu0 0.0
      %2289 = vmatpush1.msra.mxu0 0.0
      %2290 = vmatprep.mubr.f32.mxu0 0.0
      %v2291 = vand.u32 %v1145, 4294901760
      %2292 = vmatmul.mubr.f32.gmra.mrb[0].mxu0 %v2291
      %v2293 = vpop.f32.mrb[0].mxu0
      %v2294 = vadd.f32 %v2124, %v2293
      %v2295 = vpop.f32.mrb[0].mxu0
      %2296 = vmatprep.mubr.f32.mxu0 0.0
      %v2297 = vand.u32 %v1148, 4294901760
      %2298 = vmatmul.mubr.f32.gmra.mrb[0].mxu0 %v2297
      %v2299 = vpop.f32.mrb[0].mxu0
      %v2300 = vadd.f32 %v2130, %v2299
      %v2301 = vpop.f32.mrb[0].mxu0
      %2302 = vmatprep.mubr.f32.mxu0 0.0
      %v2303 = vand.u32 %v1151, 4294901760
      %2304 = vmatmul.mubr.f32.gmra.mrb[0].mxu0 %v2303
      %v2305 = vpop.f32.mrb[0].mxu0
      %v2306 = vadd.f32 %v2136, %v2305
      %v2307 = vpop.f32.mrb[0].mxu0
      %2308 = vmatprep.mubr.f32.mxu0 0.0
      %v2309 = vand.u32 %v1154, 4294901760
      %2310 = vmatmul.mubr.f32.gmra.mrb[0].mxu0 %v2309
      %v2311 = vpop.f32.mrb[0].mxu0
      %v2312 = vadd.f32 %v2142, %v2311
      %v2313 = vpop.f32.mrb[0].mxu0
      %2314 = vmatprep.mubr.f32.mxu0 0.0
      %v2315 = vand.u32 %v1157, 4294901760
      %2316 = vmatmul.mubr.f32.gmra.mrb[0].mxu0 %v2315
      %v2317 = vpop.f32.mrb[0].mxu0
      %v2318 = vadd.f32 %v2148, %v2317
      %v2319 = vpop.f32.mrb[0].mxu0
      %2320 = vmatprep.mubr.f32.mxu0 0.0
      %v2321 = vand.u32 %v1160, 4294901760
      %2322 = vmatmul.mubr.f32.gmra.mrb[0].mxu0 %v2321
      %v2323 = vpop.f32.mrb[0].mxu0
      %v2324 = vadd.f32 %v2154, %v2323
      %v2325 = vpop.f32.mrb[0].mxu0
      %2326 = vmatprep.mubr.f32.mxu0 0.0
      %v2327 = vand.u32 %v1163, 4294901760
      %2328 = vmatmul.mubr.f32.gmra.mrb[0].mxu0 %v2327
      %v2329 = vpop.f32.mrb[0].mxu0
      %v2330 = vadd.f32 %v2160, %v2329
      %v2331 = vpop.f32.mrb[0].mxu0
      %2332 = vmatprep.mubr.f32.mxu0 0.0
      %v2333 = vand.u32 %v1166, 4294901760
      %2334 = vmatmul.mubr.f32.gmra.mrb[0].mxu0 %v2333
      %v2335 = vpop.f32.mrb[0].mxu0
      %v2336 = vadd.f32 %v2166, %v2335
      %v2337 = vpop.f32.mrb[0].mxu0
      %2338 = vmatprep.mubr.f32.mxu0 0.0
      %v2339 = vand.u32 %v1169, 4294901760
      %2340 = vmatmul.mubr.f32.gmra.mrb[0].mxu0 %v2339
      %v2341 = vpop.f32.mrb[0].mxu0
      %v2342 = vadd.f32 %v2172, %v2341
      %v2343 = vpop.f32.mrb[0].mxu0
      %2344 = vmatprep.mubr.f32.mxu0 0.0
      %v2345 = vand.u32 %v1172, 4294901760
      %2346 = vmatmul.mubr.f32.gmra.mrb[0].mxu0 %v2345
      %v2347 = vpop.f32.mrb[0].mxu0
      %v2348 = vadd.f32 %v2178, %v2347
      %v2349 = vpop.f32.mrb[0].mxu0
      %2350 = vmatprep.mubr.f32.mxu0 0.0
      %v2351 = vand.u32 %v1175, 4294901760
      %2352 = vmatmul.mubr.f32.gmra.mrb[0].mxu0 %v2351
      %v2353 = vpop.f32.mrb[0].mxu0
      %v2354 = vadd.f32 %v2184, %v2353
      %v2355 = vpop.f32.mrb[0].mxu0
      %2356 = vmatprep.mubr.f32.mxu0 0.0
      %v2357 = vand.u32 %v1178, 4294901760
      %2358 = vmatmul.mubr.f32.gmra.mrb[0].mxu0 %v2357
      %v2359 = vpop.f32.mrb[0].mxu0
      %v2360 = vadd.f32 %v2190, %v2359
      %v2361 = vpop.f32.mrb[0].mxu0
      %2362 = vmatprep.mubr.f32.mxu0 0.0
      %v2363 = vand.u32 %v1181, 4294901760
      %2364 = vmatmul.mubr.f32.gmra.mrb[0].mxu0 %v2363
      %v2365 = vpop.f32.mrb[0].mxu0
      %v2366 = vadd.f32 %v2196, %v2365
      %v2367 = vpop.f32.mrb[0].mxu0
      %2368 = vmatprep.mubr.f32.mxu0 0.0
      %v2369 = vand.u32 %v1184, 4294901760
      %2370 = vmatmul.mubr.f32.gmra.mrb[0].mxu0 %v2369
      %v2371 = vpop.f32.mrb[0].mxu0
      %v2372 = vadd.f32 %v2202, %v2371
      %v2373 = vpop.f32.mrb[0].mxu0
      %2374 = vmatprep.mubr.f32.mxu0 0.0
      %v2375 = vand.u32 %v1187, 4294901760
      %2376 = vmatmul.mubr.f32.gmra.mrb[0].mxu0 %v2375
      %v2377 = vpop.f32.mrb[0].mxu0
      %v2378 = vadd.f32 %v2208, %v2377
      %v2379 = vpop.f32.mrb[0].mxu0
      %2380 = vmatprep.mubr.f32.mxu0 0.0
      %v2381 = vand.u32 %v1190, 4294901760
      %2382 = vmatmul.mubr.f32.gmra.mrb[0].mxu0 %v2381
      %v2383 = vpop.f32.mrb[0].mxu0
      %v2384 = vadd.f32 %v2214, %v2383
      %v2385 = vpop.f32.mrb[0].mxu0
      %2386 = vdwg.mxu0
      %2387 = vst.msk [vmem:[%s234] sm:$0xff] %vm245, %v2294
      %2388 = vst.msk [vmem:[%s234 + $0x8] sm:$0xff] %vm245, %v2300
      %2389 = vst.msk [vmem:[%s234 + $0x10] sm:$0xff] %vm245, %v2306
      %2390 = vst.msk [vmem:[%s234 + $0x18] sm:$0xff] %vm245, %v2312
      %2391 = vst.msk [vmem:[%s234 + $0x20] sm:$0xff] %vm245, %v2318
      %2392 = vst.msk [vmem:[%s234 + $0x28] sm:$0xff] %vm245, %v2324
      %2393 = vst.msk [vmem:[%s234 + $0x30] sm:$0xff] %vm245, %v2330
      %2394 = vst.msk [vmem:[%s234 + $0x38] sm:$0xff] %vm245, %v2336
      %2395 = vst.msk [vmem:[%s234 + $0x40] sm:$0xff] %vm245, %v2342
      %2396 = vst.msk [vmem:[%s234 + $0x48] sm:$0xff] %vm245, %v2348
      %2397 = vst.msk [vmem:[%s234 + $0x50] sm:$0xff] %vm245, %v2354
      %2398 = vst.msk [vmem:[%s234 + $0x58] sm:$0xff] %vm245, %v2360
      %2399 = vst.msk [vmem:[%s234 + $0x60] sm:$0xff] %vm245, %v2366
      %2400 = vst.msk [vmem:[%s234 + $0x68] sm:$0xff] %vm245, %v2372
      %2401 = vst.msk [vmem:[%s234 + $0x70] sm:$0xff] %vm245, %v2378
      %2402 = vst.msk [vmem:[%s234 + $0x78] sm:$0xff] %vm245, %v2384
      %v2403 = vsel %vm245, %v2294, 0.0
      %v2404 = vsel %vm245, %v2300, 0.0
      %v2405 = vadd.f32 %v2403, %v2404
      %v2406 = vsel %vm245, %v2306, 0.0
      %v2407 = vadd.f32 %v2405, %v2406
      %v2408 = vsel %vm245, %v2312, 0.0
      %v2409 = vadd.f32 %v2407, %v2408
      %v2410 = vsel %vm245, %v2318, 0.0
      %v2411 = vadd.f32 %v2409, %v2410
      %v2412 = vsel %vm245, %v2324, 0.0
      %v2413 = vadd.f32 %v2411, %v2412
      %v2414 = vsel %vm245, %v2330, 0.0
      %v2415 = vadd.f32 %v2413, %v2414
      %v2416 = vsel %vm245, %v2336, 0.0
      %v2417 = vadd.f32 %v2415, %v2416
      %v2418 = vsel %vm245, %v2342, 0.0
      %v2419 = vadd.f32 %v2417, %v2418
      %v2420 = vsel %vm245, %v2348, 0.0
      %v2421 = vadd.f32 %v2419, %v2420
      %v2422 = vsel %vm245, %v2354, 0.0
      %v2423 = vadd.f32 %v2421, %v2422
      %v2424 = vsel %vm245, %v2360, 0.0
      %v2425 = vadd.f32 %v2423, %v2424
      %v2426 = vsel %vm245, %v2366, 0.0
      %v2427 = vadd.f32 %v2425, %v2426
      %v2428 = vsel %vm245, %v2372, 0.0
      %v2429 = vadd.f32 %v2427, %v2428
      %v2430 = vsel %vm245, %v2378, 0.0
      %v2431 = vadd.f32 %v2429, %v2430
      %v2432 = vsel %vm245, %v2384, 0.0
      %v2433 = vadd.f32 %v2431, %v2432
      %v2434 = vrot.slane %v2433, 4
      %v2435 = vadd.f32 %v2433, %v2434
      %v2436 = vrot.slane %v2435, 2
      %v2437 = vadd.f32 %v2435, %v2436
      %v2438 = vrot.slane %v2437, 1
      %v2439 = vadd.f32 %v2437, %v2438
      %v2440 = vmul.f32 %v2294, %v2294
      %v2441 = vmul.f32 %v2300, %v2300
      %v2442 = vmul.f32 %v2306, %v2306
      %v2443 = vmul.f32 %v2312, %v2312
      %v2444 = vmul.f32 %v2318, %v2318
      %v2445 = vmul.f32 %v2324, %v2324
      %v2446 = vmul.f32 %v2330, %v2330
      %v2447 = vmul.f32 %v2336, %v2336
      %v2448 = vmul.f32 %v2342, %v2342
      %v2449 = vmul.f32 %v2348, %v2348
      %v2450 = vmul.f32 %v2354, %v2354
      %v2451 = vmul.f32 %v2360, %v2360
      %v2452 = vmul.f32 %v2366, %v2366
      %v2453 = vmul.f32 %v2372, %v2372
      %v2454 = vmul.f32 %v2378, %v2378
      %v2455 = vmul.f32 %v2384, %v2384
      %v2456 = vsel %vm245, %v2440, 0.0
      %v2457 = vsel %vm245, %v2441, 0.0
      %v2458 = vadd.f32 %v2456, %v2457
      %v2459 = vsel %vm245, %v2442, 0.0
      %v2460 = vadd.f32 %v2458, %v2459
      %v2461 = vsel %vm245, %v2443, 0.0
      %v2462 = vadd.f32 %v2460, %v2461
      %v2463 = vsel %vm245, %v2444, 0.0
      %v2464 = vadd.f32 %v2462, %v2463
      %v2465 = vsel %vm245, %v2445, 0.0
      %v2466 = vadd.f32 %v2464, %v2465
      %v2467 = vsel %vm245, %v2446, 0.0
      %v2468 = vadd.f32 %v2466, %v2467
      %v2469 = vsel %vm245, %v2447, 0.0
      %v2470 = vadd.f32 %v2468, %v2469
      %v2471 = vsel %vm245, %v2448, 0.0
      %v2472 = vadd.f32 %v2470, %v2471
      %v2473 = vsel %vm245, %v2449, 0.0
      %v2474 = vadd.f32 %v2472, %v2473
      %v2475 = vsel %vm245, %v2450, 0.0
      %v2476 = vadd.f32 %v2474, %v2475
      %v2477 = vsel %vm245, %v2451, 0.0
      %v2478 = vadd.f32 %v2476, %v2477
      %v2479 = vsel %vm245, %v2452, 0.0
      %v2480 = vadd.f32 %v2478, %v2479
      %v2481 = vsel %vm245, %v2453, 0.0
      %v2482 = vadd.f32 %v2480, %v2481
      %v2483 = vsel %vm245, %v2454, 0.0
      %v2484 = vadd.f32 %v2482, %v2483
      %v2485 = vsel %vm245, %v2455, 0.0
      %v2486 = vadd.f32 %v2484, %v2485
      %v2487 = vrot.slane %v2486, 4
      %v2488 = vadd.f32 %v2486, %v2487
      %v2489 = vrot.slane %v2488, 2
      %v2490 = vadd.f32 %v2488, %v2489
      %v2491 = vrot.slane %v2490, 1
      %v2492 = vadd.f32 %v2490, %v2491
      %vm2493 = vcmask 1040384
      %v2494 = vsel %vm2493, %v2439, %v2492
      %2495 = vst.msk [vmem:[%s243] sm:$0x3] %vm248, %v2494
      %s2496 = smul.u32 8, %s21
      %p2497 = scmp.lt.s32.totalorder %s20, 1
      %s2498 = scalar_select %p2497, %s20, 1
      %p2499 = scmp.lt.s32.totalorder %s2496, 15
      %s2500 = scalar_select %p2499, %s2496, 15
      %s2501 = smul.addr %s2500, 2
      %s2502 = smul.addr %s2498, 32
      %s2503 = sadd.s32 %s2501, %s2502
      %s2504 = smul.addr %s2503, 8
      %s2505 = scalar_lea.vmem %s3, %s2504
      %p2506 = scmp.lt.s32.totalorder %s20, 1
      %s2507 = scalar_select %p2506, %s20, 1
      %p2508 = scmp.lt.s32.totalorder %s21, 1
      %s2509 = scalar_select %p2508, %s21, 1
      %s2510 = smul.addr %s2507, 2
      %s2511 = sadd.s32 %s2509, %s2510
      %s2512 = smul.addr %s2511, 2
      %s2513 = scalar_lea.vmem %s4, %s2512
      // Predicated region
      $region41: #{downsample.6} parent=31 // pred_check
        %p2514 = pneg %p116
      $region42: #{downsample.6} parent=31 // pred_check_branch
        %2516 = sbr.rel (%p2514) target = $region44
      $region43: #{downsample.6} parent=31 // pred_region
        %s2517 = smul.u32 8, %s21
      $region44: #{downsample.6} parent=31 // pred_fallthru
        _
      // Predicated region
      $region45: #{downsample.6} parent=31 // pred_check
        %p2518 = pneg %p144
      $region46: #{downsample.6} parent=31 // pred_check_branch
        %2520 = sbr.rel (%p2518) target = $region48
      $region47: #{downsample.6} parent=31 // pred_region
        _
      $region48: #{downsample.6} parent=31 // pred_fallthru
        _
    $region32: #{downsample.6} parent=5 // pred_fallthru
      _
    %p2521 = scmp.le.s32.totalorder 2, %s11
    // Predicated region
    $region49: #{downsample.6} parent=5 // pred_check
      %p2522 = pneg %p2521
    $region50: #{downsample.6} parent=5 // pred_check_branch
      %2524 = sbr.rel (%p2522) target = $region52
    $region51: #{downsample.6} parent=5 // pred_region
      %s2525 = ssub.s32 %s11, 2
      // Predicated region
      $region53: #{downsample.6} parent=51 // pred_check
        %p2526 = pneg %p122
      $region54: #{downsample.6} parent=51 // pred_check_branch
        %2528 = sbr.rel (%p2526) target = $region56
      $region55: #{downsample.6} parent=51 // pred_region
        %s2529 = smul.u32 8, %s23
        %p2530 = scmp.lt.s32.totalorder %s22, 1
        %s2531 = scalar_select %p2530, %s22, 1
        %p2532 = scmp.lt.s32.totalorder %s2529, 15
        %s2533 = scalar_select %p2532, %s2529, 15
        %s2534 = smul.addr %s2533, 2
        %s2535 = smul.addr %s2531, 32
        %s2536 = sadd.s32 %s2534, %s2535
        %s2537 = smul.addr %s2536, 8
        %s2538 = scalar_lea.vmem %s3, %s2537
      $region56: #{downsample.6} parent=51 // pred_fallthru
        _
      // Predicated region
      $region57: #{downsample.6} parent=51 // pred_check
        %p2539 = pneg %p150
      $region58: #{downsample.6} parent=51 // pred_check_branch
        %2541 = sbr.rel (%p2539) target = $region60
      $region59: #{downsample.6} parent=51 // pred_region
        %p2542 = scmp.lt.s32.totalorder %s22, 1
        %s2543 = scalar_select %p2542, %s22, 1
        %p2544 = scmp.lt.s32.totalorder %s23, 1
        %s2545 = scalar_select %p2544, %s23, 1
        %s2546 = smul.addr %s2543, 2
        %s2547 = sadd.s32 %s2545, %s2546
        %s2548 = smul.addr %s2547, 2
        %s2549 = scalar_lea.vmem %s4, %s2548
      $region60: #{downsample.6} parent=51 // pred_fallthru
        _
    $region52: #{downsample.6} parent=5 // pred_fallthru
      _
  $region6: #{downsample.6} parent=0 // loop_footer
    %s15 = sadd.s32 1, %s11
  $region7: #{downsample.6} parent=0 // loop_footer_branch
    %10 = sbr.rel target = $region3
  $region8: #{downsample.6} parent=0 // loop_exit
    _

// kernel: downsample.7
$region0: #{downsample.7}
  #allocation0 [shape = 'u32[]', space=smem, size = 0x4, offset = 0x4, fixed_abs, tag = 'smem constant byte address 0x4 - core index']
  #allocation1 [shape = 'u32[144,128]{1,0:T(1,128)}', space=vmem, size = 0x12000, scoped, tag = 'internal scratch']
  %s0 = inlined_call_operand.vmem [shape: f32[2,16,8,2,8], index: 0, kind: input, shape index: {}]
  %s1 = inlined_call_operand.vmem [shape: f32[2,2,2,8], index: 1, kind: input, shape index: {}]
  %s2 = inlined_call_operand.vmem [shape: f32[1,8], index: 2, kind: input, shape index: {}]
  %s3 = inlined_call_operand.vmem [shape: f32[1,8], index: 3, kind: input, shape index: {}]
  %s4 = inlined_call_operand.vmem [shape: f32[2,16,8,2,8], index: 4, kind: output, shape index: {0}]
  %s5 = inlined_call_operand.vmem [shape: f32[2,8,8,8], index: 5, kind: output, shape index: {1}]
  %6 = xla_tuple %s4, %s5
  %s7 = sld [smem:[#allocation0]]
  $region57: #{downsample.7} parent=0
    _
  %s9 = ssub.s32 1, %s7
  %s10 = scalar_select 0, %s9, %s7
  loop: start=0, step=1, limit=6
  $region2: #{downsample.7} parent=0 // loop_pre_header
    _
  $region3: #{downsample.7} parent=0 // loop_header
    %s12 = sphi 0, %s16
    %p13 = scmp.ge.s32.totalorder %s12, 6
    %s19 = sphi 0, %s31
    %s20 = sphi 0, %s27
    %s21 = sphi 0, %s19
    %s22 = sphi 0, %s20
    %s23 = sphi 0, %s21
    %s24 = sphi 0, %s22
    %s36 = sphi 0, %s38
    %s39 = sphi 0, %s36
    %s40 = sphi 0, %s39
    %s56 = sphi 0, %s40
    %s60 = sphi 0, %s60
    %s62 = sphi 0, %s60
    %s63 = sphi 0, %s62
    %s77 = sphi 0, %s63
    %s81 = sphi 0, %s81
    %s83 = sphi 0, %s81
    %s84 = sphi 0, %s83
    %s98 = sphi 0, %s84
    %s102 = sphi 0, %s102
    %s104 = sphi 0, %s102
    %s105 = sphi 0, %s104
    %s119 = sphi 0, %s105
    %s127 = sphi 0, %s129
    %s130 = sphi 0, %s127
    %s131 = sphi 0, %s130
    %s147 = sphi 0, %s131
    %s155 = sphi 0, %s157
    %s158 = sphi 0, %s155
    %s159 = sphi 0, %s158
    %s175 = sphi 0, %s159
  $region4: #{downsample.7} parent=0 // loop_header_branch
    %15 = sbr.rel (%p13) target = $region8
  $region5: #{downsample.7} parent=0 // loop_body
    %s17 = ssub.s32 %s12, 1
    %s18 = ssub.s32 %s12, 2
    %s25 = sadd.s32 1, %s20
    %p26 = scmp.ge.s32.totalorder %s25, 2
    %s27 = scalar_select %p26, 0, %s25
    %s28 = sadd.s32 1, %s19
    %s29 = scalar_select %p26, %s28, %s19
    %p30 = scmp.ge.s32.totalorder %s29, 2
    %s31 = scalar_select %p30, 0, %s29
    %s32 = ssub.s32 %s19, %s31
    %s33 = ssub.s32 %s20, %s27
    %s34 = sor.u32 %s32, %s33
    %p35 = scmp.eq.s32.totalorder %s34, 0
    %s37 = sadd.s32 %s36, 1
    %s38 = scalar_select %p35, %s36, %s37
    %p41 = pneg %p35
    %p42 = scmp.eq.s32.totalorder %s12, 3
    %p43 = por %p41, %p42
    %p44 = scmp.ne.s32.totalorder %s36, %s39
    %p45 = scmp.eq.s32.totalorder %s12, 0
    %p46 = por %p44, %p45
    %p47 = scmp.ne.s32.totalorder %s36, %s39
    %p48 = scmp.eq.s32.totalorder %s17, 3
    %p49 = por %p47, %p48
    %p50 = scmp.ne.s32.totalorder %s39, %s40
    %p51 = scmp.eq.s32.totalorder %s17, 0
    %p52 = por %p50, %p51
    %p53 = scmp.ne.s32.totalorder %s39, %s40
    %p54 = scmp.eq.s32.totalorder %s18, 3
    %p55 = por %p53, %p54
    %p57 = scmp.ne.s32.totalorder %s40, %s56
    %p58 = scmp.eq.s32.totalorder %s18, 0
    %p59 = por %p57, %p58
    %s61 = sadd.s32 %s60, 1
    %p64 = scmp.eq.s32.totalorder %s12, 3
    %p65 = scmp.ne.s32.totalorder %s60, %s62
    %p66 = scmp.eq.s32.totalorder %s12, 0
    %p67 = por %p65, %p66
    %p68 = scmp.ne.s32.totalorder %s60, %s62
    %p69 = scmp.eq.s32.totalorder %s17, 3
    %p70 = por %p68, %p69
    %p71 = scmp.ne.s32.totalorder %s62, %s63
    %p72 = scmp.eq.s32.totalorder %s17, 0
    %p73 = por %p71, %p72
    %p74 = scmp.ne.s32.totalorder %s62, %s63
    %p75 = scmp.eq.s32.totalorder %s18, 3
    %p76 = por %p74, %p75
    %p78 = scmp.ne.s32.totalorder %s63, %s77
    %p79 = scmp.eq.s32.totalorder %s18, 0
    %p80 = por %p78, %p79
    %s82 = sadd.s32 %s81, 1
    %p85 = scmp.eq.s32.totalorder %s12, 3
    %p86 = scmp.ne.s32.totalorder %s81, %s83
    %p87 = scmp.eq.s32.totalorder %s12, 0
    %p88 = por %p86, %p87
    %p89 = scmp.ne.s32.totalorder %s81, %s83
    %p90 = scmp.eq.s32.totalorder %s17, 3
    %p91 = por %p89, %p90
    %p92 = scmp.ne.s32.totalorder %s83, %s84
    %p93 = scmp.eq.s32.totalorder %s17, 0
    %p94 = por %p92, %p93
    %p95 = scmp.ne.s32.totalorder %s83, %s84
    %p96 = scmp.eq.s32.totalorder %s18, 3
    %p97 = por %p95, %p96
    %p99 = scmp.ne.s32.totalorder %s84, %s98
    %p100 = scmp.eq.s32.totalorder %s18, 0
    %p101 = por %p99, %p100
    %s103 = sadd.s32 %s102, 1
    %p106 = scmp.eq.s32.totalorder %s12, 3
    %p107 = scmp.ne.s32.totalorder %s102, %s104
    %p108 = scmp.eq.s32.totalorder %s12, 0
    %p109 = por %p107, %p108
    %p110 = scmp.ne.s32.totalorder %s102, %s104
    %p111 = scmp.eq.s32.totalorder %s17, 3
    %p112 = por %p110, %p111
    %p113 = scmp.ne.s32.totalorder %s104, %s105
    %p114 = scmp.eq.s32.totalorder %s17, 0
    %p115 = por %p113, %p114
    %p116 = scmp.ne.s32.totalorder %s104, %s105
    %p117 = scmp.eq.s32.totalorder %s18, 3
    %p118 = por %p116, %p117
    %p120 = scmp.ne.s32.totalorder %s105, %s119
    %p121 = scmp.eq.s32.totalorder %s18, 0
    %p122 = por %p120, %p121
    %s123 = ssub.s32 %s19, %s31
    %s124 = ssub.s32 %s20, %s27
    %s125 = sor.u32 %s123, %s124
    %p126 = scmp.eq.s32.totalorder %s125, 0
    %s128 = sadd.s32 %s127, 1
    %s129 = scalar_select %p126, %s127, %s128
    %p132 = pneg %p126
    %p133 = scmp.eq.s32.totalorder %s12, 3
    %p134 = por %p132, %p133
    %p135 = scmp.ne.s32.totalorder %s127, %s130
    %p136 = scmp.eq.s32.totalorder %s12, 0
    %p137 = por %p135, %p136
    %p138 = scmp.ne.s32.totalorder %s127, %s130
    %p139 = scmp.eq.s32.totalorder %s17, 3
    %p140 = por %p138, %p139
    %p141 = scmp.ne.s32.totalorder %s130, %s131
    %p142 = scmp.eq.s32.totalorder %s17, 0
    %p143 = por %p141, %p142
    %p144 = scmp.ne.s32.totalorder %s130, %s131
    %p145 = scmp.eq.s32.totalorder %s18, 3
    %p146 = por %p144, %p145
    %p148 = scmp.ne.s32.totalorder %s131, %s147
    %p149 = scmp.eq.s32.totalorder %s18, 0
    %p150 = por %p148, %p149
    %s151 = ssub.s32 %s19, %s31
    %s152 = ssub.s32 %s20, %s27
    %s153 = sor.u32 %s151, %s152
    %p154 = scmp.eq.s32.totalorder %s153, 0
    %s156 = sadd.s32 %s155, 1
    %s157 = scalar_select %p154, %s155, %s156
    %p160 = pneg %p154
    %p161 = scmp.eq.s32.totalorder %s12, 3
    %p162 = por %p160, %p161
    %p163 = scmp.ne.s32.totalorder %s155, %s158
    %p164 = scmp.eq.s32.totalorder %s12, 0
    %p165 = por %p163, %p164
    %p166 = scmp.ne.s32.totalorder %s155, %s158
    %p167 = scmp.eq.s32.totalorder %s17, 3
    %p168 = por %p166, %p167
    %p169 = scmp.ne.s32.totalorder %s158, %s159
    %p170 = scmp.eq.s32.totalorder %s17, 0
    %p171 = por %p169, %p170
    %p172 = scmp.ne.s32.totalorder %s158, %s159
    %p173 = scmp.eq.s32.totalorder %s18, 3
    %p174 = por %p172, %p173
    %p176 = scmp.ne.s32.totalorder %s159, %s175
    %p177 = scmp.eq.s32.totalorder %s18, 0
    %p178 = por %p176, %p177
    %p179 = scmp.le.s32.totalorder 1, %s12
    %p180 = scmp.lt.s32.totalorder %s12, 5
    %p181 = pnand %p179, %p180
    %p182 = pneg %p181
    // Predicated region
    $region9: #{downsample.7} parent=5 // pred_check
      _
    $region10: #{downsample.7} parent=5 // pred_check_branch
      %184 = sbr.rel (%p181) target = $region12
    $region11: #{downsample.7} parent=5 // pred_region
      %s185 = ssub.s32 %s12, 1
      // Predicated region
      $region13: #{downsample.7} parent=11 // pred_check
        %p186 = pneg %p73
      $region14: #{downsample.7} parent=11 // pred_check_branch
        %188 = sbr.rel (%p186) target = $region16
      $region15: #{downsample.7} parent=11 // pred_region
        _
      $region16: #{downsample.7} parent=11 // pred_fallthru
        _
      // Predicated region
      $region17: #{downsample.7} parent=11 // pred_check
        %p189 = pneg %p94
      $region18: #{downsample.7} parent=11 // pred_check_branch
        %191 = sbr.rel (%p189) target = $region20
      $region19: #{downsample.7} parent=11 // pred_region
        _
      $region20: #{downsample.7} parent=11 // pred_fallthru
        _
      // Predicated region
      $region21: #{downsample.7} parent=11 // pred_check
        %p192 = pneg %p115
      $region22: #{downsample.7} parent=11 // pred_check_branch
        %194 = sbr.rel (%p192) target = $region24
      $region23: #{downsample.7} parent=11 // pred_region
        _
      $region24: #{downsample.7} parent=11 // pred_fallthru
        _
    $region12: #{downsample.7} parent=5 // pred_fallthru
      _
    %p195 = scmp.lt.s32.totalorder %s12, 4
    // Predicated region
    $region25: #{downsample.7} parent=5 // pred_check
      %p196 = pneg %p195
    $region26: #{downsample.7} parent=5 // pred_check_branch
      %198 = sbr.rel (%p196) target = $region28
    $region27: #{downsample.7} parent=5 // pred_region
      // Predicated region
      $region29: #{downsample.7} parent=27 // pred_check
        %p199 = pneg %p46
      $region30: #{downsample.7} parent=27 // pred_check_branch
        %201 = sbr.rel (%p199) target = $region32
      $region31: #{downsample.7} parent=27 // pred_region
        %s202 = smul.u32 8, %s20
        %p203 = scmp.lt.s32.totalorder %s19, 1
        %s204 = scalar_select %p203, %s19, 1
        %p205 = scmp.lt.s32.totalorder %s202, 15
        %s206 = scalar_select %p205, %s202, 15
        %s207 = smul.addr %s206, 8
        %s208 = smul.addr %s204, 128
        %s209 = sadd.s32 %s207, %s208
        %s210 = smul.addr %s209, 2
        %s211 = scalar_lea.vmem %s0, %s210
        %s212 = smul.u32 8, %s20
      $region32: #{downsample.7} parent=27 // pred_fallthru
        _
    $region28: #{downsample.7} parent=5 // pred_fallthru
      _
    %p213 = scmp.le.s32.totalorder 1, %s12
    %p214 = scmp.lt.s32.totalorder %s12, 5
    %p215 = pnand %p213, %p214
    %p216 = pneg %p215
    // Predicated region
    $region33: #{downsample.7} parent=5 // pred_check
      _
    $region34: #{downsample.7} parent=5 // pred_check_branch
      %218 = sbr.rel (%p215) target = $region36
    $region35: #{downsample.7} parent=5 // pred_region
      %s219 = ssub.s32 %s12, 1
      %s220 = smul.u32 8, %s22
      %p221 = scmp.lt.s32.totalorder %s21, 1
      %s222 = scalar_select %p221, %s21, 1
      %p223 = scmp.lt.s32.totalorder %s220, 15
      %s224 = scalar_select %p223, %s220, 15
      %s225 = smul.addr %s224, 8
      %s226 = smul.addr %s222, 128
      %s227 = sadd.s32 %s225, %s226
      %s228 = smul.addr %s227, 2
      %s229 = scalar_lea.vmem %s0, %s228
      %p230 = pneg %p52
      %p231 = pneg %p49
      %p232 = pneg %p73
      %p233 = pneg %p70
      %p234 = pneg %p94
      %p235 = pneg %p91
      %p236 = pneg %p115
      %p237 = pneg %p112
      %p238 = pneg %p143
      %p239 = pneg %p140
      %s240 = smul.u32 8, %s22
      %p241 = scmp.lt.s32.totalorder %s21, 1
      %s242 = scalar_select %p241, %s21, 1
      %p243 = scmp.lt.s32.totalorder %s240, 15
      %s244 = scalar_select %p243, %s240, 15
      %s245 = smul.addr %s244, 8
      %s246 = smul.addr %s242, 128
      %s247 = sadd.s32 %s245, %s246
      %s248 = smul.addr %s247, 2
      %s249 = scalar_lea.vmem %s4, %s248
      %p250 = pneg %p171
      %p251 = pneg %p168
      %s252 = smul.u32 4, %s22
      %p253 = scmp.lt.s32.totalorder %s21, 1
      %s254 = scalar_select %p253, %s21, 1
      %p255 = scmp.lt.s32.totalorder %s252, 7
      %s256 = scalar_select %p255, %s252, 7
      %s257 = smul.addr %s254, 8
      %s258 = sadd.s32 %s256, %s257
      %s259 = smul.addr %s258, 8
      %s260 = scalar_lea.vmem %s5, %s259
      %s261 = smul.u32 8, %s22
      %p262 = scmp.lt.s32.totalorder %s21, 1
      %s263 = scalar_select %p262, %s21, 1
      %p264 = scmp.lt.s32.totalorder %s261, 15
      %s265 = scalar_select %p264, %s261, 15
      %s266 = smul.addr %s265, 8
      %s267 = smul.addr %s263, 128
      %s268 = sadd.s32 %s266, %s267
      %s269 = smul.addr %s268, 2
      %s270 = scalar_lea.vmem %s0, %s269
      %s271 = smul.u32 8, %s22
      %s272 = smul.u32 8, %s22
      %p273 = scmp.lt.s32.totalorder %s21, 1
      %s274 = scalar_select %p273, %s21, 1
      %p275 = scmp.lt.s32.totalorder %s272, 15
      %s276 = scalar_select %p275, %s272, 15
      %s277 = smul.addr %s276, 8
      %s278 = smul.addr %s274, 128
      %s279 = sadd.s32 %s277, %s278
      %s280 = smul.addr %s279, 2
      %s281 = scalar_lea.vmem %s4, %s280
      %s282 = smul.u32 8, %s22
      %s283 = smul.u32 4, %s22
      %p284 = scmp.lt.s32.totalorder %s21, 1
      %s285 = scalar_select %p284, %s21, 1
      %p286 = scmp.lt.s32.totalorder %s283, 7
      %s287 = scalar_select %p286, %s283, 7
      %s288 = smul.addr %s285, 8
      %s289 = sadd.s32 %s287, %s288
      %s290 = smul.addr %s289, 8
      %s291 = scalar_lea.vmem %s5, %s290
      %s292 = smul.u32 4, %s22
      %v293 = vld [vmem:[%s1] sm:$0x3]
      %v294 = vld [vmem:[%s1 + $0x2] sm:$0x3]
      %v295 = vld [vmem:[%s1 + $0x4] sm:$0x3]
      %v296 = vld [vmem:[%s1 + $0x6] sm:$0x3]
      %vm297 = vcmask 58368
      %v298 = vsel %vm297, %v293, 0.0
      %v299 = vsel %vm297, %v294, 0.0
      %v300 = vadd.f32 %v298, %v299
      %v301 = vsel %vm297, %v295, 0.0
      %v302 = vadd.f32 %v300, %v301
      %v303 = vsel %vm297, %v296, 0.0
      %v304 = vadd.f32 %v302, %v303
      %v305 = vmul.f32 %v304, 0.001953125
      %v306 = vmul.f32 %v305, %v305
      %v308 = vrot.slane %v306, 7
      %v310 = vsub.f32 %v305, %v308
      %v311 = vld [vmem:[%s2] sm:$0x1]
      %v312 = vadd.f32 %v310, 1e-05
      %v313 = vrsqrt.pop %v312
      %v316 = vunpack.c.l.s4 1966171168
      %v317 = vunpack.c.0.s8 %v316
      %v318 = vlaneseq
      %v319 = vshrl.u32 %v318, 7
      %v320 = vsub.s32 %v317, %v319
      %v321 = vrot.slane %v313, %v320
      %v322 = vcombine.high %v321, %v321
      %v324 = vunpack.c.l.s4 1966171168
      %v325 = vunpack.c.0.s8 %v324
      %v326 = vlaneseq
      %v327 = vshrl.u32 %v326, 7
      %v328 = vsub.s32 %v325, %v327
      %v329 = vrot.slane %v322, %v328
      %v331 = vmul.f32 %v311, %v329
      %v332 = vld [vmem:[%s3] sm:$0x1]
      %v333 = vmul.f32 %v305, %v331
      %v334 = vsub.f32 %v332, %v333
      %v335 = vld [vmem:[%s270] sm:$0x3]
      %v336 = vld [vmem:[%s270 + $0x2] sm:$0x3]
      %v337 = vld [vmem:[%s270 + $0x4] sm:$0x3]
      %v338 = vld [vmem:[%s270 + $0x6] sm:$0x3]
      %v339 = vld [vmem:[%s270 + $0x8] sm:$0x3]
      %v340 = vld [vmem:[%s270 + $0xa] sm:$0x3]
      %v341 = vld [vmem:[%s270 + $0xc] sm:$0x3]
      %v342 = vld [vmem:[%s270 + $0xe] sm:$0x3]
      %v343 = vld [vmem:[%s270 + $0x10] sm:$0x3]
      %v344 = vld [vmem:[%s270 + $0x12] sm:$0x3]
      %v345 = vld [vmem:[%s270 + $0x14] sm:$0x3]
      %v346 = vld [vmem:[%s270 + $0x16] sm:$0x3]
      %v347 = vld [vmem:[%s270 + $0x18] sm:$0x3]
      %v348 = vld [vmem:[%s270 + $0x1a] sm:$0x3]
      %v349 = vld [vmem:[%s270 + $0x1c] sm:$0x3]
      %v350 = vld [vmem:[%s270 + $0x1e] sm:$0x3]
      %v351 = vld [vmem:[%s270 + $0x20] sm:$0x3]
      %v352 = vld [vmem:[%s270 + $0x22] sm:$0x3]
      %v353 = vld [vmem:[%s270 + $0x24] sm:$0x3]
      %v354 = vld [vmem:[%s270 + $0x26] sm:$0x3]
      %v355 = vld [vmem:[%s270 + $0x28] sm:$0x3]
      %v356 = vld [vmem:[%s270 + $0x2a] sm:$0x3]
      %v357 = vld [vmem:[%s270 + $0x2c] sm:$0x3]
      %v358 = vld [vmem:[%s270 + $0x2e] sm:$0x3]
      %v359 = vld [vmem:[%s270 + $0x30] sm:$0x3]
      %v360 = vld [vmem:[%s270 + $0x32] sm:$0x3]
      %v361 = vld [vmem:[%s270 + $0x34] sm:$0x3]
      %v362 = vld [vmem:[%s270 + $0x36] sm:$0x3]
      %v363 = vld [vmem:[%s270 + $0x38] sm:$0x3]
      %v364 = vld [vmem:[%s270 + $0x3a] sm:$0x3]
      %v365 = vld [vmem:[%s270 + $0x3c] sm:$0x3]
      %v366 = vld [vmem:[%s270 + $0x3e] sm:$0x3]
      %v367 = vld [vmem:[%s270 + $0x40] sm:$0x3]
      %v368 = vld [vmem:[%s270 + $0x42] sm:$0x3]
      %v369 = vld [vmem:[%s270 + $0x44] sm:$0x3]
      %v370 = vld [vmem:[%s270 + $0x46] sm:$0x3]
      %v371 = vld [vmem:[%s270 + $0x48] sm:$0x3]
      %v372 = vld [vmem:[%s270 + $0x4a] sm:$0x3]
      %v373 = vld [vmem:[%s270 + $0x4c] sm:$0x3]
      %v374 = vld [vmem:[%s270 + $0x4e] sm:$0x3]
      %v375 = vld [vmem:[%s270 + $0x50] sm:$0x3]
      %v376 = vld [vmem:[%s270 + $0x52] sm:$0x3]
      %v377 = vld [vmem:[%s270 + $0x54] sm:$0x3]
      %v378 = vld [vmem:[%s270 + $0x56] sm:$0x3]
      %v379 = vld [vmem:[%s270 + $0x58] sm:$0x3]
      %v380 = vld [vmem:[%s270 + $0x5a] sm:$0x3]
      %v381 = vld [vmem:[%s270 + $0x5c] sm:$0x3]
      %v382 = vld [vmem:[%s270 + $0x5e] sm:$0x3]
      %v383 = vld [vmem:[%s270 + $0x60] sm:$0x3]
      %v384 = vld [vmem:[%s270 + $0x62] sm:$0x3]
      %v385 = vld [vmem:[%s270 + $0x64] sm:$0x3]
      %v386 = vld [vmem:[%s270 + $0x66] sm:$0x3]
      %v387 = vld [vmem:[%s270 + $0x68] sm:$0x3]
      %v388 = vld [vmem:[%s270 + $0x6a] sm:$0x3]
      %v389 = vld [vmem:[%s270 + $0x6c] sm:$0x3]
      %v390 = vld [vmem:[%s270 + $0x6e] sm:$0x3]
      %v391 = vld [vmem:[%s270 + $0x70] sm:$0x3]
      %v392 = vld [vmem:[%s270 + $0x72] sm:$0x3]
      %v393 = vld [vmem:[%s270 + $0x74] sm:$0x3]
      %v394 = vld [vmem:[%s270 + $0x76] sm:$0x3]
      %v395 = vld [vmem:[%s270 + $0x78] sm:$0x3]
      %v396 = vld [vmem:[%s270 + $0x7a] sm:$0x3]
      %v397 = vld [vmem:[%s270 + $0x7c] sm:$0x3]
      %v398 = vld [vmem:[%s270 + $0x7e] sm:$0x3]
      %v400 = vlaneseq
      %v401 = vshrl.u32 %v400, 7
      %v402 = vsub.s32 0, %v401
      %v403 = vrot.slane %v331, %v402
      %v405 = vmul.f32 %v335, %v403
      %v406 = vmul.f32 %v336, %v403
      %v407 = vmul.f32 %v337, %v403
      %v408 = vmul.f32 %v338, %v403
      %v409 = vmul.f32 %v339, %v403
      %v410 = vmul.f32 %v340, %v403
      %v411 = vmul.f32 %v341, %v403
      %v412 = vmul.f32 %v342, %v403
      %v413 = vmul.f32 %v343, %v403
      %v414 = vmul.f32 %v344, %v403
      %v415 = vmul.f32 %v345, %v403
      %v416 = vmul.f32 %v346, %v403
      %v417 = vmul.f32 %v347, %v403
      %v418 = vmul.f32 %v348, %v403
      %v419 = vmul.f32 %v349, %v403
      %v420 = vmul.f32 %v350, %v403
      %v421 = vmul.f32 %v351, %v403
      %v422 = vmul.f32 %v352, %v403
      %v423 = vmul.f32 %v353, %v403
      %v424 = vmul.f32 %v354, %v403
      %v425 = vmul.f32 %v355, %v403
      %v426 = vmul.f32 %v356, %v403
      %v427 = vmul.f32 %v357, %v403
      %v428 = vmul.f32 %v358, %v403
      %v429 = vmul.f32 %v359, %v403
      %v430 = vmul.f32 %v360, %v403
      %v431 = vmul.f32 %v361, %v403
      %v432 = vmul.f32 %v362, %v403
      %v433 = vmul.f32 %v363, %v403
      %v434 = vmul.f32 %v364, %v403
      %v435 = vmul.f32 %v365, %v403
      %v436 = vmul.f32 %v366, %v403
      %v437 = vmul.f32 %v367, %v403
      %v438 = vmul.f32 %v368, %v403
      %v439 = vmul.f32 %v369, %v403
      %v440 = vmul.f32 %v370, %v403
      %v441 = vmul.f32 %v371, %v403
      %v442 = vmul.f32 %v372, %v403
      %v443 = vmul.f32 %v373, %v403
      %v444 = vmul.f32 %v374, %v403
      %v445 = vmul.f32 %v375, %v403
      %v446 = vmul.f32 %v376, %v403
      %v447 = vmul.f32 %v377, %v403
      %v448 = vmul.f32 %v378, %v403
      %v449 = vmul.f32 %v379, %v403
      %v450 = vmul.f32 %v380, %v403
      %v451 = vmul.f32 %v381, %v403
      %v452 = vmul.f32 %v382, %v403
      %v453 = vmul.f32 %v383, %v403
      %v454 = vmul.f32 %v384, %v403
      %v455 = vmul.f32 %v385, %v403
      %v456 = vmul.f32 %v386, %v403
      %v457 = vmul.f32 %v387, %v403
      %v458 = vmul.f32 %v388, %v403
      %v459 = vmul.f32 %v389, %v403
      %v460 = vmul.f32 %v390, %v403
      %v461 = vmul.f32 %v391, %v403
      %v462 = vmul.f32 %v392, %v403
      %v463 = vmul.f32 %v393, %v403
      %v464 = vmul.f32 %v394, %v403
      %v465 = vmul.f32 %v395, %v403
      %v466 = vmul.f32 %v396, %v403
      %v467 = vmul.f32 %v397, %v403
      %v468 = vmul.f32 %v398, %v403
      %v470 = vlaneseq
      %v471 = vshrl.u32 %v470, 7
      %v472 = vsub.s32 0, %v471
      %v473 = vrot.slane %v334, %v472
      %v475 = vadd.f32 %v405, %v473
      %v476 = vadd.f32 %v406, %v473
      %v477 = vadd.f32 %v407, %v473
      %v478 = vadd.f32 %v408, %v473
      %v479 = vadd.f32 %v409, %v473
      %v480 = vadd.f32 %v410, %v473
      %v481 = vadd.f32 %v411, %v473
      %v482 = vadd.f32 %v412, %v473
      %v483 = vadd.f32 %v413, %v473
      %v484 = vadd.f32 %v414, %v473
      %v485 = vadd.f32 %v415, %v473
      %v486 = vadd.f32 %v416, %v473
      %v487 = vadd.f32 %v417, %v473
      %v488 = vadd.f32 %v418, %v473
      %v489 = vadd.f32 %v419, %v473
      %v490 = vadd.f32 %v420, %v473
      %v491 = vadd.f32 %v421, %v473
      %v492 = vadd.f32 %v422, %v473
      %v493 = vadd.f32 %v423, %v473
      %v494 = vadd.f32 %v424, %v473
      %v495 = vadd.f32 %v425, %v473
      %v496 = vadd.f32 %v426, %v473
      %v497 = vadd.f32 %v427, %v473
      %v498 = vadd.f32 %v428, %v473
      %v499 = vadd.f32 %v429, %v473
      %v500 = vadd.f32 %v430, %v473
      %v501 = vadd.f32 %v431, %v473
      %v502 = vadd.f32 %v432, %v473
      %v503 = vadd.f32 %v433, %v473
      %v504 = vadd.f32 %v434, %v473
      %v505 = vadd.f32 %v435, %v473
      %v506 = vadd.f32 %v436, %v473
      %v507 = vadd.f32 %v437, %v473
      %v508 = vadd.f32 %v438, %v473
      %v509 = vadd.f32 %v439, %v473
      %v510 = vadd.f32 %v440, %v473
      %v511 = vadd.f32 %v441, %v473
      %v512 = vadd.f32 %v442, %v473
      %v513 = vadd.f32 %v443, %v473
      %v514 = vadd.f32 %v444, %v473
      %v515 = vadd.f32 %v445, %v473
      %v516 = vadd.f32 %v446, %v473
      %v517 = vadd.f32 %v447, %v473
      %v518 = vadd.f32 %v448, %v473
      %v519 = vadd.f32 %v449, %v473
      %v520 = vadd.f32 %v450, %v473
      %v521 = vadd.f32 %v451, %v473
      %v522 = vadd.f32 %v452, %v473
      %v523 = vadd.f32 %v453, %v473
      %v524 = vadd.f32 %v454, %v473
      %v525 = vadd.f32 %v455, %v473
      %v526 = vadd.f32 %v456, %v473
      %v527 = vadd.f32 %v457, %v473
      %v528 = vadd.f32 %v458, %v473
      %v529 = vadd.f32 %v459, %v473
      %v530 = vadd.f32 %v460, %v473
      %v531 = vadd.f32 %v461, %v473
      %v532 = vadd.f32 %v462, %v473
      %v533 = vadd.f32 %v463, %v473
      %v534 = vadd.f32 %v464, %v473
      %v535 = vadd.f32 %v465, %v473
      %v536 = vadd.f32 %v466, %v473
      %v537 = vadd.f32 %v467, %v473
      %v538 = vadd.f32 %v468, %v473
      %v539 = vmin.f32 %v475, 20.0
      %v540 = vmin.f32 %v476, 20.0
      %v541 = vmin.f32 %v477, 20.0
      %v542 = vmin.f32 %v478, 20.0
      %v543 = vmin.f32 %v479, 20.0
      %v544 = vmin.f32 %v480, 20.0
      %v545 = vmin.f32 %v481, 20.0
      %v546 = vmin.f32 %v482, 20.0
      %v547 = vmin.f32 %v483, 20.0
      %v548 = vmin.f32 %v484, 20.0
      %v549 = vmin.f32 %v485, 20.0
      %v550 = vmin.f32 %v486, 20.0
      %v551 = vmin.f32 %v487, 20.0
      %v552 = vmin.f32 %v488, 20.0
      %v553 = vmin.f32 %v489, 20.0
      %v554 = vmin.f32 %v490, 20.0
      %v555 = vmin.f32 %v491, 20.0
      %v556 = vmin.f32 %v492, 20.0
      %v557 = vmin.f32 %v493, 20.0
      %v558 = vmin.f32 %v494, 20.0
      %v559 = vmin.f32 %v495, 20.0
      %v560 = vmin.f32 %v496, 20.0
      %v561 = vmin.f32 %v497, 20.0
      %v562 = vmin.f32 %v498, 20.0
      %v563 = vmin.f32 %v499, 20.0
      %v564 = vmin.f32 %v500, 20.0
      %v565 = vmin.f32 %v501, 20.0
      %v566 = vmin.f32 %v502, 20.0
      %v567 = vmin.f32 %v503, 20.0
      %v568 = vmin.f32 %v504, 20.0
      %v569 = vmin.f32 %v505, 20.0
      %v570 = vmin.f32 %v506, 20.0
      %v571 = vmin.f32 %v507, 20.0
      %v572 = vmin.f32 %v508, 20.0
      %v573 = vmin.f32 %v509, 20.0
      %v574 = vmin.f32 %v510, 20.0
      %v575 = vmin.f32 %v511, 20.0
      %v576 = vmin.f32 %v512, 20.0
      %v577 = vmin.f32 %v513, 20.0
      %v578 = vmin.f32 %v514, 20.0
      %v579 = vmin.f32 %v515, 20.0
      %v580 = vmin.f32 %v516, 20.0
      %v581 = vmin.f32 %v517, 20.0
      %v582 = vmin.f32 %v518, 20.0
      %v583 = vmin.f32 %v519, 20.0
      %v584 = vmin.f32 %v520, 20.0
      %v585 = vmin.f32 %v521, 20.0
      %v586 = vmin.f32 %v522, 20.0
      %v587 = vmin.f32 %v523, 20.0
      %v588 = vmin.f32 %v524, 20.0
      %v589 = vmin.f32 %v525, 20.0
      %v590 = vmin.f32 %v526, 20.0
      %v591 = vmin.f32 %v527, 20.0
      %v592 = vmin.f32 %v528, 20.0
      %v593 = vmin.f32 %v529, 20.0
      %v594 = vmin.f32 %v530, 20.0
      %v595 = vmin.f32 %v531, 20.0
      %v596 = vmin.f32 %v532, 20.0
      %v597 = vmin.f32 %v533, 20.0
      %v598 = vmin.f32 %v534, 20.0
      %v599 = vmin.f32 %v535, 20.0
      %v600 = vmin.f32 %v536, 20.0
      %v601 = vmin.f32 %v537, 20.0
      %v602 = vmin.f32 %v538, 20.0
      %v603 = vmul.f32 %v539, 1.442695
      %v604 = vpow.pop %v603
      %v605 = vmul.f32 %v540, 1.442695
      %v606 = vpow.pop %v605
      %v607 = vmul.f32 %v541, 1.442695
      %v608 = vpow.pop %v607
      %v609 = vmul.f32 %v542, 1.442695
      %v610 = vpow.pop %v609
      %v611 = vmul.f32 %v543, 1.442695
      %v612 = vpow.pop %v611
      %v613 = vmul.f32 %v544, 1.442695
      %v614 = vpow.pop %v613
      %v615 = vmul.f32 %v545, 1.442695
      %v616 = vpow.pop %v615
      %v617 = vmul.f32 %v546, 1.442695
      %v618 = vpow.pop %v617
      %v619 = vmul.f32 %v547, 1.442695
      %v620 = vpow.pop %v619
      %v621 = vmul.f32 %v548, 1.442695
      %v622 = vpow.pop %v621
      %v623 = vmul.f32 %v549, 1.442695
      %v624 = vpow.pop %v623
      %v625 = vmul.f32 %v550, 1.442695
      %v626 = vpow.pop %v625
      %v627 = vmul.f32 %v551, 1.442695
      %v628 = vpow.pop %v627
      %v629 = vmul.f32 %v552, 1.442695
      %v630 = vpow.pop %v629
      %v631 = vmul.f32 %v553, 1.442695
      %v632 = vpow.pop %v631
      %v633 = vmul.f32 %v554, 1.442695
      %v634 = vpow.pop %v633
      %v635 = vmul.f32 %v555, 1.442695
      %v636 = vpow.pop %v635
      %v637 = vmul.f32 %v556, 1.442695
      %v638 = vpow.pop %v637
      %v639 = vmul.f32 %v557, 1.442695
      %v640 = vpow.pop %v639
      %v641 = vmul.f32 %v558, 1.442695
      %v642 = vpow.pop %v641
      %v643 = vmul.f32 %v559, 1.442695
      %v644 = vpow.pop %v643
      %v645 = vmul.f32 %v560, 1.442695
      %v646 = vpow.pop %v645
      %v647 = vmul.f32 %v561, 1.442695
      %v648 = vpow.pop %v647
      %v649 = vmul.f32 %v562, 1.442695
      %v650 = vpow.pop %v649
      %v651 = vmul.f32 %v563, 1.442695
      %v652 = vpow.pop %v651
      %v653 = vmul.f32 %v564, 1.442695
      %v654 = vpow.pop %v653
      %v655 = vmul.f32 %v565, 1.442695
      %v656 = vpow.pop %v655
      %v657 = vmul.f32 %v566, 1.442695
      %v658 = vpow.pop %v657
      %v659 = vmul.f32 %v567, 1.442695
      %v660 = vpow.pop %v659
      %v661 = vmul.f32 %v568, 1.442695
      %v662 = vpow.pop %v661
      %v663 = vmul.f32 %v569, 1.442695
      %v664 = vpow.pop %v663
      %v665 = vmul.f32 %v570, 1.442695
      %v666 = vpow.pop %v665
      %v667 = vmul.f32 %v571, 1.442695
      %v668 = vpow.pop %v667
      %v669 = vmul.f32 %v572, 1.442695
      %v670 = vpow.pop %v669
      %v671 = vmul.f32 %v573, 1.442695
      %v672 = vpow.pop %v671
      %v673 = vmul.f32 %v574, 1.442695
      %v674 = vpow.pop %v673
      %v675 = vmul.f32 %v575, 1.442695
      %v676 = vpow.pop %v675
      %v677 = vmul.f32 %v576, 1.442695
      %v678 = vpow.pop %v677
      %v679 = vmul.f32 %v577, 1.442695
      %v680 = vpow.pop %v679
      %v681 = vmul.f32 %v578, 1.442695
      %v682 = vpow.pop %v681
      %v683 = vmul.f32 %v579, 1.442695
      %v684 = vpow.pop %v683
      %v685 = vmul.f32 %v580, 1.442695
      %v686 = vpow.pop %v685
      %v687 = vmul.f32 %v581, 1.442695
      %v688 = vpow.pop %v687
      %v689 = vmul.f32 %v582, 1.442695
      %v690 = vpow.pop %v689
      %v691 = vmul.f32 %v583, 1.442695
      %v692 = vpow.pop %v691
      %v693 = vmul.f32 %v584, 1.442695
      %v694 = vpow.pop %v693
      %v695 = vmul.f32 %v585, 1.442695
      %v696 = vpow.pop %v695
      %v697 = vmul.f32 %v586, 1.442695
      %v698 = vpow.pop %v697
      %v699 = vmul.f32 %v587, 1.442695
      %v700 = vpow.pop %v699
      %v701 = vmul.f32 %v588, 1.442695
      %v702 = vpow.pop %v701
      %v703 = vmul.f32 %v589, 1.442695
      %v704 = vpow.pop %v703
      %v705 = vmul.f32 %v590, 1.442695
      %v706 = vpow.pop %v705
      %v707 = vmul.f32 %v591, 1.442695
      %v708 = vpow.pop %v707
      %v709 = vmul.f32 %v592, 1.442695
      %v710 = vpow.pop %v709
      %v711 = vmul.f32 %v593, 1.442695
      %v712 = vpow.pop %v711
      %v713 = vmul.f32 %v594, 1.442695
      %v714 = vpow.pop %v713
      %v715 = vmul.f32 %v595, 1.442695
      %v716 = vpow.pop %v715
      %v717 = vmul.f32 %v596, 1.442695
      %v718 = vpow.pop %v717
      %v719 = vmul.f32 %v597, 1.442695
      %v720 = vpow.pop %v719
      %v721 = vmul.f32 %v598, 1.442695
      %v722 = vpow.pop %v721
      %v723 = vmul.f32 %v599, 1.442695
      %v724 = vpow.pop %v723
      %v725 = vmul.f32 %v600, 1.442695
      %v726 = vpow.pop %v725
      %v727 = vmul.f32 %v601, 1.442695
      %v728 = vpow.pop %v727
      %v729 = vmul.f32 %v602, 1.442695
      %v730 = vpow.pop %v729
      %v731 = vadd.f32 %v604, 2.0
      %v732 = vadd.f32 %v606, 2.0
      %v733 = vadd.f32 %v608, 2.0
      %v734 = vadd.f32 %v610, 2.0
      %v735 = vadd.f32 %v612, 2.0
      %v736 = vadd.f32 %v614, 2.0
      %v737 = vadd.f32 %v616, 2.0
      %v738 = vadd.f32 %v618, 2.0
      %v739 = vadd.f32 %v620, 2.0
      %v740 = vadd.f32 %v622, 2.0
      %v741 = vadd.f32 %v624, 2.0
      %v742 = vadd.f32 %v626, 2.0
      %v743 = vadd.f32 %v628, 2.0
      %v744 = vadd.f32 %v630, 2.0
      %v745 = vadd.f32 %v632, 2.0
      %v746 = vadd.f32 %v634, 2.0
      %v747 = vadd.f32 %v636, 2.0
      %v748 = vadd.f32 %v638, 2.0
      %v749 = vadd.f32 %v640, 2.0
      %v750 = vadd.f32 %v642, 2.0
      %v751 = vadd.f32 %v644, 2.0
      %v752 = vadd.f32 %v646, 2.0
      %v753 = vadd.f32 %v648, 2.0
      %v754 = vadd.f32 %v650, 2.0
      %v755 = vadd.f32 %v652, 2.0
      %v756 = vadd.f32 %v654, 2.0
      %v757 = vadd.f32 %v656, 2.0
      %v758 = vadd.f32 %v658, 2.0
      %v759 = vadd.f32 %v660, 2.0
      %v760 = vadd.f32 %v662, 2.0
      %v761 = vadd.f32 %v664, 2.0
      %v762 = vadd.f32 %v666, 2.0
      %v763 = vadd.f32 %v668, 2.0
      %v764 = vadd.f32 %v670, 2.0
      %v765 = vadd.f32 %v672, 2.0
      %v766 = vadd.f32 %v674, 2.0
      %v767 = vadd.f32 %v676, 2.0
      %v768 = vadd.f32 %v678, 2.0
      %v769 = vadd.f32 %v680, 2.0
      %v770 = vadd.f32 %v682, 2.0
      %v771 = vadd.f32 %v684, 2.0
      %v772 = vadd.f32 %v686, 2.0
      %v773 = vadd.f32 %v688, 2.0
      %v774 = vadd.f32 %v690, 2.0
      %v775 = vadd.f32 %v692, 2.0
      %v776 = vadd.f32 %v694, 2.0
      %v777 = vadd.f32 %v696, 2.0
      %v778 = vadd.f32 %v698, 2.0
      %v779 = vadd.f32 %v700, 2.0
      %v780 = vadd.f32 %v702, 2.0
      %v781 = vadd.f32 %v704, 2.0
      %v782 = vadd.f32 %v706, 2.0
      %v783 = vadd.f32 %v708, 2.0
      %v784 = vadd.f32 %v710, 2.0
      %v785 = vadd.f32 %v712, 2.0
      %v786 = vadd.f32 %v714, 2.0
      %v787 = vadd.f32 %v716, 2.0
      %v788 = vadd.f32 %v718, 2.0
      %v789 = vadd.f32 %v720, 2.0
      %v790 = vadd.f32 %v722, 2.0
      %v791 = vadd.f32 %v724, 2.0
      %v792 = vadd.f32 %v726, 2.0
      %v793 = vadd.f32 %v728, 2.0
      %v794 = vadd.f32 %v730, 2.0
      %v795 = vmul.f32 %v604, %v731
      %v796 = vmul.f32 %v606, %v732
      %v797 = vmul.f32 %v608, %v733
      %v798 = vmul.f32 %v610, %v734
      %v799 = vmul.f32 %v612, %v735
      %v800 = vmul.f32 %v614, %v736
      %v801 = vmul.f32 %v616, %v737
      %v802 = vmul.f32 %v618, %v738
      %v803 = vmul.f32 %v620, %v739
      %v804 = vmul.f32 %v622, %v740
      %v805 = vmul.f32 %v624, %v741
      %v806 = vmul.f32 %v626, %v742
      %v807 = vmul.f32 %v628, %v743
      %v808 = vmul.f32 %v630, %v744
      %v809 = vmul.f32 %v632, %v745
      %v810 = vmul.f32 %v634, %v746
      %v811 = vmul.f32 %v636, %v747
      %v812 = vmul.f32 %v638, %v748
      %v813 = vmul.f32 %v640, %v749
      %v814 = vmul.f32 %v642, %v750
      %v815 = vmul.f32 %v644, %v751
      %v816 = vmul.f32 %v646, %v752
      %v817 = vmul.f32 %v648, %v753
      %v818 = vmul.f32 %v650, %v754
      %v819 = vmul.f32 %v652, %v755
      %v820 = vmul.f32 %v654, %v756
      %v821 = vmul.f32 %v656, %v757
      %v822 = vmul.f32 %v658, %v758
      %v823 = vmul.f32 %v660, %v759
      %v824 = vmul.f32 %v662, %v760
      %v825 = vmul.f32 %v664, %v761
      %v826 = vmul.f32 %v666, %v762
      %v827 = vmul.f32 %v668, %v763
      %v828 = vmul.f32 %v670, %v764
      %v829 = vmul.f32 %v672, %v765
      %v830 = vmul.f32 %v674, %v766
      %v831 = vmul.f32 %v676, %v767
      %v832 = vmul.f32 %v678, %v768
      %v833 = vmul.f32 %v680, %v769
      %v834 = vmul.f32 %v682, %v770
      %v835 = vmul.f32 %v684, %v771
      %v836 = vmul.f32 %v686, %v772
      %v837 = vmul.f32 %v688, %v773
      %v838 = vmul.f32 %v690, %v774
      %v839 = vmul.f32 %v692, %v775
      %v840 = vmul.f32 %v694, %v776
      %v841 = vmul.f32 %v696, %v777
      %v842 = vmul.f32 %v698, %v778
      %v843 = vmul.f32 %v700, %v779
      %v844 = vmul.f32 %v702, %v780
      %v845 = vmul.f32 %v704, %v781
      %v846 = vmul.f32 %v706, %v782
      %v847 = vmul.f32 %v708, %v783
      %v848 = vmul.f32 %v710, %v784
      %v849 = vmul.f32 %v712, %v785
      %v850 = vmul.f32 %v714, %v786
      %v851 = vmul.f32 %v716, %v787
      %v852 = vmul.f32 %v718, %v788
      %v853 = vmul.f32 %v720, %v789
      %v854 = vmul.f32 %v722, %v790
      %v855 = vmul.f32 %v724, %v791
      %v856 = vmul.f32 %v726, %v792
      %v857 = vmul.f32 %v728, %v793
      %v858 = vmul.f32 %v730, %v794
      %v859 = vmul.f32 %v475, %v795
      %v860 = vmul.f32 %v476, %v796
      %v861 = vmul.f32 %v477, %v797
      %v862 = vmul.f32 %v478, %v798
      %v863 = vmul.f32 %v479, %v799
      %v864 = vmul.f32 %v480, %v800
      %v865 = vmul.f32 %v481, %v801
      %v866 = vmul.f32 %v482, %v802
      %v867 = vmul.f32 %v483, %v803
      %v868 = vmul.f32 %v484, %v804
      %v869 = vmul.f32 %v485, %v805
      %v870 = vmul.f32 %v486, %v806
      %v871 = vmul.f32 %v487, %v807
      %v872 = vmul.f32 %v488, %v808
      %v873 = vmul.f32 %v489, %v809
      %v874 = vmul.f32 %v490, %v810
      %v875 = vmul.f32 %v491, %v811
      %v876 = vmul.f32 %v492, %v812
      %v877 = vmul.f32 %v493, %v813
      %v878 = vmul.f32 %v494, %v814
      %v879 = vmul.f32 %v495, %v815
      %v880 = vmul.f32 %v496, %v816
      %v881 = vmul.f32 %v497, %v817
      %v882 = vmul.f32 %v498, %v818
      %v883 = vmul.f32 %v499, %v819
      %v884 = vmul.f32 %v500, %v820
      %v885 = vmul.f32 %v501, %v821
      %v886 = vmul.f32 %v502, %v822
      %v887 = vmul.f32 %v503, %v823
      %v888 = vmul.f32 %v504, %v824
      %v889 = vmul.f32 %v505, %v825
      %v890 = vmul.f32 %v506, %v826
      %v891 = vmul.f32 %v507, %v827
      %v892 = vmul.f32 %v508, %v828
      %v893 = vmul.f32 %v509, %v829
      %v894 = vmul.f32 %v510, %v830
      %v895 = vmul.f32 %v511, %v831
      %v896 = vmul.f32 %v512, %v832
      %v897 = vmul.f32 %v513, %v833
      %v898 = vmul.f32 %v514, %v834
      %v899 = vmul.f32 %v515, %v835
      %v900 = vmul.f32 %v516, %v836
      %v901 = vmul.f32 %v517, %v837
      %v902 = vmul.f32 %v518, %v838
      %v903 = vmul.f32 %v519, %v839
      %v904 = vmul.f32 %v520, %v840
      %v905 = vmul.f32 %v521, %v841
      %v906 = vmul.f32 %v522, %v842
      %v907 = vmul.f32 %v523, %v843
      %v908 = vmul.f32 %v524, %v844
      %v909 = vmul.f32 %v525, %v845
      %v910 = vmul.f32 %v526, %v846
      %v911 = vmul.f32 %v527, %v847
      %v912 = vmul.f32 %v528, %v848
      %v913 = vmul.f32 %v529, %v849
      %v914 = vmul.f32 %v530, %v850
      %v915 = vmul.f32 %v531, %v851
      %v916 = vmul.f32 %v532, %v852
      %v917 = vmul.f32 %v533, %v853
      %v918 = vmul.f32 %v534, %v854
      %v919 = vmul.f32 %v535, %v855
      %v920 = vmul.f32 %v536, %v856
      %v921 = vmul.f32 %v537, %v857
      %v922 = vmul.f32 %v538, %v858
      %v923 = vadd.f32 %v795, 2.0
      %v924 = vadd.f32 %v796, 2.0
      %v925 = vadd.f32 %v797, 2.0
      %v926 = vadd.f32 %v798, 2.0
      %v927 = vadd.f32 %v799, 2.0
      %v928 = vadd.f32 %v800, 2.0
      %v929 = vadd.f32 %v801, 2.0
      %v930 = vadd.f32 %v802, 2.0
      %v931 = vadd.f32 %v803, 2.0
      %v932 = vadd.f32 %v804, 2.0
      %v933 = vadd.f32 %v805, 2.0
      %v934 = vadd.f32 %v806, 2.0
      %v935 = vadd.f32 %v807, 2.0
      %v936 = vadd.f32 %v808, 2.0
      %v937 = vadd.f32 %v809, 2.0
      %v938 = vadd.f32 %v810, 2.0
      %v939 = vadd.f32 %v811, 2.0
      %v940 = vadd.f32 %v812, 2.0
      %v941 = vadd.f32 %v813, 2.0
      %v942 = vadd.f32 %v814, 2.0
      %v943 = vadd.f32 %v815, 2.0
      %v944 = vadd.f32 %v816, 2.0
      %v945 = vadd.f32 %v817, 2.0
      %v946 = vadd.f32 %v818, 2.0
      %v947 = vadd.f32 %v819, 2.0
      %v948 = vadd.f32 %v820, 2.0
      %v949 = vadd.f32 %v821, 2.0
      %v950 = vadd.f32 %v822, 2.0
      %v951 = vadd.f32 %v823, 2.0
      %v952 = vadd.f32 %v824, 2.0
      %v953 = vadd.f32 %v825, 2.0
      %v954 = vadd.f32 %v826, 2.0
      %v955 = vadd.f32 %v827, 2.0
      %v956 = vadd.f32 %v828, 2.0
      %v957 = vadd.f32 %v829, 2.0
      %v958 = vadd.f32 %v830, 2.0
      %v959 = vadd.f32 %v831, 2.0
      %v960 = vadd.f32 %v832, 2.0
      %v961 = vadd.f32 %v833, 2.0
      %v962 = vadd.f32 %v834, 2.0
      %v963 = vadd.f32 %v835, 2.0
      %v964 = vadd.f32 %v836, 2.0
      %v965 = vadd.f32 %v837, 2.0
      %v966 = vadd.f32 %v838, 2.0
      %v967 = vadd.f32 %v839, 2.0
      %v968 = vadd.f32 %v840, 2.0
      %v969 = vadd.f32 %v841, 2.0
      %v970 = vadd.f32 %v842, 2.0
      %v971 = vadd.f32 %v843, 2.0
      %v972 = vadd.f32 %v844, 2.0
      %v973 = vadd.f32 %v845, 2.0
      %v974 = vadd.f32 %v846, 2.0
      %v975 = vadd.f32 %v847, 2.0
      %v976 = vadd.f32 %v848, 2.0
      %v977 = vadd.f32 %v849, 2.0
      %v978 = vadd.f32 %v850, 2.0
      %v979 = vadd.f32 %v851, 2.0
      %v980 = vadd.f32 %v852, 2.0
      %v981 = vadd.f32 %v853, 2.0
      %v982 = vadd.f32 %v854, 2.0
      %v983 = vadd.f32 %v855, 2.0
      %v984 = vadd.f32 %v856, 2.0
      %v985 = vadd.f32 %v857, 2.0
      %v986 = vadd.f32 %v858, 2.0
      %v987 = vrcp.pop %v923
      %v988 = vmul.f32 %v859, %v987
      %v989 = vrcp.pop %v924
      %v990 = vmul.f32 %v860, %v989
      %v991 = vrcp.pop %v925
      %v992 = vmul.f32 %v861, %v991
      %v993 = vrcp.pop %v926
      %v994 = vmul.f32 %v862, %v993
      %v995 = vrcp.pop %v927
      %v996 = vmul.f32 %v863, %v995
      %v997 = vrcp.pop %v928
      %v998 = vmul.f32 %v864, %v997
      %v999 = vrcp.pop %v929
      %v1000 = vmul.f32 %v865, %v999
      %v1001 = vrcp.pop %v930
      %v1002 = vmul.f32 %v866, %v1001
      %v1003 = vrcp.pop %v931
      %v1004 = vmul.f32 %v867, %v1003
      %v1005 = vrcp.pop %v932
      %v1006 = vmul.f32 %v868, %v1005
      %v1007 = vrcp.pop %v933
      %v1008 = vmul.f32 %v869, %v1007
      %v1009 = vrcp.pop %v934
      %v1010 = vmul.f32 %v870, %v1009
      %v1011 = vrcp.pop %v935
      %v1012 = vmul.f32 %v871, %v1011
      %v1013 = vrcp.pop %v936
      %v1014 = vmul.f32 %v872, %v1013
      %v1015 = vrcp.pop %v937
      %v1016 = vmul.f32 %v873, %v1015
      %v1017 = vrcp.pop %v938
      %v1018 = vmul.f32 %v874, %v1017
      %v1019 = vrcp.pop %v939
      %v1020 = vmul.f32 %v875, %v1019
      %v1021 = vrcp.pop %v940
      %v1022 = vmul.f32 %v876, %v1021
      %v1023 = vrcp.pop %v941
      %v1024 = vmul.f32 %v877, %v1023
      %v1025 = vrcp.pop %v942
      %v1026 = vmul.f32 %v878, %v1025
      %v1027 = vrcp.pop %v943
      %v1028 = vmul.f32 %v879, %v1027
      %v1029 = vrcp.pop %v944
      %v1030 = vmul.f32 %v880, %v1029
      %v1031 = vrcp.pop %v945
      %v1032 = vmul.f32 %v881, %v1031
      %v1033 = vrcp.pop %v946
      %v1034 = vmul.f32 %v882, %v1033
      %v1035 = vrcp.pop %v947
      %v1036 = vmul.f32 %v883, %v1035
      %v1037 = vrcp.pop %v948
      %v1038 = vmul.f32 %v884, %v1037
      %v1039 = vrcp.pop %v949
      %v1040 = vmul.f32 %v885, %v1039
      %v1041 = vrcp.pop %v950
      %v1042 = vmul.f32 %v886, %v1041
      %v1043 = vrcp.pop %v951
      %v1044 = vmul.f32 %v887, %v1043
      %v1045 = vrcp.pop %v952
      %v1046 = vmul.f32 %v888, %v1045
      %v1047 = vrcp.pop %v953
      %v1048 = vmul.f32 %v889, %v1047
      %v1049 = vrcp.pop %v954
      %v1050 = vmul.f32 %v890, %v1049
      %v1051 = vrcp.pop %v955
      %v1052 = vmul.f32 %v891, %v1051
      %v1053 = vrcp.pop %v956
      %v1054 = vmul.f32 %v892, %v1053
      %v1055 = vrcp.pop %v957
      %v1056 = vmul.f32 %v893, %v1055
      %v1057 = vrcp.pop %v958
      %v1058 = vmul.f32 %v894, %v1057
      %v1059 = vrcp.pop %v959
      %v1060 = vmul.f32 %v895, %v1059
      %v1061 = vrcp.pop %v960
      %v1062 = vmul.f32 %v896, %v1061
      %v1063 = vrcp.pop %v961
      %v1064 = vmul.f32 %v897, %v1063
      %v1065 = vrcp.pop %v962
      %v1066 = vmul.f32 %v898, %v1065
      %v1067 = vrcp.pop %v963
      %v1068 = vmul.f32 %v899, %v1067
      %v1069 = vrcp.pop %v964
      %v1070 = vmul.f32 %v900, %v1069
      %v1071 = vrcp.pop %v965
      %v1072 = vmul.f32 %v901, %v1071
      %v1073 = vrcp.pop %v966
      %v1074 = vmul.f32 %v902, %v1073
      %v1075 = vrcp.pop %v967
      %v1076 = vmul.f32 %v903, %v1075
      %v1077 = vrcp.pop %v968
      %v1078 = vmul.f32 %v904, %v1077
      %v1079 = vrcp.pop %v969
      %v1080 = vmul.f32 %v905, %v1079
      %v1081 = vrcp.pop %v970
      %v1082 = vmul.f32 %v906, %v1081
      %v1083 = vrcp.pop %v971
      %v1084 = vmul.f32 %v907, %v1083
      %v1085 = vrcp.pop %v972
      %v1086 = vmul.f32 %v908, %v1085
      %v1087 = vrcp.pop %v973
      %v1088 = vmul.f32 %v909, %v1087
      %v1089 = vrcp.pop %v974
      %v1090 = vmul.f32 %v910, %v1089
      %v1091 = vrcp.pop %v975
      %v1092 = vmul.f32 %v911, %v1091
      %v1093 = vrcp.pop %v976
      %v1094 = vmul.f32 %v912, %v1093
      %v1095 = vrcp.pop %v977
      %v1096 = vmul.f32 %v913, %v1095
      %v1097 = vrcp.pop %v978
      %v1098 = vmul.f32 %v914, %v1097
      %v1099 = vrcp.pop %v979
      %v1100 = vmul.f32 %v915, %v1099
      %v1101 = vrcp.pop %v980
      %v1102 = vmul.f32 %v916, %v1101
      %v1103 = vrcp.pop %v981
      %v1104 = vmul.f32 %v917, %v1103
      %v1105 = vrcp.pop %v982
      %v1106 = vmul.f32 %v918, %v1105
      %v1107 = vrcp.pop %v983
      %v1108 = vmul.f32 %v919, %v1107
      %v1109 = vrcp.pop %v984
      %v1110 = vmul.f32 %v920, %v1109
      %v1111 = vrcp.pop %v985
      %v1112 = vmul.f32 %v921, %v1111
      %v1113 = vrcp.pop %v986
      %v1114 = vmul.f32 %v922, %v1113
      %1115 = vst.msk [vmem:[%s281] sm:$0x3] %vm297, %v988
      %1116 = vst.msk [vmem:[%s281 + $0x2] sm:$0x3] %vm297, %v990
      %1117 = vst.msk [vmem:[%s281 + $0x4] sm:$0x3] %vm297, %v992
      %1118 = vst.msk [vmem:[%s281 + $0x6] sm:$0x3] %vm297, %v994
      %1119 = vst.msk [vmem:[%s281 + $0x8] sm:$0x3] %vm297, %v996
      %1120 = vst.msk [vmem:[%s281 + $0xa] sm:$0x3] %vm297, %v998
      %1121 = vst.msk [vmem:[%s281 + $0xc] sm:$0x3] %vm297, %v1000
      %1122 = vst.msk [vmem:[%s281 + $0xe] sm:$0x3] %vm297, %v1002
      %1123 = vst.msk [vmem:[%s281 + $0x10] sm:$0x3] %vm297, %v1004
      %1124 = vst.msk [vmem:[%s281 + $0x12] sm:$0x3] %vm297, %v1006
      %1125 = vst.msk [vmem:[%s281 + $0x14] sm:$0x3] %vm297, %v1008
      %1126 = vst.msk [vmem:[%s281 + $0x16] sm:$0x3] %vm297, %v1010
      %1127 = vst.msk [vmem:[%s281 + $0x18] sm:$0x3] %vm297, %v1012
      %1128 = vst.msk [vmem:[%s281 + $0x1a] sm:$0x3] %vm297, %v1014
      %1129 = vst.msk [vmem:[%s281 + $0x1c] sm:$0x3] %vm297, %v1016
      %1130 = vst.msk [vmem:[%s281 + $0x1e] sm:$0x3] %vm297, %v1018
      %1131 = vst.msk [vmem:[%s281 + $0x20] sm:$0x3] %vm297, %v1020
      %1132 = vst.msk [vmem:[%s281 + $0x22] sm:$0x3] %vm297, %v1022
      %1133 = vst.msk [vmem:[%s281 + $0x24] sm:$0x3] %vm297, %v1024
      %1134 = vst.msk [vmem:[%s281 + $0x26] sm:$0x3] %vm297, %v1026
      %1135 = vst.msk [vmem:[%s281 + $0x28] sm:$0x3] %vm297, %v1028
      %1136 = vst.msk [vmem:[%s281 + $0x2a] sm:$0x3] %vm297, %v1030
      %1137 = vst.msk [vmem:[%s281 + $0x2c] sm:$0x3] %vm297, %v1032
      %1138 = vst.msk [vmem:[%s281 + $0x2e] sm:$0x3] %vm297, %v1034
      %1139 = vst.msk [vmem:[%s281 + $0x30] sm:$0x3] %vm297, %v1036
      %1140 = vst.msk [vmem:[%s281 + $0x32] sm:$0x3] %vm297, %v1038
      %1141 = vst.msk [vmem:[%s281 + $0x34] sm:$0x3] %vm297, %v1040
      %1142 = vst.msk [vmem:[%s281 + $0x36] sm:$0x3] %vm297, %v1042
      %1143 = vst.msk [vmem:[%s281 + $0x38] sm:$0x3] %vm297, %v1044
      %1144 = vst.msk [vmem:[%s281 + $0x3a] sm:$0x3] %vm297, %v1046
      %1145 = vst.msk [vmem:[%s281 + $0x3c] sm:$0x3] %vm297, %v1048
      %1146 = vst.msk [vmem:[%s281 + $0x3e] sm:$0x3] %vm297, %v1050
      %1147 = vst.msk [vmem:[%s281 + $0x40] sm:$0x3] %vm297, %v1052
      %1148 = vst.msk [vmem:[%s281 + $0x42] sm:$0x3] %vm297, %v1054
      %1149 = vst.msk [vmem:[%s281 + $0x44] sm:$0x3] %vm297, %v1056
      %1150 = vst.msk [vmem:[%s281 + $0x46] sm:$0x3] %vm297, %v1058
      %1151 = vst.msk [vmem:[%s281 + $0x48] sm:$0x3] %vm297, %v1060
      %1152 = vst.msk [vmem:[%s281 + $0x4a] sm:$0x3] %vm297, %v1062
      %1153 = vst.msk [vmem:[%s281 + $0x4c] sm:$0x3] %vm297, %v1064
      %1154 = vst.msk [vmem:[%s281 + $0x4e] sm:$0x3] %vm297, %v1066
      %1155 = vst.msk [vmem:[%s281 + $0x50] sm:$0x3] %vm297, %v1068
      %1156 = vst.msk [vmem:[%s281 + $0x52] sm:$0x3] %vm297, %v1070
      %1157 = vst.msk [vmem:[%s281 + $0x54] sm:$0x3] %vm297, %v1072
      %1158 = vst.msk [vmem:[%s281 + $0x56] sm:$0x3] %vm297, %v1074
      %1159 = vst.msk [vmem:[%s281 + $0x58] sm:$0x3] %vm297, %v1076
      %1160 = vst.msk [vmem:[%s281 + $0x5a] sm:$0x3] %vm297, %v1078
      %1161 = vst.msk [vmem:[%s281 + $0x5c] sm:$0x3] %vm297, %v1080
      %1162 = vst.msk [vmem:[%s281 + $0x5e] sm:$0x3] %vm297, %v1082
      %1163 = vst.msk [vmem:[%s281 + $0x60] sm:$0x3] %vm297, %v1084
      %1164 = vst.msk [vmem:[%s281 + $0x62] sm:$0x3] %vm297, %v1086
      %1165 = vst.msk [vmem:[%s281 + $0x64] sm:$0x3] %vm297, %v1088
      %1166 = vst.msk [vmem:[%s281 + $0x66] sm:$0x3] %vm297, %v1090
      %1167 = vst.msk [vmem:[%s281 + $0x68] sm:$0x3] %vm297, %v1092
      %1168 = vst.msk [vmem:[%s281 + $0x6a] sm:$0x3] %vm297, %v1094
      %1169 = vst.msk [vmem:[%s281 + $0x6c] sm:$0x3] %vm297, %v1096
      %1170 = vst.msk [vmem:[%s281 + $0x6e] sm:$0x3] %vm297, %v1098
      %1171 = vst.msk [vmem:[%s281 + $0x70] sm:$0x3] %vm297, %v1100
      %1172 = vst.msk [vmem:[%s281 + $0x72] sm:$0x3] %vm297, %v1102
      %1173 = vst.msk [vmem:[%s281 + $0x74] sm:$0x3] %vm297, %v1104
      %1174 = vst.msk [vmem:[%s281 + $0x76] sm:$0x3] %vm297, %v1106
      %1175 = vst.msk [vmem:[%s281 + $0x78] sm:$0x3] %vm297, %v1108
      %1176 = vst.msk [vmem:[%s281 + $0x7a] sm:$0x3] %vm297, %v1110
      %1177 = vst.msk [vmem:[%s281 + $0x7c] sm:$0x3] %vm297, %v1112
      %1178 = vst.msk [vmem:[%s281 + $0x7e] sm:$0x3] %vm297, %v1114
      %v1179 = vsel %vm297, %v988, -inf
      %v1180 = vrot.slane %v1179, 4
      %v1181 = vmax.f32 %v1179, %v1180
      %v1182 = vrot.slane %v1181, 2
      %v1183 = vmax.f32 %v1181, %v1182
      %v1184 = vrot.slane %v1183, 1
      %v1185 = vmax.f32 %v1183, %v1184
      %v1186 = vsel %vm297, %v990, -inf
      %v1187 = vrot.slane %v1186, 4
      %v1188 = vmax.f32 %v1186, %v1187
      %v1189 = vrot.slane %v1188, 2
      %v1190 = vmax.f32 %v1188, %v1189
      %v1191 = vrot.slane %v1190, 1
      %v1192 = vmax.f32 %v1190, %v1191
      %v1193 = vsel %vm297, %v992, -inf
      %v1194 = vrot.slane %v1193, 4
      %v1195 = vmax.f32 %v1193, %v1194
      %v1196 = vrot.slane %v1195, 2
      %v1197 = vmax.f32 %v1195, %v1196
      %v1198 = vrot.slane %v1197, 1
      %v1199 = vmax.f32 %v1197, %v1198
      %v1200 = vsel %vm297, %v994, -inf
      %v1201 = vrot.slane %v1200, 4
      %v1202 = vmax.f32 %v1200, %v1201
      %v1203 = vrot.slane %v1202, 2
      %v1204 = vmax.f32 %v1202, %v1203
      %v1205 = vrot.slane %v1204, 1
      %v1206 = vmax.f32 %v1204, %v1205
      %v1207 = vsel %vm297, %v996, -inf
      %v1208 = vrot.slane %v1207, 4
      %v1209 = vmax.f32 %v1207, %v1208
      %v1210 = vrot.slane %v1209, 2
      %v1211 = vmax.f32 %v1209, %v1210
      %v1212 = vrot.slane %v1211, 1
      %v1213 = vmax.f32 %v1211, %v1212
      %v1214 = vsel %vm297, %v998, -inf
      %v1215 = vrot.slane %v1214, 4
      %v1216 = vmax.f32 %v1214, %v1215
      %v1217 = vrot.slane %v1216, 2
      %v1218 = vmax.f32 %v1216, %v1217
      %v1219 = vrot.slane %v1218, 1
      %v1220 = vmax.f32 %v1218, %v1219
      %v1221 = vsel %vm297, %v1000, -inf
      %v1222 = vrot.slane %v1221, 4
      %v1223 = vmax.f32 %v1221, %v1222
      %v1224 = vrot.slane %v1223, 2
      %v1225 = vmax.f32 %v1223, %v1224
      %v1226 = vrot.slane %v1225, 1
      %v1227 = vmax.f32 %v1225, %v1226
      %v1228 = vsel %vm297, %v1002, -inf
      %v1229 = vrot.slane %v1228, 4
      %v1230 = vmax.f32 %v1228, %v1229
      %v1231 = vrot.slane %v1230, 2
      %v1232 = vmax.f32 %v1230, %v1231
      %v1233 = vrot.slane %v1232, 1
      %v1234 = vmax.f32 %v1232, %v1233
      %v1235 = vsel %vm297, %v1004, -inf
      %v1236 = vrot.slane %v1235, 4
      %v1237 = vmax.f32 %v1235, %v1236
      %v1238 = vrot.slane %v1237, 2
      %v1239 = vmax.f32 %v1237, %v1238
      %v1240 = vrot.slane %v1239, 1
      %v1241 = vmax.f32 %v1239, %v1240
      %v1242 = vsel %vm297, %v1006, -inf
      %v1243 = vrot.slane %v1242, 4
      %v1244 = vmax.f32 %v1242, %v1243
      %v1245 = vrot.slane %v1244, 2
      %v1246 = vmax.f32 %v1244, %v1245
      %v1247 = vrot.slane %v1246, 1
      %v1248 = vmax.f32 %v1246, %v1247
      %v1249 = vsel %vm297, %v1008, -inf
      %v1250 = vrot.slane %v1249, 4
      %v1251 = vmax.f32 %v1249, %v1250
      %v1252 = vrot.slane %v1251, 2
      %v1253 = vmax.f32 %v1251, %v1252
      %v1254 = vrot.slane %v1253, 1
      %v1255 = vmax.f32 %v1253, %v1254
      %v1256 = vsel %vm297, %v1010, -inf
      %v1257 = vrot.slane %v1256, 4
      %v1258 = vmax.f32 %v1256, %v1257
      %v1259 = vrot.slane %v1258, 2
      %v1260 = vmax.f32 %v1258, %v1259
      %v1261 = vrot.slane %v1260, 1
      %v1262 = vmax.f32 %v1260, %v1261
      %v1263 = vsel %vm297, %v1012, -inf
      %v1264 = vrot.slane %v1263, 4
      %v1265 = vmax.f32 %v1263, %v1264
      %v1266 = vrot.slane %v1265, 2
      %v1267 = vmax.f32 %v1265, %v1266
      %v1268 = vrot.slane %v1267, 1
      %v1269 = vmax.f32 %v1267, %v1268
      %v1270 = vsel %vm297, %v1014, -inf
      %v1271 = vrot.slane %v1270, 4
      %v1272 = vmax.f32 %v1270, %v1271
      %v1273 = vrot.slane %v1272, 2
      %v1274 = vmax.f32 %v1272, %v1273
      %v1275 = vrot.slane %v1274, 1
      %v1276 = vmax.f32 %v1274, %v1275
      %v1277 = vsel %vm297, %v1016, -inf
      %v1278 = vrot.slane %v1277, 4
      %v1279 = vmax.f32 %v1277, %v1278
      %v1280 = vrot.slane %v1279, 2
      %v1281 = vmax.f32 %v1279, %v1280
      %v1282 = vrot.slane %v1281, 1
      %v1283 = vmax.f32 %v1281, %v1282
      %v1284 = vsel %vm297, %v1018, -inf
      %v1285 = vrot.slane %v1284, 4
      %v1286 = vmax.f32 %v1284, %v1285
      %v1287 = vrot.slane %v1286, 2
      %v1288 = vmax.f32 %v1286, %v1287
      %v1289 = vrot.slane %v1288, 1
      %v1290 = vmax.f32 %v1288, %v1289
      %v1291 = vsel %vm297, %v1020, -inf
      %v1292 = vrot.slane %v1291, 4
      %v1293 = vmax.f32 %v1291, %v1292
      %v1294 = vrot.slane %v1293, 2
      %v1295 = vmax.f32 %v1293, %v1294
      %v1296 = vrot.slane %v1295, 1
      %v1297 = vmax.f32 %v1295, %v1296
      %v1298 = vsel %vm297, %v1022, -inf
      %v1299 = vrot.slane %v1298, 4
      %v1300 = vmax.f32 %v1298, %v1299
      %v1301 = vrot.slane %v1300, 2
      %v1302 = vmax.f32 %v1300, %v1301
      %v1303 = vrot.slane %v1302, 1
      %v1304 = vmax.f32 %v1302, %v1303
      %v1305 = vsel %vm297, %v1024, -inf
      %v1306 = vrot.slane %v1305, 4
      %v1307 = vmax.f32 %v1305, %v1306
      %v1308 = vrot.slane %v1307, 2
      %v1309 = vmax.f32 %v1307, %v1308
      %v1310 = vrot.slane %v1309, 1
      %v1311 = vmax.f32 %v1309, %v1310
      %v1312 = vsel %vm297, %v1026, -inf
      %v1313 = vrot.slane %v1312, 4
      %v1314 = vmax.f32 %v1312, %v1313
      %v1315 = vrot.slane %v1314, 2
      %v1316 = vmax.f32 %v1314, %v1315
      %v1317 = vrot.slane %v1316, 1
      %v1318 = vmax.f32 %v1316, %v1317
      %v1319 = vsel %vm297, %v1028, -inf
      %v1320 = vrot.slane %v1319, 4
      %v1321 = vmax.f32 %v1319, %v1320
      %v1322 = vrot.slane %v1321, 2
      %v1323 = vmax.f32 %v1321, %v1322
      %v1324 = vrot.slane %v1323, 1
      %v1325 = vmax.f32 %v1323, %v1324
      %v1326 = vsel %vm297, %v1030, -inf
      %v1327 = vrot.slane %v1326, 4
      %v1328 = vmax.f32 %v1326, %v1327
      %v1329 = vrot.slane %v1328, 2
      %v1330 = vmax.f32 %v1328, %v1329
      %v1331 = vrot.slane %v1330, 1
      %v1332 = vmax.f32 %v1330, %v1331
      %v1333 = vsel %vm297, %v1032, -inf
      %v1334 = vrot.slane %v1333, 4
      %v1335 = vmax.f32 %v1333, %v1334
      %v1336 = vrot.slane %v1335, 2
      %v1337 = vmax.f32 %v1335, %v1336
      %v1338 = vrot.slane %v1337, 1
      %v1339 = vmax.f32 %v1337, %v1338
      %v1340 = vsel %vm297, %v1034, -inf
      %v1341 = vrot.slane %v1340, 4
      %v1342 = vmax.f32 %v1340, %v1341
      %v1343 = vrot.slane %v1342, 2
      %v1344 = vmax.f32 %v1342, %v1343
      %v1345 = vrot.slane %v1344, 1
      %v1346 = vmax.f32 %v1344, %v1345
      %v1347 = vsel %vm297, %v1036, -inf
      %v1348 = vrot.slane %v1347, 4
      %v1349 = vmax.f32 %v1347, %v1348
      %v1350 = vrot.slane %v1349, 2
      %v1351 = vmax.f32 %v1349, %v1350
      %v1352 = vrot.slane %v1351, 1
      %v1353 = vmax.f32 %v1351, %v1352
      %v1354 = vsel %vm297, %v1038, -inf
      %v1355 = vrot.slane %v1354, 4
      %v1356 = vmax.f32 %v1354, %v1355
      %v1357 = vrot.slane %v1356, 2
      %v1358 = vmax.f32 %v1356, %v1357
      %v1359 = vrot.slane %v1358, 1
      %v1360 = vmax.f32 %v1358, %v1359
      %v1361 = vsel %vm297, %v1040, -inf
      %v1362 = vrot.slane %v1361, 4
      %v1363 = vmax.f32 %v1361, %v1362
      %v1364 = vrot.slane %v1363, 2
      %v1365 = vmax.f32 %v1363, %v1364
      %v1366 = vrot.slane %v1365, 1
      %v1367 = vmax.f32 %v1365, %v1366
      %v1368 = vsel %vm297, %v1042, -inf
      %v1369 = vrot.slane %v1368, 4
      %v1370 = vmax.f32 %v1368, %v1369
      %v1371 = vrot.slane %v1370, 2
      %v1372 = vmax.f32 %v1370, %v1371
      %v1373 = vrot.slane %v1372, 1
      %v1374 = vmax.f32 %v1372, %v1373
      %v1375 = vsel %vm297, %v1044, -inf
      %v1376 = vrot.slane %v1375, 4
      %v1377 = vmax.f32 %v1375, %v1376
      %v1378 = vrot.slane %v1377, 2
      %v1379 = vmax.f32 %v1377, %v1378
      %v1380 = vrot.slane %v1379, 1
      %v1381 = vmax.f32 %v1379, %v1380
      %v1382 = vsel %vm297, %v1046, -inf
      %v1383 = vrot.slane %v1382, 4
      %v1384 = vmax.f32 %v1382, %v1383
      %v1385 = vrot.slane %v1384, 2
      %v1386 = vmax.f32 %v1384, %v1385
      %v1387 = vrot.slane %v1386, 1
      %v1388 = vmax.f32 %v1386, %v1387
      %v1389 = vsel %vm297, %v1048, -inf
      %v1390 = vrot.slane %v1389, 4
      %v1391 = vmax.f32 %v1389, %v1390
      %v1392 = vrot.slane %v1391, 2
      %v1393 = vmax.f32 %v1391, %v1392
      %v1394 = vrot.slane %v1393, 1
      %v1395 = vmax.f32 %v1393, %v1394
      %v1396 = vsel %vm297, %v1050, -inf
      %v1397 = vrot.slane %v1396, 4
      %v1398 = vmax.f32 %v1396, %v1397
      %v1399 = vrot.slane %v1398, 2
      %v1400 = vmax.f32 %v1398, %v1399
      %v1401 = vrot.slane %v1400, 1
      %v1402 = vmax.f32 %v1400, %v1401
      %v1403 = vsel %vm297, %v1052, -inf
      %v1404 = vrot.slane %v1403, 4
      %v1405 = vmax.f32 %v1403, %v1404
      %v1406 = vrot.slane %v1405, 2
      %v1407 = vmax.f32 %v1405, %v1406
      %v1408 = vrot.slane %v1407, 1
      %v1409 = vmax.f32 %v1407, %v1408
      %v1410 = vsel %vm297, %v1054, -inf
      %v1411 = vrot.slane %v1410, 4
      %v1412 = vmax.f32 %v1410, %v1411
      %v1413 = vrot.slane %v1412, 2
      %v1414 = vmax.f32 %v1412, %v1413
      %v1415 = vrot.slane %v1414, 1
      %v1416 = vmax.f32 %v1414, %v1415
      %v1417 = vsel %vm297, %v1056, -inf
      %v1418 = vrot.slane %v1417, 4
      %v1419 = vmax.f32 %v1417, %v1418
      %v1420 = vrot.slane %v1419, 2
      %v1421 = vmax.f32 %v1419, %v1420
      %v1422 = vrot.slane %v1421, 1
      %v1423 = vmax.f32 %v1421, %v1422
      %v1424 = vsel %vm297, %v1058, -inf
      %v1425 = vrot.slane %v1424, 4
      %v1426 = vmax.f32 %v1424, %v1425
      %v1427 = vrot.slane %v1426, 2
      %v1428 = vmax.f32 %v1426, %v1427
      %v1429 = vrot.slane %v1428, 1
      %v1430 = vmax.f32 %v1428, %v1429
      %v1431 = vsel %vm297, %v1060, -inf
      %v1432 = vrot.slane %v1431, 4
      %v1433 = vmax.f32 %v1431, %v1432
      %v1434 = vrot.slane %v1433, 2
      %v1435 = vmax.f32 %v1433, %v1434
      %v1436 = vrot.slane %v1435, 1
      %v1437 = vmax.f32 %v1435, %v1436
      %v1438 = vsel %vm297, %v1062, -inf
      %v1439 = vrot.slane %v1438, 4
      %v1440 = vmax.f32 %v1438, %v1439
      %v1441 = vrot.slane %v1440, 2
      %v1442 = vmax.f32 %v1440, %v1441
      %v1443 = vrot.slane %v1442, 1
      %v1444 = vmax.f32 %v1442, %v1443
      %v1445 = vsel %vm297, %v1064, -inf
      %v1446 = vrot.slane %v1445, 4
      %v1447 = vmax.f32 %v1445, %v1446
      %v1448 = vrot.slane %v1447, 2
      %v1449 = vmax.f32 %v1447, %v1448
      %v1450 = vrot.slane %v1449, 1
      %v1451 = vmax.f32 %v1449, %v1450
      %v1452 = vsel %vm297, %v1066, -inf
      %v1453 = vrot.slane %v1452, 4
      %v1454 = vmax.f32 %v1452, %v1453
      %v1455 = vrot.slane %v1454, 2
      %v1456 = vmax.f32 %v1454, %v1455
      %v1457 = vrot.slane %v1456, 1
      %v1458 = vmax.f32 %v1456, %v1457
      %v1459 = vsel %vm297, %v1068, -inf
      %v1460 = vrot.slane %v1459, 4
      %v1461 = vmax.f32 %v1459, %v1460
      %v1462 = vrot.slane %v1461, 2
      %v1463 = vmax.f32 %v1461, %v1462
      %v1464 = vrot.slane %v1463, 1
      %v1465 = vmax.f32 %v1463, %v1464
      %v1466 = vsel %vm297, %v1070, -inf
      %v1467 = vrot.slane %v1466, 4
      %v1468 = vmax.f32 %v1466, %v1467
      %v1469 = vrot.slane %v1468, 2
      %v1470 = vmax.f32 %v1468, %v1469
      %v1471 = vrot.slane %v1470, 1
      %v1472 = vmax.f32 %v1470, %v1471
      %v1473 = vsel %vm297, %v1072, -inf
      %v1474 = vrot.slane %v1473, 4
      %v1475 = vmax.f32 %v1473, %v1474
      %v1476 = vrot.slane %v1475, 2
      %v1477 = vmax.f32 %v1475, %v1476
      %v1478 = vrot.slane %v1477, 1
      %v1479 = vmax.f32 %v1477, %v1478
      %v1480 = vsel %vm297, %v1074, -inf
      %v1481 = vrot.slane %v1480, 4
      %v1482 = vmax.f32 %v1480, %v1481
      %v1483 = vrot.slane %v1482, 2
      %v1484 = vmax.f32 %v1482, %v1483
      %v1485 = vrot.slane %v1484, 1
      %v1486 = vmax.f32 %v1484, %v1485
      %v1487 = vsel %vm297, %v1076, -inf
      %v1488 = vrot.slane %v1487, 4
      %v1489 = vmax.f32 %v1487, %v1488
      %v1490 = vrot.slane %v1489, 2
      %v1491 = vmax.f32 %v1489, %v1490
      %v1492 = vrot.slane %v1491, 1
      %v1493 = vmax.f32 %v1491, %v1492
      %v1494 = vsel %vm297, %v1078, -inf
      %v1495 = vrot.slane %v1494, 4
      %v1496 = vmax.f32 %v1494, %v1495
      %v1497 = vrot.slane %v1496, 2
      %v1498 = vmax.f32 %v1496, %v1497
      %v1499 = vrot.slane %v1498, 1
      %v1500 = vmax.f32 %v1498, %v1499
      %v1501 = vsel %vm297, %v1080, -inf
      %v1502 = vrot.slane %v1501, 4
      %v1503 = vmax.f32 %v1501, %v1502
      %v1504 = vrot.slane %v1503, 2
      %v1505 = vmax.f32 %v1503, %v1504
      %v1506 = vrot.slane %v1505, 1
      %v1507 = vmax.f32 %v1505, %v1506
      %v1508 = vsel %vm297, %v1082, -inf
      %v1509 = vrot.slane %v1508, 4
      %v1510 = vmax.f32 %v1508, %v1509
      %v1511 = vrot.slane %v1510, 2
      %v1512 = vmax.f32 %v1510, %v1511
      %v1513 = vrot.slane %v1512, 1
      %v1514 = vmax.f32 %v1512, %v1513
      %v1515 = vsel %vm297, %v1084, -inf
      %v1516 = vrot.slane %v1515, 4
      %v1517 = vmax.f32 %v1515, %v1516
      %v1518 = vrot.slane %v1517, 2
      %v1519 = vmax.f32 %v1517, %v1518
      %v1520 = vrot.slane %v1519, 1
      %v1521 = vmax.f32 %v1519, %v1520
      %v1522 = vsel %vm297, %v1086, -inf
      %v1523 = vrot.slane %v1522, 4
      %v1524 = vmax.f32 %v1522, %v1523
      %v1525 = vrot.slane %v1524, 2
      %v1526 = vmax.f32 %v1524, %v1525
      %v1527 = vrot.slane %v1526, 1
      %v1528 = vmax.f32 %v1526, %v1527
      %v1529 = vsel %vm297, %v1088, -inf
      %v1530 = vrot.slane %v1529, 4
      %v1531 = vmax.f32 %v1529, %v1530
      %v1532 = vrot.slane %v1531, 2
      %v1533 = vmax.f32 %v1531, %v1532
      %v1534 = vrot.slane %v1533, 1
      %v1535 = vmax.f32 %v1533, %v1534
      %v1536 = vsel %vm297, %v1090, -inf
      %v1537 = vrot.slane %v1536, 4
      %v1538 = vmax.f32 %v1536, %v1537
      %v1539 = vrot.slane %v1538, 2
      %v1540 = vmax.f32 %v1538, %v1539
      %v1541 = vrot.slane %v1540, 1
      %v1542 = vmax.f32 %v1540, %v1541
      %v1543 = vsel %vm297, %v1092, -inf
      %v1544 = vrot.slane %v1543, 4
      %v1545 = vmax.f32 %v1543, %v1544
      %v1546 = vrot.slane %v1545, 2
      %v1547 = vmax.f32 %v1545, %v1546
      %v1548 = vrot.slane %v1547, 1
      %v1549 = vmax.f32 %v1547, %v1548
      %v1550 = vsel %vm297, %v1094, -inf
      %v1551 = vrot.slane %v1550, 4
      %v1552 = vmax.f32 %v1550, %v1551
      %v1553 = vrot.slane %v1552, 2
      %v1554 = vmax.f32 %v1552, %v1553
      %v1555 = vrot.slane %v1554, 1
      %v1556 = vmax.f32 %v1554, %v1555
      %v1557 = vsel %vm297, %v1096, -inf
      %v1558 = vrot.slane %v1557, 4
      %v1559 = vmax.f32 %v1557, %v1558
      %v1560 = vrot.slane %v1559, 2
      %v1561 = vmax.f32 %v1559, %v1560
      %v1562 = vrot.slane %v1561, 1
      %v1563 = vmax.f32 %v1561, %v1562
      %v1564 = vsel %vm297, %v1098, -inf
      %v1565 = vrot.slane %v1564, 4
      %v1566 = vmax.f32 %v1564, %v1565
      %v1567 = vrot.slane %v1566, 2
      %v1568 = vmax.f32 %v1566, %v1567
      %v1569 = vrot.slane %v1568, 1
      %v1570 = vmax.f32 %v1568, %v1569
      %v1571 = vsel %vm297, %v1100, -inf
      %v1572 = vrot.slane %v1571, 4
      %v1573 = vmax.f32 %v1571, %v1572
      %v1574 = vrot.slane %v1573, 2
      %v1575 = vmax.f32 %v1573, %v1574
      %v1576 = vrot.slane %v1575, 1
      %v1577 = vmax.f32 %v1575, %v1576
      %v1578 = vsel %vm297, %v1102, -inf
      %v1579 = vrot.slane %v1578, 4
      %v1580 = vmax.f32 %v1578, %v1579
      %v1581 = vrot.slane %v1580, 2
      %v1582 = vmax.f32 %v1580, %v1581
      %v1583 = vrot.slane %v1582, 1
      %v1584 = vmax.f32 %v1582, %v1583
      %v1585 = vsel %vm297, %v1104, -inf
      %v1586 = vrot.slane %v1585, 4
      %v1587 = vmax.f32 %v1585, %v1586
      %v1588 = vrot.slane %v1587, 2
      %v1589 = vmax.f32 %v1587, %v1588
      %v1590 = vrot.slane %v1589, 1
      %v1591 = vmax.f32 %v1589, %v1590
      %v1592 = vsel %vm297, %v1106, -inf
      %v1593 = vrot.slane %v1592, 4
      %v1594 = vmax.f32 %v1592, %v1593
      %v1595 = vrot.slane %v1594, 2
      %v1596 = vmax.f32 %v1594, %v1595
      %v1597 = vrot.slane %v1596, 1
      %v1598 = vmax.f32 %v1596, %v1597
      %v1599 = vsel %vm297, %v1108, -inf
      %v1600 = vrot.slane %v1599, 4
      %v1601 = vmax.f32 %v1599, %v1600
      %v1602 = vrot.slane %v1601, 2
      %v1603 = vmax.f32 %v1601, %v1602
      %v1604 = vrot.slane %v1603, 1
      %v1605 = vmax.f32 %v1603, %v1604
      %v1606 = vsel %vm297, %v1110, -inf
      %v1607 = vrot.slane %v1606, 4
      %v1608 = vmax.f32 %v1606, %v1607
      %v1609 = vrot.slane %v1608, 2
      %v1610 = vmax.f32 %v1608, %v1609
      %v1611 = vrot.slane %v1610, 1
      %v1612 = vmax.f32 %v1610, %v1611
      %v1613 = vsel %vm297, %v1112, -inf
      %v1614 = vrot.slane %v1613, 4
      %v1615 = vmax.f32 %v1613, %v1614
      %v1616 = vrot.slane %v1615, 2
      %v1617 = vmax.f32 %v1615, %v1616
      %v1618 = vrot.slane %v1617, 1
      %v1619 = vmax.f32 %v1617, %v1618
      %v1620 = vsel %vm297, %v1114, -inf
      %v1621 = vrot.slane %v1620, 4
      %v1622 = vmax.f32 %v1620, %v1621
      %v1623 = vrot.slane %v1622, 2
      %v1624 = vmax.f32 %v1622, %v1623
      %v1625 = vrot.slane %v1624, 1
      %v1626 = vmax.f32 %v1624, %v1625
      %vm1627 = vcmask 64512
      %v1628 = vsel %vm1627, %v1185, -inf
      %v1629 = vsel %vm1627, %v1241, -inf
      %v1630 = vmax.f32 %v1628, %v1629
      %v1631 = vsel %vm1627, %v1192, -inf
      %v1632 = vsel %vm1627, %v1248, -inf
      %v1633 = vmax.f32 %v1631, %v1632
      %v1634 = vsel %vm1627, %v1199, -inf
      %v1635 = vsel %vm1627, %v1255, -inf
      %v1636 = vmax.f32 %v1634, %v1635
      %v1637 = vsel %vm1627, %v1206, -inf
      %v1638 = vsel %vm1627, %v1262, -inf
      %v1639 = vmax.f32 %v1637, %v1638
      %v1640 = vsel %vm1627, %v1213, -inf
      %v1641 = vsel %vm1627, %v1269, -inf
      %v1642 = vmax.f32 %v1640, %v1641
      %v1643 = vsel %vm1627, %v1220, -inf
      %v1644 = vsel %vm1627, %v1276, -inf
      %v1645 = vmax.f32 %v1643, %v1644
      %v1646 = vsel %vm1627, %v1227, -inf
      %v1647 = vsel %vm1627, %v1283, -inf
      %v1648 = vmax.f32 %v1646, %v1647
      %v1649 = vsel %vm1627, %v1234, -inf
      %v1650 = vsel %vm1627, %v1290, -inf
      %v1651 = vmax.f32 %v1649, %v1650
      %v1652 = vsel %vm1627, %v1297, -inf
      %v1653 = vsel %vm1627, %v1353, -inf
      %v1654 = vmax.f32 %v1652, %v1653
      %v1655 = vsel %vm1627, %v1304, -inf
      %v1656 = vsel %vm1627, %v1360, -inf
      %v1657 = vmax.f32 %v1655, %v1656
      %v1658 = vsel %vm1627, %v1311, -inf
      %v1659 = vsel %vm1627, %v1367, -inf
      %v1660 = vmax.f32 %v1658, %v1659
      %v1661 = vsel %vm1627, %v1318, -inf
      %v1662 = vsel %vm1627, %v1374, -inf
      %v1663 = vmax.f32 %v1661, %v1662
      %v1664 = vsel %vm1627, %v1325, -inf
      %v1665 = vsel %vm1627, %v1381, -inf
      %v1666 = vmax.f32 %v1664, %v1665
      %v1667 = vsel %vm1627, %v1332, -inf
      %v1668 = vsel %vm1627, %v1388, -inf
      %v1669 = vmax.f32 %v1667, %v1668
      %v1670 = vsel %vm1627, %v1339, -inf
      %v1671 = vsel %vm1627, %v1395, -inf
      %v1672 = vmax.f32 %v1670, %v1671
      %v1673 = vsel %vm1627, %v1346, -inf
      %v1674 = vsel %vm1627, %v1402, -inf
      %v1675 = vmax.f32 %v1673, %v1674
      %v1676 = vsel %vm1627, %v1409, -inf
      %v1677 = vsel %vm1627, %v1465, -inf
      %v1678 = vmax.f32 %v1676, %v1677
      %v1679 = vsel %vm1627, %v1416, -inf
      %v1680 = vsel %vm1627, %v1472, -inf
      %v1681 = vmax.f32 %v1679, %v1680
      %v1682 = vsel %vm1627, %v1423, -inf
      %v1683 = vsel %vm1627, %v1479, -inf
      %v1684 = vmax.f32 %v1682, %v1683
      %v1685 = vsel %vm1627, %v1430, -inf
      %v1686 = vsel %vm1627, %v1486, -inf
      %v1687 = vmax.f32 %v1685, %v1686
      %v1688 = vsel %vm1627, %v1437, -inf
      %v1689 = vsel %vm1627, %v1493, -inf
      %v1690 = vmax.f32 %v1688, %v1689
      %v1691 = vsel %vm1627, %v1444, -inf
      %v1692 = vsel %vm1627, %v1500, -inf
      %v1693 = vmax.f32 %v1691, %v1692
      %v1694 = vsel %vm1627, %v1451, -inf
      %v1695 = vsel %vm1627, %v1507, -inf
      %v1696 = vmax.f32 %v1694, %v1695
      %v1697 = vsel %vm1627, %v1458, -inf
      %v1698 = vsel %vm1627, %v1514, -inf
      %v1699 = vmax.f32 %v1697, %v1698
      %v1700 = vsel %vm1627, %v1521, -inf
      %v1701 = vsel %vm1627, %v1577, -inf
      %v1702 = vmax.f32 %v1700, %v1701
      %v1703 = vsel %vm1627, %v1528, -inf
      %v1704 = vsel %vm1627, %v1584, -inf
      %v1705 = vmax.f32 %v1703, %v1704
      %v1706 = vsel %vm1627, %v1535, -inf
      %v1707 = vsel %vm1627, %v1591, -inf
      %v1708 = vmax.f32 %v1706, %v1707
      %v1709 = vsel %vm1627, %v1542, -inf
      %v1710 = vsel %vm1627, %v1598, -inf
      %v1711 = vmax.f32 %v1709, %v1710
      %v1712 = vsel %vm1627, %v1549, -inf
      %v1713 = vsel %vm1627, %v1605, -inf
      %v1714 = vmax.f32 %v1712, %v1713
      %v1715 = vsel %vm1627, %v1556, -inf
      %v1716 = vsel %vm1627, %v1612, -inf
      %v1717 = vmax.f32 %v1715, %v1716
      %v1718 = vsel %vm1627, %v1563, -inf
      %v1719 = vsel %vm1627, %v1619, -inf
      %v1720 = vmax.f32 %v1718, %v1719
      %v1721 = vsel %vm1627, %v1570, -inf
      %v1722 = vsel %vm1627, %v1626, -inf
      %v1723 = vmax.f32 %v1721, %v1722
      %vm1756 = vcmask 1041409
      %v1757 = vsel %vm1756, %v1633, %v1630
      %vm1758 = vcmask 1042434
      %v1759 = vsel %vm1758, %v1636, %v1757
      %vm1760 = vcmask 1043459
      %v1761 = vsel %vm1760, %v1639, %v1759
      %vm1762 = vcmask 1044484
      %v1763 = vsel %vm1762, %v1642, %v1761
      %vm1764 = vcmask 1045509
      %v1765 = vsel %vm1764, %v1645, %v1763
      %vm1766 = vcmask 1046534
      %v1767 = vsel %vm1766, %v1648, %v1765
      %vm1768 = vcmask 1047559
      %v1769 = vsel %vm1768, %v1651, %v1767
      %v1770 = vsel %vm1756, %v1657, %v1654
      %v1771 = vsel %vm1758, %v1660, %v1770
      %v1772 = vsel %vm1760, %v1663, %v1771
      %v1773 = vsel %vm1762, %v1666, %v1772
      %v1774 = vsel %vm1764, %v1669, %v1773
      %v1775 = vsel %vm1766, %v1672, %v1774
      %v1776 = vsel %vm1768, %v1675, %v1775
      %v1777 = vsel %vm1756, %v1681, %v1678
      %v1778 = vsel %vm1758, %v1684, %v1777
      %v1779 = vsel %vm1760, %v1687, %v1778
      %v1780 = vsel %vm1762, %v1690, %v1779
      %v1781 = vsel %vm1764, %v1693, %v1780
      %v1782 = vsel %vm1766, %v1696, %v1781
      %v1783 = vsel %vm1768, %v1699, %v1782
      %v1784 = vsel %vm1756, %v1705, %v1702
      %v1785 = vsel %vm1758, %v1708, %v1784
      %v1786 = vsel %vm1760, %v1711, %v1785
      %v1787 = vsel %vm1762, %v1714, %v1786
      %v1788 = vsel %vm1764, %v1717, %v1787
      %v1789 = vsel %vm1766, %v1720, %v1788
      %v1790 = vsel %vm1768, %v1723, %v1789
      %1795 = vst.msk [vmem:[%s291] sm:$0xff] %vm1627, %v1769
      %1796 = vst.msk [vmem:[%s291 + $0x8] sm:$0xff] %vm1627, %v1776
      %1797 = vst.msk [vmem:[%s291 + $0x10] sm:$0xff] %vm1627, %v1783
      %1798 = vst.msk [vmem:[%s291 + $0x18] sm:$0xff] %vm1627, %v1790
      %s1799 = smul.u32 8, %s22
      %p1800 = scmp.lt.s32.totalorder %s21, 1
      %s1801 = scalar_select %p1800, %s21, 1
      %p1802 = scmp.lt.s32.totalorder %s1799, 15
      %s1803 = scalar_select %p1802, %s1799, 15
      %s1804 = smul.addr %s1803, 8
      %s1805 = smul.addr %s1801, 128
      %s1806 = sadd.s32 %s1804, %s1805
      %s1807 = smul.addr %s1806, 2
      %s1808 = scalar_lea.vmem %s4, %s1807
      %s1809 = smul.u32 4, %s22
      %p1810 = scmp.lt.s32.totalorder %s21, 1
      %s1811 = scalar_select %p1810, %s21, 1
      %p1812 = scmp.lt.s32.totalorder %s1809, 7
      %s1813 = scalar_select %p1812, %s1809, 7
      %s1814 = smul.addr %s1811, 8
      %s1815 = sadd.s32 %s1813, %s1814
      %s1816 = smul.addr %s1815, 8
      %s1817 = scalar_lea.vmem %s5, %s1816
      // Predicated region
      $region37: #{downsample.7} parent=35 // pred_check
        %p1818 = pneg %p140
      $region38: #{downsample.7} parent=35 // pred_check_branch
        %1820 = sbr.rel (%p1818) target = $region40
      $region39: #{downsample.7} parent=35 // pred_region
        %s1821 = smul.u32 8, %s22
      $region40: #{downsample.7} parent=35 // pred_fallthru
        _
      // Predicated region
      $region41: #{downsample.7} parent=35 // pred_check
        %p1822 = pneg %p168
      $region42: #{downsample.7} parent=35 // pred_check_branch
        %1824 = sbr.rel (%p1822) target = $region44
      $region43: #{downsample.7} parent=35 // pred_region
        %s1825 = smul.u32 4, %s22
      $region44: #{downsample.7} parent=35 // pred_fallthru
        _
    $region36: #{downsample.7} parent=5 // pred_fallthru
      _
    %p1826 = scmp.le.s32.totalorder 2, %s12
    // Predicated region
    $region45: #{downsample.7} parent=5 // pred_check
      %p1827 = pneg %p1826
    $region46: #{downsample.7} parent=5 // pred_check_branch
      %1829 = sbr.rel (%p1827) target = $region48
    $region47: #{downsample.7} parent=5 // pred_region
      %s1830 = ssub.s32 %s12, 2
      // Predicated region
      $region49: #{downsample.7} parent=47 // pred_check
        %p1831 = pneg %p146
      $region50: #{downsample.7} parent=47 // pred_check_branch
        %1833 = sbr.rel (%p1831) target = $region52
      $region51: #{downsample.7} parent=47 // pred_region
        %s1834 = smul.u32 8, %s24
        %p1835 = scmp.lt.s32.totalorder %s23, 1
        %s1836 = scalar_select %p1835, %s23, 1
        %p1837 = scmp.lt.s32.totalorder %s1834, 15
        %s1838 = scalar_select %p1837, %s1834, 15
        %s1839 = smul.addr %s1838, 8
        %s1840 = smul.addr %s1836, 128
        %s1841 = sadd.s32 %s1839, %s1840
        %s1842 = smul.addr %s1841, 2
        %s1843 = scalar_lea.vmem %s4, %s1842
      $region52: #{downsample.7} parent=47 // pred_fallthru
        _
      // Predicated region
      $region53: #{downsample.7} parent=47 // pred_check
        %p1844 = pneg %p174
      $region54: #{downsample.7} parent=47 // pred_check_branch
        %1846 = sbr.rel (%p1844) target = $region56
      $region55: #{downsample.7} parent=47 // pred_region
        %s1847 = smul.u32 4, %s24
        %p1848 = scmp.lt.s32.totalorder %s23, 1
        %s1849 = scalar_select %p1848, %s23, 1
        %p1850 = scmp.lt.s32.totalorder %s1847, 7
        %s1851 = scalar_select %p1850, %s1847, 7
        %s1852 = smul.addr %s1849, 8
        %s1853 = sadd.s32 %s1851, %s1852
        %s1854 = smul.addr %s1853, 8
        %s1855 = scalar_lea.vmem %s5, %s1854
      $region56: #{downsample.7} parent=47 // pred_fallthru
        _
    $region48: #{downsample.7} parent=5 // pred_fallthru
      _
  $region6: #{downsample.7} parent=0 // loop_footer
    %s16 = sadd.s32 1, %s12
  $region7: #{downsample.7} parent=0 // loop_footer_branch
    %11 = sbr.rel target = $region3
  $region8: #{downsample.7} parent=0 // loop_exit
    _

</llo_original>
